<compile_context>
chip_gen: v7x
topology: tpu7x:2x2x1
jax: 0.10.0
libtpu: 0.0.40
codegen_flags: <defaults>
</compile_context>

<pallas_src>
import functools

import jax
import jax.numpy as jnp
import numpy as np
from jax.experimental import pallas as pl
from jax.experimental.pallas import tpu as pltpu

LPAD = 8  # left W-pad so the interior store of the halo scratch is sublane-aligned (f32 tile = 8)


# ------------------------- in-kernel math helpers -------------------------

def _silu(v):
    return v * jax.nn.sigmoid(v)


def _fill_pad(pad_ref, src, H, W):
    """Write src (H, W, C) into pad_ref (H+2, W+2*LPAD, C) with a zero 1-halo.

    Interior goes to rows 1..H, cols LPAD..LPAD+W (full-width, tile-aligned store);
    only the halo ring actually read by the 3x3 taps is zeroed, every step, so
    correctness never depends on scratch persistence across grid steps / cores.
    """
    C = src.shape[-1]
    dt = src.dtype
    Wp = W + 2 * LPAD
    pad_ref[1:H + 1, LPAD:LPAD + W, :] = src                                   # aligned interior
    pad_ref[0:1, :, :] = jnp.zeros((1, Wp, C), dt)                             # top halo row
    pad_ref[H + 1:H + 2, :, :] = jnp.zeros((1, Wp, C), dt)                     # bottom halo row
    pad_ref[1:H + 1, LPAD - 1:LPAD, :] = jnp.zeros((H, 1, C), dt)              # left halo col
    pad_ref[1:H + 1, LPAD + W:LPAD + W + 1, :] = jnp.zeros((H, 1, C), dt)      # right halo col


def _fill_im2col(im_ref, pad_ref, H, W, C):
    """Scatter the 9 shifted 3x3 taps of pad_ref into im_ref (H*W, 9*C) as bf16."""
    HW = H * W
    for dy in range(3):
        for dx in range(3):
            off = (dy * 3 + dx) * C
            tap = pad_ref[dy:dy + H, LPAD - 1 + dx:LPAD - 1 + dx + W, :]
            im_ref[:, off:off + C] = tap.reshape(HW, C).astype(jnp.bfloat16)


def _group_norm(xf, gamma, beta, grp, inv_n, eps=1e-5):
    """GroupNorm on (HW, C) f32.

    grp is the (C, C) 0/1 same-group membership matrix; per-group sums are computed
    and redistributed with a tiny f32 matmul at precision=HIGHEST (numerics), and the
    variance is two-pass (biased, matching torch GroupNorm).
    """
    s = jnp.sum(xf, axis=0, keepdims=True)                                      # (1, C)
    mean = jnp.dot(s, grp, precision=jax.lax.Precision.HIGHEST,
                   preferred_element_type=jnp.float32) * inv_n
    d = xf - mean
    ssd = jnp.sum(d * d, axis=0, keepdims=True)                                 # (1, C)
    var = jnp.dot(ssd, grp, precision=jax.lax.Precision.HIGHEST,
                  preferred_element_type=jnp.float32) * inv_n
    return d * jax.lax.rsqrt(var + eps) * gamma + beta


# ------------------------------ fused Pallas kernel ------------------------------

def _resnet_block_kernel(x_ref, t_ref, w1_ref, w2_ref, wmlp_ref, wr_ref,
                         pvec_ref, grp_ref, o_ref,
                         xpad_ref, hpad_ref, im1_ref, im2_ref,
                         *, H, W, Cin, Cout, Cg):
    f32 = jnp.float32
    HW = H * W
    inv_n = 1.0 / float(HW * Cg)

    grp = grp_ref[...]
    pv = pvec_ref[...]                                   # (9, Cout) packed small params
    b1, g1, be1 = pv[0:1], pv[1:2], pv[2:3]
    b2, g2, be2 = pv[3:4], pv[4:5], pv[5:6]
    br, bsc, bsh = pv[6:7], pv[7:8], pv[8:9]

    # ---- time MLP: SiLU -> Linear(T, 2*Cout); time_emb resident, row picked by program_id ----
    t = _silu(t_ref[pl.ds(pl.program_id(0), 1), :]).astype(jnp.bfloat16)        # (1, T)
    ss = jnp.dot(t, wmlp_ref[...], preferred_element_type=f32)                  # (1, 2*Cout)
    scale = ss[:, :Cout] + bsc
    shift = ss[:, Cout:] + bsh

    # ---- block1: conv3x3 (im2col, one MXU dot) -> GroupNorm -> FiLM -> SiLU ----
    _fill_pad(xpad_ref, x_ref[...], H, W)
    _fill_im2col(im1_ref, xpad_ref, H, W, Cin)
    h = jnp.dot(im1_ref[...], w1_ref[...], preferred_element_type=f32) + b1     # (HW, Cout)
    h = _group_norm(h, g1, be1, grp, inv_n)
    h = _silu(h * (1.0 + scale) + shift)

    # ---- block2: conv3x3 -> GroupNorm -> SiLU ; h never leaves VMEM ----
    _fill_pad(hpad_ref, h.reshape(H, W, Cout), H, W)
    _fill_im2col(im2_ref, hpad_ref, H, W, Cout)
    y = jnp.dot(im2_ref[...], w2_ref[...], preferred_element_type=f32) + b2
    y = _silu(_group_norm(y, g2, be2, grp, inv_n))

    # ---- residual 1x1 conv: reuse the already-cast bf16 centre tap (dy=dx=1) of im1 ----
    xres = im1_ref[:, 4 * Cin:5 * Cin]                                          # (HW, Cin) bf16
    y = y + jnp.dot(xres, wr_ref[...], preferred_element_type=f32) + br

    # Channels-last store; no in-kernel transpose (NCHW conversion happens outside).
    o_ref[...] = y.astype(o_ref.dtype)


# ------------------------------ forward wrapper ------------------------------

@functools.partial(jax.jit, static_argnames=("groups",))
def resnet_block_forward(x_nchw, time_emb, params, groups=8):
    """x_nchw: (B, dim, H, W), time_emb: (B, time_emb_dim) -> (B, dim_out, H, W)."""
    B, Cin, H, W = x_nchw.shape
    T = time_emb.shape[-1]
    Cout = params["w1"].shape[-1]
    Cg = Cout // groups
    bf = jnp.bfloat16

    # NCHW -> NHWC once on the input side (channels on lanes for the conv matmuls).
    x = jnp.transpose(x_nchw, (0, 2, 3, 1)).astype(jnp.float32)
    t = time_emb.astype(jnp.float32)

    # Conv weights flattened tap-major: K index = (dy*3 + dx)*C + c, matching im2col.
    w1 = params["w1"].reshape(9 * Cin, Cout).astype(bf)
    w2 = params["w2"].reshape(9 * Cout, Cout).astype(bf)
    wr = params["wr"].astype(bf)
    wmlp = params["w_mlp"].astype(bf)                                  # (T, 2*Cout)

    # Pack all tiny (1, Cout) vectors into one (9, Cout) block (one DMA / one spec).
    pvec = jnp.concatenate(
        [params["b1"], params["g1"], params["be1"],
         params["b2"], params["g2"], params["be2"],
         params["br"], params["b_mlp"][:, :Cout], params["b_mlp"][:, Cout:]],
        axis=0).astype(jnp.float32)                                    # (9, Cout)

    # Group-membership matrix for GroupNorm group mixing on the MXU.
    gid = jnp.arange(Cout) // Cg
    grp = (gid[:, None] == gid[None, :]).astype(jnp.float32)           # (Cout, Cout)

    def rep(a):  # full-array block, identical for every grid step
        return pl.BlockSpec(a.shape, lambda b, _n=a.ndim: (0,) * _n)

    kern = functools.partial(_resnet_block_kernel,
                             H=H, W=W, Cin=Cin, Cout=Cout, Cg=Cg)

    out = pl.pallas_call(
        kern,
        out_shape=jax.ShapeDtypeStruct((B, H * W, Cout), jnp.float32),
        grid=(B,),
        in_specs=[pl.BlockSpec((None, H, W, Cin), lambda b: (b, 0, 0, 0)),   # x (NHWC)
                  rep(t), rep(w1), rep(w2), rep(wmlp), rep(wr), rep(pvec), rep(grp)],
        out_specs=pl.BlockSpec((None, H * W, Cout), lambda b: (b, 0, 0)),
        scratch_shapes=[
            pltpu.VMEM((H + 2, W + 2 * LPAD, Cin), jnp.float32),    # zero-halo padded x
            pltpu.VMEM((H + 2, W + 2 * LPAD, Cout), jnp.float32),   # zero-halo padded h
            pltpu.VMEM((H * W, 9 * Cin), bf),                       # im2col for block1
            pltpu.VMEM((H * W, 9 * Cout), bf),                      # im2col for block2
        ],
        compiler_params=pltpu.CompilerParams(
            dimension_semantics=("parallel",),          # batch split across TCs (v7x)
            vmem_limit_bytes=48 * 1024 * 1024),         # v7x-friendly scoped budget
    )(x, t, w1, w2, wmlp, wr, pvec, grp)

    # Kernel output is channels-last (B, H*W, Cout); convert to NCHW outside the
    # kernel (no dead-epilogue transpose inside; drop this when chaining in NHWC).
    return jnp.transpose(out.reshape(B, H, W, Cout), (0, 3, 1, 2))


# ------------------------------ parameter init ------------------------------

def init_params(key, dim, dim_out, time_emb_dim):
    ks = jax.random.split(key, 6)

    def uconv3(k, cin, cout):
        bound = 1.0 / np.sqrt(cin * 9)
        return jax.random.uniform(k, (3, 3, cin, cout), jnp.float32, -bound, bound)

    def ulin(k, cin, cout):
        bound = 1.0 / np.sqrt(cin)
        return jax.random.uniform(k, (cin, cout), jnp.float32, -bound, bound)

    return {
        "w_mlp": ulin(ks[0], time_emb_dim, 2 * dim_out),
        "b_mlp": jnp.zeros((1, 2 * dim_out), jnp.float32) + 0.01,
        "w1": uconv3(ks[1], dim, dim_out),
        "b1": jnp.zeros((1, dim_out), jnp.float32) + 0.02,
        "g1": jnp.ones((1, dim_out), jnp.float32),
        "be1": jnp.zeros((1, dim_out), jnp.float32),
        "w2": uconv3(ks[2], dim_out, dim_out),
        "b2": jnp.zeros((1, dim_out), jnp.float32) - 0.02,
        "g2": jnp.ones((1, dim_out), jnp.float32),
        "be2": jnp.zeros((1, dim_out), jnp.float32),
        "wr": ulin(ks[3], dim, dim_out),
        "br": jnp.zeros((1, dim_out), jnp.float32) + 0.005,
    }


# ------------------------------ pure-JAX reference ------------------------------

def _ref_forward(x_nchw, time_emb, params, groups):
    x = jnp.transpose(x_nchw, (0, 2, 3, 1))
    silu = lambda v: v * jax.nn.sigmoid(v)
    ss = silu(time_emb) @ params["w_mlp"] + params["b_mlp"]
    Cout = params["w1"].shape[-1]
    scale, shift = ss[:, :Cout], ss[:, Cout:]

    def conv(inp, w, b):
        y = jax.lax.conv_general_dilated(
            inp, w, (1, 1), "SAME", dimension_numbers=("NHWC", "HWIO", "NHWC"))
        return y + b.reshape(1, 1, 1, -1)

    def gn(inp, gamma, beta, G, eps=1e-5):
        B, H, W, C = inp.shape
        xg = inp.reshape(B, H, W, G, C // G)
        mean = xg.mean(axis=(1, 2, 4), keepdims=True)
        var = xg.var(axis=(1, 2, 4), keepdims=True)
        xh = ((xg - mean) * jax.lax.rsqrt(var + eps)).reshape(B, H, W, C)
        return xh * gamma.reshape(1, 1, 1, -1) + beta.reshape(1, 1, 1, -1)

    h = conv(x, params["w1"], params["b1"])
    h = gn(h, params["g1"], params["be1"], groups)
    h = silu(h * (1.0 + scale[:, None, None, :]) + shift[:, None, None, :])
    h2 = conv(h, params["w2"], params["b2"])
    h2 = silu(gn(h2, params["g2"], params["be2"], groups))
    wr = params["wr"].reshape(1, 1, *params["wr"].shape)
    res = conv(x, wr, params["br"])
    return jnp.transpose(h2 + res, (0, 3, 1, 2))


# ------------------------------------ main ------------------------------------

if __name__ == "__main__":
    B, dim, dim_out, H, W = 2, 4, 16, 16, 16
    time_emb_dim = 32
    groups = 8

    key = jax.random.PRNGKey(0)
    kx, kt, kp = jax.random.split(key, 3)
    x = jax.random.normal(kx, (B, dim, H, W), jnp.float32)
    time_emb = jax.random.normal(kt, (B, time_emb_dim), jnp.float32)
    params = init_params(kp, dim, dim_out, time_emb_dim)

    out = resnet_block_forward(x, time_emb, params, groups=groups)
    out = jax.block_until_ready(out)
    assert out.shape == (B, dim_out, H, W), out.shape

    ref = _ref_forward(x, time_emb, params, groups)
    # bf16 MXU operands (f32 accumulation) vs. a pure-f32 reference -> modest tolerance.
    np.testing.assert_allclose(np.asarray(out), np.asarray(ref), atol=5e-2, rtol=5e-2)

    print("KERNEL_OK")
</pallas_src>

<mosaic_0001>
module attributes {stable_mosaic.version = 11 : i64} {
  func.func @_resnet_block_kernel(%arg0: i32, %arg1: memref<1x16x16x4xf32, #tpu.memory_space<vmem>>, %arg2: memref<2x32xf32, #tpu.memory_space<vmem>>, %arg3: memref<36x16xbf16, #tpu.memory_space<vmem>>, %arg4: memref<144x16xbf16, #tpu.memory_space<vmem>>, %arg5: memref<32x32xbf16, #tpu.memory_space<vmem>>, %arg6: memref<4x16xbf16, #tpu.memory_space<vmem>>, %arg7: memref<9x16xf32, #tpu.memory_space<vmem>>, %arg8: memref<16x16xf32, #tpu.memory_space<vmem>>, %arg9: memref<1x256x16xf32, #tpu.memory_space<vmem>>, %arg10: memref<18x32x4xf32, #tpu.memory_space<vmem>>, %arg11: memref<18x32x16xf32, #tpu.memory_space<vmem>>, %arg12: memref<256x36xbf16, #tpu.memory_space<vmem>>, %arg13: memref<256x144xbf16, #tpu.memory_space<vmem>>) attributes {dimension_semantics = [#tpu.dimension_semantics<parallel>], iteration_bounds = array<i64: 2>, scalar_prefetch = 0 : i64, scratch_operands = 4 : i64, tpu.core_type = #tpu.core_type<tc>, window_params = [{transform_indices = @transform_0, window_bounds = array<i64: 1, 16, 16, 4>}, {pipeline_mode = #tpu.pipeline_mode<synchronous>, transform_indices = @transform_1, window_bounds = array<i64: 2, 32>}, {pipeline_mode = #tpu.pipeline_mode<synchronous>, transform_indices = @transform_2, window_bounds = array<i64: 36, 16>}, {pipeline_mode = #tpu.pipeline_mode<synchronous>, transform_indices = @transform_3, window_bounds = array<i64: 144, 16>}, {pipeline_mode = #tpu.pipeline_mode<synchronous>, transform_indices = @transform_4, window_bounds = array<i64: 32, 32>}, {pipeline_mode = #tpu.pipeline_mode<synchronous>, transform_indices = @transform_5, window_bounds = array<i64: 4, 16>}, {pipeline_mode = #tpu.pipeline_mode<synchronous>, transform_indices = @transform_6, window_bounds = array<i64: 9, 16>}, {pipeline_mode = #tpu.pipeline_mode<synchronous>, transform_indices = @transform_7, window_bounds = array<i64: 16, 16>}, {transform_indices = @transform_8, window_bounds = array<i64: 1, 256, 16>}]} {
    %c0 = arith.constant 0 : index
    %c0_0 = arith.constant 0 : index
    %0 = vector.load %arg8[%c0, %c0_0] : memref<16x16xf32, #tpu.memory_space<vmem>>, vector<16x16xf32>
    %c0_1 = arith.constant 0 : index
    %c0_2 = arith.constant 0 : index
    %1 = vector.load %arg7[%c0_1, %c0_2] : memref<9x16xf32, #tpu.memory_space<vmem>>, vector<9x16xf32>
    %2 = vector.extract_strided_slice %1 {offsets = [0, 0], sizes = [1, 16], strides = [1, 1]} : vector<9x16xf32> to vector<1x16xf32>
    %3 = vector.extract_strided_slice %1 {offsets = [1, 0], sizes = [1, 16], strides = [1, 1]} : vector<9x16xf32> to vector<1x16xf32>
    %4 = vector.extract_strided_slice %1 {offsets = [2, 0], sizes = [1, 16], strides = [1, 1]} : vector<9x16xf32> to vector<1x16xf32>
    %5 = vector.extract_strided_slice %1 {offsets = [3, 0], sizes = [1, 16], strides = [1, 1]} : vector<9x16xf32> to vector<1x16xf32>
    %6 = vector.extract_strided_slice %1 {offsets = [4, 0], sizes = [1, 16], strides = [1, 1]} : vector<9x16xf32> to vector<1x16xf32>
    %7 = vector.extract_strided_slice %1 {offsets = [5, 0], sizes = [1, 16], strides = [1, 1]} : vector<9x16xf32> to vector<1x16xf32>
    %8 = vector.extract_strided_slice %1 {offsets = [6, 0], sizes = [1, 16], strides = [1, 1]} : vector<9x16xf32> to vector<1x16xf32>
    %9 = vector.extract_strided_slice %1 {offsets = [7, 0], sizes = [1, 16], strides = [1, 1]} : vector<9x16xf32> to vector<1x16xf32>
    %10 = vector.extract_strided_slice %1 {offsets = [8, 0], sizes = [1, 16], strides = [1, 1]} : vector<9x16xf32> to vector<1x16xf32>
    %11 = arith.index_cast %arg0 : i32 to index
    %c0_3 = arith.constant 0 : index
    %12 = vector.load %arg2[%11, %c0_3] : memref<2x32xf32, #tpu.memory_space<vmem>>, vector<1x32xf32>
    %13 = arith.negf %12 : vector<1x32xf32>
    %14 = math.exp %13 : vector<1x32xf32>
    %cst = arith.constant 1.000000e+00 : f32
    %15 = vector.broadcast %cst : f32 to vector<1x32xf32>
    %16 = arith.addf %15, %14 : vector<1x32xf32>
    %17 = arith.divf %15, %16 : vector<1x32xf32>
    %18 = arith.mulf %12, %17 : vector<1x32xf32>
    %19 = arith.truncf %18 : vector<1x32xf32> to vector<1x32xbf16>
    %c0_4 = arith.constant 0 : index
    %c0_5 = arith.constant 0 : index
    %20 = vector.load %arg5[%c0_4, %c0_5] : memref<32x32xbf16, #tpu.memory_space<vmem>>, vector<32x32xbf16>
    %cst_6 = arith.constant dense<0.000000e+00> : vector<1x32xf32>
    %21 = tpu.matmul %19, %20, %cst_6 {dimension_numbers = #tpu.dot_dimension_numbers<[1], [0], [0], [1], [0, 0, 1, 1], [], []>} : vector<1x32xbf16>, vector<32x32xbf16>, vector<1x32xf32> -> vector<1x32xf32>
    %22 = vector.extract_strided_slice %21 {offsets = [0, 0], sizes = [1, 16], strides = [1, 1]} : vector<1x32xf32> to vector<1x16xf32>
    %23 = arith.addf %22, %9 : vector<1x16xf32>
    %24 = vector.extract_strided_slice %21 {offsets = [0, 16], sizes = [1, 16], strides = [1, 1]} : vector<1x32xf32> to vector<1x16xf32>
    %25 = arith.addf %24, %10 : vector<1x16xf32>
    %c0_7 = arith.constant 0 : index
    %c0_8 = arith.constant 0 : index
    %c0_9 = arith.constant 0 : index
    %c0_10 = arith.constant 0 : index
    %26 = vector.load %arg1[%c0_7, %c0_8, %c0_9, %c0_10] : memref<1x16x16x4xf32, #tpu.memory_space<vmem>>, vector<1x16x16x4xf32>
    %27 = vector.shape_cast %26 : vector<1x16x16x4xf32> to vector<16x16x4xf32>
    %c1 = arith.constant 1 : index
    %c8 = arith.constant 8 : index
    %c0_11 = arith.constant 0 : index
    %28 = vector.load %arg10[%c1, %c8, %c0_11] : memref<18x32x4xf32, #tpu.memory_space<vmem>>, vector<16x16x4xf32>
    tpu.vector_store %arg10[%c1, %c8, %c0_11], %27 {strides = array<i32>} : memref<18x32x4xf32, #tpu.memory_space<vmem>>, vector<16x16x4xf32>,
    %cst_12 = arith.constant 0.000000e+00 : f32
    %29 = vector.broadcast %cst_12 : f32 to vector<1x32x4xf32>
    %c0_13 = arith.constant 0 : index
    %c0_14 = arith.constant 0 : index
    %c0_15 = arith.constant 0 : index
    %30 = vector.load %arg10[%c0_13, %c0_14, %c0_15] : memref<18x32x4xf32, #tpu.memory_space<vmem>>, vector<1x32x4xf32>
    tpu.vector_store %arg10[%c0_13, %c0_14, %c0_15], %29 {strides = array<i32>} : memref<18x32x4xf32, #tpu.memory_space<vmem>>, vector<1x32x4xf32>,
    %cst_16 = arith.constant 0.000000e+00 : f32
    %31 = vector.broadcast %cst_16 : f32 to vector<1x32x4xf32>
    %c17 = arith.constant 17 : index
    %c0_17 = arith.constant 0 : index
    %c0_18 = arith.constant 0 : index
    %32 = vector.load %arg10[%c17, %c0_17, %c0_18] : memref<18x32x4xf32, #tpu.memory_space<vmem>>, vector<1x32x4xf32>
    tpu.vector_store %arg10[%c17, %c0_17, %c0_18], %31 {strides = array<i32>} : memref<18x32x4xf32, #tpu.memory_space<vmem>>, vector<1x32x4xf32>,
    %cst_19 = arith.constant 0.000000e+00 : f32
    %33 = vector.broadcast %cst_19 : f32 to vector<16x1x4xf32>
    %c1_20 = arith.constant 1 : index
    %c7 = arith.constant 7 : index
    %c0_21 = arith.constant 0 : index
    %34 = vector.load %arg10[%c1_20, %c7, %c0_21] : memref<18x32x4xf32, #tpu.memory_space<vmem>>, vector<16x1x4xf32>
    tpu.vector_store %arg10[%c1_20, %c7, %c0_21], %33 {strides = array<i32>} : memref<18x32x4xf32, #tpu.memory_space<vmem>>, vector<16x1x4xf32>,
    %cst_22 = arith.constant 0.000000e+00 : f32
    %35 = vector.broadcast %cst_22 : f32 to vector<16x1x4xf32>
    %c1_23 = arith.constant 1 : index
    %c24 = arith.constant 24 : index
    %c0_24 = arith.constant 0 : index
    %36 = vector.load %arg10[%c1_23, %c24, %c0_24] : memref<18x32x4xf32, #tpu.memory_space<vmem>>, vector<16x1x4xf32>
    tpu.vector_store %arg10[%c1_23, %c24, %c0_24], %35 {strides = array<i32>} : memref<18x32x4xf32, #tpu.memory_space<vmem>>, vector<16x1x4xf32>,
    %c0_25 = arith.constant 0 : index
    %c7_26 = arith.constant 7 : index
    %c0_27 = arith.constant 0 : index
    %37 = vector.load %arg10[%c0_25, %c7_26, %c0_27] : memref<18x32x4xf32, #tpu.memory_space<vmem>>, vector<16x16x4xf32>
    %38 = vector.shape_cast %37 : vector<16x16x4xf32> to vector<256x4xf32>
    %39 = arith.truncf %38 : vector<256x4xf32> to vector<256x4xbf16>
    %c0_28 = arith.constant 0 : index
    %c0_29 = arith.constant 0 : index
    %40 = vector.load %arg12[%c0_28, %c0_29] : memref<256x36xbf16, #tpu.memory_space<vmem>>, vector<256x4xbf16>
    tpu.vector_store %arg12[%c0_28, %c0_29], %39 {strides = array<i32>} : memref<256x36xbf16, #tpu.memory_space<vmem>>, vector<256x4xbf16>,
    %c0_30 = arith.constant 0 : index
    %c8_31 = arith.constant 8 : index
    %c0_32 = arith.constant 0 : index
    %41 = vector.load %arg10[%c0_30, %c8_31, %c0_32] : memref<18x32x4xf32, #tpu.memory_space<vmem>>, vector<16x16x4xf32>
    %42 = vector.shape_cast %41 : vector<16x16x4xf32> to vector<256x4xf32>
    %43 = arith.truncf %42 : vector<256x4xf32> to vector<256x4xbf16>
    %c0_33 = arith.constant 0 : index
    %c4 = arith.constant 4 : index
    %44 = vector.load %arg12[%c0_33, %c4] : memref<256x36xbf16, #tpu.memory_space<vmem>>, vector<256x4xbf16>
    tpu.vector_store %arg12[%c0_33, %c4], %43 {strides = array<i32>} : memref<256x36xbf16, #tpu.memory_space<vmem>>, vector<256x4xbf16>,
    %c0_34 = arith.constant 0 : index
    %c9 = arith.constant 9 : index
    %c0_35 = arith.constant 0 : index
    %45 = vector.load %arg10[%c0_34, %c9, %c0_35] : memref<18x32x4xf32, #tpu.memory_space<vmem>>, vector<16x16x4xf32>
    %46 = vector.shape_cast %45 : vector<16x16x4xf32> to vector<256x4xf32>
    %47 = arith.truncf %46 : vector<256x4xf32> to vector<256x4xbf16>
    %c0_36 = arith.constant 0 : index
    %c8_37 = arith.constant 8 : index
    %48 = vector.load %arg12[%c0_36, %c8_37] : memref<256x36xbf16, #tpu.memory_space<vmem>>, vector<256x4xbf16>
    tpu.vector_store %arg12[%c0_36, %c8_37], %47 {strides = array<i32>} : memref<256x36xbf16, #tpu.memory_space<vmem>>, vector<256x4xbf16>,
    %c1_38 = arith.constant 1 : index
    %c7_39 = arith.constant 7 : index
    %c0_40 = arith.constant 0 : index
    %49 = vector.load %arg10[%c1_38, %c7_39, %c0_40] : memref<18x32x4xf32, #tpu.memory_space<vmem>>, vector<16x16x4xf32>
    %50 = vector.shape_cast %49 : vector<16x16x4xf32> to vector<256x4xf32>
    %51 = arith.truncf %50 : vector<256x4xf32> to vector<256x4xbf16>
    %c0_41 = arith.constant 0 : index
    %c12 = arith.constant 12 : index
    %52 = vector.load %arg12[%c0_41, %c12] : memref<256x36xbf16, #tpu.memory_space<vmem>>, vector<256x4xbf16>
    tpu.vector_store %arg12[%c0_41, %c12], %51 {strides = array<i32>} : memref<256x36xbf16, #tpu.memory_space<vmem>>, vector<256x4xbf16>,
    %c1_42 = arith.constant 1 : index
    %c8_43 = arith.constant 8 : index
    %c0_44 = arith.constant 0 : index
    %53 = vector.load %arg10[%c1_42, %c8_43, %c0_44] : memref<18x32x4xf32, #tpu.memory_space<vmem>>, vector<16x16x4xf32>
    %54 = vector.shape_cast %53 : vector<16x16x4xf32> to vector<256x4xf32>
    %55 = arith.truncf %54 : vector<256x4xf32> to vector<256x4xbf16>
    %c0_45 = arith.constant 0 : index
    %c16 = arith.constant 16 : index
    %56 = vector.load %arg12[%c0_45, %c16] : memref<256x36xbf16, #tpu.memory_space<vmem>>, vector<256x4xbf16>
    tpu.vector_store %arg12[%c0_45, %c16], %55 {strides = array<i32>} : memref<256x36xbf16, #tpu.memory_space<vmem>>, vector<256x4xbf16>,
    %c1_46 = arith.constant 1 : index
    %c9_47 = arith.constant 9 : index
    %c0_48 = arith.constant 0 : index
    %57 = vector.load %arg10[%c1_46, %c9_47, %c0_48] : memref<18x32x4xf32, #tpu.memory_space<vmem>>, vector<16x16x4xf32>
    %58 = vector.shape_cast %57 : vector<16x16x4xf32> to vector<256x4xf32>
    %59 = arith.truncf %58 : vector<256x4xf32> to vector<256x4xbf16>
    %c0_49 = arith.constant 0 : index
    %c20 = arith.constant 20 : index
    %60 = vector.load %arg12[%c0_49, %c20] : memref<256x36xbf16, #tpu.memory_space<vmem>>, vector<256x4xbf16>
    tpu.vector_store %arg12[%c0_49, %c20], %59 {strides = array<i32>} : memref<256x36xbf16, #tpu.memory_space<vmem>>, vector<256x4xbf16>,
    %c2 = arith.constant 2 : index
    %c7_50 = arith.constant 7 : index
    %c0_51 = arith.constant 0 : index
    %61 = vector.load %arg10[%c2, %c7_50, %c0_51] : memref<18x32x4xf32, #tpu.memory_space<vmem>>, vector<16x16x4xf32>
    %62 = vector.shape_cast %61 : vector<16x16x4xf32> to vector<256x4xf32>
    %63 = arith.truncf %62 : vector<256x4xf32> to vector<256x4xbf16>
    %c0_52 = arith.constant 0 : index
    %c24_53 = arith.constant 24 : index
    %64 = vector.load %arg12[%c0_52, %c24_53] : memref<256x36xbf16, #tpu.memory_space<vmem>>, vector<256x4xbf16>
    tpu.vector_store %arg12[%c0_52, %c24_53], %63 {strides = array<i32>} : memref<256x36xbf16, #tpu.memory_space<vmem>>, vector<256x4xbf16>,
    %c2_54 = arith.constant 2 : index
    %c8_55 = arith.constant 8 : index
    %c0_56 = arith.constant 0 : index
    %65 = vector.load %arg10[%c2_54, %c8_55, %c0_56] : memref<18x32x4xf32, #tpu.memory_space<vmem>>, vector<16x16x4xf32>
    %66 = vector.shape_cast %65 : vector<16x16x4xf32> to vector<256x4xf32>
    %67 = arith.truncf %66 : vector<256x4xf32> to vector<256x4xbf16>
    %c0_57 = arith.constant 0 : index
    %c28 = arith.constant 28 : index
    %68 = vector.load %arg12[%c0_57, %c28] : memref<256x36xbf16, #tpu.memory_space<vmem>>, vector<256x4xbf16>
    tpu.vector_store %arg12[%c0_57, %c28], %67 {strides = array<i32>} : memref<256x36xbf16, #tpu.memory_space<vmem>>, vector<256x4xbf16>,
    %c2_58 = arith.constant 2 : index
    %c9_59 = arith.constant 9 : index
    %c0_60 = arith.constant 0 : index
    %69 = vector.load %arg10[%c2_58, %c9_59, %c0_60] : memref<18x32x4xf32, #tpu.memory_space<vmem>>, vector<16x16x4xf32>
    %70 = vector.shape_cast %69 : vector<16x16x4xf32> to vector<256x4xf32>
    %71 = arith.truncf %70 : vector<256x4xf32> to vector<256x4xbf16>
    %c0_61 = arith.constant 0 : index
    %c32 = arith.constant 32 : index
    %72 = vector.load %arg12[%c0_61, %c32] : memref<256x36xbf16, #tpu.memory_space<vmem>>, vector<256x4xbf16>
    tpu.vector_store %arg12[%c0_61, %c32], %71 {strides = array<i32>} : memref<256x36xbf16, #tpu.memory_space<vmem>>, vector<256x4xbf16>,
    %c0_62 = arith.constant 0 : index
    %c0_63 = arith.constant 0 : index
    %73 = vector.load %arg12[%c0_62, %c0_63] : memref<256x36xbf16, #tpu.memory_space<vmem>>, vector<256x36xbf16>
    %c0_64 = arith.constant 0 : index
    %c0_65 = arith.constant 0 : index
    %74 = vector.load %arg3[%c0_64, %c0_65] : memref<36x16xbf16, #tpu.memory_space<vmem>>, vector<36x16xbf16>
    %cst_66 = arith.constant dense<0.000000e+00> : vector<256x16xf32>
    %75 = tpu.matmul %73, %74, %cst_66 {dimension_numbers = #tpu.dot_dimension_numbers<[1], [0], [0], [1], [0, 0, 1, 1], [], []>} : vector<256x36xbf16>, vector<36x16xbf16>, vector<256x16xf32> -> vector<256x16xf32>
    %76 = vector.broadcast %2 : vector<1x16xf32> to vector<256x16xf32>
    %77 = arith.addf %75, %76 : vector<256x16xf32>
    %cst_67 = arith.constant dense<0.000000e+00> : vector<16xf32>
    %78 = vector.multi_reduction <add>, %77, %cst_67 [0] : vector<256x16xf32> to vector<16xf32>
    %79 = vector.shape_cast %78 : vector<16xf32> to vector<1x16xf32>
    %cst_68 = arith.constant dense<0.000000e+00> : vector<1x16xf32>
    %80 = tpu.matmul %79, %0, %cst_68 {dimension_numbers = #tpu.dot_dimension_numbers<[1], [0], [0], [1], [0, 0, 1, 1], [], []>, precision = #tpu.contract_precision<fp32>} : vector<1x16xf32>, vector<16x16xf32>, vector<1x16xf32> -> vector<1x16xf32>
    %cst_69 = arith.constant 0.001953125 : f32
    %81 = vector.broadcast %cst_69 : f32 to vector<1x16xf32>
    %82 = arith.mulf %80, %81 : vector<1x16xf32>
    %83 = vector.broadcast %82 : vector<1x16xf32> to vector<256x16xf32>
    %84 = arith.subf %77, %83 : vector<256x16xf32>
    %85 = arith.mulf %84, %84 : vector<256x16xf32>
    %cst_70 = arith.constant dense<0.000000e+00> : vector<16xf32>
    %86 = vector.multi_reduction <add>, %85, %cst_70 [0] : vector<256x16xf32> to vector<16xf32>
    %87 = vector.shape_cast %86 : vector<16xf32> to vector<1x16xf32>
    %cst_71 = arith.constant dense<0.000000e+00> : vector<1x16xf32>
    %88 = tpu.matmul %87, %0, %cst_71 {dimension_numbers = #tpu.dot_dimension_numbers<[1], [0], [0], [1], [0, 0, 1, 1], [], []>, precision = #tpu.contract_precision<fp32>} : vector<1x16xf32>, vector<16x16xf32>, vector<1x16xf32> -> vector<1x16xf32>
    %cst_72 = arith.constant 0.001953125 : f32
    %89 = vector.broadcast %cst_72 : f32 to vector<1x16xf32>
    %90 = arith.mulf %88, %89 : vector<1x16xf32>
    %cst_73 = arith.constant 9.99999974E-6 : f32
    %91 = vector.broadcast %cst_73 : f32 to vector<1x16xf32>
    %92 = arith.addf %90, %91 : vector<1x16xf32>
    %93 = math.rsqrt %92 : vector<1x16xf32>
    %94 = vector.broadcast %93 : vector<1x16xf32> to vector<256x16xf32>
    %95 = arith.mulf %84, %94 : vector<256x16xf32>
    %96 = vector.broadcast %3 : vector<1x16xf32> to vector<256x16xf32>
    %97 = arith.mulf %95, %96 : vector<256x16xf32>
    %98 = vector.broadcast %4 : vector<1x16xf32> to vector<256x16xf32>
    %99 = arith.addf %97, %98 : vector<256x16xf32>
    %cst_74 = arith.constant 1.000000e+00 : f32
    %100 = vector.broadcast %cst_74 : f32 to vector<1x16xf32>
    %101 = arith.addf %100, %23 : vector<1x16xf32>
    %102 = vector.broadcast %101 : vector<1x16xf32> to vector<256x16xf32>
    %103 = arith.mulf %99, %102 : vector<256x16xf32>
    %104 = vector.broadcast %25 : vector<1x16xf32> to vector<256x16xf32>
    %105 = arith.addf %103, %104 : vector<256x16xf32>
    %106 = arith.negf %105 : vector<256x16xf32>
    %107 = math.exp %106 : vector<256x16xf32>
    %cst_75 = arith.constant 1.000000e+00 : f32
    %108 = vector.broadcast %cst_75 : f32 to vector<256x16xf32>
    %109 = arith.addf %108, %107 : vector<256x16xf32>
    %110 = arith.divf %108, %109 : vector<256x16xf32>
    %111 = arith.mulf %105, %110 : vector<256x16xf32>
    %112 = vector.shape_cast %111 : vector<256x16xf32> to vector<16x16x16xf32>
    %c1_76 = arith.constant 1 : index
    %c8_77 = arith.constant 8 : index
    %c0_78 = arith.constant 0 : index
    %113 = vector.load %arg11[%c1_76, %c8_77, %c0_78] : memref<18x32x16xf32, #tpu.memory_space<vmem>>, vector<16x16x16xf32>
    tpu.vector_store %arg11[%c1_76, %c8_77, %c0_78], %112 {strides = array<i32>} : memref<18x32x16xf32, #tpu.memory_space<vmem>>, vector<16x16x16xf32>,
    %cst_79 = arith.constant 0.000000e+00 : f32
    %114 = vector.broadcast %cst_79 : f32 to vector<1x32x16xf32>
    %c0_80 = arith.constant 0 : index
    %c0_81 = arith.constant 0 : index
    %c0_82 = arith.constant 0 : index
    %115 = vector.load %arg11[%c0_80, %c0_81, %c0_82] : memref<18x32x16xf32, #tpu.memory_space<vmem>>, vector<1x32x16xf32>
    tpu.vector_store %arg11[%c0_80, %c0_81, %c0_82], %114 {strides = array<i32>} : memref<18x32x16xf32, #tpu.memory_space<vmem>>, vector<1x32x16xf32>,
    %cst_83 = arith.constant 0.000000e+00 : f32
    %116 = vector.broadcast %cst_83 : f32 to vector<1x32x16xf32>
    %c17_84 = arith.constant 17 : index
    %c0_85 = arith.constant 0 : index
    %c0_86 = arith.constant 0 : index
    %117 = vector.load %arg11[%c17_84, %c0_85, %c0_86] : memref<18x32x16xf32, #tpu.memory_space<vmem>>, vector<1x32x16xf32>
    tpu.vector_store %arg11[%c17_84, %c0_85, %c0_86], %116 {strides = array<i32>} : memref<18x32x16xf32, #tpu.memory_space<vmem>>, vector<1x32x16xf32>,
    %cst_87 = arith.constant 0.000000e+00 : f32
    %118 = vector.broadcast %cst_87 : f32 to vector<16x1x16xf32>
    %c1_88 = arith.constant 1 : index
    %c7_89 = arith.constant 7 : index
    %c0_90 = arith.constant 0 : index
    %119 = vector.load %arg11[%c1_88, %c7_89, %c0_90] : memref<18x32x16xf32, #tpu.memory_space<vmem>>, vector<16x1x16xf32>
    tpu.vector_store %arg11[%c1_88, %c7_89, %c0_90], %118 {strides = array<i32>} : memref<18x32x16xf32, #tpu.memory_space<vmem>>, vector<16x1x16xf32>,
    %cst_91 = arith.constant 0.000000e+00 : f32
    %120 = vector.broadcast %cst_91 : f32 to vector<16x1x16xf32>
    %c1_92 = arith.constant 1 : index
    %c24_93 = arith.constant 24 : index
    %c0_94 = arith.constant 0 : index
    %121 = vector.load %arg11[%c1_92, %c24_93, %c0_94] : memref<18x32x16xf32, #tpu.memory_space<vmem>>, vector<16x1x16xf32>
    tpu.vector_store %arg11[%c1_92, %c24_93, %c0_94], %120 {strides = array<i32>} : memref<18x32x16xf32, #tpu.memory_space<vmem>>, vector<16x1x16xf32>,
    %c0_95 = arith.constant 0 : index
    %c7_96 = arith.constant 7 : index
    %c0_97 = arith.constant 0 : index
    %122 = vector.load %arg11[%c0_95, %c7_96, %c0_97] : memref<18x32x16xf32, #tpu.memory_space<vmem>>, vector<16x16x16xf32>
    %123 = vector.shape_cast %122 : vector<16x16x16xf32> to vector<256x16xf32>
    %124 = arith.truncf %123 : vector<256x16xf32> to vector<256x16xbf16>
    %c0_98 = arith.constant 0 : index
    %c0_99 = arith.constant 0 : index
    %125 = vector.load %arg13[%c0_98, %c0_99] : memref<256x144xbf16, #tpu.memory_space<vmem>>, vector<256x16xbf16>
    tpu.vector_store %arg13[%c0_98, %c0_99], %124 {strides = array<i32>} : memref<256x144xbf16, #tpu.memory_space<vmem>>, vector<256x16xbf16>,
    %c0_100 = arith.constant 0 : index
    %c8_101 = arith.constant 8 : index
    %c0_102 = arith.constant 0 : index
    %126 = vector.load %arg11[%c0_100, %c8_101, %c0_102] : memref<18x32x16xf32, #tpu.memory_space<vmem>>, vector<16x16x16xf32>
    %127 = vector.shape_cast %126 : vector<16x16x16xf32> to vector<256x16xf32>
    %128 = arith.truncf %127 : vector<256x16xf32> to vector<256x16xbf16>
    %c0_103 = arith.constant 0 : index
    %c16_104 = arith.constant 16 : index
    %129 = vector.load %arg13[%c0_103, %c16_104] : memref<256x144xbf16, #tpu.memory_space<vmem>>, vector<256x16xbf16>
    tpu.vector_store %arg13[%c0_103, %c16_104], %128 {strides = array<i32>} : memref<256x144xbf16, #tpu.memory_space<vmem>>, vector<256x16xbf16>,
    %c0_105 = arith.constant 0 : index
    %c9_106 = arith.constant 9 : index
    %c0_107 = arith.constant 0 : index
    %130 = vector.load %arg11[%c0_105, %c9_106, %c0_107] : memref<18x32x16xf32, #tpu.memory_space<vmem>>, vector<16x16x16xf32>
    %131 = vector.shape_cast %130 : vector<16x16x16xf32> to vector<256x16xf32>
    %132 = arith.truncf %131 : vector<256x16xf32> to vector<256x16xbf16>
    %c0_108 = arith.constant 0 : index
    %c32_109 = arith.constant 32 : index
    %133 = vector.load %arg13[%c0_108, %c32_109] : memref<256x144xbf16, #tpu.memory_space<vmem>>, vector<256x16xbf16>
    tpu.vector_store %arg13[%c0_108, %c32_109], %132 {strides = array<i32>} : memref<256x144xbf16, #tpu.memory_space<vmem>>, vector<256x16xbf16>,
    %c1_110 = arith.constant 1 : index
    %c7_111 = arith.constant 7 : index
    %c0_112 = arith.constant 0 : index
    %134 = vector.load %arg11[%c1_110, %c7_111, %c0_112] : memref<18x32x16xf32, #tpu.memory_space<vmem>>, vector<16x16x16xf32>
    %135 = vector.shape_cast %134 : vector<16x16x16xf32> to vector<256x16xf32>
    %136 = arith.truncf %135 : vector<256x16xf32> to vector<256x16xbf16>
    %c0_113 = arith.constant 0 : index
    %c48 = arith.constant 48 : index
    %137 = vector.load %arg13[%c0_113, %c48] : memref<256x144xbf16, #tpu.memory_space<vmem>>, vector<256x16xbf16>
    tpu.vector_store %arg13[%c0_113, %c48], %136 {strides = array<i32>} : memref<256x144xbf16, #tpu.memory_space<vmem>>, vector<256x16xbf16>,
    %c1_114 = arith.constant 1 : index
    %c8_115 = arith.constant 8 : index
    %c0_116 = arith.constant 0 : index
    %138 = vector.load %arg11[%c1_114, %c8_115, %c0_116] : memref<18x32x16xf32, #tpu.memory_space<vmem>>, vector<16x16x16xf32>
    %139 = vector.shape_cast %138 : vector<16x16x16xf32> to vector<256x16xf32>
    %140 = arith.truncf %139 : vector<256x16xf32> to vector<256x16xbf16>
    %c0_117 = arith.constant 0 : index
    %c64 = arith.constant 64 : index
    %141 = vector.load %arg13[%c0_117, %c64] : memref<256x144xbf16, #tpu.memory_space<vmem>>, vector<256x16xbf16>
    tpu.vector_store %arg13[%c0_117, %c64], %140 {strides = array<i32>} : memref<256x144xbf16, #tpu.memory_space<vmem>>, vector<256x16xbf16>,
    %c1_118 = arith.constant 1 : index
    %c9_119 = arith.constant 9 : index
    %c0_120 = arith.constant 0 : index
    %142 = vector.load %arg11[%c1_118, %c9_119, %c0_120] : memref<18x32x16xf32, #tpu.memory_space<vmem>>, vector<16x16x16xf32>
    %143 = vector.shape_cast %142 : vector<16x16x16xf32> to vector<256x16xf32>
    %144 = arith.truncf %143 : vector<256x16xf32> to vector<256x16xbf16>
    %c0_121 = arith.constant 0 : index
    %c80 = arith.constant 80 : index
    %145 = vector.load %arg13[%c0_121, %c80] : memref<256x144xbf16, #tpu.memory_space<vmem>>, vector<256x16xbf16>
    tpu.vector_store %arg13[%c0_121, %c80], %144 {strides = array<i32>} : memref<256x144xbf16, #tpu.memory_space<vmem>>, vector<256x16xbf16>,
    %c2_122 = arith.constant 2 : index
    %c7_123 = arith.constant 7 : index
    %c0_124 = arith.constant 0 : index
    %146 = vector.load %arg11[%c2_122, %c7_123, %c0_124] : memref<18x32x16xf32, #tpu.memory_space<vmem>>, vector<16x16x16xf32>
    %147 = vector.shape_cast %146 : vector<16x16x16xf32> to vector<256x16xf32>
    %148 = arith.truncf %147 : vector<256x16xf32> to vector<256x16xbf16>
    %c0_125 = arith.constant 0 : index
    %c96 = arith.constant 96 : index
    %149 = vector.load %arg13[%c0_125, %c96] : memref<256x144xbf16, #tpu.memory_space<vmem>>, vector<256x16xbf16>
    tpu.vector_store %arg13[%c0_125, %c96], %148 {strides = array<i32>} : memref<256x144xbf16, #tpu.memory_space<vmem>>, vector<256x16xbf16>,
    %c2_126 = arith.constant 2 : index
    %c8_127 = arith.constant 8 : index
    %c0_128 = arith.constant 0 : index
    %150 = vector.load %arg11[%c2_126, %c8_127, %c0_128] : memref<18x32x16xf32, #tpu.memory_space<vmem>>, vector<16x16x16xf32>
    %151 = vector.shape_cast %150 : vector<16x16x16xf32> to vector<256x16xf32>
    %152 = arith.truncf %151 : vector<256x16xf32> to vector<256x16xbf16>
    %c0_129 = arith.constant 0 : index
    %c112 = arith.constant 112 : index
    %153 = vector.load %arg13[%c0_129, %c112] : memref<256x144xbf16, #tpu.memory_space<vmem>>, vector<256x16xbf16>
    tpu.vector_store %arg13[%c0_129, %c112], %152 {strides = array<i32>} : memref<256x144xbf16, #tpu.memory_space<vmem>>, vector<256x16xbf16>,
    %c2_130 = arith.constant 2 : index
    %c9_131 = arith.constant 9 : index
    %c0_132 = arith.constant 0 : index
    %154 = vector.load %arg11[%c2_130, %c9_131, %c0_132] : memref<18x32x16xf32, #tpu.memory_space<vmem>>, vector<16x16x16xf32>
    %155 = vector.shape_cast %154 : vector<16x16x16xf32> to vector<256x16xf32>
    %156 = arith.truncf %155 : vector<256x16xf32> to vector<256x16xbf16>
    %c0_133 = arith.constant 0 : index
    %c128 = arith.constant 128 : index
    %157 = vector.load %arg13[%c0_133, %c128] : memref<256x144xbf16, #tpu.memory_space<vmem>>, vector<256x16xbf16>
    tpu.vector_store %arg13[%c0_133, %c128], %156 {strides = array<i32>} : memref<256x144xbf16, #tpu.memory_space<vmem>>, vector<256x16xbf16>,
    %c0_134 = arith.constant 0 : index
    %c0_135 = arith.constant 0 : index
    %158 = vector.load %arg13[%c0_134, %c0_135] : memref<256x144xbf16, #tpu.memory_space<vmem>>, vector<256x144xbf16>
    %c0_136 = arith.constant 0 : index
    %c0_137 = arith.constant 0 : index
    %159 = vector.load %arg4[%c0_136, %c0_137] : memref<144x16xbf16, #tpu.memory_space<vmem>>, vector<144x16xbf16>
    %cst_138 = arith.constant dense<0.000000e+00> : vector<256x16xf32>
    %160 = tpu.matmul %158, %159, %cst_138 {dimension_numbers = #tpu.dot_dimension_numbers<[1], [0], [0], [1], [0, 0, 1, 1], [], []>} : vector<256x144xbf16>, vector<144x16xbf16>, vector<256x16xf32> -> vector<256x16xf32>
    %161 = vector.broadcast %5 : vector<1x16xf32> to vector<256x16xf32>
    %162 = arith.addf %160, %161 : vector<256x16xf32>
    %cst_139 = arith.constant dense<0.000000e+00> : vector<16xf32>
    %163 = vector.multi_reduction <add>, %162, %cst_139 [0] : vector<256x16xf32> to vector<16xf32>
    %164 = vector.shape_cast %163 : vector<16xf32> to vector<1x16xf32>
    %cst_140 = arith.constant dense<0.000000e+00> : vector<1x16xf32>
    %165 = tpu.matmul %164, %0, %cst_140 {dimension_numbers = #tpu.dot_dimension_numbers<[1], [0], [0], [1], [0, 0, 1, 1], [], []>, precision = #tpu.contract_precision<fp32>} : vector<1x16xf32>, vector<16x16xf32>, vector<1x16xf32> -> vector<1x16xf32>
    %cst_141 = arith.constant 0.001953125 : f32
    %166 = vector.broadcast %cst_141 : f32 to vector<1x16xf32>
    %167 = arith.mulf %165, %166 : vector<1x16xf32>
    %168 = vector.broadcast %167 : vector<1x16xf32> to vector<256x16xf32>
    %169 = arith.subf %162, %168 : vector<256x16xf32>
    %170 = arith.mulf %169, %169 : vector<256x16xf32>
    %cst_142 = arith.constant dense<0.000000e+00> : vector<16xf32>
    %171 = vector.multi_reduction <add>, %170, %cst_142 [0] : vector<256x16xf32> to vector<16xf32>
    %172 = vector.shape_cast %171 : vector<16xf32> to vector<1x16xf32>
    %cst_143 = arith.constant dense<0.000000e+00> : vector<1x16xf32>
    %173 = tpu.matmul %172, %0, %cst_143 {dimension_numbers = #tpu.dot_dimension_numbers<[1], [0], [0], [1], [0, 0, 1, 1], [], []>, precision = #tpu.contract_precision<fp32>} : vector<1x16xf32>, vector<16x16xf32>, vector<1x16xf32> -> vector<1x16xf32>
    %cst_144 = arith.constant 0.001953125 : f32
    %174 = vector.broadcast %cst_144 : f32 to vector<1x16xf32>
    %175 = arith.mulf %173, %174 : vector<1x16xf32>
    %cst_145 = arith.constant 9.99999974E-6 : f32
    %176 = vector.broadcast %cst_145 : f32 to vector<1x16xf32>
    %177 = arith.addf %175, %176 : vector<1x16xf32>
    %178 = math.rsqrt %177 : vector<1x16xf32>
    %179 = vector.broadcast %178 : vector<1x16xf32> to vector<256x16xf32>
    %180 = arith.mulf %169, %179 : vector<256x16xf32>
    %181 = vector.broadcast %6 : vector<1x16xf32> to vector<256x16xf32>
    %182 = arith.mulf %180, %181 : vector<256x16xf32>
    %183 = vector.broadcast %7 : vector<1x16xf32> to vector<256x16xf32>
    %184 = arith.addf %182, %183 : vector<256x16xf32>
    %185 = arith.negf %184 : vector<256x16xf32>
    %186 = math.exp %185 : vector<256x16xf32>
    %cst_146 = arith.constant 1.000000e+00 : f32
    %187 = vector.broadcast %cst_146 : f32 to vector<256x16xf32>
    %188 = arith.addf %187, %186 : vector<256x16xf32>
    %189 = arith.divf %187, %188 : vector<256x16xf32>
    %190 = arith.mulf %184, %189 : vector<256x16xf32>
    %c0_147 = arith.constant 0 : index
    %c16_148 = arith.constant 16 : index
    %191 = vector.load %arg12[%c0_147, %c16_148] : memref<256x36xbf16, #tpu.memory_space<vmem>>, vector<256x4xbf16>
    %c0_149 = arith.constant 0 : index
    %c0_150 = arith.constant 0 : index
    %192 = vector.load %arg6[%c0_149, %c0_150] : memref<4x16xbf16, #tpu.memory_space<vmem>>, vector<4x16xbf16>
    %cst_151 = arith.constant dense<0.000000e+00> : vector<256x16xf32>
    %193 = tpu.matmul %191, %192, %cst_151 {dimension_numbers = #tpu.dot_dimension_numbers<[1], [0], [0], [1], [0, 0, 1, 1], [], []>} : vector<256x4xbf16>, vector<4x16xbf16>, vector<256x16xf32> -> vector<256x16xf32>
    %194 = arith.addf %190, %193 : vector<256x16xf32>
    %195 = vector.broadcast %8 : vector<1x16xf32> to vector<256x16xf32>
    %196 = arith.addf %194, %195 : vector<256x16xf32>
    %c0_152 = arith.constant 0 : index
    %c0_153 = arith.constant 0 : index
    %c0_154 = arith.constant 0 : index
    %197 = vector.load %arg9[%c0_152, %c0_153, %c0_154] : memref<1x256x16xf32, #tpu.memory_space<vmem>>, vector<1x256x16xf32>
    %198 = vector.shape_cast %197 : vector<1x256x16xf32> to vector<256x16xf32>
    %199 = vector.shape_cast %196 : vector<256x16xf32> to vector<1x256x16xf32>
    tpu.vector_store %arg9[%c0_152, %c0_153, %c0_154], %199 {strides = array<i32>} : memref<1x256x16xf32, #tpu.memory_space<vmem>>, vector<1x256x16xf32>,
    return
  }
  func.func @transform_0(%arg0: i32) -> (i32, i32, i32, i32) {
    %c0_i32 = arith.constant 0 : i32
    %c0_i32_0 = arith.constant 0 : i32
    %c0_i32_1 = arith.constant 0 : i32
    %c0_i32_2 = arith.constant 0 : i32
    return %arg0, %c0_i32, %c0_i32_0, %c0_i32_1 : i32, i32, i32, i32
  }
  func.func @transform_1(%arg0: i32) -> (i32, i32) {
    %c0_i32 = arith.constant 0 : i32
    %c0_i32_0 = arith.constant 0 : i32
    %c0_i32_1 = arith.constant 0 : i32
    return %c0_i32, %c0_i32_0 : i32, i32
  }
  func.func @transform_2(%arg0: i32) -> (i32, i32) {
    %c0_i32 = arith.constant 0 : i32
    %c0_i32_0 = arith.constant 0 : i32
    %c0_i32_1 = arith.constant 0 : i32
    return %c0_i32, %c0_i32_0 : i32, i32
  }
  func.func @transform_3(%arg0: i32) -> (i32, i32) {
    %c0_i32 = arith.constant 0 : i32
    %c0_i32_0 = arith.constant 0 : i32
    %c0_i32_1 = arith.constant 0 : i32
    return %c0_i32, %c0_i32_0 : i32, i32
  }
  func.func @transform_4(%arg0: i32) -> (i32, i32) {
    %c0_i32 = arith.constant 0 : i32
    %c0_i32_0 = arith.constant 0 : i32
    %c0_i32_1 = arith.constant 0 : i32
    return %c0_i32, %c0_i32_0 : i32, i32
  }
  func.func @transform_5(%arg0: i32) -> (i32, i32) {
    %c0_i32 = arith.constant 0 : i32
    %c0_i32_0 = arith.constant 0 : i32
    %c0_i32_1 = arith.constant 0 : i32
    return %c0_i32, %c0_i32_0 : i32, i32
  }
  func.func @transform_6(%arg0: i32) -> (i32, i32) {
    %c0_i32 = arith.constant 0 : i32
    %c0_i32_0 = arith.constant 0 : i32
    %c0_i32_1 = arith.constant 0 : i32
    return %c0_i32, %c0_i32_0 : i32, i32
  }
  func.func @transform_7(%arg0: i32) -> (i32, i32) {
    %c0_i32 = arith.constant 0 : i32
    %c0_i32_0 = arith.constant 0 : i32
    %c0_i32_1 = arith.constant 0 : i32
    return %c0_i32, %c0_i32_0 : i32, i32
  }
  func.func @transform_8(%arg0: i32) -> (i32, i32, i32) {
    %c0_i32 = arith.constant 0 : i32
    %c0_i32_0 = arith.constant 0 : i32
    %c0_i32_1 = arith.constant 0 : i32
    return %arg0, %c0_i32, %c0_i32_0 : i32, i32, i32
  }
}

</mosaic_0001>

<llo_original>
// kernel: resnet_block_forward.1
$region0: #{resnet_block_forward.1}
  #allocation0 [shape = 'u32[]', space=smem, size = 0x4, offset = 0x4, fixed_abs, tag = 'smem constant byte address 0x4 - core index']
  #allocation1 [shape = 'u32[144,128]{1,0:T(1,128)}', space=vmem, size = 0x12000, scoped, tag = 'internal scratch']
  #allocation2 [shape = 'f32[18,32,4]{2,1,0:T(8,128)}', space=vmem, size = 0x48000, scoped, tag = 'scratch operand']
  #allocation3 [shape = 'f32[18,32,16]{2,1,0:T(8,128)}', space=vmem, size = 0x48000, scoped, tag = 'scratch operand']
  #allocation4 [shape = 'bf16[256,36]{1,0:T(16,128)(2,1)}', space=vmem, size = 0x10000, scoped, tag = 'scratch operand']
  #allocation5 [shape = 'bf16[256,144]{1,0:T(16,128)(2,1)}', space=vmem, size = 0x20000, scoped, tag = 'scratch operand']
  %s0 = inlined_call_operand.vmem [shape: f32[2,16,16,4], index: 0, kind: input, shape index: {}]
  %s1 = inlined_call_operand.vmem [shape: f32[2,32], index: 1, kind: input, shape index: {}]
  %s2 = inlined_call_operand.vmem [shape: bf16[36,16], index: 2, kind: input, shape index: {}]
  %s3 = inlined_call_operand.vmem [shape: bf16[144,16], index: 3, kind: input, shape index: {}]
  %s4 = inlined_call_operand.vmem [shape: bf16[32,32], index: 4, kind: input, shape index: {}]
  %s5 = inlined_call_operand.vmem [shape: bf16[4,16], index: 5, kind: input, shape index: {}]
  %s6 = inlined_call_operand.vmem [shape: f32[9,16], index: 6, kind: input, shape index: {}]
  %s7 = inlined_call_operand.vmem [shape: f32[16,16], index: 7, kind: input, shape index: {}]
  %s8 = inlined_call_operand.vmem [shape: f32[2,256,16], index: 8, kind: output, shape index: {}]
  %s9 = sld [smem:[#allocation0]]
  $region65: #{resnet_block_forward.1} parent=0
    _
  %s11 = ssub.s32 1, %s9
  %s12 = scalar_select 0, %s11, %s9
  loop: start=0, step=1, limit=4
  $region2: #{resnet_block_forward.1} parent=0 // loop_pre_header
    _
  $region3: #{resnet_block_forward.1} parent=0 // loop_header
    %s14 = sphi 0, %s18
    %p15 = scmp.ge.s32.totalorder %s14, 4
    %s24 = sphi 0, %s26
    %s27 = sphi 0, %s24
    %s28 = sphi 0, %s27
    %s44 = sphi 0, %s28
    %s48 = sphi 0, %s48
    %s50 = sphi 0, %s48
    %s51 = sphi 0, %s50
    %s65 = sphi 0, %s51
    %s69 = sphi 0, %s69
    %s71 = sphi 0, %s69
    %s72 = sphi 0, %s71
    %s86 = sphi 0, %s72
    %s90 = sphi 0, %s90
    %s92 = sphi 0, %s90
    %s93 = sphi 0, %s92
    %s107 = sphi 0, %s93
    %s111 = sphi 0, %s111
    %s113 = sphi 0, %s111
    %s114 = sphi 0, %s113
    %s128 = sphi 0, %s114
    %s132 = sphi 0, %s132
    %s134 = sphi 0, %s132
    %s135 = sphi 0, %s134
    %s149 = sphi 0, %s135
    %s153 = sphi 0, %s153
    %s155 = sphi 0, %s153
    %s156 = sphi 0, %s155
    %s170 = sphi 0, %s156
    %s174 = sphi 0, %s174
    %s176 = sphi 0, %s174
    %s177 = sphi 0, %s176
    %s191 = sphi 0, %s177
    %s197 = sphi 0, %s199
    %s200 = sphi 0, %s197
    %s201 = sphi 0, %s200
    %s217 = sphi 0, %s201
  $region4: #{resnet_block_forward.1} parent=0 // loop_header_branch
    %17 = sbr.rel (%p15) target = $region8
  $region5: #{resnet_block_forward.1} parent=0 // loop_body
    %s19 = ssub.s32 %s14, 1
    %s20 = ssub.s32 %s14, 2
    %s21 = sadd.s32 %s14, 1
    %s22 = ssub.s32 %s14, %s21
    %p23 = scmp.eq.s32.totalorder %s22, 0
    %s25 = sadd.s32 %s24, 1
    %s26 = scalar_select %p23, %s24, %s25
    %p29 = pneg %p23
    %p30 = scmp.eq.s32.totalorder %s14, 1
    %p31 = por %p29, %p30
    %p32 = scmp.ne.s32.totalorder %s24, %s27
    %p33 = scmp.eq.s32.totalorder %s14, 0
    %p34 = por %p32, %p33
    %p35 = scmp.ne.s32.totalorder %s24, %s27
    %p36 = scmp.eq.s32.totalorder %s19, 1
    %p37 = por %p35, %p36
    %p38 = scmp.ne.s32.totalorder %s27, %s28
    %p39 = scmp.eq.s32.totalorder %s19, 0
    %p40 = por %p38, %p39
    %p41 = scmp.ne.s32.totalorder %s27, %s28
    %p42 = scmp.eq.s32.totalorder %s20, 1
    %p43 = por %p41, %p42
    %p45 = scmp.ne.s32.totalorder %s28, %s44
    %p46 = scmp.eq.s32.totalorder %s20, 0
    %p47 = por %p45, %p46
    %s49 = sadd.s32 %s48, 1
    %p52 = scmp.eq.s32.totalorder %s14, 1
    %p53 = scmp.ne.s32.totalorder %s48, %s50
    %p54 = scmp.eq.s32.totalorder %s14, 0
    %p55 = por %p53, %p54
    %p56 = scmp.ne.s32.totalorder %s48, %s50
    %p57 = scmp.eq.s32.totalorder %s19, 1
    %p58 = por %p56, %p57
    %p59 = scmp.ne.s32.totalorder %s50, %s51
    %p60 = scmp.eq.s32.totalorder %s19, 0
    %p61 = por %p59, %p60
    %p62 = scmp.ne.s32.totalorder %s50, %s51
    %p63 = scmp.eq.s32.totalorder %s20, 1
    %p64 = por %p62, %p63
    %p66 = scmp.ne.s32.totalorder %s51, %s65
    %p67 = scmp.eq.s32.totalorder %s20, 0
    %p68 = por %p66, %p67
    %s70 = sadd.s32 %s69, 1
    %p73 = scmp.eq.s32.totalorder %s14, 1
    %p74 = scmp.ne.s32.totalorder %s69, %s71
    %p75 = scmp.eq.s32.totalorder %s14, 0
    %p76 = por %p74, %p75
    %p77 = scmp.ne.s32.totalorder %s69, %s71
    %p78 = scmp.eq.s32.totalorder %s19, 1
    %p79 = por %p77, %p78
    %p80 = scmp.ne.s32.totalorder %s71, %s72
    %p81 = scmp.eq.s32.totalorder %s19, 0
    %p82 = por %p80, %p81
    %p83 = scmp.ne.s32.totalorder %s71, %s72
    %p84 = scmp.eq.s32.totalorder %s20, 1
    %p85 = por %p83, %p84
    %p87 = scmp.ne.s32.totalorder %s72, %s86
    %p88 = scmp.eq.s32.totalorder %s20, 0
    %p89 = por %p87, %p88
    %s91 = sadd.s32 %s90, 1
    %p94 = scmp.eq.s32.totalorder %s14, 1
    %p95 = scmp.ne.s32.totalorder %s90, %s92
    %p96 = scmp.eq.s32.totalorder %s14, 0
    %p97 = por %p95, %p96
    %p98 = scmp.ne.s32.totalorder %s90, %s92
    %p99 = scmp.eq.s32.totalorder %s19, 1
    %p100 = por %p98, %p99
    %p101 = scmp.ne.s32.totalorder %s92, %s93
    %p102 = scmp.eq.s32.totalorder %s19, 0
    %p103 = por %p101, %p102
    %p104 = scmp.ne.s32.totalorder %s92, %s93
    %p105 = scmp.eq.s32.totalorder %s20, 1
    %p106 = por %p104, %p105
    %p108 = scmp.ne.s32.totalorder %s93, %s107
    %p109 = scmp.eq.s32.totalorder %s20, 0
    %p110 = por %p108, %p109
    %s112 = sadd.s32 %s111, 1
    %p115 = scmp.eq.s32.totalorder %s14, 1
    %p116 = scmp.ne.s32.totalorder %s111, %s113
    %p117 = scmp.eq.s32.totalorder %s14, 0
    %p118 = por %p116, %p117
    %p119 = scmp.ne.s32.totalorder %s111, %s113
    %p120 = scmp.eq.s32.totalorder %s19, 1
    %p121 = por %p119, %p120
    %p122 = scmp.ne.s32.totalorder %s113, %s114
    %p123 = scmp.eq.s32.totalorder %s19, 0
    %p124 = por %p122, %p123
    %p125 = scmp.ne.s32.totalorder %s113, %s114
    %p126 = scmp.eq.s32.totalorder %s20, 1
    %p127 = por %p125, %p126
    %p129 = scmp.ne.s32.totalorder %s114, %s128
    %p130 = scmp.eq.s32.totalorder %s20, 0
    %p131 = por %p129, %p130
    %s133 = sadd.s32 %s132, 1
    %p136 = scmp.eq.s32.totalorder %s14, 1
    %p137 = scmp.ne.s32.totalorder %s132, %s134
    %p138 = scmp.eq.s32.totalorder %s14, 0
    %p139 = por %p137, %p138
    %p140 = scmp.ne.s32.totalorder %s132, %s134
    %p141 = scmp.eq.s32.totalorder %s19, 1
    %p142 = por %p140, %p141
    %p143 = scmp.ne.s32.totalorder %s134, %s135
    %p144 = scmp.eq.s32.totalorder %s19, 0
    %p145 = por %p143, %p144
    %p146 = scmp.ne.s32.totalorder %s134, %s135
    %p147 = scmp.eq.s32.totalorder %s20, 1
    %p148 = por %p146, %p147
    %p150 = scmp.ne.s32.totalorder %s135, %s149
    %p151 = scmp.eq.s32.totalorder %s20, 0
    %p152 = por %p150, %p151
    %s154 = sadd.s32 %s153, 1
    %p157 = scmp.eq.s32.totalorder %s14, 1
    %p158 = scmp.ne.s32.totalorder %s153, %s155
    %p159 = scmp.eq.s32.totalorder %s14, 0
    %p160 = por %p158, %p159
    %p161 = scmp.ne.s32.totalorder %s153, %s155
    %p162 = scmp.eq.s32.totalorder %s19, 1
    %p163 = por %p161, %p162
    %p164 = scmp.ne.s32.totalorder %s155, %s156
    %p165 = scmp.eq.s32.totalorder %s19, 0
    %p166 = por %p164, %p165
    %p167 = scmp.ne.s32.totalorder %s155, %s156
    %p168 = scmp.eq.s32.totalorder %s20, 1
    %p169 = por %p167, %p168
    %p171 = scmp.ne.s32.totalorder %s156, %s170
    %p172 = scmp.eq.s32.totalorder %s20, 0
    %p173 = por %p171, %p172
    %s175 = sadd.s32 %s174, 1
    %p178 = scmp.eq.s32.totalorder %s14, 1
    %p179 = scmp.ne.s32.totalorder %s174, %s176
    %p180 = scmp.eq.s32.totalorder %s14, 0
    %p181 = por %p179, %p180
    %p182 = scmp.ne.s32.totalorder %s174, %s176
    %p183 = scmp.eq.s32.totalorder %s19, 1
    %p184 = por %p182, %p183
    %p185 = scmp.ne.s32.totalorder %s176, %s177
    %p186 = scmp.eq.s32.totalorder %s19, 0
    %p187 = por %p185, %p186
    %p188 = scmp.ne.s32.totalorder %s176, %s177
    %p189 = scmp.eq.s32.totalorder %s20, 1
    %p190 = por %p188, %p189
    %p192 = scmp.ne.s32.totalorder %s177, %s191
    %p193 = scmp.eq.s32.totalorder %s20, 0
    %p194 = por %p192, %p193
    %s195 = ssub.s32 %s14, %s21
    %p196 = scmp.eq.s32.totalorder %s195, 0
    %s198 = sadd.s32 %s197, 1
    %s199 = scalar_select %p196, %s197, %s198
    %p202 = pneg %p196
    %p203 = scmp.eq.s32.totalorder %s14, 1
    %p204 = por %p202, %p203
    %p205 = scmp.ne.s32.totalorder %s197, %s200
    %p206 = scmp.eq.s32.totalorder %s14, 0
    %p207 = por %p205, %p206
    %p208 = scmp.ne.s32.totalorder %s197, %s200
    %p209 = scmp.eq.s32.totalorder %s19, 1
    %p210 = por %p208, %p209
    %p211 = scmp.ne.s32.totalorder %s200, %s201
    %p212 = scmp.eq.s32.totalorder %s19, 0
    %p213 = por %p211, %p212
    %p214 = scmp.ne.s32.totalorder %s200, %s201
    %p215 = scmp.eq.s32.totalorder %s20, 1
    %p216 = por %p214, %p215
    %p218 = scmp.ne.s32.totalorder %s201, %s217
    %p219 = scmp.eq.s32.totalorder %s20, 0
    %p220 = por %p218, %p219
    %p221 = scmp.le.s32.totalorder 1, %s14
    %p222 = scmp.lt.s32.totalorder %s14, 3
    %p223 = pnand %p221, %p222
    %p224 = pneg %p223
    // Predicated region
    $region9: #{resnet_block_forward.1} parent=5 // pred_check
      _
    $region10: #{resnet_block_forward.1} parent=5 // pred_check_branch
      %226 = sbr.rel (%p223) target = $region12
    $region11: #{resnet_block_forward.1} parent=5 // pred_region
      %s227 = ssub.s32 %s14, 1
      // Predicated region
      $region13: #{resnet_block_forward.1} parent=11 // pred_check
        %p228 = pneg %p61
      $region14: #{resnet_block_forward.1} parent=11 // pred_check_branch
        %230 = sbr.rel (%p228) target = $region16
      $region15: #{resnet_block_forward.1} parent=11 // pred_region
        _
      $region16: #{resnet_block_forward.1} parent=11 // pred_fallthru
        _
      // Predicated region
      $region17: #{resnet_block_forward.1} parent=11 // pred_check
        %p231 = pneg %p82
      $region18: #{resnet_block_forward.1} parent=11 // pred_check_branch
        %233 = sbr.rel (%p231) target = $region20
      $region19: #{resnet_block_forward.1} parent=11 // pred_region
        _
      $region20: #{resnet_block_forward.1} parent=11 // pred_fallthru
        _
      // Predicated region
      $region21: #{resnet_block_forward.1} parent=11 // pred_check
        %p234 = pneg %p103
      $region22: #{resnet_block_forward.1} parent=11 // pred_check_branch
        %236 = sbr.rel (%p234) target = $region24
      $region23: #{resnet_block_forward.1} parent=11 // pred_region
        _
      $region24: #{resnet_block_forward.1} parent=11 // pred_fallthru
        _
      // Predicated region
      $region25: #{resnet_block_forward.1} parent=11 // pred_check
        %p237 = pneg %p124
      $region26: #{resnet_block_forward.1} parent=11 // pred_check_branch
        %239 = sbr.rel (%p237) target = $region28
      $region27: #{resnet_block_forward.1} parent=11 // pred_region
        _
      $region28: #{resnet_block_forward.1} parent=11 // pred_fallthru
        _
      // Predicated region
      $region29: #{resnet_block_forward.1} parent=11 // pred_check
        %p240 = pneg %p145
      $region30: #{resnet_block_forward.1} parent=11 // pred_check_branch
        %242 = sbr.rel (%p240) target = $region32
      $region31: #{resnet_block_forward.1} parent=11 // pred_region
        _
      $region32: #{resnet_block_forward.1} parent=11 // pred_fallthru
        _
      // Predicated region
      $region33: #{resnet_block_forward.1} parent=11 // pred_check
        %p243 = pneg %p166
      $region34: #{resnet_block_forward.1} parent=11 // pred_check_branch
        %245 = sbr.rel (%p243) target = $region36
      $region35: #{resnet_block_forward.1} parent=11 // pred_region
        _
      $region36: #{resnet_block_forward.1} parent=11 // pred_fallthru
        _
      // Predicated region
      $region37: #{resnet_block_forward.1} parent=11 // pred_check
        %p246 = pneg %p187
      $region38: #{resnet_block_forward.1} parent=11 // pred_check_branch
        %248 = sbr.rel (%p246) target = $region40
      $region39: #{resnet_block_forward.1} parent=11 // pred_region
        _
      $region40: #{resnet_block_forward.1} parent=11 // pred_fallthru
        _
    $region12: #{resnet_block_forward.1} parent=5 // pred_fallthru
      _
    %p249 = scmp.lt.s32.totalorder %s14, 2
    // Predicated region
    $region41: #{resnet_block_forward.1} parent=5 // pred_check
      %p250 = pneg %p249
    $region42: #{resnet_block_forward.1} parent=5 // pred_check_branch
      %252 = sbr.rel (%p250) target = $region44
    $region43: #{resnet_block_forward.1} parent=5 // pred_region
      // Predicated region
      $region45: #{resnet_block_forward.1} parent=43 // pred_check
        %p253 = pneg %p34
      $region46: #{resnet_block_forward.1} parent=43 // pred_check_branch
        %255 = sbr.rel (%p253) target = $region48
      $region47: #{resnet_block_forward.1} parent=43 // pred_region
        %p256 = scmp.lt.s32.totalorder %s14, 1
        %s257 = scalar_select %p256, %s14, 1
        %s258 = smul.addr %s257, 32
        %s259 = smul.addr %s258, 8
        %s260 = scalar_lea.vmem %s0, %s259
      $region48: #{resnet_block_forward.1} parent=43 // pred_fallthru
        _
    $region44: #{resnet_block_forward.1} parent=5 // pred_fallthru
      _
    %p261 = scmp.le.s32.totalorder 1, %s14
    %p262 = scmp.lt.s32.totalorder %s14, 3
    %p263 = pnand %p261, %p262
    %p264 = pneg %p263
    // Predicated region
    $region49: #{resnet_block_forward.1} parent=5 // pred_check
      _
    $region50: #{resnet_block_forward.1} parent=5 // pred_check_branch
      %266 = sbr.rel (%p263) target = $region52
    $region51: #{resnet_block_forward.1} parent=5 // pred_region
      %s267 = ssub.s32 %s14, 1
      %p268 = scmp.lt.s32.totalorder %s19, 1
      %s269 = scalar_select %p268, %s19, 1
      %s270 = smul.addr %s269, 32
      %s271 = smul.addr %s270, 8
      %s272 = scalar_lea.vmem %s0, %s271
      %p273 = pneg %p40
      %p274 = pneg %p37
      %p275 = pneg %p61
      %p276 = pneg %p58
      %p277 = pneg %p82
      %p278 = pneg %p79
      %p279 = pneg %p103
      %p280 = pneg %p100
      %p281 = pneg %p124
      %p282 = pneg %p121
      %p283 = pneg %p145
      %p284 = pneg %p142
      %p285 = pneg %p166
      %p286 = pneg %p163
      %p287 = pneg %p187
      %p288 = pneg %p184
      %p289 = pneg %p213
      %p290 = pneg %p210
      %p291 = scmp.lt.s32.totalorder %s19, 1
      %s292 = scalar_select %p291, %s19, 1
      %s293 = smul.addr %s292, 32
      %s294 = smul.addr %s293, 8
      %s295 = scalar_lea.vmem %s8, %s294
      %p296 = scmp.lt.s32.totalorder %s19, 1
      %s297 = scalar_select %p296, %s19, 1
      %s298 = smul.addr %s297, 32
      %s299 = smul.addr %s298, 8
      %s300 = scalar_lea.vmem %s0, %s299
      %p301 = scmp.lt.s32.totalorder %s19, 1
      %s302 = scalar_select %p301, %s19, 1
      %s303 = smul.addr %s302, 32
      %s304 = smul.addr %s303, 8
      %s305 = scalar_lea.vmem %s8, %s304
      %v307 = vld [vmem:[%s7] sm:$0xff]
      %v308 = vld [vmem:[%s7 + $0x8] sm:$0xff]
      %v309 = vld [vmem:[%s6] sm:$0xff]
      %v310 = vld [vmem:[%s6 + $0x8] sm:$0x1]
      %s311 = scalar_lea.vmem %s1, %s19
      %v312 = vld [vmem:[%s311] sm:$0x1]
      %v313 = vxor.u32 %v312, 2147483648
      %v314 = vmul.f32 %v313, 1.442695
      %v315 = vpow.pop %v314
      %v316 = vadd.f32 %v315, 1.0
      %v317 = vrcp.pop %v316
      %v318 = vmul.f32 1.0, %v317
      %v319 = vmul.f32 %v312, %v318
      %v320 = vpack.c.bf16 %v319, %v319
      %v321 = vld [vmem:[%s4] sm:$0xf]
      %v322 = vld [vmem:[%s4 + $0x4] sm:$0xf]
      %v323 = vld [vmem:[%s4 + $0x8] sm:$0xf]
      %v324 = vld [vmem:[%s4 + $0xc] sm:$0xf]
      %v329 = vunpack.c.l.b16 %v321
      %v330 = vunpack.c.l.b16 %v322
      %v331 = vunpack.c.l.b16 %v323
      %v332 = vunpack.c.l.b16 %v324
      %v333 = vpack.c.b16 %v330, %v329
      %v334 = vpack.c.b16 %v332, %v331
      %vm337 = vcmask 261120
      %v339 = vsel %vm337, %v320, 0
      %341 = vmatprep.subr.bf16.mxu0 0
      %342 = vmatpush1.bf16.msra.mxu0 %v333
      %343 = vmatprep.subr.bf16.mxu0 0
      %344 = vmatpush1.bf16.msra.mxu0 %v334
      %345 = vmatprep.subr.bf16.mxu0 0
      %346 = vmatpush1.bf16.msra.mxu0 0
      %347 = vmatprep.subr.bf16.mxu0 0
      %348 = vmatpush1.bf16.msra.mxu0 0
      %349 = vmatprep.subr.bf16.mxu0 0
      %350 = vmatpush1.bf16.msra.mxu0 0
      %351 = vmatprep.subr.bf16.mxu0 0
      %352 = vmatpush1.bf16.msra.mxu0 0
      %353 = vmatprep.subr.bf16.mxu0 0
      %354 = vmatpush1.bf16.msra.mxu0 0
      %355 = vmatprep.subr.bf16.mxu0 0
      %356 = vmatpush1.bf16.msra.mxu0 0
      %357 = vmatprep.subr.bf16.mxu0 0
      %358 = vmatpush1.bf16.msra.mxu0 0
      %359 = vmatprep.subr.bf16.mxu0 0
      %360 = vmatpush1.bf16.msra.mxu0 0
      %361 = vmatprep.subr.bf16.mxu0 0
      %362 = vmatpush1.bf16.msra.mxu0 0
      %363 = vmatprep.subr.bf16.mxu0 0
      %364 = vmatpush1.bf16.msra.mxu0 0
      %365 = vmatprep.subr.bf16.mxu0 0
      %366 = vmatpush1.bf16.msra.mxu0 0
      %367 = vmatprep.subr.bf16.mxu0 0
      %368 = vmatpush1.bf16.msra.mxu0 0
      %369 = vmatprep.subr.bf16.mxu0 0
      %370 = vmatpush1.bf16.msra.mxu0 0
      %371 = vmatprep.subr.bf16.mxu0 0
      %372 = vmatpush1.bf16.msra.mxu0 0
      %373 = vmatprep.mubr.bf16.mxu0 0
      %374 = vmatmul.mubr.bf16.gmra.mrb[0].mxu0 %v339
      %v375 = vpop.f32.mrb[0].mxu0
      %v376 = vadd.f32 0.0, %v375
      %v377 = vpop.f32.mrb[0].mxu0
      %v378 = vpop.f32.mrb[0].mxu0
      %v379 = vpop.f32.mrb[0].mxu0
      %380 = vdwg.mxu0
      %v382 = vrot.slane %v309, 7
      %v384 = vadd.f32 %v376, %v382
      %386 = vrot.lane.b32.xlu0 %v310, 16
      %v387 = vpop.permute.xlu0 %386
      %v389 = vadd.f32 %v376, %v387
      %v390 = vld [vmem:[%s300] sm:$0xff]
      %v391 = vld [vmem:[%s300 + $0x8] sm:$0xff]
      %v392 = vld [vmem:[%s300 + $0x10] sm:$0xff]
      %v393 = vld [vmem:[%s300 + $0x18] sm:$0xff]
      %v394 = vld [vmem:[%s300 + $0x20] sm:$0xff]
      %v395 = vld [vmem:[%s300 + $0x28] sm:$0xff]
      %v396 = vld [vmem:[%s300 + $0x30] sm:$0xff]
      %v397 = vld [vmem:[%s300 + $0x38] sm:$0xff]
      %v398 = vld [vmem:[%s300 + $0x40] sm:$0xff]
      %v399 = vld [vmem:[%s300 + $0x48] sm:$0xff]
      %v400 = vld [vmem:[%s300 + $0x50] sm:$0xff]
      %v401 = vld [vmem:[%s300 + $0x58] sm:$0xff]
      %v402 = vld [vmem:[%s300 + $0x60] sm:$0xff]
      %v403 = vld [vmem:[%s300 + $0x68] sm:$0xff]
      %v404 = vld [vmem:[%s300 + $0x70] sm:$0xff]
      %v405 = vld [vmem:[%s300 + $0x78] sm:$0xff]
      %v406 = vld [vmem:[%s300 + $0x80] sm:$0xff]
      %v407 = vld [vmem:[%s300 + $0x88] sm:$0xff]
      %v408 = vld [vmem:[%s300 + $0x90] sm:$0xff]
      %v409 = vld [vmem:[%s300 + $0x98] sm:$0xff]
      %v410 = vld [vmem:[%s300 + $0xa0] sm:$0xff]
      %v411 = vld [vmem:[%s300 + $0xa8] sm:$0xff]
      %v412 = vld [vmem:[%s300 + $0xb0] sm:$0xff]
      %v413 = vld [vmem:[%s300 + $0xb8] sm:$0xff]
      %v414 = vld [vmem:[%s300 + $0xc0] sm:$0xff]
      %v415 = vld [vmem:[%s300 + $0xc8] sm:$0xff]
      %v416 = vld [vmem:[%s300 + $0xd0] sm:$0xff]
      %v417 = vld [vmem:[%s300 + $0xd8] sm:$0xff]
      %v418 = vld [vmem:[%s300 + $0xe0] sm:$0xff]
      %v419 = vld [vmem:[%s300 + $0xe8] sm:$0xff]
      %v420 = vld [vmem:[%s300 + $0xf0] sm:$0xff]
      %v421 = vld [vmem:[%s300 + $0xf8] sm:$0xff]
      %s422 = scalar_lea.vmem [#allocation2], 32
      %vm423 = vcmask 31744
      %424 = vst.msk [vmem:[%s422 + $0x8] sm:$0xff] %vm423, %v390
      %425 = vst.msk [vmem:[%s422 + $0x10] sm:$0xff] %vm423, %v391
      %426 = vst.msk [vmem:[%s422 + $0x28] sm:$0xff] %vm423, %v392
      %427 = vst.msk [vmem:[%s422 + $0x30] sm:$0xff] %vm423, %v393
      %428 = vst.msk [vmem:[%s422 + $0x48] sm:$0xff] %vm423, %v394
      %429 = vst.msk [vmem:[%s422 + $0x50] sm:$0xff] %vm423, %v395
      %430 = vst.msk [vmem:[%s422 + $0x68] sm:$0xff] %vm423, %v396
      %431 = vst.msk [vmem:[%s422 + $0x70] sm:$0xff] %vm423, %v397
      %432 = vst.msk [vmem:[%s422 + $0x88] sm:$0xff] %vm423, %v398
      %433 = vst.msk [vmem:[%s422 + $0x90] sm:$0xff] %vm423, %v399
      %434 = vst.msk [vmem:[%s422 + $0xa8] sm:$0xff] %vm423, %v400
      %435 = vst.msk [vmem:[%s422 + $0xb0] sm:$0xff] %vm423, %v401
      %436 = vst.msk [vmem:[%s422 + $0xc8] sm:$0xff] %vm423, %v402
      %437 = vst.msk [vmem:[%s422 + $0xd0] sm:$0xff] %vm423, %v403
      %438 = vst.msk [vmem:[%s422 + $0xe8] sm:$0xff] %vm423, %v404
      %439 = vst.msk [vmem:[%s422 + $0xf0] sm:$0xff] %vm423, %v405
      %440 = vst.msk [vmem:[%s422 + $0x108] sm:$0xff] %vm423, %v406
      %441 = vst.msk [vmem:[%s422 + $0x110] sm:$0xff] %vm423, %v407
      %442 = vst.msk [vmem:[%s422 + $0x128] sm:$0xff] %vm423, %v408
      %443 = vst.msk [vmem:[%s422 + $0x130] sm:$0xff] %vm423, %v409
      %444 = vst.msk [vmem:[%s422 + $0x148] sm:$0xff] %vm423, %v410
      %445 = vst.msk [vmem:[%s422 + $0x150] sm:$0xff] %vm423, %v411
      %446 = vst.msk [vmem:[%s422 + $0x168] sm:$0xff] %vm423, %v412
      %447 = vst.msk [vmem:[%s422 + $0x170] sm:$0xff] %vm423, %v413
      %448 = vst.msk [vmem:[%s422 + $0x188] sm:$0xff] %vm423, %v414
      %449 = vst.msk [vmem:[%s422 + $0x190] sm:$0xff] %vm423, %v415
      %450 = vst.msk [vmem:[%s422 + $0x1a8] sm:$0xff] %vm423, %v416
      %451 = vst.msk [vmem:[%s422 + $0x1b0] sm:$0xff] %vm423, %v417
      %452 = vst.msk [vmem:[%s422 + $0x1c8] sm:$0xff] %vm423, %v418
      %453 = vst.msk [vmem:[%s422 + $0x1d0] sm:$0xff] %vm423, %v419
      %454 = vst.msk [vmem:[%s422 + $0x1e8] sm:$0xff] %vm423, %v420
      %455 = vst.msk [vmem:[%s422 + $0x1f0] sm:$0xff] %vm423, %v421
      %456 = vst.msk [vmem:[#allocation2] sm:$0xff] %vm423, 0.0
      %457 = vst.msk [vmem:[#allocation2 + $0x8] sm:$0xff] %vm423, 0.0
      %458 = vst.msk [vmem:[#allocation2 + $0x10] sm:$0xff] %vm423, 0.0
      %459 = vst.msk [vmem:[#allocation2 + $0x18] sm:$0xff] %vm423, 0.0
      %s460 = scalar_lea.vmem [#allocation2], 544
      %461 = vst.msk [vmem:[%s460] sm:$0xff] %vm423, 0.0
      %462 = vst.msk [vmem:[%s460 + $0x8] sm:$0xff] %vm423, 0.0
      %463 = vst.msk [vmem:[%s460 + $0x10] sm:$0xff] %vm423, 0.0
      %464 = vst.msk [vmem:[%s460 + $0x18] sm:$0xff] %vm423, 0.0
      %vm465 = vcmask 24576
      %466 = vst.msk [vmem:[%s422 + $0x7] sm:$0x1] %vm465, 0.0
      %467 = vst.msk [vmem:[%s422 + $0x27] sm:$0x1] %vm465, 0.0
      %468 = vst.msk [vmem:[%s422 + $0x47] sm:$0x1] %vm465, 0.0
      %469 = vst.msk [vmem:[%s422 + $0x67] sm:$0x1] %vm465, 0.0
      %470 = vst.msk [vmem:[%s422 + $0x87] sm:$0x1] %vm465, 0.0
      %471 = vst.msk [vmem:[%s422 + $0xa7] sm:$0x1] %vm465, 0.0
      %472 = vst.msk [vmem:[%s422 + $0xc7] sm:$0x1] %vm465, 0.0
      %473 = vst.msk [vmem:[%s422 + $0xe7] sm:$0x1] %vm465, 0.0
      %474 = vst.msk [vmem:[%s422 + $0x107] sm:$0x1] %vm465, 0.0
      %475 = vst.msk [vmem:[%s422 + $0x127] sm:$0x1] %vm465, 0.0
      %476 = vst.msk [vmem:[%s422 + $0x147] sm:$0x1] %vm465, 0.0
      %477 = vst.msk [vmem:[%s422 + $0x167] sm:$0x1] %vm465, 0.0
      %478 = vst.msk [vmem:[%s422 + $0x187] sm:$0x1] %vm465, 0.0
      %479 = vst.msk [vmem:[%s422 + $0x1a7] sm:$0x1] %vm465, 0.0
      %480 = vst.msk [vmem:[%s422 + $0x1c7] sm:$0x1] %vm465, 0.0
      %481 = vst.msk [vmem:[%s422 + $0x1e7] sm:$0x1] %vm465, 0.0
      %482 = vst.msk [vmem:[%s422 + $0x18] sm:$0x1] %vm465, 0.0
      %483 = vst.msk [vmem:[%s422 + $0x38] sm:$0x1] %vm465, 0.0
      %484 = vst.msk [vmem:[%s422 + $0x58] sm:$0x1] %vm465, 0.0
      %485 = vst.msk [vmem:[%s422 + $0x78] sm:$0x1] %vm465, 0.0
      %486 = vst.msk [vmem:[%s422 + $0x98] sm:$0x1] %vm465, 0.0
      %487 = vst.msk [vmem:[%s422 + $0xb8] sm:$0x1] %vm465, 0.0
      %488 = vst.msk [vmem:[%s422 + $0xd8] sm:$0x1] %vm465, 0.0
      %489 = vst.msk [vmem:[%s422 + $0xf8] sm:$0x1] %vm465, 0.0
      %490 = vst.msk [vmem:[%s422 + $0x118] sm:$0x1] %vm465, 0.0
      %491 = vst.msk [vmem:[%s422 + $0x138] sm:$0x1] %vm465, 0.0
      %492 = vst.msk [vmem:[%s422 + $0x158] sm:$0x1] %vm465, 0.0
      %493 = vst.msk [vmem:[%s422 + $0x178] sm:$0x1] %vm465, 0.0
      %494 = vst.msk [vmem:[%s422 + $0x198] sm:$0x1] %vm465, 0.0
      %495 = vst.msk [vmem:[%s422 + $0x1b8] sm:$0x1] %vm465, 0.0
      %496 = vst.msk [vmem:[%s422 + $0x1d8] sm:$0x1] %vm465, 0.0
      %497 = vst.msk [vmem:[%s422 + $0x1f8] sm:$0x1] %vm465, 0.0
      %v498 = vld [vmem:[#allocation2 + $0x7] sm:$0xff]
      %v499 = vld [vmem:[#allocation2 + $0xf] sm:$0xff]
      %v500 = vld [vmem:[#allocation2 + $0x27] sm:$0xff]
      %v501 = vld [vmem:[#allocation2 + $0x2f] sm:$0xff]
      %v502 = vld [vmem:[#allocation2 + $0x47] sm:$0xff]
      %v503 = vld [vmem:[#allocation2 + $0x4f] sm:$0xff]
      %v504 = vld [vmem:[#allocation2 + $0x67] sm:$0xff]
      %v505 = vld [vmem:[#allocation2 + $0x6f] sm:$0xff]
      %v506 = vld [vmem:[#allocation2 + $0x87] sm:$0xff]
      %v507 = vld [vmem:[#allocation2 + $0x8f] sm:$0xff]
      %v508 = vld [vmem:[#allocation2 + $0xa7] sm:$0xff]
      %v509 = vld [vmem:[#allocation2 + $0xaf] sm:$0xff]
      %v510 = vld [vmem:[#allocation2 + $0xc7] sm:$0xff]
      %v511 = vld [vmem:[#allocation2 + $0xcf] sm:$0xff]
      %v512 = vld [vmem:[#allocation2 + $0xe7] sm:$0xff]
      %v513 = vld [vmem:[#allocation2 + $0xef] sm:$0xff]
      %v514 = vld [vmem:[#allocation2 + $0x107] sm:$0xff]
      %v515 = vld [vmem:[#allocation2 + $0x10f] sm:$0xff]
      %v516 = vld [vmem:[#allocation2 + $0x127] sm:$0xff]
      %v517 = vld [vmem:[#allocation2 + $0x12f] sm:$0xff]
      %v518 = vld [vmem:[#allocation2 + $0x147] sm:$0xff]
      %v519 = vld [vmem:[#allocation2 + $0x14f] sm:$0xff]
      %v520 = vld [vmem:[#allocation2 + $0x167] sm:$0xff]
      %v521 = vld [vmem:[#allocation2 + $0x16f] sm:$0xff]
      %v522 = vld [vmem:[#allocation2 + $0x187] sm:$0xff]
      %v523 = vld [vmem:[#allocation2 + $0x18f] sm:$0xff]
      %v524 = vld [vmem:[#allocation2 + $0x1a7] sm:$0xff]
      %v525 = vld [vmem:[#allocation2 + $0x1af] sm:$0xff]
      %v526 = vld [vmem:[#allocation2 + $0x1c7] sm:$0xff]
      %v527 = vld [vmem:[#allocation2 + $0x1cf] sm:$0xff]
      %v528 = vld [vmem:[#allocation2 + $0x1e7] sm:$0xff]
      %v529 = vld [vmem:[#allocation2 + $0x1ef] sm:$0xff]
      %v530 = vpack.c.bf16 %v499, %v498
      %v531 = vpack.c.bf16 %v501, %v500
      %v532 = vpack.c.bf16 %v503, %v502
      %v533 = vpack.c.bf16 %v505, %v504
      %v534 = vpack.c.bf16 %v507, %v506
      %v535 = vpack.c.bf16 %v509, %v508
      %v536 = vpack.c.bf16 %v511, %v510
      %v537 = vpack.c.bf16 %v513, %v512
      %v538 = vpack.c.bf16 %v515, %v514
      %v539 = vpack.c.bf16 %v517, %v516
      %v540 = vpack.c.bf16 %v519, %v518
      %v541 = vpack.c.bf16 %v521, %v520
      %v542 = vpack.c.bf16 %v523, %v522
      %v543 = vpack.c.bf16 %v525, %v524
      %v544 = vpack.c.bf16 %v527, %v526
      %v545 = vpack.c.bf16 %v529, %v528
      %546 = vst.msk [vmem:[#allocation4] sm:$0xff] %vm423, %v530
      %547 = vst.msk [vmem:[#allocation4 + $0x8] sm:$0xff] %vm423, %v531
      %548 = vst.msk [vmem:[#allocation4 + $0x10] sm:$0xff] %vm423, %v532
      %549 = vst.msk [vmem:[#allocation4 + $0x18] sm:$0xff] %vm423, %v533
      %550 = vst.msk [vmem:[#allocation4 + $0x20] sm:$0xff] %vm423, %v534
      %551 = vst.msk [vmem:[#allocation4 + $0x28] sm:$0xff] %vm423, %v535
      %552 = vst.msk [vmem:[#allocation4 + $0x30] sm:$0xff] %vm423, %v536
      %553 = vst.msk [vmem:[#allocation4 + $0x38] sm:$0xff] %vm423, %v537
      %554 = vst.msk [vmem:[#allocation4 + $0x40] sm:$0xff] %vm423, %v538
      %555 = vst.msk [vmem:[#allocation4 + $0x48] sm:$0xff] %vm423, %v539
      %556 = vst.msk [vmem:[#allocation4 + $0x50] sm:$0xff] %vm423, %v540
      %557 = vst.msk [vmem:[#allocation4 + $0x58] sm:$0xff] %vm423, %v541
      %558 = vst.msk [vmem:[#allocation4 + $0x60] sm:$0xff] %vm423, %v542
      %559 = vst.msk [vmem:[#allocation4 + $0x68] sm:$0xff] %vm423, %v543
      %560 = vst.msk [vmem:[#allocation4 + $0x70] sm:$0xff] %vm423, %v544
      %561 = vst.msk [vmem:[#allocation4 + $0x78] sm:$0xff] %vm423, %v545
      %v562 = vld [vmem:[#allocation2 + $0x8] sm:$0xff]
      %v563 = vld [vmem:[#allocation2 + $0x10] sm:$0xff]
      %v564 = vld [vmem:[#allocation2 + $0x28] sm:$0xff]
      %v565 = vld [vmem:[#allocation2 + $0x30] sm:$0xff]
      %v566 = vld [vmem:[#allocation2 + $0x48] sm:$0xff]
      %v567 = vld [vmem:[#allocation2 + $0x50] sm:$0xff]
      %v568 = vld [vmem:[#allocation2 + $0x68] sm:$0xff]
      %v569 = vld [vmem:[#allocation2 + $0x70] sm:$0xff]
      %v570 = vld [vmem:[#allocation2 + $0x88] sm:$0xff]
      %v571 = vld [vmem:[#allocation2 + $0x90] sm:$0xff]
      %v572 = vld [vmem:[#allocation2 + $0xa8] sm:$0xff]
      %v573 = vld [vmem:[#allocation2 + $0xb0] sm:$0xff]
      %v574 = vld [vmem:[#allocation2 + $0xc8] sm:$0xff]
      %v575 = vld [vmem:[#allocation2 + $0xd0] sm:$0xff]
      %v576 = vld [vmem:[#allocation2 + $0xe8] sm:$0xff]
      %v577 = vld [vmem:[#allocation2 + $0xf0] sm:$0xff]
      %v578 = vld [vmem:[#allocation2 + $0x108] sm:$0xff]
      %v579 = vld [vmem:[#allocation2 + $0x110] sm:$0xff]
      %v580 = vld [vmem:[#allocation2 + $0x128] sm:$0xff]
      %v581 = vld [vmem:[#allocation2 + $0x130] sm:$0xff]
      %v582 = vld [vmem:[#allocation2 + $0x148] sm:$0xff]
      %v583 = vld [vmem:[#allocation2 + $0x150] sm:$0xff]
      %v584 = vld [vmem:[#allocation2 + $0x168] sm:$0xff]
      %v585 = vld [vmem:[#allocation2 + $0x170] sm:$0xff]
      %v586 = vld [vmem:[#allocation2 + $0x188] sm:$0xff]
      %v587 = vld [vmem:[#allocation2 + $0x190] sm:$0xff]
      %v588 = vld [vmem:[#allocation2 + $0x1a8] sm:$0xff]
      %v589 = vld [vmem:[#allocation2 + $0x1b0] sm:$0xff]
      %v590 = vld [vmem:[#allocation2 + $0x1c8] sm:$0xff]
      %v591 = vld [vmem:[#allocation2 + $0x1d0] sm:$0xff]
      %v592 = vld [vmem:[#allocation2 + $0x1e8] sm:$0xff]
      %v593 = vld [vmem:[#allocation2 + $0x1f0] sm:$0xff]
      %v594 = vpack.c.bf16 %v563, %v562
      %v595 = vpack.c.bf16 %v565, %v564
      %v596 = vpack.c.bf16 %v567, %v566
      %v597 = vpack.c.bf16 %v569, %v568
      %v598 = vpack.c.bf16 %v571, %v570
      %v599 = vpack.c.bf16 %v573, %v572
      %v600 = vpack.c.bf16 %v575, %v574
      %v601 = vpack.c.bf16 %v577, %v576
      %v602 = vpack.c.bf16 %v579, %v578
      %v603 = vpack.c.bf16 %v581, %v580
      %v604 = vpack.c.bf16 %v583, %v582
      %v605 = vpack.c.bf16 %v585, %v584
      %v606 = vpack.c.bf16 %v587, %v586
      %v607 = vpack.c.bf16 %v589, %v588
      %v608 = vpack.c.bf16 %v591, %v590
      %v609 = vpack.c.bf16 %v593, %v592
      %626 = vrot.lane.b32.xlu0 %v594, 4
      %v627 = vpop.permute.xlu0 %626
      %628 = vrot.lane.b32.xlu0 %v595, 4
      %v629 = vpop.permute.xlu0 %628
      %630 = vrot.lane.b32.xlu0 %v596, 4
      %v631 = vpop.permute.xlu0 %630
      %632 = vrot.lane.b32.xlu0 %v597, 4
      %v633 = vpop.permute.xlu0 %632
      %634 = vrot.lane.b32.xlu0 %v598, 4
      %v635 = vpop.permute.xlu0 %634
      %636 = vrot.lane.b32.xlu0 %v599, 4
      %v637 = vpop.permute.xlu0 %636
      %638 = vrot.lane.b32.xlu0 %v600, 4
      %v639 = vpop.permute.xlu0 %638
      %640 = vrot.lane.b32.xlu0 %v601, 4
      %v641 = vpop.permute.xlu0 %640
      %642 = vrot.lane.b32.xlu0 %v602, 4
      %v643 = vpop.permute.xlu0 %642
      %644 = vrot.lane.b32.xlu0 %v603, 4
      %v645 = vpop.permute.xlu0 %644
      %646 = vrot.lane.b32.xlu0 %v604, 4
      %v647 = vpop.permute.xlu0 %646
      %648 = vrot.lane.b32.xlu0 %v605, 4
      %v649 = vpop.permute.xlu0 %648
      %650 = vrot.lane.b32.xlu0 %v606, 4
      %v651 = vpop.permute.xlu0 %650
      %652 = vrot.lane.b32.xlu0 %v607, 4
      %v653 = vpop.permute.xlu0 %652
      %654 = vrot.lane.b32.xlu0 %v608, 4
      %v655 = vpop.permute.xlu0 %654
      %656 = vrot.lane.b32.xlu0 %v609, 4
      %v657 = vpop.permute.xlu0 %656
      %vm674 = vcmask 64544
      %675 = vst.msk [vmem:[#allocation4] sm:$0xff] %vm674, %v627
      %676 = vst.msk [vmem:[#allocation4 + $0x8] sm:$0xff] %vm674, %v629
      %677 = vst.msk [vmem:[#allocation4 + $0x10] sm:$0xff] %vm674, %v631
      %678 = vst.msk [vmem:[#allocation4 + $0x18] sm:$0xff] %vm674, %v633
      %679 = vst.msk [vmem:[#allocation4 + $0x20] sm:$0xff] %vm674, %v635
      %680 = vst.msk [vmem:[#allocation4 + $0x28] sm:$0xff] %vm674, %v637
      %681 = vst.msk [vmem:[#allocation4 + $0x30] sm:$0xff] %vm674, %v639
      %682 = vst.msk [vmem:[#allocation4 + $0x38] sm:$0xff] %vm674, %v641
      %683 = vst.msk [vmem:[#allocation4 + $0x40] sm:$0xff] %vm674, %v643
      %684 = vst.msk [vmem:[#allocation4 + $0x48] sm:$0xff] %vm674, %v645
      %685 = vst.msk [vmem:[#allocation4 + $0x50] sm:$0xff] %vm674, %v647
      %686 = vst.msk [vmem:[#allocation4 + $0x58] sm:$0xff] %vm674, %v649
      %687 = vst.msk [vmem:[#allocation4 + $0x60] sm:$0xff] %vm674, %v651
      %688 = vst.msk [vmem:[#allocation4 + $0x68] sm:$0xff] %vm674, %v653
      %689 = vst.msk [vmem:[#allocation4 + $0x70] sm:$0xff] %vm674, %v655
      %690 = vst.msk [vmem:[#allocation4 + $0x78] sm:$0xff] %vm674, %v657
      %v691 = vld [vmem:[#allocation2 + $0x9] sm:$0xff]
      %v692 = vld [vmem:[#allocation2 + $0x11] sm:$0xff]
      %v693 = vld [vmem:[#allocation2 + $0x29] sm:$0xff]
      %v694 = vld [vmem:[#allocation2 + $0x31] sm:$0xff]
      %v695 = vld [vmem:[#allocation2 + $0x49] sm:$0xff]
      %v696 = vld [vmem:[#allocation2 + $0x51] sm:$0xff]
      %v697 = vld [vmem:[#allocation2 + $0x69] sm:$0xff]
      %v698 = vld [vmem:[#allocation2 + $0x71] sm:$0xff]
      %v699 = vld [vmem:[#allocation2 + $0x89] sm:$0xff]
      %v700 = vld [vmem:[#allocation2 + $0x91] sm:$0xff]
      %v701 = vld [vmem:[#allocation2 + $0xa9] sm:$0xff]
      %v702 = vld [vmem:[#allocation2 + $0xb1] sm:$0xff]
      %v703 = vld [vmem:[#allocation2 + $0xc9] sm:$0xff]
      %v704 = vld [vmem:[#allocation2 + $0xd1] sm:$0xff]
      %v705 = vld [vmem:[#allocation2 + $0xe9] sm:$0xff]
      %v706 = vld [vmem:[#allocation2 + $0xf1] sm:$0xff]
      %v707 = vld [vmem:[#allocation2 + $0x109] sm:$0xff]
      %v708 = vld [vmem:[#allocation2 + $0x111] sm:$0xff]
      %v709 = vld [vmem:[#allocation2 + $0x129] sm:$0xff]
      %v710 = vld [vmem:[#allocation2 + $0x131] sm:$0xff]
      %v711 = vld [vmem:[#allocation2 + $0x149] sm:$0xff]
      %v712 = vld [vmem:[#allocation2 + $0x151] sm:$0xff]
      %v713 = vld [vmem:[#allocation2 + $0x169] sm:$0xff]
      %v714 = vld [vmem:[#allocation2 + $0x171] sm:$0xff]
      %v715 = vld [vmem:[#allocation2 + $0x189] sm:$0xff]
      %v716 = vld [vmem:[#allocation2 + $0x191] sm:$0xff]
      %v717 = vld [vmem:[#allocation2 + $0x1a9] sm:$0xff]
      %v718 = vld [vmem:[#allocation2 + $0x1b1] sm:$0xff]
      %v719 = vld [vmem:[#allocation2 + $0x1c9] sm:$0xff]
      %v720 = vld [vmem:[#allocation2 + $0x1d1] sm:$0xff]
      %v721 = vld [vmem:[#allocation2 + $0x1e9] sm:$0xff]
      %v722 = vld [vmem:[#allocation2 + $0x1f1] sm:$0xff]
      %v723 = vpack.c.bf16 %v692, %v691
      %v724 = vpack.c.bf16 %v694, %v693
      %v725 = vpack.c.bf16 %v696, %v695
      %v726 = vpack.c.bf16 %v698, %v697
      %v727 = vpack.c.bf16 %v700, %v699
      %v728 = vpack.c.bf16 %v702, %v701
      %v729 = vpack.c.bf16 %v704, %v703
      %v730 = vpack.c.bf16 %v706, %v705
      %v731 = vpack.c.bf16 %v708, %v707
      %v732 = vpack.c.bf16 %v710, %v709
      %v733 = vpack.c.bf16 %v712, %v711
      %v734 = vpack.c.bf16 %v714, %v713
      %v735 = vpack.c.bf16 %v716, %v715
      %v736 = vpack.c.bf16 %v718, %v717
      %v737 = vpack.c.bf16 %v720, %v719
      %v738 = vpack.c.bf16 %v722, %v721
      %755 = vrot.lane.b32.xlu0 %v723, 8
      %v756 = vpop.permute.xlu0 %755
      %757 = vrot.lane.b32.xlu0 %v724, 8
      %v758 = vpop.permute.xlu0 %757
      %759 = vrot.lane.b32.xlu0 %v725, 8
      %v760 = vpop.permute.xlu0 %759
      %761 = vrot.lane.b32.xlu0 %v726, 8
      %v762 = vpop.permute.xlu0 %761
      %763 = vrot.lane.b32.xlu0 %v727, 8
      %v764 = vpop.permute.xlu0 %763
      %765 = vrot.lane.b32.xlu0 %v728, 8
      %v766 = vpop.permute.xlu0 %765
      %767 = vrot.lane.b32.xlu0 %v729, 8
      %v768 = vpop.permute.xlu0 %767
      %769 = vrot.lane.b32.xlu0 %v730, 8
      %v770 = vpop.permute.xlu0 %769
      %771 = vrot.lane.b32.xlu0 %v731, 8
      %v772 = vpop.permute.xlu0 %771
      %773 = vrot.lane.b32.xlu0 %v732, 8
      %v774 = vpop.permute.xlu0 %773
      %775 = vrot.lane.b32.xlu0 %v733, 8
      %v776 = vpop.permute.xlu0 %775
      %777 = vrot.lane.b32.xlu0 %v734, 8
      %v778 = vpop.permute.xlu0 %777
      %779 = vrot.lane.b32.xlu0 %v735, 8
      %v780 = vpop.permute.xlu0 %779
      %781 = vrot.lane.b32.xlu0 %v736, 8
      %v782 = vpop.permute.xlu0 %781
      %783 = vrot.lane.b32.xlu0 %v737, 8
      %v784 = vpop.permute.xlu0 %783
      %785 = vrot.lane.b32.xlu0 %v738, 8
      %v786 = vpop.permute.xlu0 %785
      %vm803 = vcmask 97344
      %804 = vst.msk [vmem:[#allocation4] sm:$0xff] %vm803, %v756
      %805 = vst.msk [vmem:[#allocation4 + $0x8] sm:$0xff] %vm803, %v758
      %806 = vst.msk [vmem:[#allocation4 + $0x10] sm:$0xff] %vm803, %v760
      %807 = vst.msk [vmem:[#allocation4 + $0x18] sm:$0xff] %vm803, %v762
      %808 = vst.msk [vmem:[#allocation4 + $0x20] sm:$0xff] %vm803, %v764
      %809 = vst.msk [vmem:[#allocation4 + $0x28] sm:$0xff] %vm803, %v766
      %810 = vst.msk [vmem:[#allocation4 + $0x30] sm:$0xff] %vm803, %v768
      %811 = vst.msk [vmem:[#allocation4 + $0x38] sm:$0xff] %vm803, %v770
      %812 = vst.msk [vmem:[#allocation4 + $0x40] sm:$0xff] %vm803, %v772
      %813 = vst.msk [vmem:[#allocation4 + $0x48] sm:$0xff] %vm803, %v774
      %814 = vst.msk [vmem:[#allocation4 + $0x50] sm:$0xff] %vm803, %v776
      %815 = vst.msk [vmem:[#allocation4 + $0x58] sm:$0xff] %vm803, %v778
      %816 = vst.msk [vmem:[#allocation4 + $0x60] sm:$0xff] %vm803, %v780
      %817 = vst.msk [vmem:[#allocation4 + $0x68] sm:$0xff] %vm803, %v782
      %818 = vst.msk [vmem:[#allocation4 + $0x70] sm:$0xff] %vm803, %v784
      %819 = vst.msk [vmem:[#allocation4 + $0x78] sm:$0xff] %vm803, %v786
      %v820 = vld [vmem:[%s422 + $0x7] sm:$0xff]
      %v821 = vld [vmem:[%s422 + $0xf] sm:$0xff]
      %v822 = vld [vmem:[%s422 + $0x27] sm:$0xff]
      %v823 = vld [vmem:[%s422 + $0x2f] sm:$0xff]
      %v824 = vld [vmem:[%s422 + $0x47] sm:$0xff]
      %v825 = vld [vmem:[%s422 + $0x4f] sm:$0xff]
      %v826 = vld [vmem:[%s422 + $0x67] sm:$0xff]
      %v827 = vld [vmem:[%s422 + $0x6f] sm:$0xff]
      %v828 = vld [vmem:[%s422 + $0x87] sm:$0xff]
      %v829 = vld [vmem:[%s422 + $0x8f] sm:$0xff]
      %v830 = vld [vmem:[%s422 + $0xa7] sm:$0xff]
      %v831 = vld [vmem:[%s422 + $0xaf] sm:$0xff]
      %v832 = vld [vmem:[%s422 + $0xc7] sm:$0xff]
      %v833 = vld [vmem:[%s422 + $0xcf] sm:$0xff]
      %v834 = vld [vmem:[%s422 + $0xe7] sm:$0xff]
      %v835 = vld [vmem:[%s422 + $0xef] sm:$0xff]
      %v836 = vld [vmem:[%s422 + $0x107] sm:$0xff]
      %v837 = vld [vmem:[%s422 + $0x10f] sm:$0xff]
      %v838 = vld [vmem:[%s422 + $0x127] sm:$0xff]
      %v839 = vld [vmem:[%s422 + $0x12f] sm:$0xff]
      %v840 = vld [vmem:[%s422 + $0x147] sm:$0xff]
      %v841 = vld [vmem:[%s422 + $0x14f] sm:$0xff]
      %v842 = vld [vmem:[%s422 + $0x167] sm:$0xff]
      %v843 = vld [vmem:[%s422 + $0x16f] sm:$0xff]
      %v844 = vld [vmem:[%s422 + $0x187] sm:$0xff]
      %v845 = vld [vmem:[%s422 + $0x18f] sm:$0xff]
      %v846 = vld [vmem:[%s422 + $0x1a7] sm:$0xff]
      %v847 = vld [vmem:[%s422 + $0x1af] sm:$0xff]
      %v848 = vld [vmem:[%s422 + $0x1c7] sm:$0xff]
      %v849 = vld [vmem:[%s422 + $0x1cf] sm:$0xff]
      %v850 = vld [vmem:[%s422 + $0x1e7] sm:$0xff]
      %v851 = vld [vmem:[%s422 + $0x1ef] sm:$0xff]
      %v852 = vpack.c.bf16 %v821, %v820
      %v853 = vpack.c.bf16 %v823, %v822
      %v854 = vpack.c.bf16 %v825, %v824
      %v855 = vpack.c.bf16 %v827, %v826
      %v856 = vpack.c.bf16 %v829, %v828
      %v857 = vpack.c.bf16 %v831, %v830
      %v858 = vpack.c.bf16 %v833, %v832
      %v859 = vpack.c.bf16 %v835, %v834
      %v860 = vpack.c.bf16 %v837, %v836
      %v861 = vpack.c.bf16 %v839, %v838
      %v862 = vpack.c.bf16 %v841, %v840
      %v863 = vpack.c.bf16 %v843, %v842
      %v864 = vpack.c.bf16 %v845, %v844
      %v865 = vpack.c.bf16 %v847, %v846
      %v866 = vpack.c.bf16 %v849, %v848
      %v867 = vpack.c.bf16 %v851, %v850
      %884 = vrot.lane.b32.xlu0 %v852, 12
      %v885 = vpop.permute.xlu0 %884
      %886 = vrot.lane.b32.xlu0 %v853, 12
      %v887 = vpop.permute.xlu0 %886
      %888 = vrot.lane.b32.xlu0 %v854, 12
      %v889 = vpop.permute.xlu0 %888
      %890 = vrot.lane.b32.xlu0 %v855, 12
      %v891 = vpop.permute.xlu0 %890
      %892 = vrot.lane.b32.xlu0 %v856, 12
      %v893 = vpop.permute.xlu0 %892
      %894 = vrot.lane.b32.xlu0 %v857, 12
      %v895 = vpop.permute.xlu0 %894
      %896 = vrot.lane.b32.xlu0 %v858, 12
      %v897 = vpop.permute.xlu0 %896
      %898 = vrot.lane.b32.xlu0 %v859, 12
      %v899 = vpop.permute.xlu0 %898
      %900 = vrot.lane.b32.xlu0 %v860, 12
      %v901 = vpop.permute.xlu0 %900
      %902 = vrot.lane.b32.xlu0 %v861, 12
      %v903 = vpop.permute.xlu0 %902
      %904 = vrot.lane.b32.xlu0 %v862, 12
      %v905 = vpop.permute.xlu0 %904
      %906 = vrot.lane.b32.xlu0 %v863, 12
      %v907 = vpop.permute.xlu0 %906
      %908 = vrot.lane.b32.xlu0 %v864, 12
      %v909 = vpop.permute.xlu0 %908
      %910 = vrot.lane.b32.xlu0 %v865, 12
      %v911 = vpop.permute.xlu0 %910
      %912 = vrot.lane.b32.xlu0 %v866, 12
      %v913 = vpop.permute.xlu0 %912
      %914 = vrot.lane.b32.xlu0 %v867, 12
      %v915 = vpop.permute.xlu0 %914
      %vm932 = vcmask 130144
      %933 = vst.msk [vmem:[#allocation4] sm:$0xff] %vm932, %v885
      %934 = vst.msk [vmem:[#allocation4 + $0x8] sm:$0xff] %vm932, %v887
      %935 = vst.msk [vmem:[#allocation4 + $0x10] sm:$0xff] %vm932, %v889
      %936 = vst.msk [vmem:[#allocation4 + $0x18] sm:$0xff] %vm932, %v891
      %937 = vst.msk [vmem:[#allocation4 + $0x20] sm:$0xff] %vm932, %v893
      %938 = vst.msk [vmem:[#allocation4 + $0x28] sm:$0xff] %vm932, %v895
      %939 = vst.msk [vmem:[#allocation4 + $0x30] sm:$0xff] %vm932, %v897
      %940 = vst.msk [vmem:[#allocation4 + $0x38] sm:$0xff] %vm932, %v899
      %941 = vst.msk [vmem:[#allocation4 + $0x40] sm:$0xff] %vm932, %v901
      %942 = vst.msk [vmem:[#allocation4 + $0x48] sm:$0xff] %vm932, %v903
      %943 = vst.msk [vmem:[#allocation4 + $0x50] sm:$0xff] %vm932, %v905
      %944 = vst.msk [vmem:[#allocation4 + $0x58] sm:$0xff] %vm932, %v907
      %945 = vst.msk [vmem:[#allocation4 + $0x60] sm:$0xff] %vm932, %v909
      %946 = vst.msk [vmem:[#allocation4 + $0x68] sm:$0xff] %vm932, %v911
      %947 = vst.msk [vmem:[#allocation4 + $0x70] sm:$0xff] %vm932, %v913
      %948 = vst.msk [vmem:[#allocation4 + $0x78] sm:$0xff] %vm932, %v915
      %v949 = vld [vmem:[%s422 + $0x8] sm:$0xff]
      %v950 = vld [vmem:[%s422 + $0x10] sm:$0xff]
      %v951 = vld [vmem:[%s422 + $0x28] sm:$0xff]
      %v952 = vld [vmem:[%s422 + $0x30] sm:$0xff]
      %v953 = vld [vmem:[%s422 + $0x48] sm:$0xff]
      %v954 = vld [vmem:[%s422 + $0x50] sm:$0xff]
      %v955 = vld [vmem:[%s422 + $0x68] sm:$0xff]
      %v956 = vld [vmem:[%s422 + $0x70] sm:$0xff]
      %v957 = vld [vmem:[%s422 + $0x88] sm:$0xff]
      %v958 = vld [vmem:[%s422 + $0x90] sm:$0xff]
      %v959 = vld [vmem:[%s422 + $0xa8] sm:$0xff]
      %v960 = vld [vmem:[%s422 + $0xb0] sm:$0xff]
      %v961 = vld [vmem:[%s422 + $0xc8] sm:$0xff]
      %v962 = vld [vmem:[%s422 + $0xd0] sm:$0xff]
      %v963 = vld [vmem:[%s422 + $0xe8] sm:$0xff]
      %v964 = vld [vmem:[%s422 + $0xf0] sm:$0xff]
      %v965 = vld [vmem:[%s422 + $0x108] sm:$0xff]
      %v966 = vld [vmem:[%s422 + $0x110] sm:$0xff]
      %v967 = vld [vmem:[%s422 + $0x128] sm:$0xff]
      %v968 = vld [vmem:[%s422 + $0x130] sm:$0xff]
      %v969 = vld [vmem:[%s422 + $0x148] sm:$0xff]
      %v970 = vld [vmem:[%s422 + $0x150] sm:$0xff]
      %v971 = vld [vmem:[%s422 + $0x168] sm:$0xff]
      %v972 = vld [vmem:[%s422 + $0x170] sm:$0xff]
      %v973 = vld [vmem:[%s422 + $0x188] sm:$0xff]
      %v974 = vld [vmem:[%s422 + $0x190] sm:$0xff]
      %v975 = vld [vmem:[%s422 + $0x1a8] sm:$0xff]
      %v976 = vld [vmem:[%s422 + $0x1b0] sm:$0xff]
      %v977 = vld [vmem:[%s422 + $0x1c8] sm:$0xff]
      %v978 = vld [vmem:[%s422 + $0x1d0] sm:$0xff]
      %v979 = vld [vmem:[%s422 + $0x1e8] sm:$0xff]
      %v980 = vld [vmem:[%s422 + $0x1f0] sm:$0xff]
      %v981 = vpack.c.bf16 %v950, %v949
      %v982 = vpack.c.bf16 %v952, %v951
      %v983 = vpack.c.bf16 %v954, %v953
      %v984 = vpack.c.bf16 %v956, %v955
      %v985 = vpack.c.bf16 %v958, %v957
      %v986 = vpack.c.bf16 %v960, %v959
      %v987 = vpack.c.bf16 %v962, %v961
      %v988 = vpack.c.bf16 %v964, %v963
      %v989 = vpack.c.bf16 %v966, %v965
      %v990 = vpack.c.bf16 %v968, %v967
      %v991 = vpack.c.bf16 %v970, %v969
      %v992 = vpack.c.bf16 %v972, %v971
      %v993 = vpack.c.bf16 %v974, %v973
      %v994 = vpack.c.bf16 %v976, %v975
      %v995 = vpack.c.bf16 %v978, %v977
      %v996 = vpack.c.bf16 %v980, %v979
      %1013 = vrot.lane.b32.xlu0 %v981, 16
      %v1014 = vpop.permute.xlu0 %1013
      %1015 = vrot.lane.b32.xlu0 %v982, 16
      %v1016 = vpop.permute.xlu0 %1015
      %1017 = vrot.lane.b32.xlu0 %v983, 16
      %v1018 = vpop.permute.xlu0 %1017
      %1019 = vrot.lane.b32.xlu0 %v984, 16
      %v1020 = vpop.permute.xlu0 %1019
      %1021 = vrot.lane.b32.xlu0 %v985, 16
      %v1022 = vpop.permute.xlu0 %1021
      %1023 = vrot.lane.b32.xlu0 %v986, 16
      %v1024 = vpop.permute.xlu0 %1023
      %1025 = vrot.lane.b32.xlu0 %v987, 16
      %v1026 = vpop.permute.xlu0 %1025
      %1027 = vrot.lane.b32.xlu0 %v988, 16
      %v1028 = vpop.permute.xlu0 %1027
      %1029 = vrot.lane.b32.xlu0 %v989, 16
      %v1030 = vpop.permute.xlu0 %1029
      %1031 = vrot.lane.b32.xlu0 %v990, 16
      %v1032 = vpop.permute.xlu0 %1031
      %1033 = vrot.lane.b32.xlu0 %v991, 16
      %v1034 = vpop.permute.xlu0 %1033
      %1035 = vrot.lane.b32.xlu0 %v992, 16
      %v1036 = vpop.permute.xlu0 %1035
      %1037 = vrot.lane.b32.xlu0 %v993, 16
      %v1038 = vpop.permute.xlu0 %1037
      %1039 = vrot.lane.b32.xlu0 %v994, 16
      %v1040 = vpop.permute.xlu0 %1039
      %1041 = vrot.lane.b32.xlu0 %v995, 16
      %v1042 = vpop.permute.xlu0 %1041
      %1043 = vrot.lane.b32.xlu0 %v996, 16
      %v1044 = vpop.permute.xlu0 %1043
      %vm1061 = vcmask 162944
      %1062 = vst.msk [vmem:[#allocation4] sm:$0xff] %vm1061, %v1014
      %1063 = vst.msk [vmem:[#allocation4 + $0x8] sm:$0xff] %vm1061, %v1016
      %1064 = vst.msk [vmem:[#allocation4 + $0x10] sm:$0xff] %vm1061, %v1018
      %1065 = vst.msk [vmem:[#allocation4 + $0x18] sm:$0xff] %vm1061, %v1020
      %1066 = vst.msk [vmem:[#allocation4 + $0x20] sm:$0xff] %vm1061, %v1022
      %1067 = vst.msk [vmem:[#allocation4 + $0x28] sm:$0xff] %vm1061, %v1024
      %1068 = vst.msk [vmem:[#allocation4 + $0x30] sm:$0xff] %vm1061, %v1026
      %1069 = vst.msk [vmem:[#allocation4 + $0x38] sm:$0xff] %vm1061, %v1028
      %1070 = vst.msk [vmem:[#allocation4 + $0x40] sm:$0xff] %vm1061, %v1030
      %1071 = vst.msk [vmem:[#allocation4 + $0x48] sm:$0xff] %vm1061, %v1032
      %1072 = vst.msk [vmem:[#allocation4 + $0x50] sm:$0xff] %vm1061, %v1034
      %1073 = vst.msk [vmem:[#allocation4 + $0x58] sm:$0xff] %vm1061, %v1036
      %1074 = vst.msk [vmem:[#allocation4 + $0x60] sm:$0xff] %vm1061, %v1038
      %1075 = vst.msk [vmem:[#allocation4 + $0x68] sm:$0xff] %vm1061, %v1040
      %1076 = vst.msk [vmem:[#allocation4 + $0x70] sm:$0xff] %vm1061, %v1042
      %1077 = vst.msk [vmem:[#allocation4 + $0x78] sm:$0xff] %vm1061, %v1044
      %v1078 = vld [vmem:[%s422 + $0x9] sm:$0xff]
      %v1079 = vld [vmem:[%s422 + $0x11] sm:$0xff]
      %v1080 = vld [vmem:[%s422 + $0x29] sm:$0xff]
      %v1081 = vld [vmem:[%s422 + $0x31] sm:$0xff]
      %v1082 = vld [vmem:[%s422 + $0x49] sm:$0xff]
      %v1083 = vld [vmem:[%s422 + $0x51] sm:$0xff]
      %v1084 = vld [vmem:[%s422 + $0x69] sm:$0xff]
      %v1085 = vld [vmem:[%s422 + $0x71] sm:$0xff]
      %v1086 = vld [vmem:[%s422 + $0x89] sm:$0xff]
      %v1087 = vld [vmem:[%s422 + $0x91] sm:$0xff]
      %v1088 = vld [vmem:[%s422 + $0xa9] sm:$0xff]
      %v1089 = vld [vmem:[%s422 + $0xb1] sm:$0xff]
      %v1090 = vld [vmem:[%s422 + $0xc9] sm:$0xff]
      %v1091 = vld [vmem:[%s422 + $0xd1] sm:$0xff]
      %v1092 = vld [vmem:[%s422 + $0xe9] sm:$0xff]
      %v1093 = vld [vmem:[%s422 + $0xf1] sm:$0xff]
      %v1094 = vld [vmem:[%s422 + $0x109] sm:$0xff]
      %v1095 = vld [vmem:[%s422 + $0x111] sm:$0xff]
      %v1096 = vld [vmem:[%s422 + $0x129] sm:$0xff]
      %v1097 = vld [vmem:[%s422 + $0x131] sm:$0xff]
      %v1098 = vld [vmem:[%s422 + $0x149] sm:$0xff]
      %v1099 = vld [vmem:[%s422 + $0x151] sm:$0xff]
      %v1100 = vld [vmem:[%s422 + $0x169] sm:$0xff]
      %v1101 = vld [vmem:[%s422 + $0x171] sm:$0xff]
      %v1102 = vld [vmem:[%s422 + $0x189] sm:$0xff]
      %v1103 = vld [vmem:[%s422 + $0x191] sm:$0xff]
      %v1104 = vld [vmem:[%s422 + $0x1a9] sm:$0xff]
      %v1105 = vld [vmem:[%s422 + $0x1b1] sm:$0xff]
      %v1106 = vld [vmem:[%s422 + $0x1c9] sm:$0xff]
      %v1107 = vld [vmem:[%s422 + $0x1d1] sm:$0xff]
      %v1108 = vld [vmem:[%s422 + $0x1e9] sm:$0xff]
      %v1109 = vld [vmem:[%s422 + $0x1f1] sm:$0xff]
      %v1110 = vpack.c.bf16 %v1079, %v1078
      %v1111 = vpack.c.bf16 %v1081, %v1080
      %v1112 = vpack.c.bf16 %v1083, %v1082
      %v1113 = vpack.c.bf16 %v1085, %v1084
      %v1114 = vpack.c.bf16 %v1087, %v1086
      %v1115 = vpack.c.bf16 %v1089, %v1088
      %v1116 = vpack.c.bf16 %v1091, %v1090
      %v1117 = vpack.c.bf16 %v1093, %v1092
      %v1118 = vpack.c.bf16 %v1095, %v1094
      %v1119 = vpack.c.bf16 %v1097, %v1096
      %v1120 = vpack.c.bf16 %v1099, %v1098
      %v1121 = vpack.c.bf16 %v1101, %v1100
      %v1122 = vpack.c.bf16 %v1103, %v1102
      %v1123 = vpack.c.bf16 %v1105, %v1104
      %v1124 = vpack.c.bf16 %v1107, %v1106
      %v1125 = vpack.c.bf16 %v1109, %v1108
      %1142 = vrot.lane.b32.xlu0 %v1110, 20
      %v1143 = vpop.permute.xlu0 %1142
      %1144 = vrot.lane.b32.xlu0 %v1111, 20
      %v1145 = vpop.permute.xlu0 %1144
      %1146 = vrot.lane.b32.xlu0 %v1112, 20
      %v1147 = vpop.permute.xlu0 %1146
      %1148 = vrot.lane.b32.xlu0 %v1113, 20
      %v1149 = vpop.permute.xlu0 %1148
      %1150 = vrot.lane.b32.xlu0 %v1114, 20
      %v1151 = vpop.permute.xlu0 %1150
      %1152 = vrot.lane.b32.xlu0 %v1115, 20
      %v1153 = vpop.permute.xlu0 %1152
      %1154 = vrot.lane.b32.xlu0 %v1116, 20
      %v1155 = vpop.permute.xlu0 %1154
      %1156 = vrot.lane.b32.xlu0 %v1117, 20
      %v1157 = vpop.permute.xlu0 %1156
      %1158 = vrot.lane.b32.xlu0 %v1118, 20
      %v1159 = vpop.permute.xlu0 %1158
      %1160 = vrot.lane.b32.xlu0 %v1119, 20
      %v1161 = vpop.permute.xlu0 %1160
      %1162 = vrot.lane.b32.xlu0 %v1120, 20
      %v1163 = vpop.permute.xlu0 %1162
      %1164 = vrot.lane.b32.xlu0 %v1121, 20
      %v1165 = vpop.permute.xlu0 %1164
      %1166 = vrot.lane.b32.xlu0 %v1122, 20
      %v1167 = vpop.permute.xlu0 %1166
      %1168 = vrot.lane.b32.xlu0 %v1123, 20
      %v1169 = vpop.permute.xlu0 %1168
      %1170 = vrot.lane.b32.xlu0 %v1124, 20
      %v1171 = vpop.permute.xlu0 %1170
      %1172 = vrot.lane.b32.xlu0 %v1125, 20
      %v1173 = vpop.permute.xlu0 %1172
      %vm1190 = vcmask 195744
      %1191 = vst.msk [vmem:[#allocation4] sm:$0xff] %vm1190, %v1143
      %1192 = vst.msk [vmem:[#allocation4 + $0x8] sm:$0xff] %vm1190, %v1145
      %1193 = vst.msk [vmem:[#allocation4 + $0x10] sm:$0xff] %vm1190, %v1147
      %1194 = vst.msk [vmem:[#allocation4 + $0x18] sm:$0xff] %vm1190, %v1149
      %1195 = vst.msk [vmem:[#allocation4 + $0x20] sm:$0xff] %vm1190, %v1151
      %1196 = vst.msk [vmem:[#allocation4 + $0x28] sm:$0xff] %vm1190, %v1153
      %1197 = vst.msk [vmem:[#allocation4 + $0x30] sm:$0xff] %vm1190, %v1155
      %1198 = vst.msk [vmem:[#allocation4 + $0x38] sm:$0xff] %vm1190, %v1157
      %1199 = vst.msk [vmem:[#allocation4 + $0x40] sm:$0xff] %vm1190, %v1159
      %1200 = vst.msk [vmem:[#allocation4 + $0x48] sm:$0xff] %vm1190, %v1161
      %1201 = vst.msk [vmem:[#allocation4 + $0x50] sm:$0xff] %vm1190, %v1163
      %1202 = vst.msk [vmem:[#allocation4 + $0x58] sm:$0xff] %vm1190, %v1165
      %1203 = vst.msk [vmem:[#allocation4 + $0x60] sm:$0xff] %vm1190, %v1167
      %1204 = vst.msk [vmem:[#allocation4 + $0x68] sm:$0xff] %vm1190, %v1169
      %1205 = vst.msk [vmem:[#allocation4 + $0x70] sm:$0xff] %vm1190, %v1171
      %1206 = vst.msk [vmem:[#allocation4 + $0x78] sm:$0xff] %vm1190, %v1173
      %s1207 = scalar_lea.vmem [#allocation2], 64
      %v1208 = vld [vmem:[%s1207 + $0x7] sm:$0xff]
      %v1209 = vld [vmem:[%s1207 + $0xf] sm:$0xff]
      %v1210 = vld [vmem:[%s1207 + $0x27] sm:$0xff]
      %v1211 = vld [vmem:[%s1207 + $0x2f] sm:$0xff]
      %v1212 = vld [vmem:[%s1207 + $0x47] sm:$0xff]
      %v1213 = vld [vmem:[%s1207 + $0x4f] sm:$0xff]
      %v1214 = vld [vmem:[%s1207 + $0x67] sm:$0xff]
      %v1215 = vld [vmem:[%s1207 + $0x6f] sm:$0xff]
      %v1216 = vld [vmem:[%s1207 + $0x87] sm:$0xff]
      %v1217 = vld [vmem:[%s1207 + $0x8f] sm:$0xff]
      %v1218 = vld [vmem:[%s1207 + $0xa7] sm:$0xff]
      %v1219 = vld [vmem:[%s1207 + $0xaf] sm:$0xff]
      %v1220 = vld [vmem:[%s1207 + $0xc7] sm:$0xff]
      %v1221 = vld [vmem:[%s1207 + $0xcf] sm:$0xff]
      %v1222 = vld [vmem:[%s1207 + $0xe7] sm:$0xff]
      %v1223 = vld [vmem:[%s1207 + $0xef] sm:$0xff]
      %v1224 = vld [vmem:[%s1207 + $0x107] sm:$0xff]
      %v1225 = vld [vmem:[%s1207 + $0x10f] sm:$0xff]
      %v1226 = vld [vmem:[%s1207 + $0x127] sm:$0xff]
      %v1227 = vld [vmem:[%s1207 + $0x12f] sm:$0xff]
      %v1228 = vld [vmem:[%s1207 + $0x147] sm:$0xff]
      %v1229 = vld [vmem:[%s1207 + $0x14f] sm:$0xff]
      %v1230 = vld [vmem:[%s1207 + $0x167] sm:$0xff]
      %v1231 = vld [vmem:[%s1207 + $0x16f] sm:$0xff]
      %v1232 = vld [vmem:[%s1207 + $0x187] sm:$0xff]
      %v1233 = vld [vmem:[%s1207 + $0x18f] sm:$0xff]
      %v1234 = vld [vmem:[%s1207 + $0x1a7] sm:$0xff]
      %v1235 = vld [vmem:[%s1207 + $0x1af] sm:$0xff]
      %v1236 = vld [vmem:[%s1207 + $0x1c7] sm:$0xff]
      %v1237 = vld [vmem:[%s1207 + $0x1cf] sm:$0xff]
      %v1238 = vld [vmem:[%s1207 + $0x1e7] sm:$0xff]
      %v1239 = vld [vmem:[%s1207 + $0x1ef] sm:$0xff]
      %v1240 = vpack.c.bf16 %v1209, %v1208
      %v1241 = vpack.c.bf16 %v1211, %v1210
      %v1242 = vpack.c.bf16 %v1213, %v1212
      %v1243 = vpack.c.bf16 %v1215, %v1214
      %v1244 = vpack.c.bf16 %v1217, %v1216
      %v1245 = vpack.c.bf16 %v1219, %v1218
      %v1246 = vpack.c.bf16 %v1221, %v1220
      %v1247 = vpack.c.bf16 %v1223, %v1222
      %v1248 = vpack.c.bf16 %v1225, %v1224
      %v1249 = vpack.c.bf16 %v1227, %v1226
      %v1250 = vpack.c.bf16 %v1229, %v1228
      %v1251 = vpack.c.bf16 %v1231, %v1230
      %v1252 = vpack.c.bf16 %v1233, %v1232
      %v1253 = vpack.c.bf16 %v1235, %v1234
      %v1254 = vpack.c.bf16 %v1237, %v1236
      %v1255 = vpack.c.bf16 %v1239, %v1238
      %1272 = vrot.lane.b32.xlu0 %v1240, 24
      %v1273 = vpop.permute.xlu0 %1272
      %1274 = vrot.lane.b32.xlu0 %v1241, 24
      %v1275 = vpop.permute.xlu0 %1274
      %1276 = vrot.lane.b32.xlu0 %v1242, 24
      %v1277 = vpop.permute.xlu0 %1276
      %1278 = vrot.lane.b32.xlu0 %v1243, 24
      %v1279 = vpop.permute.xlu0 %1278
      %1280 = vrot.lane.b32.xlu0 %v1244, 24
      %v1281 = vpop.permute.xlu0 %1280
      %1282 = vrot.lane.b32.xlu0 %v1245, 24
      %v1283 = vpop.permute.xlu0 %1282
      %1284 = vrot.lane.b32.xlu0 %v1246, 24
      %v1285 = vpop.permute.xlu0 %1284
      %1286 = vrot.lane.b32.xlu0 %v1247, 24
      %v1287 = vpop.permute.xlu0 %1286
      %1288 = vrot.lane.b32.xlu0 %v1248, 24
      %v1289 = vpop.permute.xlu0 %1288
      %1290 = vrot.lane.b32.xlu0 %v1249, 24
      %v1291 = vpop.permute.xlu0 %1290
      %1292 = vrot.lane.b32.xlu0 %v1250, 24
      %v1293 = vpop.permute.xlu0 %1292
      %1294 = vrot.lane.b32.xlu0 %v1251, 24
      %v1295 = vpop.permute.xlu0 %1294
      %1296 = vrot.lane.b32.xlu0 %v1252, 24
      %v1297 = vpop.permute.xlu0 %1296
      %1298 = vrot.lane.b32.xlu0 %v1253, 24
      %v1299 = vpop.permute.xlu0 %1298
      %1300 = vrot.lane.b32.xlu0 %v1254, 24
      %v1301 = vpop.permute.xlu0 %1300
      %1302 = vrot.lane.b32.xlu0 %v1255, 24
      %v1303 = vpop.permute.xlu0 %1302
      %vm1320 = vcmask 228544
      %1321 = vst.msk [vmem:[#allocation4] sm:$0xff] %vm1320, %v1273
      %1322 = vst.msk [vmem:[#allocation4 + $0x8] sm:$0xff] %vm1320, %v1275
      %1323 = vst.msk [vmem:[#allocation4 + $0x10] sm:$0xff] %vm1320, %v1277
      %1324 = vst.msk [vmem:[#allocation4 + $0x18] sm:$0xff] %vm1320, %v1279
      %1325 = vst.msk [vmem:[#allocation4 + $0x20] sm:$0xff] %vm1320, %v1281
      %1326 = vst.msk [vmem:[#allocation4 + $0x28] sm:$0xff] %vm1320, %v1283
      %1327 = vst.msk [vmem:[#allocation4 + $0x30] sm:$0xff] %vm1320, %v1285
      %1328 = vst.msk [vmem:[#allocation4 + $0x38] sm:$0xff] %vm1320, %v1287
      %1329 = vst.msk [vmem:[#allocation4 + $0x40] sm:$0xff] %vm1320, %v1289
      %1330 = vst.msk [vmem:[#allocation4 + $0x48] sm:$0xff] %vm1320, %v1291
      %1331 = vst.msk [vmem:[#allocation4 + $0x50] sm:$0xff] %vm1320, %v1293
      %1332 = vst.msk [vmem:[#allocation4 + $0x58] sm:$0xff] %vm1320, %v1295
      %1333 = vst.msk [vmem:[#allocation4 + $0x60] sm:$0xff] %vm1320, %v1297
      %1334 = vst.msk [vmem:[#allocation4 + $0x68] sm:$0xff] %vm1320, %v1299
      %1335 = vst.msk [vmem:[#allocation4 + $0x70] sm:$0xff] %vm1320, %v1301
      %1336 = vst.msk [vmem:[#allocation4 + $0x78] sm:$0xff] %vm1320, %v1303
      %v1337 = vld [vmem:[%s1207 + $0x8] sm:$0xff]
      %v1338 = vld [vmem:[%s1207 + $0x10] sm:$0xff]
      %v1339 = vld [vmem:[%s1207 + $0x28] sm:$0xff]
      %v1340 = vld [vmem:[%s1207 + $0x30] sm:$0xff]
      %v1341 = vld [vmem:[%s1207 + $0x48] sm:$0xff]
      %v1342 = vld [vmem:[%s1207 + $0x50] sm:$0xff]
      %v1343 = vld [vmem:[%s1207 + $0x68] sm:$0xff]
      %v1344 = vld [vmem:[%s1207 + $0x70] sm:$0xff]
      %v1345 = vld [vmem:[%s1207 + $0x88] sm:$0xff]
      %v1346 = vld [vmem:[%s1207 + $0x90] sm:$0xff]
      %v1347 = vld [vmem:[%s1207 + $0xa8] sm:$0xff]
      %v1348 = vld [vmem:[%s1207 + $0xb0] sm:$0xff]
      %v1349 = vld [vmem:[%s1207 + $0xc8] sm:$0xff]
      %v1350 = vld [vmem:[%s1207 + $0xd0] sm:$0xff]
      %v1351 = vld [vmem:[%s1207 + $0xe8] sm:$0xff]
      %v1352 = vld [vmem:[%s1207 + $0xf0] sm:$0xff]
      %v1353 = vld [vmem:[%s1207 + $0x108] sm:$0xff]
      %v1354 = vld [vmem:[%s1207 + $0x110] sm:$0xff]
      %v1355 = vld [vmem:[%s1207 + $0x128] sm:$0xff]
      %v1356 = vld [vmem:[%s1207 + $0x130] sm:$0xff]
      %v1357 = vld [vmem:[%s1207 + $0x148] sm:$0xff]
      %v1358 = vld [vmem:[%s1207 + $0x150] sm:$0xff]
      %v1359 = vld [vmem:[%s1207 + $0x168] sm:$0xff]
      %v1360 = vld [vmem:[%s1207 + $0x170] sm:$0xff]
      %v1361 = vld [vmem:[%s1207 + $0x188] sm:$0xff]
      %v1362 = vld [vmem:[%s1207 + $0x190] sm:$0xff]
      %v1363 = vld [vmem:[%s1207 + $0x1a8] sm:$0xff]
      %v1364 = vld [vmem:[%s1207 + $0x1b0] sm:$0xff]
      %v1365 = vld [vmem:[%s1207 + $0x1c8] sm:$0xff]
      %v1366 = vld [vmem:[%s1207 + $0x1d0] sm:$0xff]
      %v1367 = vld [vmem:[%s1207 + $0x1e8] sm:$0xff]
      %v1368 = vld [vmem:[%s1207 + $0x1f0] sm:$0xff]
      %v1369 = vpack.c.bf16 %v1338, %v1337
      %v1370 = vpack.c.bf16 %v1340, %v1339
      %v1371 = vpack.c.bf16 %v1342, %v1341
      %v1372 = vpack.c.bf16 %v1344, %v1343
      %v1373 = vpack.c.bf16 %v1346, %v1345
      %v1374 = vpack.c.bf16 %v1348, %v1347
      %v1375 = vpack.c.bf16 %v1350, %v1349
      %v1376 = vpack.c.bf16 %v1352, %v1351
      %v1377 = vpack.c.bf16 %v1354, %v1353
      %v1378 = vpack.c.bf16 %v1356, %v1355
      %v1379 = vpack.c.bf16 %v1358, %v1357
      %v1380 = vpack.c.bf16 %v1360, %v1359
      %v1381 = vpack.c.bf16 %v1362, %v1361
      %v1382 = vpack.c.bf16 %v1364, %v1363
      %v1383 = vpack.c.bf16 %v1366, %v1365
      %v1384 = vpack.c.bf16 %v1368, %v1367
      %1401 = vrot.lane.b32.xlu0 %v1369, 28
      %v1402 = vpop.permute.xlu0 %1401
      %1403 = vrot.lane.b32.xlu0 %v1370, 28
      %v1404 = vpop.permute.xlu0 %1403
      %1405 = vrot.lane.b32.xlu0 %v1371, 28
      %v1406 = vpop.permute.xlu0 %1405
      %1407 = vrot.lane.b32.xlu0 %v1372, 28
      %v1408 = vpop.permute.xlu0 %1407
      %1409 = vrot.lane.b32.xlu0 %v1373, 28
      %v1410 = vpop.permute.xlu0 %1409
      %1411 = vrot.lane.b32.xlu0 %v1374, 28
      %v1412 = vpop.permute.xlu0 %1411
      %1413 = vrot.lane.b32.xlu0 %v1375, 28
      %v1414 = vpop.permute.xlu0 %1413
      %1415 = vrot.lane.b32.xlu0 %v1376, 28
      %v1416 = vpop.permute.xlu0 %1415
      %1417 = vrot.lane.b32.xlu0 %v1377, 28
      %v1418 = vpop.permute.xlu0 %1417
      %1419 = vrot.lane.b32.xlu0 %v1378, 28
      %v1420 = vpop.permute.xlu0 %1419
      %1421 = vrot.lane.b32.xlu0 %v1379, 28
      %v1422 = vpop.permute.xlu0 %1421
      %1423 = vrot.lane.b32.xlu0 %v1380, 28
      %v1424 = vpop.permute.xlu0 %1423
      %1425 = vrot.lane.b32.xlu0 %v1381, 28
      %v1426 = vpop.permute.xlu0 %1425
      %1427 = vrot.lane.b32.xlu0 %v1382, 28
      %v1428 = vpop.permute.xlu0 %1427
      %1429 = vrot.lane.b32.xlu0 %v1383, 28
      %v1430 = vpop.permute.xlu0 %1429
      %1431 = vrot.lane.b32.xlu0 %v1384, 28
      %v1432 = vpop.permute.xlu0 %1431
      %vm1449 = vcmask 261344
      %1450 = vst.msk [vmem:[#allocation4] sm:$0xff] %vm1449, %v1402
      %1451 = vst.msk [vmem:[#allocation4 + $0x8] sm:$0xff] %vm1449, %v1404
      %1452 = vst.msk [vmem:[#allocation4 + $0x10] sm:$0xff] %vm1449, %v1406
      %1453 = vst.msk [vmem:[#allocation4 + $0x18] sm:$0xff] %vm1449, %v1408
      %1454 = vst.msk [vmem:[#allocation4 + $0x20] sm:$0xff] %vm1449, %v1410
      %1455 = vst.msk [vmem:[#allocation4 + $0x28] sm:$0xff] %vm1449, %v1412
      %1456 = vst.msk [vmem:[#allocation4 + $0x30] sm:$0xff] %vm1449, %v1414
      %1457 = vst.msk [vmem:[#allocation4 + $0x38] sm:$0xff] %vm1449, %v1416
      %1458 = vst.msk [vmem:[#allocation4 + $0x40] sm:$0xff] %vm1449, %v1418
      %1459 = vst.msk [vmem:[#allocation4 + $0x48] sm:$0xff] %vm1449, %v1420
      %1460 = vst.msk [vmem:[#allocation4 + $0x50] sm:$0xff] %vm1449, %v1422
      %1461 = vst.msk [vmem:[#allocation4 + $0x58] sm:$0xff] %vm1449, %v1424
      %1462 = vst.msk [vmem:[#allocation4 + $0x60] sm:$0xff] %vm1449, %v1426
      %1463 = vst.msk [vmem:[#allocation4 + $0x68] sm:$0xff] %vm1449, %v1428
      %1464 = vst.msk [vmem:[#allocation4 + $0x70] sm:$0xff] %vm1449, %v1430
      %1465 = vst.msk [vmem:[#allocation4 + $0x78] sm:$0xff] %vm1449, %v1432
      %v1466 = vld [vmem:[%s1207 + $0x9] sm:$0xff]
      %v1467 = vld [vmem:[%s1207 + $0x11] sm:$0xff]
      %v1468 = vld [vmem:[%s1207 + $0x29] sm:$0xff]
      %v1469 = vld [vmem:[%s1207 + $0x31] sm:$0xff]
      %v1470 = vld [vmem:[%s1207 + $0x49] sm:$0xff]
      %v1471 = vld [vmem:[%s1207 + $0x51] sm:$0xff]
      %v1472 = vld [vmem:[%s1207 + $0x69] sm:$0xff]
      %v1473 = vld [vmem:[%s1207 + $0x71] sm:$0xff]
      %v1474 = vld [vmem:[%s1207 + $0x89] sm:$0xff]
      %v1475 = vld [vmem:[%s1207 + $0x91] sm:$0xff]
      %v1476 = vld [vmem:[%s1207 + $0xa9] sm:$0xff]
      %v1477 = vld [vmem:[%s1207 + $0xb1] sm:$0xff]
      %v1478 = vld [vmem:[%s1207 + $0xc9] sm:$0xff]
      %v1479 = vld [vmem:[%s1207 + $0xd1] sm:$0xff]
      %v1480 = vld [vmem:[%s1207 + $0xe9] sm:$0xff]
      %v1481 = vld [vmem:[%s1207 + $0xf1] sm:$0xff]
      %v1482 = vld [vmem:[%s1207 + $0x109] sm:$0xff]
      %v1483 = vld [vmem:[%s1207 + $0x111] sm:$0xff]
      %v1484 = vld [vmem:[%s1207 + $0x129] sm:$0xff]
      %v1485 = vld [vmem:[%s1207 + $0x131] sm:$0xff]
      %v1486 = vld [vmem:[%s1207 + $0x149] sm:$0xff]
      %v1487 = vld [vmem:[%s1207 + $0x151] sm:$0xff]
      %v1488 = vld [vmem:[%s1207 + $0x169] sm:$0xff]
      %v1489 = vld [vmem:[%s1207 + $0x171] sm:$0xff]
      %v1490 = vld [vmem:[%s1207 + $0x189] sm:$0xff]
      %v1491 = vld [vmem:[%s1207 + $0x191] sm:$0xff]
      %v1492 = vld [vmem:[%s1207 + $0x1a9] sm:$0xff]
      %v1493 = vld [vmem:[%s1207 + $0x1b1] sm:$0xff]
      %v1494 = vld [vmem:[%s1207 + $0x1c9] sm:$0xff]
      %v1495 = vld [vmem:[%s1207 + $0x1d1] sm:$0xff]
      %v1496 = vld [vmem:[%s1207 + $0x1e9] sm:$0xff]
      %v1497 = vld [vmem:[%s1207 + $0x1f1] sm:$0xff]
      %v1498 = vpack.c.bf16 %v1467, %v1466
      %v1499 = vpack.c.bf16 %v1469, %v1468
      %v1500 = vpack.c.bf16 %v1471, %v1470
      %v1501 = vpack.c.bf16 %v1473, %v1472
      %v1502 = vpack.c.bf16 %v1475, %v1474
      %v1503 = vpack.c.bf16 %v1477, %v1476
      %v1504 = vpack.c.bf16 %v1479, %v1478
      %v1505 = vpack.c.bf16 %v1481, %v1480
      %v1506 = vpack.c.bf16 %v1483, %v1482
      %v1507 = vpack.c.bf16 %v1485, %v1484
      %v1508 = vpack.c.bf16 %v1487, %v1486
      %v1509 = vpack.c.bf16 %v1489, %v1488
      %v1510 = vpack.c.bf16 %v1491, %v1490
      %v1511 = vpack.c.bf16 %v1493, %v1492
      %v1512 = vpack.c.bf16 %v1495, %v1494
      %v1513 = vpack.c.bf16 %v1497, %v1496
      %1530 = vrot.lane.b32.xlu0 %v1498, 32
      %v1531 = vpop.permute.xlu0 %1530
      %1532 = vrot.lane.b32.xlu0 %v1499, 32
      %v1533 = vpop.permute.xlu0 %1532
      %1534 = vrot.lane.b32.xlu0 %v1500, 32
      %v1535 = vpop.permute.xlu0 %1534
      %1536 = vrot.lane.b32.xlu0 %v1501, 32
      %v1537 = vpop.permute.xlu0 %1536
      %1538 = vrot.lane.b32.xlu0 %v1502, 32
      %v1539 = vpop.permute.xlu0 %1538
      %1540 = vrot.lane.b32.xlu0 %v1503, 32
      %v1541 = vpop.permute.xlu0 %1540
      %1542 = vrot.lane.b32.xlu0 %v1504, 32
      %v1543 = vpop.permute.xlu0 %1542
      %1544 = vrot.lane.b32.xlu0 %v1505, 32
      %v1545 = vpop.permute.xlu0 %1544
      %1546 = vrot.lane.b32.xlu0 %v1506, 32
      %v1547 = vpop.permute.xlu0 %1546
      %1548 = vrot.lane.b32.xlu0 %v1507, 32
      %v1549 = vpop.permute.xlu0 %1548
      %1550 = vrot.lane.b32.xlu0 %v1508, 32
      %v1551 = vpop.permute.xlu0 %1550
      %1552 = vrot.lane.b32.xlu0 %v1509, 32
      %v1553 = vpop.permute.xlu0 %1552
      %1554 = vrot.lane.b32.xlu0 %v1510, 32
      %v1555 = vpop.permute.xlu0 %1554
      %1556 = vrot.lane.b32.xlu0 %v1511, 32
      %v1557 = vpop.permute.xlu0 %1556
      %1558 = vrot.lane.b32.xlu0 %v1512, 32
      %v1559 = vpop.permute.xlu0 %1558
      %1560 = vrot.lane.b32.xlu0 %v1513, 32
      %v1561 = vpop.permute.xlu0 %1560
      %vm1578 = vcmask 294144
      %1579 = vst.msk [vmem:[#allocation4] sm:$0xff] %vm1578, %v1531
      %1580 = vst.msk [vmem:[#allocation4 + $0x8] sm:$0xff] %vm1578, %v1533
      %1581 = vst.msk [vmem:[#allocation4 + $0x10] sm:$0xff] %vm1578, %v1535
      %1582 = vst.msk [vmem:[#allocation4 + $0x18] sm:$0xff] %vm1578, %v1537
      %1583 = vst.msk [vmem:[#allocation4 + $0x20] sm:$0xff] %vm1578, %v1539
      %1584 = vst.msk [vmem:[#allocation4 + $0x28] sm:$0xff] %vm1578, %v1541
      %1585 = vst.msk [vmem:[#allocation4 + $0x30] sm:$0xff] %vm1578, %v1543
      %1586 = vst.msk [vmem:[#allocation4 + $0x38] sm:$0xff] %vm1578, %v1545
      %1587 = vst.msk [vmem:[#allocation4 + $0x40] sm:$0xff] %vm1578, %v1547
      %1588 = vst.msk [vmem:[#allocation4 + $0x48] sm:$0xff] %vm1578, %v1549
      %1589 = vst.msk [vmem:[#allocation4 + $0x50] sm:$0xff] %vm1578, %v1551
      %1590 = vst.msk [vmem:[#allocation4 + $0x58] sm:$0xff] %vm1578, %v1553
      %1591 = vst.msk [vmem:[#allocation4 + $0x60] sm:$0xff] %vm1578, %v1555
      %1592 = vst.msk [vmem:[#allocation4 + $0x68] sm:$0xff] %vm1578, %v1557
      %1593 = vst.msk [vmem:[#allocation4 + $0x70] sm:$0xff] %vm1578, %v1559
      %1594 = vst.msk [vmem:[#allocation4 + $0x78] sm:$0xff] %vm1578, %v1561
      %v1595 = vld [vmem:[#allocation4] sm:$0xff]
      %v1596 = vld [vmem:[#allocation4 + $0x8] sm:$0xff]
      %v1597 = vld [vmem:[#allocation4 + $0x10] sm:$0xff]
      %v1598 = vld [vmem:[#allocation4 + $0x18] sm:$0xff]
      %v1599 = vld [vmem:[#allocation4 + $0x20] sm:$0xff]
      %v1600 = vld [vmem:[#allocation4 + $0x28] sm:$0xff]
      %v1601 = vld [vmem:[#allocation4 + $0x30] sm:$0xff]
      %v1602 = vld [vmem:[#allocation4 + $0x38] sm:$0xff]
      %v1603 = vld [vmem:[#allocation4 + $0x40] sm:$0xff]
      %v1604 = vld [vmem:[#allocation4 + $0x48] sm:$0xff]
      %v1605 = vld [vmem:[#allocation4 + $0x50] sm:$0xff]
      %v1606 = vld [vmem:[#allocation4 + $0x58] sm:$0xff]
      %v1607 = vld [vmem:[#allocation4 + $0x60] sm:$0xff]
      %v1608 = vld [vmem:[#allocation4 + $0x68] sm:$0xff]
      %v1609 = vld [vmem:[#allocation4 + $0x70] sm:$0xff]
      %v1610 = vld [vmem:[#allocation4 + $0x78] sm:$0xff]
      %v1611 = vld [vmem:[%s2] sm:$0xf]
      %v1612 = vld [vmem:[%s2 + $0x4] sm:$0xf]
      %v1613 = vld [vmem:[%s2 + $0x8] sm:$0xf]
      %v1614 = vld [vmem:[%s2 + $0xc] sm:$0xf]
      %v1615 = vld [vmem:[%s2 + $0x10] sm:$0x3]
      %v1616 = vlaneseq
      %v1617 = vshrl.u32 %v1616, 7
      %v1618 = vsub.s32 0, %v1617
      %v1619 = vrot.slane %v309, %v1618
      %v1625 = vunpack.c.l.b16 %v1611
      %v1626 = vunpack.c.l.b16 %v1612
      %v1627 = vunpack.c.l.b16 %v1613
      %v1628 = vunpack.c.l.b16 %v1614
      %v1629 = vunpack.c.l.b16 %v1615
      %v1630 = vpack.c.b16 %v1626, %v1625
      %v1631 = vpack.c.b16 %v1628, %v1627
      %v1632 = vpack.c.b16 %v1629, %v1629
      %vm1635 = vcmask 293888
      %v1637 = vsel %vm1635, %v1595, 0
      %v1640 = vsel %vm1635, %v1596, 0
      %v1643 = vsel %vm1635, %v1597, 0
      %v1646 = vsel %vm1635, %v1598, 0
      %v1649 = vsel %vm1635, %v1599, 0
      %v1652 = vsel %vm1635, %v1600, 0
      %v1655 = vsel %vm1635, %v1601, 0
      %v1658 = vsel %vm1635, %v1602, 0
      %v1661 = vsel %vm1635, %v1603, 0
      %v1664 = vsel %vm1635, %v1604, 0
      %v1667 = vsel %vm1635, %v1605, 0
      %v1670 = vsel %vm1635, %v1606, 0
      %v1673 = vsel %vm1635, %v1607, 0
      %v1676 = vsel %vm1635, %v1608, 0
      %v1679 = vsel %vm1635, %v1609, 0
      %v1682 = vsel %vm1635, %v1610, 0
      %vm1684 = vcmask 1041408
      %v1686 = vsel %vm1684, %v1632, 0
      %1688 = vmatprep.subr.bf16.mxu0 0
      %1689 = vmatpush1.bf16.msra.mxu0 %v1630
      %1690 = vmatprep.subr.bf16.mxu0 0
      %1691 = vmatpush1.bf16.msra.mxu0 %v1631
      %1692 = vmatprep.subr.bf16.mxu0 0
      %1693 = vmatpush1.bf16.msra.mxu0 %v1686
      %1694 = vmatprep.subr.bf16.mxu0 0
      %1695 = vmatpush1.bf16.msra.mxu0 0
      %1696 = vmatprep.subr.bf16.mxu0 0
      %1697 = vmatpush1.bf16.msra.mxu0 0
      %1698 = vmatprep.subr.bf16.mxu0 0
      %1699 = vmatpush1.bf16.msra.mxu0 0
      %1700 = vmatprep.subr.bf16.mxu0 0
      %1701 = vmatpush1.bf16.msra.mxu0 0
      %1702 = vmatprep.subr.bf16.mxu0 0
      %1703 = vmatpush1.bf16.msra.mxu0 0
      %1704 = vmatprep.subr.bf16.mxu0 0
      %1705 = vmatpush1.bf16.msra.mxu0 0
      %1706 = vmatprep.subr.bf16.mxu0 0
      %1707 = vmatpush1.bf16.msra.mxu0 0
      %1708 = vmatprep.subr.bf16.mxu0 0
      %1709 = vmatpush1.bf16.msra.mxu0 0
      %1710 = vmatprep.subr.bf16.mxu0 0
      %1711 = vmatpush1.bf16.msra.mxu0 0
      %1712 = vmatprep.subr.bf16.mxu0 0
      %1713 = vmatpush1.bf16.msra.mxu0 0
      %1714 = vmatprep.subr.bf16.mxu0 0
      %1715 = vmatpush1.bf16.msra.mxu0 0
      %1716 = vmatprep.subr.bf16.mxu0 0
      %1717 = vmatpush1.bf16.msra.mxu0 0
      %1718 = vmatprep.subr.bf16.mxu0 0
      %1719 = vmatpush1.bf16.msra.mxu0 0
      %1720 = vmatprep.mubr.bf16.mxu0 0
      %1721 = vmatmul.mubr.bf16.gmra.mrb[0].mxu0 %v1637
      %v1722 = vpop.f32.mrb[0].mxu0
      %v1723 = vadd.f32 %v1619, %v1722
      %v1724 = vpop.f32.mrb[0].mxu0
      %v1725 = vpop.f32.mrb[0].mxu0
      %v1726 = vadd.f32 %v1619, %v1725
      %v1727 = vpop.f32.mrb[0].mxu0
      %1728 = vmatprep.mubr.bf16.mxu0 0
      %1729 = vmatmul.mubr.bf16.gmra.mrb[0].mxu0 %v1640
      %v1730 = vpop.f32.mrb[0].mxu0
      %v1731 = vadd.f32 %v1619, %v1730
      %v1732 = vpop.f32.mrb[0].mxu0
      %v1733 = vpop.f32.mrb[0].mxu0
      %v1734 = vadd.f32 %v1619, %v1733
      %v1735 = vpop.f32.mrb[0].mxu0
      %1736 = vmatprep.mubr.bf16.mxu0 0
      %1737 = vmatmul.mubr.bf16.gmra.mrb[0].mxu0 %v1643
      %v1738 = vpop.f32.mrb[0].mxu0
      %v1739 = vadd.f32 %v1619, %v1738
      %v1740 = vpop.f32.mrb[0].mxu0
      %v1741 = vpop.f32.mrb[0].mxu0
      %v1742 = vadd.f32 %v1619, %v1741
      %v1743 = vpop.f32.mrb[0].mxu0
      %1744 = vmatprep.mubr.bf16.mxu0 0
      %1745 = vmatmul.mubr.bf16.gmra.mrb[0].mxu0 %v1646
      %v1746 = vpop.f32.mrb[0].mxu0
      %v1747 = vadd.f32 %v1619, %v1746
      %v1748 = vpop.f32.mrb[0].mxu0
      %v1749 = vpop.f32.mrb[0].mxu0
      %v1750 = vadd.f32 %v1619, %v1749
      %v1751 = vpop.f32.mrb[0].mxu0
      %1752 = vmatprep.mubr.bf16.mxu0 0
      %1753 = vmatmul.mubr.bf16.gmra.mrb[0].mxu0 %v1649
      %v1754 = vpop.f32.mrb[0].mxu0
      %v1755 = vadd.f32 %v1619, %v1754
      %v1756 = vpop.f32.mrb[0].mxu0
      %v1757 = vpop.f32.mrb[0].mxu0
      %v1758 = vadd.f32 %v1619, %v1757
      %v1759 = vpop.f32.mrb[0].mxu0
      %1760 = vmatprep.mubr.bf16.mxu0 0
      %1761 = vmatmul.mubr.bf16.gmra.mrb[0].mxu0 %v1652
      %v1762 = vpop.f32.mrb[0].mxu0
      %v1763 = vadd.f32 %v1619, %v1762
      %v1764 = vpop.f32.mrb[0].mxu0
      %v1765 = vpop.f32.mrb[0].mxu0
      %v1766 = vadd.f32 %v1619, %v1765
      %v1767 = vpop.f32.mrb[0].mxu0
      %1768 = vmatprep.mubr.bf16.mxu0 0
      %1769 = vmatmul.mubr.bf16.gmra.mrb[0].mxu0 %v1655
      %v1770 = vpop.f32.mrb[0].mxu0
      %v1771 = vadd.f32 %v1619, %v1770
      %v1772 = vpop.f32.mrb[0].mxu0
      %v1773 = vpop.f32.mrb[0].mxu0
      %v1774 = vadd.f32 %v1619, %v1773
      %v1775 = vpop.f32.mrb[0].mxu0
      %1776 = vmatprep.mubr.bf16.mxu0 0
      %1777 = vmatmul.mubr.bf16.gmra.mrb[0].mxu0 %v1658
      %v1778 = vpop.f32.mrb[0].mxu0
      %v1779 = vadd.f32 %v1619, %v1778
      %v1780 = vpop.f32.mrb[0].mxu0
      %v1781 = vpop.f32.mrb[0].mxu0
      %v1782 = vadd.f32 %v1619, %v1781
      %v1783 = vpop.f32.mrb[0].mxu0
      %1784 = vmatprep.mubr.bf16.mxu0 0
      %1785 = vmatmul.mubr.bf16.gmra.mrb[0].mxu0 %v1661
      %v1786 = vpop.f32.mrb[0].mxu0
      %v1787 = vadd.f32 %v1619, %v1786
      %v1788 = vpop.f32.mrb[0].mxu0
      %v1789 = vpop.f32.mrb[0].mxu0
      %v1790 = vadd.f32 %v1619, %v1789
      %v1791 = vpop.f32.mrb[0].mxu0
      %1792 = vmatprep.mubr.bf16.mxu0 0
      %1793 = vmatmul.mubr.bf16.gmra.mrb[0].mxu0 %v1664
      %v1794 = vpop.f32.mrb[0].mxu0
      %v1795 = vadd.f32 %v1619, %v1794
      %v1796 = vpop.f32.mrb[0].mxu0
      %v1797 = vpop.f32.mrb[0].mxu0
      %v1798 = vadd.f32 %v1619, %v1797
      %v1799 = vpop.f32.mrb[0].mxu0
      %1800 = vmatprep.mubr.bf16.mxu0 0
      %1801 = vmatmul.mubr.bf16.gmra.mrb[0].mxu0 %v1667
      %v1802 = vpop.f32.mrb[0].mxu0
      %v1803 = vadd.f32 %v1619, %v1802
      %v1804 = vpop.f32.mrb[0].mxu0
      %v1805 = vpop.f32.mrb[0].mxu0
      %v1806 = vadd.f32 %v1619, %v1805
      %v1807 = vpop.f32.mrb[0].mxu0
      %1808 = vmatprep.mubr.bf16.mxu0 0
      %1809 = vmatmul.mubr.bf16.gmra.mrb[0].mxu0 %v1670
      %v1810 = vpop.f32.mrb[0].mxu0
      %v1811 = vadd.f32 %v1619, %v1810
      %v1812 = vpop.f32.mrb[0].mxu0
      %v1813 = vpop.f32.mrb[0].mxu0
      %v1814 = vadd.f32 %v1619, %v1813
      %v1815 = vpop.f32.mrb[0].mxu0
      %1816 = vmatprep.mubr.bf16.mxu0 0
      %1817 = vmatmul.mubr.bf16.gmra.mrb[0].mxu0 %v1673
      %v1818 = vpop.f32.mrb[0].mxu0
      %v1819 = vadd.f32 %v1619, %v1818
      %v1820 = vpop.f32.mrb[0].mxu0
      %v1821 = vpop.f32.mrb[0].mxu0
      %v1822 = vadd.f32 %v1619, %v1821
      %v1823 = vpop.f32.mrb[0].mxu0
      %1824 = vmatprep.mubr.bf16.mxu0 0
      %1825 = vmatmul.mubr.bf16.gmra.mrb[0].mxu0 %v1676
      %v1826 = vpop.f32.mrb[0].mxu0
      %v1827 = vadd.f32 %v1619, %v1826
      %v1828 = vpop.f32.mrb[0].mxu0
      %v1829 = vpop.f32.mrb[0].mxu0
      %v1830 = vadd.f32 %v1619, %v1829
      %v1831 = vpop.f32.mrb[0].mxu0
      %1832 = vmatprep.mubr.bf16.mxu0 0
      %1833 = vmatmul.mubr.bf16.gmra.mrb[0].mxu0 %v1679
      %v1834 = vpop.f32.mrb[0].mxu0
      %v1835 = vadd.f32 %v1619, %v1834
      %v1836 = vpop.f32.mrb[0].mxu0
      %v1837 = vpop.f32.mrb[0].mxu0
      %v1838 = vadd.f32 %v1619, %v1837
      %v1839 = vpop.f32.mrb[0].mxu0
      %1840 = vmatprep.mubr.bf16.mxu0 0
      %1841 = vmatmul.mubr.bf16.gmra.mrb[0].mxu0 %v1682
      %v1842 = vpop.f32.mrb[0].mxu0
      %v1843 = vadd.f32 %v1619, %v1842
      %v1844 = vpop.f32.mrb[0].mxu0
      %v1845 = vpop.f32.mrb[0].mxu0
      %v1846 = vadd.f32 %v1619, %v1845
      %v1847 = vpop.f32.mrb[0].mxu0
      %1848 = vdwg.mxu0
      %vm1849 = vcmask 130048
      %v1850 = vsel %vm1849, %v1723, 0.0
      %v1851 = vsel %vm1849, %v1726, 0.0
      %v1852 = vadd.f32 %v1850, %v1851
      %v1853 = vsel %vm1849, %v1731, 0.0
      %v1854 = vadd.f32 %v1852, %v1853
      %v1855 = vsel %vm1849, %v1734, 0.0
      %v1856 = vadd.f32 %v1854, %v1855
      %v1857 = vsel %vm1849, %v1739, 0.0
      %v1858 = vadd.f32 %v1856, %v1857
      %v1859 = vsel %vm1849, %v1742, 0.0
      %v1860 = vadd.f32 %v1858, %v1859
      %v1861 = vsel %vm1849, %v1747, 0.0
      %v1862 = vadd.f32 %v1860, %v1861
      %v1863 = vsel %vm1849, %v1750, 0.0
      %v1864 = vadd.f32 %v1862, %v1863
      %v1865 = vsel %vm1849, %v1755, 0.0
      %v1866 = vadd.f32 %v1864, %v1865
      %v1867 = vsel %vm1849, %v1758, 0.0
      %v1868 = vadd.f32 %v1866, %v1867
      %v1869 = vsel %vm1849, %v1763, 0.0
      %v1870 = vadd.f32 %v1868, %v1869
      %v1871 = vsel %vm1849, %v1766, 0.0
      %v1872 = vadd.f32 %v1870, %v1871
      %v1873 = vsel %vm1849, %v1771, 0.0
      %v1874 = vadd.f32 %v1872, %v1873
      %v1875 = vsel %vm1849, %v1774, 0.0
      %v1876 = vadd.f32 %v1874, %v1875
      %v1877 = vsel %vm1849, %v1779, 0.0
      %v1878 = vadd.f32 %v1876, %v1877
      %v1879 = vsel %vm1849, %v1782, 0.0
      %v1880 = vadd.f32 %v1878, %v1879
      %v1881 = vsel %vm1849, %v1787, 0.0
      %v1882 = vadd.f32 %v1880, %v1881
      %v1883 = vsel %vm1849, %v1790, 0.0
      %v1884 = vadd.f32 %v1882, %v1883
      %v1885 = vsel %vm1849, %v1795, 0.0
      %v1886 = vadd.f32 %v1884, %v1885
      %v1887 = vsel %vm1849, %v1798, 0.0
      %v1888 = vadd.f32 %v1886, %v1887
      %v1889 = vsel %vm1849, %v1803, 0.0
      %v1890 = vadd.f32 %v1888, %v1889
      %v1891 = vsel %vm1849, %v1806, 0.0
      %v1892 = vadd.f32 %v1890, %v1891
      %v1893 = vsel %vm1849, %v1811, 0.0
      %v1894 = vadd.f32 %v1892, %v1893
      %v1895 = vsel %vm1849, %v1814, 0.0
      %v1896 = vadd.f32 %v1894, %v1895
      %v1897 = vsel %vm1849, %v1819, 0.0
      %v1898 = vadd.f32 %v1896, %v1897
      %v1899 = vsel %vm1849, %v1822, 0.0
      %v1900 = vadd.f32 %v1898, %v1899
      %v1901 = vsel %vm1849, %v1827, 0.0
      %v1902 = vadd.f32 %v1900, %v1901
      %v1903 = vsel %vm1849, %v1830, 0.0
      %v1904 = vadd.f32 %v1902, %v1903
      %v1905 = vsel %vm1849, %v1835, 0.0
      %v1906 = vadd.f32 %v1904, %v1905
      %v1907 = vsel %vm1849, %v1838, 0.0
      %v1908 = vadd.f32 %v1906, %v1907
      %v1909 = vsel %vm1849, %v1843, 0.0
      %v1910 = vadd.f32 %v1908, %v1909
      %v1911 = vsel %vm1849, %v1846, 0.0
      %v1912 = vadd.f32 %v1910, %v1911
      %v1913 = vrot.slane %v1912, 4
      %v1914 = vadd.f32 %v1912, %v1913
      %v1915 = vrot.slane %v1914, 2
      %v1916 = vadd.f32 %v1914, %v1915
      %v1917 = vrot.slane %v1916, 1
      %v1918 = vadd.f32 %v1916, %v1917
      %v1920 = vsel %vm1849, %v1918, 0
      %1922 = vmatprep.subr.mxu0 0.0
      %v1923 = vand.u32 %v307, 4294901760
      %1924 = vmatpush1.msra.mxu0 %v1923
      %1925 = vmatprep.subr.mxu0 0.0
      %v1926 = vand.u32 %v308, 4294901760
      %1927 = vmatpush1.msra.mxu0 %v1926
      %1928 = vmatprep.subr.mxu0 0.0
      %1929 = vmatpush1.msra.mxu0 0.0
      %1930 = vmatprep.subr.mxu0 0.0
      %1931 = vmatpush1.msra.mxu0 0.0
      %1932 = vmatprep.subr.mxu0 0.0
      %1933 = vmatpush1.msra.mxu0 0.0
      %1934 = vmatprep.subr.mxu0 0.0
      %1935 = vmatpush1.msra.mxu0 0.0
      %1936 = vmatprep.subr.mxu0 0.0
      %1937 = vmatpush1.msra.mxu0 0.0
      %1938 = vmatprep.subr.mxu0 0.0
      %1939 = vmatpush1.msra.mxu0 0.0
      %1940 = vmatprep.subr.mxu0 0.0
      %1941 = vmatpush1.msra.mxu0 0.0
      %1942 = vmatprep.subr.mxu0 0.0
      %1943 = vmatpush1.msra.mxu0 0.0
      %1944 = vmatprep.subr.mxu0 0.0
      %1945 = vmatpush1.msra.mxu0 0.0
      %1946 = vmatprep.subr.mxu0 0.0
      %1947 = vmatpush1.msra.mxu0 0.0
      %1948 = vmatprep.subr.mxu0 0.0
      %1949 = vmatpush1.msra.mxu0 0.0
      %1950 = vmatprep.subr.mxu0 0.0
      %1951 = vmatpush1.msra.mxu0 0.0
      %1952 = vmatprep.subr.mxu0 0.0
      %1953 = vmatpush1.msra.mxu0 0.0
      %1954 = vmatprep.subr.mxu0 0.0
      %1955 = vmatpush1.msra.mxu0 0.0
      %1956 = vmatprep.subr.mxu0 0.0
      %1957 = vmatpush1.msra.mxu0 0.0
      %1958 = vmatprep.subr.mxu0 0.0
      %1959 = vmatpush1.msra.mxu0 0.0
      %1960 = vmatprep.subr.mxu0 0.0
      %1961 = vmatpush1.msra.mxu0 0.0
      %1962 = vmatprep.subr.mxu0 0.0
      %1963 = vmatpush1.msra.mxu0 0.0
      %1964 = vmatprep.subr.mxu0 0.0
      %1965 = vmatpush1.msra.mxu0 0.0
      %1966 = vmatprep.subr.mxu0 0.0
      %1967 = vmatpush1.msra.mxu0 0.0
      %1968 = vmatprep.subr.mxu0 0.0
      %1969 = vmatpush1.msra.mxu0 0.0
      %1970 = vmatprep.subr.mxu0 0.0
      %1971 = vmatpush1.msra.mxu0 0.0
      %1972 = vmatprep.subr.mxu0 0.0
      %1973 = vmatpush1.msra.mxu0 0.0
      %1974 = vmatprep.subr.mxu0 0.0
      %1975 = vmatpush1.msra.mxu0 0.0
      %1976 = vmatprep.subr.mxu0 0.0
      %1977 = vmatpush1.msra.mxu0 0.0
      %1978 = vmatprep.subr.mxu0 0.0
      %1979 = vmatpush1.msra.mxu0 0.0
      %1980 = vmatprep.subr.mxu0 0.0
      %1981 = vmatpush1.msra.mxu0 0.0
      %1982 = vmatprep.subr.mxu0 0.0
      %1983 = vmatpush1.msra.mxu0 0.0
      %1984 = vmatprep.subr.mxu0 0.0
      %1985 = vmatpush1.msra.mxu0 0.0
      %1986 = vmatprep.subr.mxu0 0.0
      %1987 = vmatpush1.msra.mxu0 0.0
      %1988 = vmatprep.mubr.f32.mxu0 0.0
      %v1989 = vand.u32 %v1920, 4294901760
      %v1990 = vsub.f32 %v1920, %v1989
      %v1991 = vand.u32 %v1990, 4294901760
      %v1992 = vsub.f32 %v1990, %v1991
      %v1993 = vand.u32 %v1992, 4294901760
      %1994 = vmatmul.mubr.f32.gmra.mrb[0].mxu0 %v1993
      %v1995 = vpop.f32.mrb[0].mxu0
      %v1996 = vadd.f32 0.0, %v1995
      %v1997 = vpop.f32.mrb[0].mxu0
      %1998 = vdwg.mxu0
      %1999 = vmatprep.subr.mxu0 0.0
      %v2000 = vand.u32 %v307, 4294901760
      %v2001 = vsub.f32 %v307, %v2000
      %v2002 = vand.u32 %v2001, 4294901760
      %v2003 = vsub.f32 %v2001, %v2002
      %v2004 = vand.u32 %v2003, 4294901760
      %2005 = vmatpush1.msra.mxu0 %v2004
      %2006 = vmatprep.subr.mxu0 0.0
      %v2007 = vand.u32 %v308, 4294901760
      %v2008 = vsub.f32 %v308, %v2007
      %v2009 = vand.u32 %v2008, 4294901760
      %v2010 = vsub.f32 %v2008, %v2009
      %v2011 = vand.u32 %v2010, 4294901760
      %2012 = vmatpush1.msra.mxu0 %v2011
      %2013 = vmatprep.subr.mxu0 0.0
      %2014 = vmatpush1.msra.mxu0 0.0
      %2015 = vmatprep.subr.mxu0 0.0
      %2016 = vmatpush1.msra.mxu0 0.0
      %2017 = vmatprep.subr.mxu0 0.0
      %2018 = vmatpush1.msra.mxu0 0.0
      %2019 = vmatprep.subr.mxu0 0.0
      %2020 = vmatpush1.msra.mxu0 0.0
      %2021 = vmatprep.subr.mxu0 0.0
      %2022 = vmatpush1.msra.mxu0 0.0
      %2023 = vmatprep.subr.mxu0 0.0
      %2024 = vmatpush1.msra.mxu0 0.0
      %2025 = vmatprep.subr.mxu0 0.0
      %2026 = vmatpush1.msra.mxu0 0.0
      %2027 = vmatprep.subr.mxu0 0.0
      %2028 = vmatpush1.msra.mxu0 0.0
      %2029 = vmatprep.subr.mxu0 0.0
      %2030 = vmatpush1.msra.mxu0 0.0
      %2031 = vmatprep.subr.mxu0 0.0
      %2032 = vmatpush1.msra.mxu0 0.0
      %2033 = vmatprep.subr.mxu0 0.0
      %2034 = vmatpush1.msra.mxu0 0.0
      %2035 = vmatprep.subr.mxu0 0.0
      %2036 = vmatpush1.msra.mxu0 0.0
      %2037 = vmatprep.subr.mxu0 0.0
      %2038 = vmatpush1.msra.mxu0 0.0
      %2039 = vmatprep.subr.mxu0 0.0
      %2040 = vmatpush1.msra.mxu0 0.0
      %2041 = vmatprep.subr.mxu0 0.0
      %2042 = vmatpush1.msra.mxu0 0.0
      %2043 = vmatprep.subr.mxu0 0.0
      %2044 = vmatpush1.msra.mxu0 0.0
      %2045 = vmatprep.subr.mxu0 0.0
      %2046 = vmatpush1.msra.mxu0 0.0
      %2047 = vmatprep.subr.mxu0 0.0
      %2048 = vmatpush1.msra.mxu0 0.0
      %2049 = vmatprep.subr.mxu0 0.0
      %2050 = vmatpush1.msra.mxu0 0.0
      %2051 = vmatprep.subr.mxu0 0.0
      %2052 = vmatpush1.msra.mxu0 0.0
      %2053 = vmatprep.subr.mxu0 0.0
      %2054 = vmatpush1.msra.mxu0 0.0
      %2055 = vmatprep.subr.mxu0 0.0
      %2056 = vmatpush1.msra.mxu0 0.0
      %2057 = vmatprep.subr.mxu0 0.0
      %2058 = vmatpush1.msra.mxu0 0.0
      %2059 = vmatprep.subr.mxu0 0.0
      %2060 = vmatpush1.msra.mxu0 0.0
      %2061 = vmatprep.subr.mxu0 0.0
      %2062 = vmatpush1.msra.mxu0 0.0
      %2063 = vmatprep.subr.mxu0 0.0
      %2064 = vmatpush1.msra.mxu0 0.0
      %2065 = vmatprep.subr.mxu0 0.0
      %2066 = vmatpush1.msra.mxu0 0.0
      %2067 = vmatprep.subr.mxu0 0.0
      %2068 = vmatpush1.msra.mxu0 0.0
      %2069 = vmatprep.subr.mxu0 0.0
      %2070 = vmatpush1.msra.mxu0 0.0
      %2071 = vmatprep.subr.mxu0 0.0
      %2072 = vmatpush1.msra.mxu0 0.0
      %2073 = vmatprep.mubr.f32.mxu0 0.0
      %v2074 = vand.u32 %v1920, 4294901760
      %2075 = vmatmul.mubr.f32.gmra.mrb[0].mxu0 %v2074
      %v2076 = vpop.f32.mrb[0].mxu0
      %v2077 = vadd.f32 %v1996, %v2076
      %v2078 = vpop.f32.mrb[0].mxu0
      %2079 = vdwg.mxu0
      %2080 = vmatprep.subr.mxu0 0.0
      %v2081 = vand.u32 %v307, 4294901760
      %v2082 = vsub.f32 %v307, %v2081
      %2083 = vmatpush1.msra.mxu0 %v2082
      %2084 = vmatprep.subr.mxu0 0.0
      %v2085 = vand.u32 %v308, 4294901760
      %v2086 = vsub.f32 %v308, %v2085
      %2087 = vmatpush1.msra.mxu0 %v2086
      %2088 = vmatprep.subr.mxu0 0.0
      %2089 = vmatpush1.msra.mxu0 0.0
      %2090 = vmatprep.subr.mxu0 0.0
      %2091 = vmatpush1.msra.mxu0 0.0
      %2092 = vmatprep.subr.mxu0 0.0
      %2093 = vmatpush1.msra.mxu0 0.0
      %2094 = vmatprep.subr.mxu0 0.0
      %2095 = vmatpush1.msra.mxu0 0.0
      %2096 = vmatprep.subr.mxu0 0.0
      %2097 = vmatpush1.msra.mxu0 0.0
      %2098 = vmatprep.subr.mxu0 0.0
      %2099 = vmatpush1.msra.mxu0 0.0
      %2100 = vmatprep.subr.mxu0 0.0
      %2101 = vmatpush1.msra.mxu0 0.0
      %2102 = vmatprep.subr.mxu0 0.0
      %2103 = vmatpush1.msra.mxu0 0.0
      %2104 = vmatprep.subr.mxu0 0.0
      %2105 = vmatpush1.msra.mxu0 0.0
      %2106 = vmatprep.subr.mxu0 0.0
      %2107 = vmatpush1.msra.mxu0 0.0
      %2108 = vmatprep.subr.mxu0 0.0
      %2109 = vmatpush1.msra.mxu0 0.0
      %2110 = vmatprep.subr.mxu0 0.0
      %2111 = vmatpush1.msra.mxu0 0.0
      %2112 = vmatprep.subr.mxu0 0.0
      %2113 = vmatpush1.msra.mxu0 0.0
      %2114 = vmatprep.subr.mxu0 0.0
      %2115 = vmatpush1.msra.mxu0 0.0
      %2116 = vmatprep.subr.mxu0 0.0
      %2117 = vmatpush1.msra.mxu0 0.0
      %2118 = vmatprep.subr.mxu0 0.0
      %2119 = vmatpush1.msra.mxu0 0.0
      %2120 = vmatprep.subr.mxu0 0.0
      %2121 = vmatpush1.msra.mxu0 0.0
      %2122 = vmatprep.subr.mxu0 0.0
      %2123 = vmatpush1.msra.mxu0 0.0
      %2124 = vmatprep.subr.mxu0 0.0
      %2125 = vmatpush1.msra.mxu0 0.0
      %2126 = vmatprep.subr.mxu0 0.0
      %2127 = vmatpush1.msra.mxu0 0.0
      %2128 = vmatprep.subr.mxu0 0.0
      %2129 = vmatpush1.msra.mxu0 0.0
      %2130 = vmatprep.subr.mxu0 0.0
      %2131 = vmatpush1.msra.mxu0 0.0
      %2132 = vmatprep.subr.mxu0 0.0
      %2133 = vmatpush1.msra.mxu0 0.0
      %2134 = vmatprep.subr.mxu0 0.0
      %2135 = vmatpush1.msra.mxu0 0.0
      %2136 = vmatprep.subr.mxu0 0.0
      %2137 = vmatpush1.msra.mxu0 0.0
      %2138 = vmatprep.subr.mxu0 0.0
      %2139 = vmatpush1.msra.mxu0 0.0
      %2140 = vmatprep.subr.mxu0 0.0
      %2141 = vmatpush1.msra.mxu0 0.0
      %2142 = vmatprep.subr.mxu0 0.0
      %2143 = vmatpush1.msra.mxu0 0.0
      %2144 = vmatprep.subr.mxu0 0.0
      %2145 = vmatpush1.msra.mxu0 0.0
      %2146 = vmatprep.subr.mxu0 0.0
      %2147 = vmatpush1.msra.mxu0 0.0
      %2148 = vmatprep.mubr.f32.mxu0 0.0
      %v2149 = vand.u32 %v1920, 4294901760
      %v2150 = vsub.f32 %v1920, %v2149
      %2151 = vmatmul.mubr.f32.gmra.mrb[0].mxu0 %v2150
      %v2152 = vpop.f32.mrb[0].mxu0
      %v2153 = vadd.f32 %v2077, %v2152
      %v2154 = vpop.f32.mrb[0].mxu0
      %2155 = vdwg.mxu0
      %2156 = vmatprep.subr.mxu0 0.0
      %v2157 = vand.u32 %v307, 4294901760
      %2158 = vmatpush1.msra.mxu0 %v2157
      %2159 = vmatprep.subr.mxu0 0.0
      %v2160 = vand.u32 %v308, 4294901760
      %2161 = vmatpush1.msra.mxu0 %v2160
      %2162 = vmatprep.subr.mxu0 0.0
      %2163 = vmatpush1.msra.mxu0 0.0
      %2164 = vmatprep.subr.mxu0 0.0
      %2165 = vmatpush1.msra.mxu0 0.0
      %2166 = vmatprep.subr.mxu0 0.0
      %2167 = vmatpush1.msra.mxu0 0.0
      %2168 = vmatprep.subr.mxu0 0.0
      %2169 = vmatpush1.msra.mxu0 0.0
      %2170 = vmatprep.subr.mxu0 0.0
      %2171 = vmatpush1.msra.mxu0 0.0
      %2172 = vmatprep.subr.mxu0 0.0
      %2173 = vmatpush1.msra.mxu0 0.0
      %2174 = vmatprep.subr.mxu0 0.0
      %2175 = vmatpush1.msra.mxu0 0.0
      %2176 = vmatprep.subr.mxu0 0.0
      %2177 = vmatpush1.msra.mxu0 0.0
      %2178 = vmatprep.subr.mxu0 0.0
      %2179 = vmatpush1.msra.mxu0 0.0
      %2180 = vmatprep.subr.mxu0 0.0
      %2181 = vmatpush1.msra.mxu0 0.0
      %2182 = vmatprep.subr.mxu0 0.0
      %2183 = vmatpush1.msra.mxu0 0.0
      %2184 = vmatprep.subr.mxu0 0.0
      %2185 = vmatpush1.msra.mxu0 0.0
      %2186 = vmatprep.subr.mxu0 0.0
      %2187 = vmatpush1.msra.mxu0 0.0
      %2188 = vmatprep.subr.mxu0 0.0
      %2189 = vmatpush1.msra.mxu0 0.0
      %2190 = vmatprep.subr.mxu0 0.0
      %2191 = vmatpush1.msra.mxu0 0.0
      %2192 = vmatprep.subr.mxu0 0.0
      %2193 = vmatpush1.msra.mxu0 0.0
      %2194 = vmatprep.subr.mxu0 0.0
      %2195 = vmatpush1.msra.mxu0 0.0
      %2196 = vmatprep.subr.mxu0 0.0
      %2197 = vmatpush1.msra.mxu0 0.0
      %2198 = vmatprep.subr.mxu0 0.0
      %2199 = vmatpush1.msra.mxu0 0.0
      %2200 = vmatprep.subr.mxu0 0.0
      %2201 = vmatpush1.msra.mxu0 0.0
      %2202 = vmatprep.subr.mxu0 0.0
      %2203 = vmatpush1.msra.mxu0 0.0
      %2204 = vmatprep.subr.mxu0 0.0
      %2205 = vmatpush1.msra.mxu0 0.0
      %2206 = vmatprep.subr.mxu0 0.0
      %2207 = vmatpush1.msra.mxu0 0.0
      %2208 = vmatprep.subr.mxu0 0.0
      %2209 = vmatpush1.msra.mxu0 0.0
      %2210 = vmatprep.subr.mxu0 0.0
      %2211 = vmatpush1.msra.mxu0 0.0
      %2212 = vmatprep.subr.mxu0 0.0
      %2213 = vmatpush1.msra.mxu0 0.0
      %2214 = vmatprep.subr.mxu0 0.0
      %2215 = vmatpush1.msra.mxu0 0.0
      %2216 = vmatprep.subr.mxu0 0.0
      %2217 = vmatpush1.msra.mxu0 0.0
      %2218 = vmatprep.subr.mxu0 0.0
      %2219 = vmatpush1.msra.mxu0 0.0
      %2220 = vmatprep.subr.mxu0 0.0
      %2221 = vmatpush1.msra.mxu0 0.0
      %2222 = vmatprep.mubr.f32.mxu0 0.0
      %v2223 = vand.u32 %v1920, 4294901760
      %v2224 = vsub.f32 %v1920, %v2223
      %v2225 = vand.u32 %v2224, 4294901760
      %2226 = vmatmul.mubr.f32.gmra.mrb[0].mxu0 %v2225
      %v2227 = vpop.f32.mrb[0].mxu0
      %v2228 = vadd.f32 %v2153, %v2227
      %v2229 = vpop.f32.mrb[0].mxu0
      %2230 = vdwg.mxu0
      %2231 = vmatprep.subr.mxu0 0.0
      %v2232 = vand.u32 %v307, 4294901760
      %v2233 = vsub.f32 %v307, %v2232
      %v2234 = vand.u32 %v2233, 4294901760
      %2235 = vmatpush1.msra.mxu0 %v2234
      %2236 = vmatprep.subr.mxu0 0.0
      %v2237 = vand.u32 %v308, 4294901760
      %v2238 = vsub.f32 %v308, %v2237
      %v2239 = vand.u32 %v2238, 4294901760
      %2240 = vmatpush1.msra.mxu0 %v2239
      %2241 = vmatprep.subr.mxu0 0.0
      %2242 = vmatpush1.msra.mxu0 0.0
      %2243 = vmatprep.subr.mxu0 0.0
      %2244 = vmatpush1.msra.mxu0 0.0
      %2245 = vmatprep.subr.mxu0 0.0
      %2246 = vmatpush1.msra.mxu0 0.0
      %2247 = vmatprep.subr.mxu0 0.0
      %2248 = vmatpush1.msra.mxu0 0.0
      %2249 = vmatprep.subr.mxu0 0.0
      %2250 = vmatpush1.msra.mxu0 0.0
      %2251 = vmatprep.subr.mxu0 0.0
      %2252 = vmatpush1.msra.mxu0 0.0
      %2253 = vmatprep.subr.mxu0 0.0
      %2254 = vmatpush1.msra.mxu0 0.0
      %2255 = vmatprep.subr.mxu0 0.0
      %2256 = vmatpush1.msra.mxu0 0.0
      %2257 = vmatprep.subr.mxu0 0.0
      %2258 = vmatpush1.msra.mxu0 0.0
      %2259 = vmatprep.subr.mxu0 0.0
      %2260 = vmatpush1.msra.mxu0 0.0
      %2261 = vmatprep.subr.mxu0 0.0
      %2262 = vmatpush1.msra.mxu0 0.0
      %2263 = vmatprep.subr.mxu0 0.0
      %2264 = vmatpush1.msra.mxu0 0.0
      %2265 = vmatprep.subr.mxu0 0.0
      %2266 = vmatpush1.msra.mxu0 0.0
      %2267 = vmatprep.subr.mxu0 0.0
      %2268 = vmatpush1.msra.mxu0 0.0
      %2269 = vmatprep.subr.mxu0 0.0
      %2270 = vmatpush1.msra.mxu0 0.0
      %2271 = vmatprep.subr.mxu0 0.0
      %2272 = vmatpush1.msra.mxu0 0.0
      %2273 = vmatprep.subr.mxu0 0.0
      %2274 = vmatpush1.msra.mxu0 0.0
      %2275 = vmatprep.subr.mxu0 0.0
      %2276 = vmatpush1.msra.mxu0 0.0
      %2277 = vmatprep.subr.mxu0 0.0
      %2278 = vmatpush1.msra.mxu0 0.0
      %2279 = vmatprep.subr.mxu0 0.0
      %2280 = vmatpush1.msra.mxu0 0.0
      %2281 = vmatprep.subr.mxu0 0.0
      %2282 = vmatpush1.msra.mxu0 0.0
      %2283 = vmatprep.subr.mxu0 0.0
      %2284 = vmatpush1.msra.mxu0 0.0
      %2285 = vmatprep.subr.mxu0 0.0
      %2286 = vmatpush1.msra.mxu0 0.0
      %2287 = vmatprep.subr.mxu0 0.0
      %2288 = vmatpush1.msra.mxu0 0.0
      %2289 = vmatprep.subr.mxu0 0.0
      %2290 = vmatpush1.msra.mxu0 0.0
      %2291 = vmatprep.subr.mxu0 0.0
      %2292 = vmatpush1.msra.mxu0 0.0
      %2293 = vmatprep.subr.mxu0 0.0
      %2294 = vmatpush1.msra.mxu0 0.0
      %2295 = vmatprep.subr.mxu0 0.0
      %2296 = vmatpush1.msra.mxu0 0.0
      %2297 = vmatprep.subr.mxu0 0.0
      %2298 = vmatpush1.msra.mxu0 0.0
      %2299 = vmatprep.subr.mxu0 0.0
      %2300 = vmatpush1.msra.mxu0 0.0
      %2301 = vmatprep.mubr.f32.mxu0 0.0
      %v2302 = vand.u32 %v1920, 4294901760
      %2303 = vmatmul.mubr.f32.gmra.mrb[0].mxu0 %v2302
      %v2304 = vpop.f32.mrb[0].mxu0
      %v2305 = vadd.f32 %v2228, %v2304
      %v2306 = vpop.f32.mrb[0].mxu0
      %2307 = vdwg.mxu0
      %2308 = vmatprep.subr.mxu0 0.0
      %v2309 = vand.u32 %v307, 4294901760
      %2310 = vmatpush1.msra.mxu0 %v2309
      %2311 = vmatprep.subr.mxu0 0.0
      %v2312 = vand.u32 %v308, 4294901760
      %2313 = vmatpush1.msra.mxu0 %v2312
      %2314 = vmatprep.subr.mxu0 0.0
      %2315 = vmatpush1.msra.mxu0 0.0
      %2316 = vmatprep.subr.mxu0 0.0
      %2317 = vmatpush1.msra.mxu0 0.0
      %2318 = vmatprep.subr.mxu0 0.0
      %2319 = vmatpush1.msra.mxu0 0.0
      %2320 = vmatprep.subr.mxu0 0.0
      %2321 = vmatpush1.msra.mxu0 0.0
      %2322 = vmatprep.subr.mxu0 0.0
      %2323 = vmatpush1.msra.mxu0 0.0
      %2324 = vmatprep.subr.mxu0 0.0
      %2325 = vmatpush1.msra.mxu0 0.0
      %2326 = vmatprep.subr.mxu0 0.0
      %2327 = vmatpush1.msra.mxu0 0.0
      %2328 = vmatprep.subr.mxu0 0.0
      %2329 = vmatpush1.msra.mxu0 0.0
      %2330 = vmatprep.subr.mxu0 0.0
      %2331 = vmatpush1.msra.mxu0 0.0
      %2332 = vmatprep.subr.mxu0 0.0
      %2333 = vmatpush1.msra.mxu0 0.0
      %2334 = vmatprep.subr.mxu0 0.0
      %2335 = vmatpush1.msra.mxu0 0.0
      %2336 = vmatprep.subr.mxu0 0.0
      %2337 = vmatpush1.msra.mxu0 0.0
      %2338 = vmatprep.subr.mxu0 0.0
      %2339 = vmatpush1.msra.mxu0 0.0
      %2340 = vmatprep.subr.mxu0 0.0
      %2341 = vmatpush1.msra.mxu0 0.0
      %2342 = vmatprep.subr.mxu0 0.0
      %2343 = vmatpush1.msra.mxu0 0.0
      %2344 = vmatprep.subr.mxu0 0.0
      %2345 = vmatpush1.msra.mxu0 0.0
      %2346 = vmatprep.subr.mxu0 0.0
      %2347 = vmatpush1.msra.mxu0 0.0
      %2348 = vmatprep.subr.mxu0 0.0
      %2349 = vmatpush1.msra.mxu0 0.0
      %2350 = vmatprep.subr.mxu0 0.0
      %2351 = vmatpush1.msra.mxu0 0.0
      %2352 = vmatprep.subr.mxu0 0.0
      %2353 = vmatpush1.msra.mxu0 0.0
      %2354 = vmatprep.subr.mxu0 0.0
      %2355 = vmatpush1.msra.mxu0 0.0
      %2356 = vmatprep.subr.mxu0 0.0
      %2357 = vmatpush1.msra.mxu0 0.0
      %2358 = vmatprep.subr.mxu0 0.0
      %2359 = vmatpush1.msra.mxu0 0.0
      %2360 = vmatprep.subr.mxu0 0.0
      %2361 = vmatpush1.msra.mxu0 0.0
      %2362 = vmatprep.subr.mxu0 0.0
      %2363 = vmatpush1.msra.mxu0 0.0
      %2364 = vmatprep.subr.mxu0 0.0
      %2365 = vmatpush1.msra.mxu0 0.0
      %2366 = vmatprep.subr.mxu0 0.0
      %2367 = vmatpush1.msra.mxu0 0.0
      %2368 = vmatprep.subr.mxu0 0.0
      %2369 = vmatpush1.msra.mxu0 0.0
      %2370 = vmatprep.subr.mxu0 0.0
      %2371 = vmatpush1.msra.mxu0 0.0
      %2372 = vmatprep.subr.mxu0 0.0
      %2373 = vmatpush1.msra.mxu0 0.0
      %2374 = vmatprep.mubr.f32.mxu0 0.0
      %v2375 = vand.u32 %v1920, 4294901760
      %2376 = vmatmul.mubr.f32.gmra.mrb[0].mxu0 %v2375
      %v2377 = vpop.f32.mrb[0].mxu0
      %v2378 = vadd.f32 %v2305, %v2377
      %v2379 = vpop.f32.mrb[0].mxu0
      %2380 = vdwg.mxu0
      %v2381 = vmul.f32 %v2378, 0.001953125
      %v2382 = vlaneseq
      %v2383 = vshrl.u32 %v2382, 7
      %v2384 = vsub.s32 0, %v2383
      %v2385 = vrot.slane %v2381, %v2384
      %v2386 = vsub.f32 %v1723, %v2385
      %v2387 = vsub.f32 %v1726, %v2385
      %v2388 = vsub.f32 %v1731, %v2385
      %v2389 = vsub.f32 %v1734, %v2385
      %v2390 = vsub.f32 %v1739, %v2385
      %v2391 = vsub.f32 %v1742, %v2385
      %v2392 = vsub.f32 %v1747, %v2385
      %v2393 = vsub.f32 %v1750, %v2385
      %v2394 = vsub.f32 %v1755, %v2385
      %v2395 = vsub.f32 %v1758, %v2385
      %v2396 = vsub.f32 %v1763, %v2385
      %v2397 = vsub.f32 %v1766, %v2385
      %v2398 = vsub.f32 %v1771, %v2385
      %v2399 = vsub.f32 %v1774, %v2385
      %v2400 = vsub.f32 %v1779, %v2385
      %v2401 = vsub.f32 %v1782, %v2385
      %v2402 = vsub.f32 %v1787, %v2385
      %v2403 = vsub.f32 %v1790, %v2385
      %v2404 = vsub.f32 %v1795, %v2385
      %v2405 = vsub.f32 %v1798, %v2385
      %v2406 = vsub.f32 %v1803, %v2385
      %v2407 = vsub.f32 %v1806, %v2385
      %v2408 = vsub.f32 %v1811, %v2385
      %v2409 = vsub.f32 %v1814, %v2385
      %v2410 = vsub.f32 %v1819, %v2385
      %v2411 = vsub.f32 %v1822, %v2385
      %v2412 = vsub.f32 %v1827, %v2385
      %v2413 = vsub.f32 %v1830, %v2385
      %v2414 = vsub.f32 %v1835, %v2385
      %v2415 = vsub.f32 %v1838, %v2385
      %v2416 = vsub.f32 %v1843, %v2385
      %v2417 = vsub.f32 %v1846, %v2385
      %v2418 = vmul.f32 %v2386, %v2386
      %v2419 = vmul.f32 %v2387, %v2387
      %v2420 = vmul.f32 %v2388, %v2388
      %v2421 = vmul.f32 %v2389, %v2389
      %v2422 = vmul.f32 %v2390, %v2390
      %v2423 = vmul.f32 %v2391, %v2391
      %v2424 = vmul.f32 %v2392, %v2392
      %v2425 = vmul.f32 %v2393, %v2393
      %v2426 = vmul.f32 %v2394, %v2394
      %v2427 = vmul.f32 %v2395, %v2395
      %v2428 = vmul.f32 %v2396, %v2396
      %v2429 = vmul.f32 %v2397, %v2397
      %v2430 = vmul.f32 %v2398, %v2398
      %v2431 = vmul.f32 %v2399, %v2399
      %v2432 = vmul.f32 %v2400, %v2400
      %v2433 = vmul.f32 %v2401, %v2401
      %v2434 = vmul.f32 %v2402, %v2402
      %v2435 = vmul.f32 %v2403, %v2403
      %v2436 = vmul.f32 %v2404, %v2404
      %v2437 = vmul.f32 %v2405, %v2405
      %v2438 = vmul.f32 %v2406, %v2406
      %v2439 = vmul.f32 %v2407, %v2407
      %v2440 = vmul.f32 %v2408, %v2408
      %v2441 = vmul.f32 %v2409, %v2409
      %v2442 = vmul.f32 %v2410, %v2410
      %v2443 = vmul.f32 %v2411, %v2411
      %v2444 = vmul.f32 %v2412, %v2412
      %v2445 = vmul.f32 %v2413, %v2413
      %v2446 = vmul.f32 %v2414, %v2414
      %v2447 = vmul.f32 %v2415, %v2415
      %v2448 = vmul.f32 %v2416, %v2416
      %v2449 = vmul.f32 %v2417, %v2417
      %v2450 = vsel %vm1849, %v2418, 0.0
      %v2451 = vsel %vm1849, %v2419, 0.0
      %v2452 = vadd.f32 %v2450, %v2451
      %v2453 = vsel %vm1849, %v2420, 0.0
      %v2454 = vadd.f32 %v2452, %v2453
      %v2455 = vsel %vm1849, %v2421, 0.0
      %v2456 = vadd.f32 %v2454, %v2455
      %v2457 = vsel %vm1849, %v2422, 0.0
      %v2458 = vadd.f32 %v2456, %v2457
      %v2459 = vsel %vm1849, %v2423, 0.0
      %v2460 = vadd.f32 %v2458, %v2459
      %v2461 = vsel %vm1849, %v2424, 0.0
      %v2462 = vadd.f32 %v2460, %v2461
      %v2463 = vsel %vm1849, %v2425, 0.0
      %v2464 = vadd.f32 %v2462, %v2463
      %v2465 = vsel %vm1849, %v2426, 0.0
      %v2466 = vadd.f32 %v2464, %v2465
      %v2467 = vsel %vm1849, %v2427, 0.0
      %v2468 = vadd.f32 %v2466, %v2467
      %v2469 = vsel %vm1849, %v2428, 0.0
      %v2470 = vadd.f32 %v2468, %v2469
      %v2471 = vsel %vm1849, %v2429, 0.0
      %v2472 = vadd.f32 %v2470, %v2471
      %v2473 = vsel %vm1849, %v2430, 0.0
      %v2474 = vadd.f32 %v2472, %v2473
      %v2475 = vsel %vm1849, %v2431, 0.0
      %v2476 = vadd.f32 %v2474, %v2475
      %v2477 = vsel %vm1849, %v2432, 0.0
      %v2478 = vadd.f32 %v2476, %v2477
      %v2479 = vsel %vm1849, %v2433, 0.0
      %v2480 = vadd.f32 %v2478, %v2479
      %v2481 = vsel %vm1849, %v2434, 0.0
      %v2482 = vadd.f32 %v2480, %v2481
      %v2483 = vsel %vm1849, %v2435, 0.0
      %v2484 = vadd.f32 %v2482, %v2483
      %v2485 = vsel %vm1849, %v2436, 0.0
      %v2486 = vadd.f32 %v2484, %v2485
      %v2487 = vsel %vm1849, %v2437, 0.0
      %v2488 = vadd.f32 %v2486, %v2487
      %v2489 = vsel %vm1849, %v2438, 0.0
      %v2490 = vadd.f32 %v2488, %v2489
      %v2491 = vsel %vm1849, %v2439, 0.0
      %v2492 = vadd.f32 %v2490, %v2491
      %v2493 = vsel %vm1849, %v2440, 0.0
      %v2494 = vadd.f32 %v2492, %v2493
      %v2495 = vsel %vm1849, %v2441, 0.0
      %v2496 = vadd.f32 %v2494, %v2495
      %v2497 = vsel %vm1849, %v2442, 0.0
      %v2498 = vadd.f32 %v2496, %v2497
      %v2499 = vsel %vm1849, %v2443, 0.0
      %v2500 = vadd.f32 %v2498, %v2499
      %v2501 = vsel %vm1849, %v2444, 0.0
      %v2502 = vadd.f32 %v2500, %v2501
      %v2503 = vsel %vm1849, %v2445, 0.0
      %v2504 = vadd.f32 %v2502, %v2503
      %v2505 = vsel %vm1849, %v2446, 0.0
      %v2506 = vadd.f32 %v2504, %v2505
      %v2507 = vsel %vm1849, %v2447, 0.0
      %v2508 = vadd.f32 %v2506, %v2507
      %v2509 = vsel %vm1849, %v2448, 0.0
      %v2510 = vadd.f32 %v2508, %v2509
      %v2511 = vsel %vm1849, %v2449, 0.0
      %v2512 = vadd.f32 %v2510, %v2511
      %v2513 = vrot.slane %v2512, 4
      %v2514 = vadd.f32 %v2512, %v2513
      %v2515 = vrot.slane %v2514, 2
      %v2516 = vadd.f32 %v2514, %v2515
      %v2517 = vrot.slane %v2516, 1
      %v2518 = vadd.f32 %v2516, %v2517
      %v2520 = vsel %vm1849, %v2518, 0
      %2522 = vmatprep.subr.mxu0 0.0
      %v2523 = vand.u32 %v307, 4294901760
      %2524 = vmatpush1.msra.mxu0 %v2523
      %2525 = vmatprep.subr.mxu0 0.0
      %v2526 = vand.u32 %v308, 4294901760
      %2527 = vmatpush1.msra.mxu0 %v2526
      %2528 = vmatprep.subr.mxu0 0.0
      %2529 = vmatpush1.msra.mxu0 0.0
      %2530 = vmatprep.subr.mxu0 0.0
      %2531 = vmatpush1.msra.mxu0 0.0
      %2532 = vmatprep.subr.mxu0 0.0
      %2533 = vmatpush1.msra.mxu0 0.0
      %2534 = vmatprep.subr.mxu0 0.0
      %2535 = vmatpush1.msra.mxu0 0.0
      %2536 = vmatprep.subr.mxu0 0.0
      %2537 = vmatpush1.msra.mxu0 0.0
      %2538 = vmatprep.subr.mxu0 0.0
      %2539 = vmatpush1.msra.mxu0 0.0
      %2540 = vmatprep.subr.mxu0 0.0
      %2541 = vmatpush1.msra.mxu0 0.0
      %2542 = vmatprep.subr.mxu0 0.0
      %2543 = vmatpush1.msra.mxu0 0.0
      %2544 = vmatprep.subr.mxu0 0.0
      %2545 = vmatpush1.msra.mxu0 0.0
      %2546 = vmatprep.subr.mxu0 0.0
      %2547 = vmatpush1.msra.mxu0 0.0
      %2548 = vmatprep.subr.mxu0 0.0
      %2549 = vmatpush1.msra.mxu0 0.0
      %2550 = vmatprep.subr.mxu0 0.0
      %2551 = vmatpush1.msra.mxu0 0.0
      %2552 = vmatprep.subr.mxu0 0.0
      %2553 = vmatpush1.msra.mxu0 0.0
      %2554 = vmatprep.subr.mxu0 0.0
      %2555 = vmatpush1.msra.mxu0 0.0
      %2556 = vmatprep.subr.mxu0 0.0
      %2557 = vmatpush1.msra.mxu0 0.0
      %2558 = vmatprep.subr.mxu0 0.0
      %2559 = vmatpush1.msra.mxu0 0.0
      %2560 = vmatprep.subr.mxu0 0.0
      %2561 = vmatpush1.msra.mxu0 0.0
      %2562 = vmatprep.subr.mxu0 0.0
      %2563 = vmatpush1.msra.mxu0 0.0
      %2564 = vmatprep.subr.mxu0 0.0
      %2565 = vmatpush1.msra.mxu0 0.0
      %2566 = vmatprep.subr.mxu0 0.0
      %2567 = vmatpush1.msra.mxu0 0.0
      %2568 = vmatprep.subr.mxu0 0.0
      %2569 = vmatpush1.msra.mxu0 0.0
      %2570 = vmatprep.subr.mxu0 0.0
      %2571 = vmatpush1.msra.mxu0 0.0
      %2572 = vmatprep.subr.mxu0 0.0
      %2573 = vmatpush1.msra.mxu0 0.0
      %2574 = vmatprep.subr.mxu0 0.0
      %2575 = vmatpush1.msra.mxu0 0.0
      %2576 = vmatprep.subr.mxu0 0.0
      %2577 = vmatpush1.msra.mxu0 0.0
      %2578 = vmatprep.subr.mxu0 0.0
      %2579 = vmatpush1.msra.mxu0 0.0
      %2580 = vmatprep.subr.mxu0 0.0
      %2581 = vmatpush1.msra.mxu0 0.0
      %2582 = vmatprep.subr.mxu0 0.0
      %2583 = vmatpush1.msra.mxu0 0.0
      %2584 = vmatprep.subr.mxu0 0.0
      %2585 = vmatpush1.msra.mxu0 0.0
      %2586 = vmatprep.subr.mxu0 0.0
      %2587 = vmatpush1.msra.mxu0 0.0
      %2588 = vmatprep.mubr.f32.mxu0 0.0
      %v2589 = vand.u32 %v2520, 4294901760
      %v2590 = vsub.f32 %v2520, %v2589
      %v2591 = vand.u32 %v2590, 4294901760
      %v2592 = vsub.f32 %v2590, %v2591
      %v2593 = vand.u32 %v2592, 4294901760
      %2594 = vmatmul.mubr.f32.gmra.mrb[0].mxu0 %v2593
      %v2595 = vpop.f32.mrb[0].mxu0
      %v2596 = vadd.f32 0.0, %v2595
      %v2597 = vpop.f32.mrb[0].mxu0
      %2598 = vdwg.mxu0
      %2599 = vmatprep.subr.mxu0 0.0
      %v2600 = vand.u32 %v307, 4294901760
      %v2601 = vsub.f32 %v307, %v2600
      %v2602 = vand.u32 %v2601, 4294901760
      %v2603 = vsub.f32 %v2601, %v2602
      %v2604 = vand.u32 %v2603, 4294901760
      %2605 = vmatpush1.msra.mxu0 %v2604
      %2606 = vmatprep.subr.mxu0 0.0
      %v2607 = vand.u32 %v308, 4294901760
      %v2608 = vsub.f32 %v308, %v2607
      %v2609 = vand.u32 %v2608, 4294901760
      %v2610 = vsub.f32 %v2608, %v2609
      %v2611 = vand.u32 %v2610, 4294901760
      %2612 = vmatpush1.msra.mxu0 %v2611
      %2613 = vmatprep.subr.mxu0 0.0
      %2614 = vmatpush1.msra.mxu0 0.0
      %2615 = vmatprep.subr.mxu0 0.0
      %2616 = vmatpush1.msra.mxu0 0.0
      %2617 = vmatprep.subr.mxu0 0.0
      %2618 = vmatpush1.msra.mxu0 0.0
      %2619 = vmatprep.subr.mxu0 0.0
      %2620 = vmatpush1.msra.mxu0 0.0
      %2621 = vmatprep.subr.mxu0 0.0
      %2622 = vmatpush1.msra.mxu0 0.0
      %2623 = vmatprep.subr.mxu0 0.0
      %2624 = vmatpush1.msra.mxu0 0.0
      %2625 = vmatprep.subr.mxu0 0.0
      %2626 = vmatpush1.msra.mxu0 0.0
      %2627 = vmatprep.subr.mxu0 0.0
      %2628 = vmatpush1.msra.mxu0 0.0
      %2629 = vmatprep.subr.mxu0 0.0
      %2630 = vmatpush1.msra.mxu0 0.0
      %2631 = vmatprep.subr.mxu0 0.0
      %2632 = vmatpush1.msra.mxu0 0.0
      %2633 = vmatprep.subr.mxu0 0.0
      %2634 = vmatpush1.msra.mxu0 0.0
      %2635 = vmatprep.subr.mxu0 0.0
      %2636 = vmatpush1.msra.mxu0 0.0
      %2637 = vmatprep.subr.mxu0 0.0
      %2638 = vmatpush1.msra.mxu0 0.0
      %2639 = vmatprep.subr.mxu0 0.0
      %2640 = vmatpush1.msra.mxu0 0.0
      %2641 = vmatprep.subr.mxu0 0.0
      %2642 = vmatpush1.msra.mxu0 0.0
      %2643 = vmatprep.subr.mxu0 0.0
      %2644 = vmatpush1.msra.mxu0 0.0
      %2645 = vmatprep.subr.mxu0 0.0
      %2646 = vmatpush1.msra.mxu0 0.0
      %2647 = vmatprep.subr.mxu0 0.0
      %2648 = vmatpush1.msra.mxu0 0.0
      %2649 = vmatprep.subr.mxu0 0.0
      %2650 = vmatpush1.msra.mxu0 0.0
      %2651 = vmatprep.subr.mxu0 0.0
      %2652 = vmatpush1.msra.mxu0 0.0
      %2653 = vmatprep.subr.mxu0 0.0
      %2654 = vmatpush1.msra.mxu0 0.0
      %2655 = vmatprep.subr.mxu0 0.0
      %2656 = vmatpush1.msra.mxu0 0.0
      %2657 = vmatprep.subr.mxu0 0.0
      %2658 = vmatpush1.msra.mxu0 0.0
      %2659 = vmatprep.subr.mxu0 0.0
      %2660 = vmatpush1.msra.mxu0 0.0
      %2661 = vmatprep.subr.mxu0 0.0
      %2662 = vmatpush1.msra.mxu0 0.0
      %2663 = vmatprep.subr.mxu0 0.0
      %2664 = vmatpush1.msra.mxu0 0.0
      %2665 = vmatprep.subr.mxu0 0.0
      %2666 = vmatpush1.msra.mxu0 0.0
      %2667 = vmatprep.subr.mxu0 0.0
      %2668 = vmatpush1.msra.mxu0 0.0
      %2669 = vmatprep.subr.mxu0 0.0
      %2670 = vmatpush1.msra.mxu0 0.0
      %2671 = vmatprep.subr.mxu0 0.0
      %2672 = vmatpush1.msra.mxu0 0.0
      %2673 = vmatprep.mubr.f32.mxu0 0.0
      %v2674 = vand.u32 %v2520, 4294901760
      %2675 = vmatmul.mubr.f32.gmra.mrb[0].mxu0 %v2674
      %v2676 = vpop.f32.mrb[0].mxu0
      %v2677 = vadd.f32 %v2596, %v2676
      %v2678 = vpop.f32.mrb[0].mxu0
      %2679 = vdwg.mxu0
      %2680 = vmatprep.subr.mxu0 0.0
      %v2681 = vand.u32 %v307, 4294901760
      %v2682 = vsub.f32 %v307, %v2681
      %2683 = vmatpush1.msra.mxu0 %v2682
      %2684 = vmatprep.subr.mxu0 0.0
      %v2685 = vand.u32 %v308, 4294901760
      %v2686 = vsub.f32 %v308, %v2685
      %2687 = vmatpush1.msra.mxu0 %v2686
      %2688 = vmatprep.subr.mxu0 0.0
      %2689 = vmatpush1.msra.mxu0 0.0
      %2690 = vmatprep.subr.mxu0 0.0
      %2691 = vmatpush1.msra.mxu0 0.0
      %2692 = vmatprep.subr.mxu0 0.0
      %2693 = vmatpush1.msra.mxu0 0.0
      %2694 = vmatprep.subr.mxu0 0.0
      %2695 = vmatpush1.msra.mxu0 0.0
      %2696 = vmatprep.subr.mxu0 0.0
      %2697 = vmatpush1.msra.mxu0 0.0
      %2698 = vmatprep.subr.mxu0 0.0
      %2699 = vmatpush1.msra.mxu0 0.0
      %2700 = vmatprep.subr.mxu0 0.0
      %2701 = vmatpush1.msra.mxu0 0.0
      %2702 = vmatprep.subr.mxu0 0.0
      %2703 = vmatpush1.msra.mxu0 0.0
      %2704 = vmatprep.subr.mxu0 0.0
      %2705 = vmatpush1.msra.mxu0 0.0
      %2706 = vmatprep.subr.mxu0 0.0
      %2707 = vmatpush1.msra.mxu0 0.0
      %2708 = vmatprep.subr.mxu0 0.0
      %2709 = vmatpush1.msra.mxu0 0.0
      %2710 = vmatprep.subr.mxu0 0.0
      %2711 = vmatpush1.msra.mxu0 0.0
      %2712 = vmatprep.subr.mxu0 0.0
      %2713 = vmatpush1.msra.mxu0 0.0
      %2714 = vmatprep.subr.mxu0 0.0
      %2715 = vmatpush1.msra.mxu0 0.0
      %2716 = vmatprep.subr.mxu0 0.0
      %2717 = vmatpush1.msra.mxu0 0.0
      %2718 = vmatprep.subr.mxu0 0.0
      %2719 = vmatpush1.msra.mxu0 0.0
      %2720 = vmatprep.subr.mxu0 0.0
      %2721 = vmatpush1.msra.mxu0 0.0
      %2722 = vmatprep.subr.mxu0 0.0
      %2723 = vmatpush1.msra.mxu0 0.0
      %2724 = vmatprep.subr.mxu0 0.0
      %2725 = vmatpush1.msra.mxu0 0.0
      %2726 = vmatprep.subr.mxu0 0.0
      %2727 = vmatpush1.msra.mxu0 0.0
      %2728 = vmatprep.subr.mxu0 0.0
      %2729 = vmatpush1.msra.mxu0 0.0
      %2730 = vmatprep.subr.mxu0 0.0
      %2731 = vmatpush1.msra.mxu0 0.0
      %2732 = vmatprep.subr.mxu0 0.0
      %2733 = vmatpush1.msra.mxu0 0.0
      %2734 = vmatprep.subr.mxu0 0.0
      %2735 = vmatpush1.msra.mxu0 0.0
      %2736 = vmatprep.subr.mxu0 0.0
      %2737 = vmatpush1.msra.mxu0 0.0
      %2738 = vmatprep.subr.mxu0 0.0
      %2739 = vmatpush1.msra.mxu0 0.0
      %2740 = vmatprep.subr.mxu0 0.0
      %2741 = vmatpush1.msra.mxu0 0.0
      %2742 = vmatprep.subr.mxu0 0.0
      %2743 = vmatpush1.msra.mxu0 0.0
      %2744 = vmatprep.subr.mxu0 0.0
      %2745 = vmatpush1.msra.mxu0 0.0
      %2746 = vmatprep.subr.mxu0 0.0
      %2747 = vmatpush1.msra.mxu0 0.0
      %2748 = vmatprep.mubr.f32.mxu0 0.0
      %v2749 = vand.u32 %v2520, 4294901760
      %v2750 = vsub.f32 %v2520, %v2749
      %2751 = vmatmul.mubr.f32.gmra.mrb[0].mxu0 %v2750
      %v2752 = vpop.f32.mrb[0].mxu0
      %v2753 = vadd.f32 %v2677, %v2752
      %v2754 = vpop.f32.mrb[0].mxu0
      %2755 = vdwg.mxu0
      %2756 = vmatprep.subr.mxu0 0.0
      %v2757 = vand.u32 %v307, 4294901760
      %2758 = vmatpush1.msra.mxu0 %v2757
      %2759 = vmatprep.subr.mxu0 0.0
      %v2760 = vand.u32 %v308, 4294901760
      %2761 = vmatpush1.msra.mxu0 %v2760
      %2762 = vmatprep.subr.mxu0 0.0
      %2763 = vmatpush1.msra.mxu0 0.0
      %2764 = vmatprep.subr.mxu0 0.0
      %2765 = vmatpush1.msra.mxu0 0.0
      %2766 = vmatprep.subr.mxu0 0.0
      %2767 = vmatpush1.msra.mxu0 0.0
      %2768 = vmatprep.subr.mxu0 0.0
      %2769 = vmatpush1.msra.mxu0 0.0
      %2770 = vmatprep.subr.mxu0 0.0
      %2771 = vmatpush1.msra.mxu0 0.0
      %2772 = vmatprep.subr.mxu0 0.0
      %2773 = vmatpush1.msra.mxu0 0.0
      %2774 = vmatprep.subr.mxu0 0.0
      %2775 = vmatpush1.msra.mxu0 0.0
      %2776 = vmatprep.subr.mxu0 0.0
      %2777 = vmatpush1.msra.mxu0 0.0
      %2778 = vmatprep.subr.mxu0 0.0
      %2779 = vmatpush1.msra.mxu0 0.0
      %2780 = vmatprep.subr.mxu0 0.0
      %2781 = vmatpush1.msra.mxu0 0.0
      %2782 = vmatprep.subr.mxu0 0.0
      %2783 = vmatpush1.msra.mxu0 0.0
      %2784 = vmatprep.subr.mxu0 0.0
      %2785 = vmatpush1.msra.mxu0 0.0
      %2786 = vmatprep.subr.mxu0 0.0
      %2787 = vmatpush1.msra.mxu0 0.0
      %2788 = vmatprep.subr.mxu0 0.0
      %2789 = vmatpush1.msra.mxu0 0.0
      %2790 = vmatprep.subr.mxu0 0.0
      %2791 = vmatpush1.msra.mxu0 0.0
      %2792 = vmatprep.subr.mxu0 0.0
      %2793 = vmatpush1.msra.mxu0 0.0
      %2794 = vmatprep.subr.mxu0 0.0
      %2795 = vmatpush1.msra.mxu0 0.0
      %2796 = vmatprep.subr.mxu0 0.0
      %2797 = vmatpush1.msra.mxu0 0.0
      %2798 = vmatprep.subr.mxu0 0.0
      %2799 = vmatpush1.msra.mxu0 0.0
      %2800 = vmatprep.subr.mxu0 0.0
      %2801 = vmatpush1.msra.mxu0 0.0
      %2802 = vmatprep.subr.mxu0 0.0
      %2803 = vmatpush1.msra.mxu0 0.0
      %2804 = vmatprep.subr.mxu0 0.0
      %2805 = vmatpush1.msra.mxu0 0.0
      %2806 = vmatprep.subr.mxu0 0.0
      %2807 = vmatpush1.msra.mxu0 0.0
      %2808 = vmatprep.subr.mxu0 0.0
      %2809 = vmatpush1.msra.mxu0 0.0
      %2810 = vmatprep.subr.mxu0 0.0
      %2811 = vmatpush1.msra.mxu0 0.0
      %2812 = vmatprep.subr.mxu0 0.0
      %2813 = vmatpush1.msra.mxu0 0.0
      %2814 = vmatprep.subr.mxu0 0.0
      %2815 = vmatpush1.msra.mxu0 0.0
      %2816 = vmatprep.subr.mxu0 0.0
      %2817 = vmatpush1.msra.mxu0 0.0
      %2818 = vmatprep.subr.mxu0 0.0
      %2819 = vmatpush1.msra.mxu0 0.0
      %2820 = vmatprep.subr.mxu0 0.0
      %2821 = vmatpush1.msra.mxu0 0.0
      %2822 = vmatprep.mubr.f32.mxu0 0.0
      %v2823 = vand.u32 %v2520, 4294901760
      %v2824 = vsub.f32 %v2520, %v2823
      %v2825 = vand.u32 %v2824, 4294901760
      %2826 = vmatmul.mubr.f32.gmra.mrb[0].mxu0 %v2825
      %v2827 = vpop.f32.mrb[0].mxu0
      %v2828 = vadd.f32 %v2753, %v2827
      %v2829 = vpop.f32.mrb[0].mxu0
      %2830 = vdwg.mxu0
      %2831 = vmatprep.subr.mxu0 0.0
      %v2832 = vand.u32 %v307, 4294901760
      %v2833 = vsub.f32 %v307, %v2832
      %v2834 = vand.u32 %v2833, 4294901760
      %2835 = vmatpush1.msra.mxu0 %v2834
      %2836 = vmatprep.subr.mxu0 0.0
      %v2837 = vand.u32 %v308, 4294901760
      %v2838 = vsub.f32 %v308, %v2837
      %v2839 = vand.u32 %v2838, 4294901760
      %2840 = vmatpush1.msra.mxu0 %v2839
      %2841 = vmatprep.subr.mxu0 0.0
      %2842 = vmatpush1.msra.mxu0 0.0
      %2843 = vmatprep.subr.mxu0 0.0
      %2844 = vmatpush1.msra.mxu0 0.0
      %2845 = vmatprep.subr.mxu0 0.0
      %2846 = vmatpush1.msra.mxu0 0.0
      %2847 = vmatprep.subr.mxu0 0.0
      %2848 = vmatpush1.msra.mxu0 0.0
      %2849 = vmatprep.subr.mxu0 0.0
      %2850 = vmatpush1.msra.mxu0 0.0
      %2851 = vmatprep.subr.mxu0 0.0
      %2852 = vmatpush1.msra.mxu0 0.0
      %2853 = vmatprep.subr.mxu0 0.0
      %2854 = vmatpush1.msra.mxu0 0.0
      %2855 = vmatprep.subr.mxu0 0.0
      %2856 = vmatpush1.msra.mxu0 0.0
      %2857 = vmatprep.subr.mxu0 0.0
      %2858 = vmatpush1.msra.mxu0 0.0
      %2859 = vmatprep.subr.mxu0 0.0
      %2860 = vmatpush1.msra.mxu0 0.0
      %2861 = vmatprep.subr.mxu0 0.0
      %2862 = vmatpush1.msra.mxu0 0.0
      %2863 = vmatprep.subr.mxu0 0.0
      %2864 = vmatpush1.msra.mxu0 0.0
      %2865 = vmatprep.subr.mxu0 0.0
      %2866 = vmatpush1.msra.mxu0 0.0
      %2867 = vmatprep.subr.mxu0 0.0
      %2868 = vmatpush1.msra.mxu0 0.0
      %2869 = vmatprep.subr.mxu0 0.0
      %2870 = vmatpush1.msra.mxu0 0.0
      %2871 = vmatprep.subr.mxu0 0.0
      %2872 = vmatpush1.msra.mxu0 0.0
      %2873 = vmatprep.subr.mxu0 0.0
      %2874 = vmatpush1.msra.mxu0 0.0
      %2875 = vmatprep.subr.mxu0 0.0
      %2876 = vmatpush1.msra.mxu0 0.0
      %2877 = vmatprep.subr.mxu0 0.0
      %2878 = vmatpush1.msra.mxu0 0.0
      %2879 = vmatprep.subr.mxu0 0.0
      %2880 = vmatpush1.msra.mxu0 0.0
      %2881 = vmatprep.subr.mxu0 0.0
      %2882 = vmatpush1.msra.mxu0 0.0
      %2883 = vmatprep.subr.mxu0 0.0
      %2884 = vmatpush1.msra.mxu0 0.0
      %2885 = vmatprep.subr.mxu0 0.0
      %2886 = vmatpush1.msra.mxu0 0.0
      %2887 = vmatprep.subr.mxu0 0.0
      %2888 = vmatpush1.msra.mxu0 0.0
      %2889 = vmatprep.subr.mxu0 0.0
      %2890 = vmatpush1.msra.mxu0 0.0
      %2891 = vmatprep.subr.mxu0 0.0
      %2892 = vmatpush1.msra.mxu0 0.0
      %2893 = vmatprep.subr.mxu0 0.0
      %2894 = vmatpush1.msra.mxu0 0.0
      %2895 = vmatprep.subr.mxu0 0.0
      %2896 = vmatpush1.msra.mxu0 0.0
      %2897 = vmatprep.subr.mxu0 0.0
      %2898 = vmatpush1.msra.mxu0 0.0
      %2899 = vmatprep.subr.mxu0 0.0
      %2900 = vmatpush1.msra.mxu0 0.0
      %2901 = vmatprep.mubr.f32.mxu0 0.0
      %v2902 = vand.u32 %v2520, 4294901760
      %2903 = vmatmul.mubr.f32.gmra.mrb[0].mxu0 %v2902
      %v2904 = vpop.f32.mrb[0].mxu0
      %v2905 = vadd.f32 %v2828, %v2904
      %v2906 = vpop.f32.mrb[0].mxu0
      %2907 = vdwg.mxu0
      %2908 = vmatprep.subr.mxu0 0.0
      %v2909 = vand.u32 %v307, 4294901760
      %2910 = vmatpush1.msra.mxu0 %v2909
      %2911 = vmatprep.subr.mxu0 0.0
      %v2912 = vand.u32 %v308, 4294901760
      %2913 = vmatpush1.msra.mxu0 %v2912
      %2914 = vmatprep.subr.mxu0 0.0
      %2915 = vmatpush1.msra.mxu0 0.0
      %2916 = vmatprep.subr.mxu0 0.0
      %2917 = vmatpush1.msra.mxu0 0.0
      %2918 = vmatprep.subr.mxu0 0.0
      %2919 = vmatpush1.msra.mxu0 0.0
      %2920 = vmatprep.subr.mxu0 0.0
      %2921 = vmatpush1.msra.mxu0 0.0
      %2922 = vmatprep.subr.mxu0 0.0
      %2923 = vmatpush1.msra.mxu0 0.0
      %2924 = vmatprep.subr.mxu0 0.0
      %2925 = vmatpush1.msra.mxu0 0.0
      %2926 = vmatprep.subr.mxu0 0.0
      %2927 = vmatpush1.msra.mxu0 0.0
      %2928 = vmatprep.subr.mxu0 0.0
      %2929 = vmatpush1.msra.mxu0 0.0
      %2930 = vmatprep.subr.mxu0 0.0
      %2931 = vmatpush1.msra.mxu0 0.0
      %2932 = vmatprep.subr.mxu0 0.0
      %2933 = vmatpush1.msra.mxu0 0.0
      %2934 = vmatprep.subr.mxu0 0.0
      %2935 = vmatpush1.msra.mxu0 0.0
      %2936 = vmatprep.subr.mxu0 0.0
      %2937 = vmatpush1.msra.mxu0 0.0
      %2938 = vmatprep.subr.mxu0 0.0
      %2939 = vmatpush1.msra.mxu0 0.0
      %2940 = vmatprep.subr.mxu0 0.0
      %2941 = vmatpush1.msra.mxu0 0.0
      %2942 = vmatprep.subr.mxu0 0.0
      %2943 = vmatpush1.msra.mxu0 0.0
      %2944 = vmatprep.subr.mxu0 0.0
      %2945 = vmatpush1.msra.mxu0 0.0
      %2946 = vmatprep.subr.mxu0 0.0
      %2947 = vmatpush1.msra.mxu0 0.0
      %2948 = vmatprep.subr.mxu0 0.0
      %2949 = vmatpush1.msra.mxu0 0.0
      %2950 = vmatprep.subr.mxu0 0.0
      %2951 = vmatpush1.msra.mxu0 0.0
      %2952 = vmatprep.subr.mxu0 0.0
      %2953 = vmatpush1.msra.mxu0 0.0
      %2954 = vmatprep.subr.mxu0 0.0
      %2955 = vmatpush1.msra.mxu0 0.0
      %2956 = vmatprep.subr.mxu0 0.0
      %2957 = vmatpush1.msra.mxu0 0.0
      %2958 = vmatprep.subr.mxu0 0.0
      %2959 = vmatpush1.msra.mxu0 0.0
      %2960 = vmatprep.subr.mxu0 0.0
      %2961 = vmatpush1.msra.mxu0 0.0
      %2962 = vmatprep.subr.mxu0 0.0
      %2963 = vmatpush1.msra.mxu0 0.0
      %2964 = vmatprep.subr.mxu0 0.0
      %2965 = vmatpush1.msra.mxu0 0.0
      %2966 = vmatprep.subr.mxu0 0.0
      %2967 = vmatpush1.msra.mxu0 0.0
      %2968 = vmatprep.subr.mxu0 0.0
      %2969 = vmatpush1.msra.mxu0 0.0
      %2970 = vmatprep.subr.mxu0 0.0
      %2971 = vmatpush1.msra.mxu0 0.0
      %2972 = vmatprep.subr.mxu0 0.0
      %2973 = vmatpush1.msra.mxu0 0.0
      %2974 = vmatprep.mubr.f32.mxu0 0.0
      %v2975 = vand.u32 %v2520, 4294901760
      %2976 = vmatmul.mubr.f32.gmra.mrb[0].mxu0 %v2975
      %v2977 = vpop.f32.mrb[0].mxu0
      %v2978 = vadd.f32 %v2905, %v2977
      %v2979 = vpop.f32.mrb[0].mxu0
      %2980 = vdwg.mxu0
      %v2981 = vmul.f32 %v2978, 0.001953125
      %v2982 = vadd.f32 %v2981, 1e-05
      %v2983 = vrsqrt.pop %v2982
      %v2984 = vlaneseq
      %v2985 = vshrl.u32 %v2984, 7
      %v2986 = vsub.s32 0, %v2985
      %v2987 = vrot.slane %v2983, %v2986
      %v2988 = vmul.f32 %v2386, %v2987
      %v2989 = vmul.f32 %v2387, %v2987
      %v2990 = vmul.f32 %v2388, %v2987
      %v2991 = vmul.f32 %v2389, %v2987
      %v2992 = vmul.f32 %v2390, %v2987
      %v2993 = vmul.f32 %v2391, %v2987
      %v2994 = vmul.f32 %v2392, %v2987
      %v2995 = vmul.f32 %v2393, %v2987
      %v2996 = vmul.f32 %v2394, %v2987
      %v2997 = vmul.f32 %v2395, %v2987
      %v2998 = vmul.f32 %v2396, %v2987
      %v2999 = vmul.f32 %v2397, %v2987
      %v3000 = vmul.f32 %v2398, %v2987
      %v3001 = vmul.f32 %v2399, %v2987
      %v3002 = vmul.f32 %v2400, %v2987
      %v3003 = vmul.f32 %v2401, %v2987
      %v3004 = vmul.f32 %v2402, %v2987
      %v3005 = vmul.f32 %v2403, %v2987
      %v3006 = vmul.f32 %v2404, %v2987
      %v3007 = vmul.f32 %v2405, %v2987
      %v3008 = vmul.f32 %v2406, %v2987
      %v3009 = vmul.f32 %v2407, %v2987
      %v3010 = vmul.f32 %v2408, %v2987
      %v3011 = vmul.f32 %v2409, %v2987
      %v3012 = vmul.f32 %v2410, %v2987
      %v3013 = vmul.f32 %v2411, %v2987
      %v3014 = vmul.f32 %v2412, %v2987
      %v3015 = vmul.f32 %v2413, %v2987
      %v3016 = vmul.f32 %v2414, %v2987
      %v3017 = vmul.f32 %v2415, %v2987
      %v3018 = vmul.f32 %v2416, %v2987
      %v3019 = vmul.f32 %v2417, %v2987
      %v3020 = vlaneseq
      %v3021 = vshrl.u32 %v3020, 7
      %v3022 = vsub.s32 1, %v3021
      %v3023 = vrot.slane %v309, %v3022
      %v3024 = vmul.f32 %v2988, %v3023
      %v3025 = vmul.f32 %v2989, %v3023
      %v3026 = vmul.f32 %v2990, %v3023
      %v3027 = vmul.f32 %v2991, %v3023
      %v3028 = vmul.f32 %v2992, %v3023
      %v3029 = vmul.f32 %v2993, %v3023
      %v3030 = vmul.f32 %v2994, %v3023
      %v3031 = vmul.f32 %v2995, %v3023
      %v3032 = vmul.f32 %v2996, %v3023
      %v3033 = vmul.f32 %v2997, %v3023
      %v3034 = vmul.f32 %v2998, %v3023
      %v3035 = vmul.f32 %v2999, %v3023
      %v3036 = vmul.f32 %v3000, %v3023
      %v3037 = vmul.f32 %v3001, %v3023
      %v3038 = vmul.f32 %v3002, %v3023
      %v3039 = vmul.f32 %v3003, %v3023
      %v3040 = vmul.f32 %v3004, %v3023
      %v3041 = vmul.f32 %v3005, %v3023
      %v3042 = vmul.f32 %v3006, %v3023
      %v3043 = vmul.f32 %v3007, %v3023
      %v3044 = vmul.f32 %v3008, %v3023
      %v3045 = vmul.f32 %v3009, %v3023
      %v3046 = vmul.f32 %v3010, %v3023
      %v3047 = vmul.f32 %v3011, %v3023
      %v3048 = vmul.f32 %v3012, %v3023
      %v3049 = vmul.f32 %v3013, %v3023
      %v3050 = vmul.f32 %v3014, %v3023
      %v3051 = vmul.f32 %v3015, %v3023
      %v3052 = vmul.f32 %v3016, %v3023
      %v3053 = vmul.f32 %v3017, %v3023
      %v3054 = vmul.f32 %v3018, %v3023
      %v3055 = vmul.f32 %v3019, %v3023
      %v3056 = vlaneseq
      %v3057 = vshrl.u32 %v3056, 7
      %v3058 = vsub.s32 2, %v3057
      %v3059 = vrot.slane %v309, %v3058
      %v3060 = vadd.f32 %v3024, %v3059
      %v3061 = vadd.f32 %v3025, %v3059
      %v3062 = vadd.f32 %v3026, %v3059
      %v3063 = vadd.f32 %v3027, %v3059
      %v3064 = vadd.f32 %v3028, %v3059
      %v3065 = vadd.f32 %v3029, %v3059
      %v3066 = vadd.f32 %v3030, %v3059
      %v3067 = vadd.f32 %v3031, %v3059
      %v3068 = vadd.f32 %v3032, %v3059
      %v3069 = vadd.f32 %v3033, %v3059
      %v3070 = vadd.f32 %v3034, %v3059
      %v3071 = vadd.f32 %v3035, %v3059
      %v3072 = vadd.f32 %v3036, %v3059
      %v3073 = vadd.f32 %v3037, %v3059
      %v3074 = vadd.f32 %v3038, %v3059
      %v3075 = vadd.f32 %v3039, %v3059
      %v3076 = vadd.f32 %v3040, %v3059
      %v3077 = vadd.f32 %v3041, %v3059
      %v3078 = vadd.f32 %v3042, %v3059
      %v3079 = vadd.f32 %v3043, %v3059
      %v3080 = vadd.f32 %v3044, %v3059
      %v3081 = vadd.f32 %v3045, %v3059
      %v3082 = vadd.f32 %v3046, %v3059
      %v3083 = vadd.f32 %v3047, %v3059
      %v3084 = vadd.f32 %v3048, %v3059
      %v3085 = vadd.f32 %v3049, %v3059
      %v3086 = vadd.f32 %v3050, %v3059
      %v3087 = vadd.f32 %v3051, %v3059
      %v3088 = vadd.f32 %v3052, %v3059
      %v3089 = vadd.f32 %v3053, %v3059
      %v3090 = vadd.f32 %v3054, %v3059
      %v3091 = vadd.f32 %v3055, %v3059
      %v3092 = vadd.f32 %v384, 1.0
      %v3093 = vlaneseq
      %v3094 = vshrl.u32 %v3093, 7
      %v3095 = vsub.s32 0, %v3094
      %v3096 = vrot.slane %v3092, %v3095
      %v3097 = vmul.f32 %v3060, %v3096
      %v3098 = vmul.f32 %v3061, %v3096
      %v3099 = vmul.f32 %v3062, %v3096
      %v3100 = vmul.f32 %v3063, %v3096
      %v3101 = vmul.f32 %v3064, %v3096
      %v3102 = vmul.f32 %v3065, %v3096
      %v3103 = vmul.f32 %v3066, %v3096
      %v3104 = vmul.f32 %v3067, %v3096
      %v3105 = vmul.f32 %v3068, %v3096
      %v3106 = vmul.f32 %v3069, %v3096
      %v3107 = vmul.f32 %v3070, %v3096
      %v3108 = vmul.f32 %v3071, %v3096
      %v3109 = vmul.f32 %v3072, %v3096
      %v3110 = vmul.f32 %v3073, %v3096
      %v3111 = vmul.f32 %v3074, %v3096
      %v3112 = vmul.f32 %v3075, %v3096
      %v3113 = vmul.f32 %v3076, %v3096
      %v3114 = vmul.f32 %v3077, %v3096
      %v3115 = vmul.f32 %v3078, %v3096
      %v3116 = vmul.f32 %v3079, %v3096
      %v3117 = vmul.f32 %v3080, %v3096
      %v3118 = vmul.f32 %v3081, %v3096
      %v3119 = vmul.f32 %v3082, %v3096
      %v3120 = vmul.f32 %v3083, %v3096
      %v3121 = vmul.f32 %v3084, %v3096
      %v3122 = vmul.f32 %v3085, %v3096
      %v3123 = vmul.f32 %v3086, %v3096
      %v3124 = vmul.f32 %v3087, %v3096
      %v3125 = vmul.f32 %v3088, %v3096
      %v3126 = vmul.f32 %v3089, %v3096
      %v3127 = vmul.f32 %v3090, %v3096
      %v3128 = vmul.f32 %v3091, %v3096
      %v3129 = vlaneseq
      %v3130 = vshrl.u32 %v3129, 7
      %v3131 = vsub.s32 0, %v3130
      %v3132 = vrot.slane %v389, %v3131
      %3134 = vrot.lane.b32.xlu0 %v3132, 112
      %v3135 = vpop.permute.xlu0 %3134
      %v3137 = vadd.f32 %v3097, %v3135
      %v3138 = vadd.f32 %v3098, %v3135
      %v3139 = vadd.f32 %v3099, %v3135
      %v3140 = vadd.f32 %v3100, %v3135
      %v3141 = vadd.f32 %v3101, %v3135
      %v3142 = vadd.f32 %v3102, %v3135
      %v3143 = vadd.f32 %v3103, %v3135
      %v3144 = vadd.f32 %v3104, %v3135
      %v3145 = vadd.f32 %v3105, %v3135
      %v3146 = vadd.f32 %v3106, %v3135
      %v3147 = vadd.f32 %v3107, %v3135
      %v3148 = vadd.f32 %v3108, %v3135
      %v3149 = vadd.f32 %v3109, %v3135
      %v3150 = vadd.f32 %v3110, %v3135
      %v3151 = vadd.f32 %v3111, %v3135
      %v3152 = vadd.f32 %v3112, %v3135
      %v3153 = vadd.f32 %v3113, %v3135
      %v3154 = vadd.f32 %v3114, %v3135
      %v3155 = vadd.f32 %v3115, %v3135
      %v3156 = vadd.f32 %v3116, %v3135
      %v3157 = vadd.f32 %v3117, %v3135
      %v3158 = vadd.f32 %v3118, %v3135
      %v3159 = vadd.f32 %v3119, %v3135
      %v3160 = vadd.f32 %v3120, %v3135
      %v3161 = vadd.f32 %v3121, %v3135
      %v3162 = vadd.f32 %v3122, %v3135
      %v3163 = vadd.f32 %v3123, %v3135
      %v3164 = vadd.f32 %v3124, %v3135
      %v3165 = vadd.f32 %v3125, %v3135
      %v3166 = vadd.f32 %v3126, %v3135
      %v3167 = vadd.f32 %v3127, %v3135
      %v3168 = vadd.f32 %v3128, %v3135
      %v3169 = vxor.u32 %v3137, 2147483648
      %v3170 = vxor.u32 %v3138, 2147483648
      %v3171 = vxor.u32 %v3139, 2147483648
      %v3172 = vxor.u32 %v3140, 2147483648
      %v3173 = vxor.u32 %v3141, 2147483648
      %v3174 = vxor.u32 %v3142, 2147483648
      %v3175 = vxor.u32 %v3143, 2147483648
      %v3176 = vxor.u32 %v3144, 2147483648
      %v3177 = vxor.u32 %v3145, 2147483648
      %v3178 = vxor.u32 %v3146, 2147483648
      %v3179 = vxor.u32 %v3147, 2147483648
      %v3180 = vxor.u32 %v3148, 2147483648
      %v3181 = vxor.u32 %v3149, 2147483648
      %v3182 = vxor.u32 %v3150, 2147483648
      %v3183 = vxor.u32 %v3151, 2147483648
      %v3184 = vxor.u32 %v3152, 2147483648
      %v3185 = vxor.u32 %v3153, 2147483648
      %v3186 = vxor.u32 %v3154, 2147483648
      %v3187 = vxor.u32 %v3155, 2147483648
      %v3188 = vxor.u32 %v3156, 2147483648
      %v3189 = vxor.u32 %v3157, 2147483648
      %v3190 = vxor.u32 %v3158, 2147483648
      %v3191 = vxor.u32 %v3159, 2147483648
      %v3192 = vxor.u32 %v3160, 2147483648
      %v3193 = vxor.u32 %v3161, 2147483648
      %v3194 = vxor.u32 %v3162, 2147483648
      %v3195 = vxor.u32 %v3163, 2147483648
      %v3196 = vxor.u32 %v3164, 2147483648
      %v3197 = vxor.u32 %v3165, 2147483648
      %v3198 = vxor.u32 %v3166, 2147483648
      %v3199 = vxor.u32 %v3167, 2147483648
      %v3200 = vxor.u32 %v3168, 2147483648
      %v3201 = vmul.f32 %v3169, 1.442695
      %v3202 = vpow.pop %v3201
      %v3203 = vmul.f32 %v3170, 1.442695
      %v3204 = vpow.pop %v3203
      %v3205 = vmul.f32 %v3171, 1.442695
      %v3206 = vpow.pop %v3205
      %v3207 = vmul.f32 %v3172, 1.442695
      %v3208 = vpow.pop %v3207
      %v3209 = vmul.f32 %v3173, 1.442695
      %v3210 = vpow.pop %v3209
      %v3211 = vmul.f32 %v3174, 1.442695
      %v3212 = vpow.pop %v3211
      %v3213 = vmul.f32 %v3175, 1.442695
      %v3214 = vpow.pop %v3213
      %v3215 = vmul.f32 %v3176, 1.442695
      %v3216 = vpow.pop %v3215
      %v3217 = vmul.f32 %v3177, 1.442695
      %v3218 = vpow.pop %v3217
      %v3219 = vmul.f32 %v3178, 1.442695
      %v3220 = vpow.pop %v3219
      %v3221 = vmul.f32 %v3179, 1.442695
      %v3222 = vpow.pop %v3221
      %v3223 = vmul.f32 %v3180, 1.442695
      %v3224 = vpow.pop %v3223
      %v3225 = vmul.f32 %v3181, 1.442695
      %v3226 = vpow.pop %v3225
      %v3227 = vmul.f32 %v3182, 1.442695
      %v3228 = vpow.pop %v3227
      %v3229 = vmul.f32 %v3183, 1.442695
      %v3230 = vpow.pop %v3229
      %v3231 = vmul.f32 %v3184, 1.442695
      %v3232 = vpow.pop %v3231
      %v3233 = vmul.f32 %v3185, 1.442695
      %v3234 = vpow.pop %v3233
      %v3235 = vmul.f32 %v3186, 1.442695
      %v3236 = vpow.pop %v3235
      %v3237 = vmul.f32 %v3187, 1.442695
      %v3238 = vpow.pop %v3237
      %v3239 = vmul.f32 %v3188, 1.442695
      %v3240 = vpow.pop %v3239
      %v3241 = vmul.f32 %v3189, 1.442695
      %v3242 = vpow.pop %v3241
      %v3243 = vmul.f32 %v3190, 1.442695
      %v3244 = vpow.pop %v3243
      %v3245 = vmul.f32 %v3191, 1.442695
      %v3246 = vpow.pop %v3245
      %v3247 = vmul.f32 %v3192, 1.442695
      %v3248 = vpow.pop %v3247
      %v3249 = vmul.f32 %v3193, 1.442695
      %v3250 = vpow.pop %v3249
      %v3251 = vmul.f32 %v3194, 1.442695
      %v3252 = vpow.pop %v3251
      %v3253 = vmul.f32 %v3195, 1.442695
      %v3254 = vpow.pop %v3253
      %v3255 = vmul.f32 %v3196, 1.442695
      %v3256 = vpow.pop %v3255
      %v3257 = vmul.f32 %v3197, 1.442695
      %v3258 = vpow.pop %v3257
      %v3259 = vmul.f32 %v3198, 1.442695
      %v3260 = vpow.pop %v3259
      %v3261 = vmul.f32 %v3199, 1.442695
      %v3262 = vpow.pop %v3261
      %v3263 = vmul.f32 %v3200, 1.442695
      %v3264 = vpow.pop %v3263
      %v3265 = vadd.f32 %v3202, 1.0
      %v3266 = vadd.f32 %v3204, 1.0
      %v3267 = vadd.f32 %v3206, 1.0
      %v3268 = vadd.f32 %v3208, 1.0
      %v3269 = vadd.f32 %v3210, 1.0
      %v3270 = vadd.f32 %v3212, 1.0
      %v3271 = vadd.f32 %v3214, 1.0
      %v3272 = vadd.f32 %v3216, 1.0
      %v3273 = vadd.f32 %v3218, 1.0
      %v3274 = vadd.f32 %v3220, 1.0
      %v3275 = vadd.f32 %v3222, 1.0
      %v3276 = vadd.f32 %v3224, 1.0
      %v3277 = vadd.f32 %v3226, 1.0
      %v3278 = vadd.f32 %v3228, 1.0
      %v3279 = vadd.f32 %v3230, 1.0
      %v3280 = vadd.f32 %v3232, 1.0
      %v3281 = vadd.f32 %v3234, 1.0
      %v3282 = vadd.f32 %v3236, 1.0
      %v3283 = vadd.f32 %v3238, 1.0
      %v3284 = vadd.f32 %v3240, 1.0
      %v3285 = vadd.f32 %v3242, 1.0
      %v3286 = vadd.f32 %v3244, 1.0
      %v3287 = vadd.f32 %v3246, 1.0
      %v3288 = vadd.f32 %v3248, 1.0
      %v3289 = vadd.f32 %v3250, 1.0
      %v3290 = vadd.f32 %v3252, 1.0
      %v3291 = vadd.f32 %v3254, 1.0
      %v3292 = vadd.f32 %v3256, 1.0
      %v3293 = vadd.f32 %v3258, 1.0
      %v3294 = vadd.f32 %v3260, 1.0
      %v3295 = vadd.f32 %v3262, 1.0
      %v3296 = vadd.f32 %v3264, 1.0
      %v3297 = vrcp.pop %v3265
      %v3298 = vmul.f32 1.0, %v3297
      %v3299 = vrcp.pop %v3266
      %v3300 = vmul.f32 1.0, %v3299
      %v3301 = vrcp.pop %v3267
      %v3302 = vmul.f32 1.0, %v3301
      %v3303 = vrcp.pop %v3268
      %v3304 = vmul.f32 1.0, %v3303
      %v3305 = vrcp.pop %v3269
      %v3306 = vmul.f32 1.0, %v3305
      %v3307 = vrcp.pop %v3270
      %v3308 = vmul.f32 1.0, %v3307
      %v3309 = vrcp.pop %v3271
      %v3310 = vmul.f32 1.0, %v3309
      %v3311 = vrcp.pop %v3272
      %v3312 = vmul.f32 1.0, %v3311
      %v3313 = vrcp.pop %v3273
      %v3314 = vmul.f32 1.0, %v3313
      %v3315 = vrcp.pop %v3274
      %v3316 = vmul.f32 1.0, %v3315
      %v3317 = vrcp.pop %v3275
      %v3318 = vmul.f32 1.0, %v3317
      %v3319 = vrcp.pop %v3276
      %v3320 = vmul.f32 1.0, %v3319
      %v3321 = vrcp.pop %v3277
      %v3322 = vmul.f32 1.0, %v3321
      %v3323 = vrcp.pop %v3278
      %v3324 = vmul.f32 1.0, %v3323
      %v3325 = vrcp.pop %v3279
      %v3326 = vmul.f32 1.0, %v3325
      %v3327 = vrcp.pop %v3280
      %v3328 = vmul.f32 1.0, %v3327
      %v3329 = vrcp.pop %v3281
      %v3330 = vmul.f32 1.0, %v3329
      %v3331 = vrcp.pop %v3282
      %v3332 = vmul.f32 1.0, %v3331
      %v3333 = vrcp.pop %v3283
      %v3334 = vmul.f32 1.0, %v3333
      %v3335 = vrcp.pop %v3284
      %v3336 = vmul.f32 1.0, %v3335
      %v3337 = vrcp.pop %v3285
      %v3338 = vmul.f32 1.0, %v3337
      %v3339 = vrcp.pop %v3286
      %v3340 = vmul.f32 1.0, %v3339
      %v3341 = vrcp.pop %v3287
      %v3342 = vmul.f32 1.0, %v3341
      %v3343 = vrcp.pop %v3288
      %v3344 = vmul.f32 1.0, %v3343
      %v3345 = vrcp.pop %v3289
      %v3346 = vmul.f32 1.0, %v3345
      %v3347 = vrcp.pop %v3290
      %v3348 = vmul.f32 1.0, %v3347
      %v3349 = vrcp.pop %v3291
      %v3350 = vmul.f32 1.0, %v3349
      %v3351 = vrcp.pop %v3292
      %v3352 = vmul.f32 1.0, %v3351
      %v3353 = vrcp.pop %v3293
      %v3354 = vmul.f32 1.0, %v3353
      %v3355 = vrcp.pop %v3294
      %v3356 = vmul.f32 1.0, %v3355
      %v3357 = vrcp.pop %v3295
      %v3358 = vmul.f32 1.0, %v3357
      %v3359 = vrcp.pop %v3296
      %v3360 = vmul.f32 1.0, %v3359
      %v3361 = vmul.f32 %v3137, %v3298
      %v3362 = vmul.f32 %v3138, %v3300
      %v3363 = vmul.f32 %v3139, %v3302
      %v3364 = vmul.f32 %v3140, %v3304
      %v3365 = vmul.f32 %v3141, %v3306
      %v3366 = vmul.f32 %v3142, %v3308
      %v3367 = vmul.f32 %v3143, %v3310
      %v3368 = vmul.f32 %v3144, %v3312
      %v3369 = vmul.f32 %v3145, %v3314
      %v3370 = vmul.f32 %v3146, %v3316
      %v3371 = vmul.f32 %v3147, %v3318
      %v3372 = vmul.f32 %v3148, %v3320
      %v3373 = vmul.f32 %v3149, %v3322
      %v3374 = vmul.f32 %v3150, %v3324
      %v3375 = vmul.f32 %v3151, %v3326
      %v3376 = vmul.f32 %v3152, %v3328
      %v3377 = vmul.f32 %v3153, %v3330
      %v3378 = vmul.f32 %v3154, %v3332
      %v3379 = vmul.f32 %v3155, %v3334
      %v3380 = vmul.f32 %v3156, %v3336
      %v3381 = vmul.f32 %v3157, %v3338
      %v3382 = vmul.f32 %v3158, %v3340
      %v3383 = vmul.f32 %v3159, %v3342
      %v3384 = vmul.f32 %v3160, %v3344
      %v3385 = vmul.f32 %v3161, %v3346
      %v3386 = vmul.f32 %v3162, %v3348
      %v3387 = vmul.f32 %v3163, %v3350
      %v3388 = vmul.f32 %v3164, %v3352
      %v3389 = vmul.f32 %v3165, %v3354
      %v3390 = vmul.f32 %v3166, %v3356
      %v3391 = vmul.f32 %v3167, %v3358
      %v3392 = vmul.f32 %v3168, %v3360
      %s3393 = scalar_lea.vmem [#allocation3], 32
      %3394 = vst.msk [vmem:[%s3393 + $0x8] sm:$0xff] %vm1849, %v3361
      %3395 = vst.msk [vmem:[%s3393 + $0x10] sm:$0xff] %vm1849, %v3362
      %3396 = vst.msk [vmem:[%s3393 + $0x28] sm:$0xff] %vm1849, %v3363
      %3397 = vst.msk [vmem:[%s3393 + $0x30] sm:$0xff] %vm1849, %v3364
      %3398 = vst.msk [vmem:[%s3393 + $0x48] sm:$0xff] %vm1849, %v3365
      %3399 = vst.msk [vmem:[%s3393 + $0x50] sm:$0xff] %vm1849, %v3366
      %3400 = vst.msk [vmem:[%s3393 + $0x68] sm:$0xff] %vm1849, %v3367
      %3401 = vst.msk [vmem:[%s3393 + $0x70] sm:$0xff] %vm1849, %v3368
      %3402 = vst.msk [vmem:[%s3393 + $0x88] sm:$0xff] %vm1849, %v3369
      %3403 = vst.msk [vmem:[%s3393 + $0x90] sm:$0xff] %vm1849, %v3370
      %3404 = vst.msk [vmem:[%s3393 + $0xa8] sm:$0xff] %vm1849, %v3371
      %3405 = vst.msk [vmem:[%s3393 + $0xb0] sm:$0xff] %vm1849, %v3372
      %3406 = vst.msk [vmem:[%s3393 + $0xc8] sm:$0xff] %vm1849, %v3373
      %3407 = vst.msk [vmem:[%s3393 + $0xd0] sm:$0xff] %vm1849, %v3374
      %3408 = vst.msk [vmem:[%s3393 + $0xe8] sm:$0xff] %vm1849, %v3375
      %3409 = vst.msk [vmem:[%s3393 + $0xf0] sm:$0xff] %vm1849, %v3376
      %3410 = vst.msk [vmem:[%s3393 + $0x108] sm:$0xff] %vm1849, %v3377
      %3411 = vst.msk [vmem:[%s3393 + $0x110] sm:$0xff] %vm1849, %v3378
      %3412 = vst.msk [vmem:[%s3393 + $0x128] sm:$0xff] %vm1849, %v3379
      %3413 = vst.msk [vmem:[%s3393 + $0x130] sm:$0xff] %vm1849, %v3380
      %3414 = vst.msk [vmem:[%s3393 + $0x148] sm:$0xff] %vm1849, %v3381
      %3415 = vst.msk [vmem:[%s3393 + $0x150] sm:$0xff] %vm1849, %v3382
      %3416 = vst.msk [vmem:[%s3393 + $0x168] sm:$0xff] %vm1849, %v3383
      %3417 = vst.msk [vmem:[%s3393 + $0x170] sm:$0xff] %vm1849, %v3384
      %3418 = vst.msk [vmem:[%s3393 + $0x188] sm:$0xff] %vm1849, %v3385
      %3419 = vst.msk [vmem:[%s3393 + $0x190] sm:$0xff] %vm1849, %v3386
      %3420 = vst.msk [vmem:[%s3393 + $0x1a8] sm:$0xff] %vm1849, %v3387
      %3421 = vst.msk [vmem:[%s3393 + $0x1b0] sm:$0xff] %vm1849, %v3388
      %3422 = vst.msk [vmem:[%s3393 + $0x1c8] sm:$0xff] %vm1849, %v3389
      %3423 = vst.msk [vmem:[%s3393 + $0x1d0] sm:$0xff] %vm1849, %v3390
      %3424 = vst.msk [vmem:[%s3393 + $0x1e8] sm:$0xff] %vm1849, %v3391
      %3425 = vst.msk [vmem:[%s3393 + $0x1f0] sm:$0xff] %vm1849, %v3392
      %3426 = vst.msk [vmem:[#allocation3] sm:$0xff] %vm1849, 0.0
      %3427 = vst.msk [vmem:[#allocation3 + $0x8] sm:$0xff] %vm1849, 0.0
      %3428 = vst.msk [vmem:[#allocation3 + $0x10] sm:$0xff] %vm1849, 0.0
      %3429 = vst.msk [vmem:[#allocation3 + $0x18] sm:$0xff] %vm1849, 0.0
      %s3430 = scalar_lea.vmem [#allocation3], 544
      %3431 = vst.msk [vmem:[%s3430] sm:$0xff] %vm1849, 0.0
      %3432 = vst.msk [vmem:[%s3430 + $0x8] sm:$0xff] %vm1849, 0.0
      %3433 = vst.msk [vmem:[%s3430 + $0x10] sm:$0xff] %vm1849, 0.0
      %3434 = vst.msk [vmem:[%s3430 + $0x18] sm:$0xff] %vm1849, 0.0
      %vm3435 = vcmask 122880
      %3436 = vst.msk [vmem:[%s3393 + $0x7] sm:$0x1] %vm3435, 0.0
      %3437 = vst.msk [vmem:[%s3393 + $0x27] sm:$0x1] %vm3435, 0.0
      %3438 = vst.msk [vmem:[%s3393 + $0x47] sm:$0x1] %vm3435, 0.0
      %3439 = vst.msk [vmem:[%s3393 + $0x67] sm:$0x1] %vm3435, 0.0
      %3440 = vst.msk [vmem:[%s3393 + $0x87] sm:$0x1] %vm3435, 0.0
      %3441 = vst.msk [vmem:[%s3393 + $0xa7] sm:$0x1] %vm3435, 0.0
      %3442 = vst.msk [vmem:[%s3393 + $0xc7] sm:$0x1] %vm3435, 0.0
      %3443 = vst.msk [vmem:[%s3393 + $0xe7] sm:$0x1] %vm3435, 0.0
      %3444 = vst.msk [vmem:[%s3393 + $0x107] sm:$0x1] %vm3435, 0.0
      %3445 = vst.msk [vmem:[%s3393 + $0x127] sm:$0x1] %vm3435, 0.0
      %3446 = vst.msk [vmem:[%s3393 + $0x147] sm:$0x1] %vm3435, 0.0
      %3447 = vst.msk [vmem:[%s3393 + $0x167] sm:$0x1] %vm3435, 0.0
      %3448 = vst.msk [vmem:[%s3393 + $0x187] sm:$0x1] %vm3435, 0.0
      %3449 = vst.msk [vmem:[%s3393 + $0x1a7] sm:$0x1] %vm3435, 0.0
      %3450 = vst.msk [vmem:[%s3393 + $0x1c7] sm:$0x1] %vm3435, 0.0
      %3451 = vst.msk [vmem:[%s3393 + $0x1e7] sm:$0x1] %vm3435, 0.0
      %3452 = vst.msk [vmem:[%s3393 + $0x18] sm:$0x1] %vm3435, 0.0
      %3453 = vst.msk [vmem:[%s3393 + $0x38] sm:$0x1] %vm3435, 0.0
      %3454 = vst.msk [vmem:[%s3393 + $0x58] sm:$0x1] %vm3435, 0.0
      %3455 = vst.msk [vmem:[%s3393 + $0x78] sm:$0x1] %vm3435, 0.0
      %3456 = vst.msk [vmem:[%s3393 + $0x98] sm:$0x1] %vm3435, 0.0
      %3457 = vst.msk [vmem:[%s3393 + $0xb8] sm:$0x1] %vm3435, 0.0
      %3458 = vst.msk [vmem:[%s3393 + $0xd8] sm:$0x1] %vm3435, 0.0
      %3459 = vst.msk [vmem:[%s3393 + $0xf8] sm:$0x1] %vm3435, 0.0
      %3460 = vst.msk [vmem:[%s3393 + $0x118] sm:$0x1] %vm3435, 0.0
      %3461 = vst.msk [vmem:[%s3393 + $0x138] sm:$0x1] %vm3435, 0.0
      %3462 = vst.msk [vmem:[%s3393 + $0x158] sm:$0x1] %vm3435, 0.0
      %3463 = vst.msk [vmem:[%s3393 + $0x178] sm:$0x1] %vm3435, 0.0
      %3464 = vst.msk [vmem:[%s3393 + $0x198] sm:$0x1] %vm3435, 0.0
      %3465 = vst.msk [vmem:[%s3393 + $0x1b8] sm:$0x1] %vm3435, 0.0
      %3466 = vst.msk [vmem:[%s3393 + $0x1d8] sm:$0x1] %vm3435, 0.0
      %3467 = vst.msk [vmem:[%s3393 + $0x1f8] sm:$0x1] %vm3435, 0.0
      %v3468 = vld [vmem:[#allocation3 + $0x7] sm:$0xff]
      %v3469 = vld [vmem:[#allocation3 + $0xf] sm:$0xff]
      %v3470 = vld [vmem:[#allocation3 + $0x27] sm:$0xff]
      %v3471 = vld [vmem:[#allocation3 + $0x2f] sm:$0xff]
      %v3472 = vld [vmem:[#allocation3 + $0x47] sm:$0xff]
      %v3473 = vld [vmem:[#allocation3 + $0x4f] sm:$0xff]
      %v3474 = vld [vmem:[#allocation3 + $0x67] sm:$0xff]
      %v3475 = vld [vmem:[#allocation3 + $0x6f] sm:$0xff]
      %v3476 = vld [vmem:[#allocation3 + $0x87] sm:$0xff]
      %v3477 = vld [vmem:[#allocation3 + $0x8f] sm:$0xff]
      %v3478 = vld [vmem:[#allocation3 + $0xa7] sm:$0xff]
      %v3479 = vld [vmem:[#allocation3 + $0xaf] sm:$0xff]
      %v3480 = vld [vmem:[#allocation3 + $0xc7] sm:$0xff]
      %v3481 = vld [vmem:[#allocation3 + $0xcf] sm:$0xff]
      %v3482 = vld [vmem:[#allocation3 + $0xe7] sm:$0xff]
      %v3483 = vld [vmem:[#allocation3 + $0xef] sm:$0xff]
      %v3484 = vld [vmem:[#allocation3 + $0x107] sm:$0xff]
      %v3485 = vld [vmem:[#allocation3 + $0x10f] sm:$0xff]
      %v3486 = vld [vmem:[#allocation3 + $0x127] sm:$0xff]
      %v3487 = vld [vmem:[#allocation3 + $0x12f] sm:$0xff]
      %v3488 = vld [vmem:[#allocation3 + $0x147] sm:$0xff]
      %v3489 = vld [vmem:[#allocation3 + $0x14f] sm:$0xff]
      %v3490 = vld [vmem:[#allocation3 + $0x167] sm:$0xff]
      %v3491 = vld [vmem:[#allocation3 + $0x16f] sm:$0xff]
      %v3492 = vld [vmem:[#allocation3 + $0x187] sm:$0xff]
      %v3493 = vld [vmem:[#allocation3 + $0x18f] sm:$0xff]
      %v3494 = vld [vmem:[#allocation3 + $0x1a7] sm:$0xff]
      %v3495 = vld [vmem:[#allocation3 + $0x1af] sm:$0xff]
      %v3496 = vld [vmem:[#allocation3 + $0x1c7] sm:$0xff]
      %v3497 = vld [vmem:[#allocation3 + $0x1cf] sm:$0xff]
      %v3498 = vld [vmem:[#allocation3 + $0x1e7] sm:$0xff]
      %v3499 = vld [vmem:[#allocation3 + $0x1ef] sm:$0xff]
      %v3500 = vpack.c.bf16 %v3469, %v3468
      %v3501 = vpack.c.bf16 %v3471, %v3470
      %v3502 = vpack.c.bf16 %v3473, %v3472
      %v3503 = vpack.c.bf16 %v3475, %v3474
      %v3504 = vpack.c.bf16 %v3477, %v3476
      %v3505 = vpack.c.bf16 %v3479, %v3478
      %v3506 = vpack.c.bf16 %v3481, %v3480
      %v3507 = vpack.c.bf16 %v3483, %v3482
      %v3508 = vpack.c.bf16 %v3485, %v3484
      %v3509 = vpack.c.bf16 %v3487, %v3486
      %v3510 = vpack.c.bf16 %v3489, %v3488
      %v3511 = vpack.c.bf16 %v3491, %v3490
      %v3512 = vpack.c.bf16 %v3493, %v3492
      %v3513 = vpack.c.bf16 %v3495, %v3494
      %v3514 = vpack.c.bf16 %v3497, %v3496
      %v3515 = vpack.c.bf16 %v3499, %v3498
      %3516 = vst.msk [vmem:[#allocation5] sm:$0xff] %vm1849, %v3500
      %3517 = vst.msk [vmem:[#allocation5 + $0x10] sm:$0xff] %vm1849, %v3501
      %3518 = vst.msk [vmem:[#allocation5 + $0x20] sm:$0xff] %vm1849, %v3502
      %3519 = vst.msk [vmem:[#allocation5 + $0x30] sm:$0xff] %vm1849, %v3503
      %3520 = vst.msk [vmem:[#allocation5 + $0x40] sm:$0xff] %vm1849, %v3504
      %3521 = vst.msk [vmem:[#allocation5 + $0x50] sm:$0xff] %vm1849, %v3505
      %3522 = vst.msk [vmem:[#allocation5 + $0x60] sm:$0xff] %vm1849, %v3506
      %3523 = vst.msk [vmem:[#allocation5 + $0x70] sm:$0xff] %vm1849, %v3507
      %3524 = vst.msk [vmem:[#allocation5 + $0x80] sm:$0xff] %vm1849, %v3508
      %3525 = vst.msk [vmem:[#allocation5 + $0x90] sm:$0xff] %vm1849, %v3509
      %3526 = vst.msk [vmem:[#allocation5 + $0xa0] sm:$0xff] %vm1849, %v3510
      %3527 = vst.msk [vmem:[#allocation5 + $0xb0] sm:$0xff] %vm1849, %v3511
      %3528 = vst.msk [vmem:[#allocation5 + $0xc0] sm:$0xff] %vm1849, %v3512
      %3529 = vst.msk [vmem:[#allocation5 + $0xd0] sm:$0xff] %vm1849, %v3513
      %3530 = vst.msk [vmem:[#allocation5 + $0xe0] sm:$0xff] %vm1849, %v3514
      %3531 = vst.msk [vmem:[#allocation5 + $0xf0] sm:$0xff] %vm1849, %v3515
      %v3532 = vld [vmem:[#allocation3 + $0x8] sm:$0xff]
      %v3533 = vld [vmem:[#allocation3 + $0x10] sm:$0xff]
      %v3534 = vld [vmem:[#allocation3 + $0x28] sm:$0xff]
      %v3535 = vld [vmem:[#allocation3 + $0x30] sm:$0xff]
      %v3536 = vld [vmem:[#allocation3 + $0x48] sm:$0xff]
      %v3537 = vld [vmem:[#allocation3 + $0x50] sm:$0xff]
      %v3538 = vld [vmem:[#allocation3 + $0x68] sm:$0xff]
      %v3539 = vld [vmem:[#allocation3 + $0x70] sm:$0xff]
      %v3540 = vld [vmem:[#allocation3 + $0x88] sm:$0xff]
      %v3541 = vld [vmem:[#allocation3 + $0x90] sm:$0xff]
      %v3542 = vld [vmem:[#allocation3 + $0xa8] sm:$0xff]
      %v3543 = vld [vmem:[#allocation3 + $0xb0] sm:$0xff]
      %v3544 = vld [vmem:[#allocation3 + $0xc8] sm:$0xff]
      %v3545 = vld [vmem:[#allocation3 + $0xd0] sm:$0xff]
      %v3546 = vld [vmem:[#allocation3 + $0xe8] sm:$0xff]
      %v3547 = vld [vmem:[#allocation3 + $0xf0] sm:$0xff]
      %v3548 = vld [vmem:[#allocation3 + $0x108] sm:$0xff]
      %v3549 = vld [vmem:[#allocation3 + $0x110] sm:$0xff]
      %v3550 = vld [vmem:[#allocation3 + $0x128] sm:$0xff]
      %v3551 = vld [vmem:[#allocation3 + $0x130] sm:$0xff]
      %v3552 = vld [vmem:[#allocation3 + $0x148] sm:$0xff]
      %v3553 = vld [vmem:[#allocation3 + $0x150] sm:$0xff]
      %v3554 = vld [vmem:[#allocation3 + $0x168] sm:$0xff]
      %v3555 = vld [vmem:[#allocation3 + $0x170] sm:$0xff]
      %v3556 = vld [vmem:[#allocation3 + $0x188] sm:$0xff]
      %v3557 = vld [vmem:[#allocation3 + $0x190] sm:$0xff]
      %v3558 = vld [vmem:[#allocation3 + $0x1a8] sm:$0xff]
      %v3559 = vld [vmem:[#allocation3 + $0x1b0] sm:$0xff]
      %v3560 = vld [vmem:[#allocation3 + $0x1c8] sm:$0xff]
      %v3561 = vld [vmem:[#allocation3 + $0x1d0] sm:$0xff]
      %v3562 = vld [vmem:[#allocation3 + $0x1e8] sm:$0xff]
      %v3563 = vld [vmem:[#allocation3 + $0x1f0] sm:$0xff]
      %v3564 = vpack.c.bf16 %v3533, %v3532
      %v3565 = vpack.c.bf16 %v3535, %v3534
      %v3566 = vpack.c.bf16 %v3537, %v3536
      %v3567 = vpack.c.bf16 %v3539, %v3538
      %v3568 = vpack.c.bf16 %v3541, %v3540
      %v3569 = vpack.c.bf16 %v3543, %v3542
      %v3570 = vpack.c.bf16 %v3545, %v3544
      %v3571 = vpack.c.bf16 %v3547, %v3546
      %v3572 = vpack.c.bf16 %v3549, %v3548
      %v3573 = vpack.c.bf16 %v3551, %v3550
      %v3574 = vpack.c.bf16 %v3553, %v3552
      %v3575 = vpack.c.bf16 %v3555, %v3554
      %v3576 = vpack.c.bf16 %v3557, %v3556
      %v3577 = vpack.c.bf16 %v3559, %v3558
      %v3578 = vpack.c.bf16 %v3561, %v3560
      %v3579 = vpack.c.bf16 %v3563, %v3562
      %3596 = vrot.lane.b32.xlu0 %v3564, 16
      %v3597 = vpop.permute.xlu0 %3596
      %3598 = vrot.lane.b32.xlu0 %v3565, 16
      %v3599 = vpop.permute.xlu0 %3598
      %3600 = vrot.lane.b32.xlu0 %v3566, 16
      %v3601 = vpop.permute.xlu0 %3600
      %3602 = vrot.lane.b32.xlu0 %v3567, 16
      %v3603 = vpop.permute.xlu0 %3602
      %3604 = vrot.lane.b32.xlu0 %v3568, 16
      %v3605 = vpop.permute.xlu0 %3604
      %3606 = vrot.lane.b32.xlu0 %v3569, 16
      %v3607 = vpop.permute.xlu0 %3606
      %3608 = vrot.lane.b32.xlu0 %v3570, 16
      %v3609 = vpop.permute.xlu0 %3608
      %3610 = vrot.lane.b32.xlu0 %v3571, 16
      %v3611 = vpop.permute.xlu0 %3610
      %3612 = vrot.lane.b32.xlu0 %v3572, 16
      %v3613 = vpop.permute.xlu0 %3612
      %3614 = vrot.lane.b32.xlu0 %v3573, 16
      %v3615 = vpop.permute.xlu0 %3614
      %3616 = vrot.lane.b32.xlu0 %v3574, 16
      %v3617 = vpop.permute.xlu0 %3616
      %3618 = vrot.lane.b32.xlu0 %v3575, 16
      %v3619 = vpop.permute.xlu0 %3618
      %3620 = vrot.lane.b32.xlu0 %v3576, 16
      %v3621 = vpop.permute.xlu0 %3620
      %3622 = vrot.lane.b32.xlu0 %v3577, 16
      %v3623 = vpop.permute.xlu0 %3622
      %3624 = vrot.lane.b32.xlu0 %v3578, 16
      %v3625 = vpop.permute.xlu0 %3624
      %3626 = vrot.lane.b32.xlu0 %v3579, 16
      %v3627 = vpop.permute.xlu0 %3626
      %vm3644 = vcmask 261248
      %3645 = vst.msk [vmem:[#allocation5] sm:$0xff] %vm3644, %v3597
      %3646 = vst.msk [vmem:[#allocation5 + $0x10] sm:$0xff] %vm3644, %v3599
      %3647 = vst.msk [vmem:[#allocation5 + $0x20] sm:$0xff] %vm3644, %v3601
      %3648 = vst.msk [vmem:[#allocation5 + $0x30] sm:$0xff] %vm3644, %v3603
      %3649 = vst.msk [vmem:[#allocation5 + $0x40] sm:$0xff] %vm3644, %v3605
      %3650 = vst.msk [vmem:[#allocation5 + $0x50] sm:$0xff] %vm3644, %v3607
      %3651 = vst.msk [vmem:[#allocation5 + $0x60] sm:$0xff] %vm3644, %v3609
      %3652 = vst.msk [vmem:[#allocation5 + $0x70] sm:$0xff] %vm3644, %v3611
      %3653 = vst.msk [vmem:[#allocation5 + $0x80] sm:$0xff] %vm3644, %v3613
      %3654 = vst.msk [vmem:[#allocation5 + $0x90] sm:$0xff] %vm3644, %v3615
      %3655 = vst.msk [vmem:[#allocation5 + $0xa0] sm:$0xff] %vm3644, %v3617
      %3656 = vst.msk [vmem:[#allocation5 + $0xb0] sm:$0xff] %vm3644, %v3619
      %3657 = vst.msk [vmem:[#allocation5 + $0xc0] sm:$0xff] %vm3644, %v3621
      %3658 = vst.msk [vmem:[#allocation5 + $0xd0] sm:$0xff] %vm3644, %v3623
      %3659 = vst.msk [vmem:[#allocation5 + $0xe0] sm:$0xff] %vm3644, %v3625
      %3660 = vst.msk [vmem:[#allocation5 + $0xf0] sm:$0xff] %vm3644, %v3627
      %v3661 = vld [vmem:[#allocation3 + $0x9] sm:$0xff]
      %v3662 = vld [vmem:[#allocation3 + $0x11] sm:$0xff]
      %v3663 = vld [vmem:[#allocation3 + $0x29] sm:$0xff]
      %v3664 = vld [vmem:[#allocation3 + $0x31] sm:$0xff]
      %v3665 = vld [vmem:[#allocation3 + $0x49] sm:$0xff]
      %v3666 = vld [vmem:[#allocation3 + $0x51] sm:$0xff]
      %v3667 = vld [vmem:[#allocation3 + $0x69] sm:$0xff]
      %v3668 = vld [vmem:[#allocation3 + $0x71] sm:$0xff]
      %v3669 = vld [vmem:[#allocation3 + $0x89] sm:$0xff]
      %v3670 = vld [vmem:[#allocation3 + $0x91] sm:$0xff]
      %v3671 = vld [vmem:[#allocation3 + $0xa9] sm:$0xff]
      %v3672 = vld [vmem:[#allocation3 + $0xb1] sm:$0xff]
      %v3673 = vld [vmem:[#allocation3 + $0xc9] sm:$0xff]
      %v3674 = vld [vmem:[#allocation3 + $0xd1] sm:$0xff]
      %v3675 = vld [vmem:[#allocation3 + $0xe9] sm:$0xff]
      %v3676 = vld [vmem:[#allocation3 + $0xf1] sm:$0xff]
      %v3677 = vld [vmem:[#allocation3 + $0x109] sm:$0xff]
      %v3678 = vld [vmem:[#allocation3 + $0x111] sm:$0xff]
      %v3679 = vld [vmem:[#allocation3 + $0x129] sm:$0xff]
      %v3680 = vld [vmem:[#allocation3 + $0x131] sm:$0xff]
      %v3681 = vld [vmem:[#allocation3 + $0x149] sm:$0xff]
      %v3682 = vld [vmem:[#allocation3 + $0x151] sm:$0xff]
      %v3683 = vld [vmem:[#allocation3 + $0x169] sm:$0xff]
      %v3684 = vld [vmem:[#allocation3 + $0x171] sm:$0xff]
      %v3685 = vld [vmem:[#allocation3 + $0x189] sm:$0xff]
      %v3686 = vld [vmem:[#allocation3 + $0x191] sm:$0xff]
      %v3687 = vld [vmem:[#allocation3 + $0x1a9] sm:$0xff]
      %v3688 = vld [vmem:[#allocation3 + $0x1b1] sm:$0xff]
      %v3689 = vld [vmem:[#allocation3 + $0x1c9] sm:$0xff]
      %v3690 = vld [vmem:[#allocation3 + $0x1d1] sm:$0xff]
      %v3691 = vld [vmem:[#allocation3 + $0x1e9] sm:$0xff]
      %v3692 = vld [vmem:[#allocation3 + $0x1f1] sm:$0xff]
      %v3693 = vpack.c.bf16 %v3662, %v3661
      %v3694 = vpack.c.bf16 %v3664, %v3663
      %v3695 = vpack.c.bf16 %v3666, %v3665
      %v3696 = vpack.c.bf16 %v3668, %v3667
      %v3697 = vpack.c.bf16 %v3670, %v3669
      %v3698 = vpack.c.bf16 %v3672, %v3671
      %v3699 = vpack.c.bf16 %v3674, %v3673
      %v3700 = vpack.c.bf16 %v3676, %v3675
      %v3701 = vpack.c.bf16 %v3678, %v3677
      %v3702 = vpack.c.bf16 %v3680, %v3679
      %v3703 = vpack.c.bf16 %v3682, %v3681
      %v3704 = vpack.c.bf16 %v3684, %v3683
      %v3705 = vpack.c.bf16 %v3686, %v3685
      %v3706 = vpack.c.bf16 %v3688, %v3687
      %v3707 = vpack.c.bf16 %v3690, %v3689
      %v3708 = vpack.c.bf16 %v3692, %v3691
      %3725 = vrot.lane.b32.xlu0 %v3693, 32
      %v3726 = vpop.permute.xlu0 %3725
      %3727 = vrot.lane.b32.xlu0 %v3694, 32
      %v3728 = vpop.permute.xlu0 %3727
      %3729 = vrot.lane.b32.xlu0 %v3695, 32
      %v3730 = vpop.permute.xlu0 %3729
      %3731 = vrot.lane.b32.xlu0 %v3696, 32
      %v3732 = vpop.permute.xlu0 %3731
      %3733 = vrot.lane.b32.xlu0 %v3697, 32
      %v3734 = vpop.permute.xlu0 %3733
      %3735 = vrot.lane.b32.xlu0 %v3698, 32
      %v3736 = vpop.permute.xlu0 %3735
      %3737 = vrot.lane.b32.xlu0 %v3699, 32
      %v3738 = vpop.permute.xlu0 %3737
      %3739 = vrot.lane.b32.xlu0 %v3700, 32
      %v3740 = vpop.permute.xlu0 %3739
      %3741 = vrot.lane.b32.xlu0 %v3701, 32
      %v3742 = vpop.permute.xlu0 %3741
      %3743 = vrot.lane.b32.xlu0 %v3702, 32
      %v3744 = vpop.permute.xlu0 %3743
      %3745 = vrot.lane.b32.xlu0 %v3703, 32
      %v3746 = vpop.permute.xlu0 %3745
      %3747 = vrot.lane.b32.xlu0 %v3704, 32
      %v3748 = vpop.permute.xlu0 %3747
      %3749 = vrot.lane.b32.xlu0 %v3705, 32
      %v3750 = vpop.permute.xlu0 %3749
      %3751 = vrot.lane.b32.xlu0 %v3706, 32
      %v3752 = vpop.permute.xlu0 %3751
      %3753 = vrot.lane.b32.xlu0 %v3707, 32
      %v3754 = vpop.permute.xlu0 %3753
      %3755 = vrot.lane.b32.xlu0 %v3708, 32
      %v3756 = vpop.permute.xlu0 %3755
      %vm3773 = vcmask 392448
      %3774 = vst.msk [vmem:[#allocation5] sm:$0xff] %vm3773, %v3726
      %3775 = vst.msk [vmem:[#allocation5 + $0x10] sm:$0xff] %vm3773, %v3728
      %3776 = vst.msk [vmem:[#allocation5 + $0x20] sm:$0xff] %vm3773, %v3730
      %3777 = vst.msk [vmem:[#allocation5 + $0x30] sm:$0xff] %vm3773, %v3732
      %3778 = vst.msk [vmem:[#allocation5 + $0x40] sm:$0xff] %vm3773, %v3734
      %3779 = vst.msk [vmem:[#allocation5 + $0x50] sm:$0xff] %vm3773, %v3736
      %3780 = vst.msk [vmem:[#allocation5 + $0x60] sm:$0xff] %vm3773, %v3738
      %3781 = vst.msk [vmem:[#allocation5 + $0x70] sm:$0xff] %vm3773, %v3740
      %3782 = vst.msk [vmem:[#allocation5 + $0x80] sm:$0xff] %vm3773, %v3742
      %3783 = vst.msk [vmem:[#allocation5 + $0x90] sm:$0xff] %vm3773, %v3744
      %3784 = vst.msk [vmem:[#allocation5 + $0xa0] sm:$0xff] %vm3773, %v3746
      %3785 = vst.msk [vmem:[#allocation5 + $0xb0] sm:$0xff] %vm3773, %v3748
      %3786 = vst.msk [vmem:[#allocation5 + $0xc0] sm:$0xff] %vm3773, %v3750
      %3787 = vst.msk [vmem:[#allocation5 + $0xd0] sm:$0xff] %vm3773, %v3752
      %3788 = vst.msk [vmem:[#allocation5 + $0xe0] sm:$0xff] %vm3773, %v3754
      %3789 = vst.msk [vmem:[#allocation5 + $0xf0] sm:$0xff] %vm3773, %v3756
      %v3790 = vld [vmem:[%s3393 + $0x7] sm:$0xff]
      %v3791 = vld [vmem:[%s3393 + $0xf] sm:$0xff]
      %v3792 = vld [vmem:[%s3393 + $0x27] sm:$0xff]
      %v3793 = vld [vmem:[%s3393 + $0x2f] sm:$0xff]
      %v3794 = vld [vmem:[%s3393 + $0x47] sm:$0xff]
      %v3795 = vld [vmem:[%s3393 + $0x4f] sm:$0xff]
      %v3796 = vld [vmem:[%s3393 + $0x67] sm:$0xff]
      %v3797 = vld [vmem:[%s3393 + $0x6f] sm:$0xff]
      %v3798 = vld [vmem:[%s3393 + $0x87] sm:$0xff]
      %v3799 = vld [vmem:[%s3393 + $0x8f] sm:$0xff]
      %v3800 = vld [vmem:[%s3393 + $0xa7] sm:$0xff]
      %v3801 = vld [vmem:[%s3393 + $0xaf] sm:$0xff]
      %v3802 = vld [vmem:[%s3393 + $0xc7] sm:$0xff]
      %v3803 = vld [vmem:[%s3393 + $0xcf] sm:$0xff]
      %v3804 = vld [vmem:[%s3393 + $0xe7] sm:$0xff]
      %v3805 = vld [vmem:[%s3393 + $0xef] sm:$0xff]
      %v3806 = vld [vmem:[%s3393 + $0x107] sm:$0xff]
      %v3807 = vld [vmem:[%s3393 + $0x10f] sm:$0xff]
      %v3808 = vld [vmem:[%s3393 + $0x127] sm:$0xff]
      %v3809 = vld [vmem:[%s3393 + $0x12f] sm:$0xff]
      %v3810 = vld [vmem:[%s3393 + $0x147] sm:$0xff]
      %v3811 = vld [vmem:[%s3393 + $0x14f] sm:$0xff]
      %v3812 = vld [vmem:[%s3393 + $0x167] sm:$0xff]
      %v3813 = vld [vmem:[%s3393 + $0x16f] sm:$0xff]
      %v3814 = vld [vmem:[%s3393 + $0x187] sm:$0xff]
      %v3815 = vld [vmem:[%s3393 + $0x18f] sm:$0xff]
      %v3816 = vld [vmem:[%s3393 + $0x1a7] sm:$0xff]
      %v3817 = vld [vmem:[%s3393 + $0x1af] sm:$0xff]
      %v3818 = vld [vmem:[%s3393 + $0x1c7] sm:$0xff]
      %v3819 = vld [vmem:[%s3393 + $0x1cf] sm:$0xff]
      %v3820 = vld [vmem:[%s3393 + $0x1e7] sm:$0xff]
      %v3821 = vld [vmem:[%s3393 + $0x1ef] sm:$0xff]
      %v3822 = vpack.c.bf16 %v3791, %v3790
      %v3823 = vpack.c.bf16 %v3793, %v3792
      %v3824 = vpack.c.bf16 %v3795, %v3794
      %v3825 = vpack.c.bf16 %v3797, %v3796
      %v3826 = vpack.c.bf16 %v3799, %v3798
      %v3827 = vpack.c.bf16 %v3801, %v3800
      %v3828 = vpack.c.bf16 %v3803, %v3802
      %v3829 = vpack.c.bf16 %v3805, %v3804
      %v3830 = vpack.c.bf16 %v3807, %v3806
      %v3831 = vpack.c.bf16 %v3809, %v3808
      %v3832 = vpack.c.bf16 %v3811, %v3810
      %v3833 = vpack.c.bf16 %v3813, %v3812
      %v3834 = vpack.c.bf16 %v3815, %v3814
      %v3835 = vpack.c.bf16 %v3817, %v3816
      %v3836 = vpack.c.bf16 %v3819, %v3818
      %v3837 = vpack.c.bf16 %v3821, %v3820
      %3854 = vrot.lane.b32.xlu0 %v3822, 48
      %v3855 = vpop.permute.xlu0 %3854
      %3856 = vrot.lane.b32.xlu0 %v3823, 48
      %v3857 = vpop.permute.xlu0 %3856
      %3858 = vrot.lane.b32.xlu0 %v3824, 48
      %v3859 = vpop.permute.xlu0 %3858
      %3860 = vrot.lane.b32.xlu0 %v3825, 48
      %v3861 = vpop.permute.xlu0 %3860
      %3862 = vrot.lane.b32.xlu0 %v3826, 48
      %v3863 = vpop.permute.xlu0 %3862
      %3864 = vrot.lane.b32.xlu0 %v3827, 48
      %v3865 = vpop.permute.xlu0 %3864
      %3866 = vrot.lane.b32.xlu0 %v3828, 48
      %v3867 = vpop.permute.xlu0 %3866
      %3868 = vrot.lane.b32.xlu0 %v3829, 48
      %v3869 = vpop.permute.xlu0 %3868
      %3870 = vrot.lane.b32.xlu0 %v3830, 48
      %v3871 = vpop.permute.xlu0 %3870
      %3872 = vrot.lane.b32.xlu0 %v3831, 48
      %v3873 = vpop.permute.xlu0 %3872
      %3874 = vrot.lane.b32.xlu0 %v3832, 48
      %v3875 = vpop.permute.xlu0 %3874
      %3876 = vrot.lane.b32.xlu0 %v3833, 48
      %v3877 = vpop.permute.xlu0 %3876
      %3878 = vrot.lane.b32.xlu0 %v3834, 48
      %v3879 = vpop.permute.xlu0 %3878
      %3880 = vrot.lane.b32.xlu0 %v3835, 48
      %v3881 = vpop.permute.xlu0 %3880
      %3882 = vrot.lane.b32.xlu0 %v3836, 48
      %v3883 = vpop.permute.xlu0 %3882
      %3884 = vrot.lane.b32.xlu0 %v3837, 48
      %v3885 = vpop.permute.xlu0 %3884
      %vm3902 = vcmask 523648
      %3903 = vst.msk [vmem:[#allocation5] sm:$0xff] %vm3902, %v3855
      %3904 = vst.msk [vmem:[#allocation5 + $0x10] sm:$0xff] %vm3902, %v3857
      %3905 = vst.msk [vmem:[#allocation5 + $0x20] sm:$0xff] %vm3902, %v3859
      %3906 = vst.msk [vmem:[#allocation5 + $0x30] sm:$0xff] %vm3902, %v3861
      %3907 = vst.msk [vmem:[#allocation5 + $0x40] sm:$0xff] %vm3902, %v3863
      %3908 = vst.msk [vmem:[#allocation5 + $0x50] sm:$0xff] %vm3902, %v3865
      %3909 = vst.msk [vmem:[#allocation5 + $0x60] sm:$0xff] %vm3902, %v3867
      %3910 = vst.msk [vmem:[#allocation5 + $0x70] sm:$0xff] %vm3902, %v3869
      %3911 = vst.msk [vmem:[#allocation5 + $0x80] sm:$0xff] %vm3902, %v3871
      %3912 = vst.msk [vmem:[#allocation5 + $0x90] sm:$0xff] %vm3902, %v3873
      %3913 = vst.msk [vmem:[#allocation5 + $0xa0] sm:$0xff] %vm3902, %v3875
      %3914 = vst.msk [vmem:[#allocation5 + $0xb0] sm:$0xff] %vm3902, %v3877
      %3915 = vst.msk [vmem:[#allocation5 + $0xc0] sm:$0xff] %vm3902, %v3879
      %3916 = vst.msk [vmem:[#allocation5 + $0xd0] sm:$0xff] %vm3902, %v3881
      %3917 = vst.msk [vmem:[#allocation5 + $0xe0] sm:$0xff] %vm3902, %v3883
      %3918 = vst.msk [vmem:[#allocation5 + $0xf0] sm:$0xff] %vm3902, %v3885
      %v3919 = vld [vmem:[%s3393 + $0x8] sm:$0xff]
      %v3920 = vld [vmem:[%s3393 + $0x10] sm:$0xff]
      %v3921 = vld [vmem:[%s3393 + $0x28] sm:$0xff]
      %v3922 = vld [vmem:[%s3393 + $0x30] sm:$0xff]
      %v3923 = vld [vmem:[%s3393 + $0x48] sm:$0xff]
      %v3924 = vld [vmem:[%s3393 + $0x50] sm:$0xff]
      %v3925 = vld [vmem:[%s3393 + $0x68] sm:$0xff]
      %v3926 = vld [vmem:[%s3393 + $0x70] sm:$0xff]
      %v3927 = vld [vmem:[%s3393 + $0x88] sm:$0xff]
      %v3928 = vld [vmem:[%s3393 + $0x90] sm:$0xff]
      %v3929 = vld [vmem:[%s3393 + $0xa8] sm:$0xff]
      %v3930 = vld [vmem:[%s3393 + $0xb0] sm:$0xff]
      %v3931 = vld [vmem:[%s3393 + $0xc8] sm:$0xff]
      %v3932 = vld [vmem:[%s3393 + $0xd0] sm:$0xff]
      %v3933 = vld [vmem:[%s3393 + $0xe8] sm:$0xff]
      %v3934 = vld [vmem:[%s3393 + $0xf0] sm:$0xff]
      %v3935 = vld [vmem:[%s3393 + $0x108] sm:$0xff]
      %v3936 = vld [vmem:[%s3393 + $0x110] sm:$0xff]
      %v3937 = vld [vmem:[%s3393 + $0x128] sm:$0xff]
      %v3938 = vld [vmem:[%s3393 + $0x130] sm:$0xff]
      %v3939 = vld [vmem:[%s3393 + $0x148] sm:$0xff]
      %v3940 = vld [vmem:[%s3393 + $0x150] sm:$0xff]
      %v3941 = vld [vmem:[%s3393 + $0x168] sm:$0xff]
      %v3942 = vld [vmem:[%s3393 + $0x170] sm:$0xff]
      %v3943 = vld [vmem:[%s3393 + $0x188] sm:$0xff]
      %v3944 = vld [vmem:[%s3393 + $0x190] sm:$0xff]
      %v3945 = vld [vmem:[%s3393 + $0x1a8] sm:$0xff]
      %v3946 = vld [vmem:[%s3393 + $0x1b0] sm:$0xff]
      %v3947 = vld [vmem:[%s3393 + $0x1c8] sm:$0xff]
      %v3948 = vld [vmem:[%s3393 + $0x1d0] sm:$0xff]
      %v3949 = vld [vmem:[%s3393 + $0x1e8] sm:$0xff]
      %v3950 = vld [vmem:[%s3393 + $0x1f0] sm:$0xff]
      %v3951 = vpack.c.bf16 %v3920, %v3919
      %v3952 = vpack.c.bf16 %v3922, %v3921
      %v3953 = vpack.c.bf16 %v3924, %v3923
      %v3954 = vpack.c.bf16 %v3926, %v3925
      %v3955 = vpack.c.bf16 %v3928, %v3927
      %v3956 = vpack.c.bf16 %v3930, %v3929
      %v3957 = vpack.c.bf16 %v3932, %v3931
      %v3958 = vpack.c.bf16 %v3934, %v3933
      %v3959 = vpack.c.bf16 %v3936, %v3935
      %v3960 = vpack.c.bf16 %v3938, %v3937
      %v3961 = vpack.c.bf16 %v3940, %v3939
      %v3962 = vpack.c.bf16 %v3942, %v3941
      %v3963 = vpack.c.bf16 %v3944, %v3943
      %v3964 = vpack.c.bf16 %v3946, %v3945
      %v3965 = vpack.c.bf16 %v3948, %v3947
      %v3966 = vpack.c.bf16 %v3950, %v3949
      %3983 = vrot.lane.b32.xlu0 %v3951, 64
      %v3984 = vpop.permute.xlu0 %3983
      %3985 = vrot.lane.b32.xlu0 %v3952, 64
      %v3986 = vpop.permute.xlu0 %3985
      %3987 = vrot.lane.b32.xlu0 %v3953, 64
      %v3988 = vpop.permute.xlu0 %3987
      %3989 = vrot.lane.b32.xlu0 %v3954, 64
      %v3990 = vpop.permute.xlu0 %3989
      %3991 = vrot.lane.b32.xlu0 %v3955, 64
      %v3992 = vpop.permute.xlu0 %3991
      %3993 = vrot.lane.b32.xlu0 %v3956, 64
      %v3994 = vpop.permute.xlu0 %3993
      %3995 = vrot.lane.b32.xlu0 %v3957, 64
      %v3996 = vpop.permute.xlu0 %3995
      %3997 = vrot.lane.b32.xlu0 %v3958, 64
      %v3998 = vpop.permute.xlu0 %3997
      %3999 = vrot.lane.b32.xlu0 %v3959, 64
      %v4000 = vpop.permute.xlu0 %3999
      %4001 = vrot.lane.b32.xlu0 %v3960, 64
      %v4002 = vpop.permute.xlu0 %4001
      %4003 = vrot.lane.b32.xlu0 %v3961, 64
      %v4004 = vpop.permute.xlu0 %4003
      %4005 = vrot.lane.b32.xlu0 %v3962, 64
      %v4006 = vpop.permute.xlu0 %4005
      %4007 = vrot.lane.b32.xlu0 %v3963, 64
      %v4008 = vpop.permute.xlu0 %4007
      %4009 = vrot.lane.b32.xlu0 %v3964, 64
      %v4010 = vpop.permute.xlu0 %4009
      %4011 = vrot.lane.b32.xlu0 %v3965, 64
      %v4012 = vpop.permute.xlu0 %4011
      %4013 = vrot.lane.b32.xlu0 %v3966, 64
      %v4014 = vpop.permute.xlu0 %4013
      %vm4031 = vcmask 654848
      %4032 = vst.msk [vmem:[#allocation5] sm:$0xff] %vm4031, %v3984
      %4033 = vst.msk [vmem:[#allocation5 + $0x10] sm:$0xff] %vm4031, %v3986
      %4034 = vst.msk [vmem:[#allocation5 + $0x20] sm:$0xff] %vm4031, %v3988
      %4035 = vst.msk [vmem:[#allocation5 + $0x30] sm:$0xff] %vm4031, %v3990
      %4036 = vst.msk [vmem:[#allocation5 + $0x40] sm:$0xff] %vm4031, %v3992
      %4037 = vst.msk [vmem:[#allocation5 + $0x50] sm:$0xff] %vm4031, %v3994
      %4038 = vst.msk [vmem:[#allocation5 + $0x60] sm:$0xff] %vm4031, %v3996
      %4039 = vst.msk [vmem:[#allocation5 + $0x70] sm:$0xff] %vm4031, %v3998
      %4040 = vst.msk [vmem:[#allocation5 + $0x80] sm:$0xff] %vm4031, %v4000
      %4041 = vst.msk [vmem:[#allocation5 + $0x90] sm:$0xff] %vm4031, %v4002
      %4042 = vst.msk [vmem:[#allocation5 + $0xa0] sm:$0xff] %vm4031, %v4004
      %4043 = vst.msk [vmem:[#allocation5 + $0xb0] sm:$0xff] %vm4031, %v4006
      %4044 = vst.msk [vmem:[#allocation5 + $0xc0] sm:$0xff] %vm4031, %v4008
      %4045 = vst.msk [vmem:[#allocation5 + $0xd0] sm:$0xff] %vm4031, %v4010
      %4046 = vst.msk [vmem:[#allocation5 + $0xe0] sm:$0xff] %vm4031, %v4012
      %4047 = vst.msk [vmem:[#allocation5 + $0xf0] sm:$0xff] %vm4031, %v4014
      %v4048 = vld [vmem:[%s3393 + $0x9] sm:$0xff]
      %v4049 = vld [vmem:[%s3393 + $0x11] sm:$0xff]
      %v4050 = vld [vmem:[%s3393 + $0x29] sm:$0xff]
      %v4051 = vld [vmem:[%s3393 + $0x31] sm:$0xff]
      %v4052 = vld [vmem:[%s3393 + $0x49] sm:$0xff]
      %v4053 = vld [vmem:[%s3393 + $0x51] sm:$0xff]
      %v4054 = vld [vmem:[%s3393 + $0x69] sm:$0xff]
      %v4055 = vld [vmem:[%s3393 + $0x71] sm:$0xff]
      %v4056 = vld [vmem:[%s3393 + $0x89] sm:$0xff]
      %v4057 = vld [vmem:[%s3393 + $0x91] sm:$0xff]
      %v4058 = vld [vmem:[%s3393 + $0xa9] sm:$0xff]
      %v4059 = vld [vmem:[%s3393 + $0xb1] sm:$0xff]
      %v4060 = vld [vmem:[%s3393 + $0xc9] sm:$0xff]
      %v4061 = vld [vmem:[%s3393 + $0xd1] sm:$0xff]
      %v4062 = vld [vmem:[%s3393 + $0xe9] sm:$0xff]
      %v4063 = vld [vmem:[%s3393 + $0xf1] sm:$0xff]
      %v4064 = vld [vmem:[%s3393 + $0x109] sm:$0xff]
      %v4065 = vld [vmem:[%s3393 + $0x111] sm:$0xff]
      %v4066 = vld [vmem:[%s3393 + $0x129] sm:$0xff]
      %v4067 = vld [vmem:[%s3393 + $0x131] sm:$0xff]
      %v4068 = vld [vmem:[%s3393 + $0x149] sm:$0xff]
      %v4069 = vld [vmem:[%s3393 + $0x151] sm:$0xff]
      %v4070 = vld [vmem:[%s3393 + $0x169] sm:$0xff]
      %v4071 = vld [vmem:[%s3393 + $0x171] sm:$0xff]
      %v4072 = vld [vmem:[%s3393 + $0x189] sm:$0xff]
      %v4073 = vld [vmem:[%s3393 + $0x191] sm:$0xff]
      %v4074 = vld [vmem:[%s3393 + $0x1a9] sm:$0xff]
      %v4075 = vld [vmem:[%s3393 + $0x1b1] sm:$0xff]
      %v4076 = vld [vmem:[%s3393 + $0x1c9] sm:$0xff]
      %v4077 = vld [vmem:[%s3393 + $0x1d1] sm:$0xff]
      %v4078 = vld [vmem:[%s3393 + $0x1e9] sm:$0xff]
      %v4079 = vld [vmem:[%s3393 + $0x1f1] sm:$0xff]
      %v4080 = vpack.c.bf16 %v4049, %v4048
      %v4081 = vpack.c.bf16 %v4051, %v4050
      %v4082 = vpack.c.bf16 %v4053, %v4052
      %v4083 = vpack.c.bf16 %v4055, %v4054
      %v4084 = vpack.c.bf16 %v4057, %v4056
      %v4085 = vpack.c.bf16 %v4059, %v4058
      %v4086 = vpack.c.bf16 %v4061, %v4060
      %v4087 = vpack.c.bf16 %v4063, %v4062
      %v4088 = vpack.c.bf16 %v4065, %v4064
      %v4089 = vpack.c.bf16 %v4067, %v4066
      %v4090 = vpack.c.bf16 %v4069, %v4068
      %v4091 = vpack.c.bf16 %v4071, %v4070
      %v4092 = vpack.c.bf16 %v4073, %v4072
      %v4093 = vpack.c.bf16 %v4075, %v4074
      %v4094 = vpack.c.bf16 %v4077, %v4076
      %v4095 = vpack.c.bf16 %v4079, %v4078
      %4112 = vrot.lane.b32.xlu0 %v4080, 80
      %v4113 = vpop.permute.xlu0 %4112
      %4114 = vrot.lane.b32.xlu0 %v4081, 80
      %v4115 = vpop.permute.xlu0 %4114
      %4116 = vrot.lane.b32.xlu0 %v4082, 80
      %v4117 = vpop.permute.xlu0 %4116
      %4118 = vrot.lane.b32.xlu0 %v4083, 80
      %v4119 = vpop.permute.xlu0 %4118
      %4120 = vrot.lane.b32.xlu0 %v4084, 80
      %v4121 = vpop.permute.xlu0 %4120
      %4122 = vrot.lane.b32.xlu0 %v4085, 80
      %v4123 = vpop.permute.xlu0 %4122
      %4124 = vrot.lane.b32.xlu0 %v4086, 80
      %v4125 = vpop.permute.xlu0 %4124
      %4126 = vrot.lane.b32.xlu0 %v4087, 80
      %v4127 = vpop.permute.xlu0 %4126
      %4128 = vrot.lane.b32.xlu0 %v4088, 80
      %v4129 = vpop.permute.xlu0 %4128
      %4130 = vrot.lane.b32.xlu0 %v4089, 80
      %v4131 = vpop.permute.xlu0 %4130
      %4132 = vrot.lane.b32.xlu0 %v4090, 80
      %v4133 = vpop.permute.xlu0 %4132
      %4134 = vrot.lane.b32.xlu0 %v4091, 80
      %v4135 = vpop.permute.xlu0 %4134
      %4136 = vrot.lane.b32.xlu0 %v4092, 80
      %v4137 = vpop.permute.xlu0 %4136
      %4138 = vrot.lane.b32.xlu0 %v4093, 80
      %v4139 = vpop.permute.xlu0 %4138
      %4140 = vrot.lane.b32.xlu0 %v4094, 80
      %v4141 = vpop.permute.xlu0 %4140
      %4142 = vrot.lane.b32.xlu0 %v4095, 80
      %v4143 = vpop.permute.xlu0 %4142
      %vm4160 = vcmask 786048
      %4161 = vst.msk [vmem:[#allocation5] sm:$0xff] %vm4160, %v4113
      %4162 = vst.msk [vmem:[#allocation5 + $0x10] sm:$0xff] %vm4160, %v4115
      %4163 = vst.msk [vmem:[#allocation5 + $0x20] sm:$0xff] %vm4160, %v4117
      %4164 = vst.msk [vmem:[#allocation5 + $0x30] sm:$0xff] %vm4160, %v4119
      %4165 = vst.msk [vmem:[#allocation5 + $0x40] sm:$0xff] %vm4160, %v4121
      %4166 = vst.msk [vmem:[#allocation5 + $0x50] sm:$0xff] %vm4160, %v4123
      %4167 = vst.msk [vmem:[#allocation5 + $0x60] sm:$0xff] %vm4160, %v4125
      %4168 = vst.msk [vmem:[#allocation5 + $0x70] sm:$0xff] %vm4160, %v4127
      %4169 = vst.msk [vmem:[#allocation5 + $0x80] sm:$0xff] %vm4160, %v4129
      %4170 = vst.msk [vmem:[#allocation5 + $0x90] sm:$0xff] %vm4160, %v4131
      %4171 = vst.msk [vmem:[#allocation5 + $0xa0] sm:$0xff] %vm4160, %v4133
      %4172 = vst.msk [vmem:[#allocation5 + $0xb0] sm:$0xff] %vm4160, %v4135
      %4173 = vst.msk [vmem:[#allocation5 + $0xc0] sm:$0xff] %vm4160, %v4137
      %4174 = vst.msk [vmem:[#allocation5 + $0xd0] sm:$0xff] %vm4160, %v4139
      %4175 = vst.msk [vmem:[#allocation5 + $0xe0] sm:$0xff] %vm4160, %v4141
      %4176 = vst.msk [vmem:[#allocation5 + $0xf0] sm:$0xff] %vm4160, %v4143
      %s4177 = scalar_lea.vmem [#allocation3], 64
      %v4178 = vld [vmem:[%s4177 + $0x7] sm:$0xff]
      %v4179 = vld [vmem:[%s4177 + $0xf] sm:$0xff]
      %v4180 = vld [vmem:[%s4177 + $0x27] sm:$0xff]
      %v4181 = vld [vmem:[%s4177 + $0x2f] sm:$0xff]
      %v4182 = vld [vmem:[%s4177 + $0x47] sm:$0xff]
      %v4183 = vld [vmem:[%s4177 + $0x4f] sm:$0xff]
      %v4184 = vld [vmem:[%s4177 + $0x67] sm:$0xff]
      %v4185 = vld [vmem:[%s4177 + $0x6f] sm:$0xff]
      %v4186 = vld [vmem:[%s4177 + $0x87] sm:$0xff]
      %v4187 = vld [vmem:[%s4177 + $0x8f] sm:$0xff]
      %v4188 = vld [vmem:[%s4177 + $0xa7] sm:$0xff]
      %v4189 = vld [vmem:[%s4177 + $0xaf] sm:$0xff]
      %v4190 = vld [vmem:[%s4177 + $0xc7] sm:$0xff]
      %v4191 = vld [vmem:[%s4177 + $0xcf] sm:$0xff]
      %v4192 = vld [vmem:[%s4177 + $0xe7] sm:$0xff]
      %v4193 = vld [vmem:[%s4177 + $0xef] sm:$0xff]
      %v4194 = vld [vmem:[%s4177 + $0x107] sm:$0xff]
      %v4195 = vld [vmem:[%s4177 + $0x10f] sm:$0xff]
      %v4196 = vld [vmem:[%s4177 + $0x127] sm:$0xff]
      %v4197 = vld [vmem:[%s4177 + $0x12f] sm:$0xff]
      %v4198 = vld [vmem:[%s4177 + $0x147] sm:$0xff]
      %v4199 = vld [vmem:[%s4177 + $0x14f] sm:$0xff]
      %v4200 = vld [vmem:[%s4177 + $0x167] sm:$0xff]
      %v4201 = vld [vmem:[%s4177 + $0x16f] sm:$0xff]
      %v4202 = vld [vmem:[%s4177 + $0x187] sm:$0xff]
      %v4203 = vld [vmem:[%s4177 + $0x18f] sm:$0xff]
      %v4204 = vld [vmem:[%s4177 + $0x1a7] sm:$0xff]
      %v4205 = vld [vmem:[%s4177 + $0x1af] sm:$0xff]
      %v4206 = vld [vmem:[%s4177 + $0x1c7] sm:$0xff]
      %v4207 = vld [vmem:[%s4177 + $0x1cf] sm:$0xff]
      %v4208 = vld [vmem:[%s4177 + $0x1e7] sm:$0xff]
      %v4209 = vld [vmem:[%s4177 + $0x1ef] sm:$0xff]
      %v4210 = vpack.c.bf16 %v4179, %v4178
      %v4211 = vpack.c.bf16 %v4181, %v4180
      %v4212 = vpack.c.bf16 %v4183, %v4182
      %v4213 = vpack.c.bf16 %v4185, %v4184
      %v4214 = vpack.c.bf16 %v4187, %v4186
      %v4215 = vpack.c.bf16 %v4189, %v4188
      %v4216 = vpack.c.bf16 %v4191, %v4190
      %v4217 = vpack.c.bf16 %v4193, %v4192
      %v4218 = vpack.c.bf16 %v4195, %v4194
      %v4219 = vpack.c.bf16 %v4197, %v4196
      %v4220 = vpack.c.bf16 %v4199, %v4198
      %v4221 = vpack.c.bf16 %v4201, %v4200
      %v4222 = vpack.c.bf16 %v4203, %v4202
      %v4223 = vpack.c.bf16 %v4205, %v4204
      %v4224 = vpack.c.bf16 %v4207, %v4206
      %v4225 = vpack.c.bf16 %v4209, %v4208
      %4242 = vrot.lane.b32.xlu0 %v4210, 96
      %v4243 = vpop.permute.xlu0 %4242
      %4244 = vrot.lane.b32.xlu0 %v4211, 96
      %v4245 = vpop.permute.xlu0 %4244
      %4246 = vrot.lane.b32.xlu0 %v4212, 96
      %v4247 = vpop.permute.xlu0 %4246
      %4248 = vrot.lane.b32.xlu0 %v4213, 96
      %v4249 = vpop.permute.xlu0 %4248
      %4250 = vrot.lane.b32.xlu0 %v4214, 96
      %v4251 = vpop.permute.xlu0 %4250
      %4252 = vrot.lane.b32.xlu0 %v4215, 96
      %v4253 = vpop.permute.xlu0 %4252
      %4254 = vrot.lane.b32.xlu0 %v4216, 96
      %v4255 = vpop.permute.xlu0 %4254
      %4256 = vrot.lane.b32.xlu0 %v4217, 96
      %v4257 = vpop.permute.xlu0 %4256
      %4258 = vrot.lane.b32.xlu0 %v4218, 96
      %v4259 = vpop.permute.xlu0 %4258
      %4260 = vrot.lane.b32.xlu0 %v4219, 96
      %v4261 = vpop.permute.xlu0 %4260
      %4262 = vrot.lane.b32.xlu0 %v4220, 96
      %v4263 = vpop.permute.xlu0 %4262
      %4264 = vrot.lane.b32.xlu0 %v4221, 96
      %v4265 = vpop.permute.xlu0 %4264
      %4266 = vrot.lane.b32.xlu0 %v4222, 96
      %v4267 = vpop.permute.xlu0 %4266
      %4268 = vrot.lane.b32.xlu0 %v4223, 96
      %v4269 = vpop.permute.xlu0 %4268
      %4270 = vrot.lane.b32.xlu0 %v4224, 96
      %v4271 = vpop.permute.xlu0 %4270
      %4272 = vrot.lane.b32.xlu0 %v4225, 96
      %v4273 = vpop.permute.xlu0 %4272
      %vm4290 = vcmask 917248
      %4291 = vst.msk [vmem:[#allocation5] sm:$0xff] %vm4290, %v4243
      %4292 = vst.msk [vmem:[#allocation5 + $0x10] sm:$0xff] %vm4290, %v4245
      %4293 = vst.msk [vmem:[#allocation5 + $0x20] sm:$0xff] %vm4290, %v4247
      %4294 = vst.msk [vmem:[#allocation5 + $0x30] sm:$0xff] %vm4290, %v4249
      %4295 = vst.msk [vmem:[#allocation5 + $0x40] sm:$0xff] %vm4290, %v4251
      %4296 = vst.msk [vmem:[#allocation5 + $0x50] sm:$0xff] %vm4290, %v4253
      %4297 = vst.msk [vmem:[#allocation5 + $0x60] sm:$0xff] %vm4290, %v4255
      %4298 = vst.msk [vmem:[#allocation5 + $0x70] sm:$0xff] %vm4290, %v4257
      %4299 = vst.msk [vmem:[#allocation5 + $0x80] sm:$0xff] %vm4290, %v4259
      %4300 = vst.msk [vmem:[#allocation5 + $0x90] sm:$0xff] %vm4290, %v4261
      %4301 = vst.msk [vmem:[#allocation5 + $0xa0] sm:$0xff] %vm4290, %v4263
      %4302 = vst.msk [vmem:[#allocation5 + $0xb0] sm:$0xff] %vm4290, %v4265
      %4303 = vst.msk [vmem:[#allocation5 + $0xc0] sm:$0xff] %vm4290, %v4267
      %4304 = vst.msk [vmem:[#allocation5 + $0xd0] sm:$0xff] %vm4290, %v4269
      %4305 = vst.msk [vmem:[#allocation5 + $0xe0] sm:$0xff] %vm4290, %v4271
      %4306 = vst.msk [vmem:[#allocation5 + $0xf0] sm:$0xff] %vm4290, %v4273
      %v4307 = vld [vmem:[%s4177 + $0x8] sm:$0xff]
      %v4308 = vld [vmem:[%s4177 + $0x10] sm:$0xff]
      %v4309 = vld [vmem:[%s4177 + $0x28] sm:$0xff]
      %v4310 = vld [vmem:[%s4177 + $0x30] sm:$0xff]
      %v4311 = vld [vmem:[%s4177 + $0x48] sm:$0xff]
      %v4312 = vld [vmem:[%s4177 + $0x50] sm:$0xff]
      %v4313 = vld [vmem:[%s4177 + $0x68] sm:$0xff]
      %v4314 = vld [vmem:[%s4177 + $0x70] sm:$0xff]
      %v4315 = vld [vmem:[%s4177 + $0x88] sm:$0xff]
      %v4316 = vld [vmem:[%s4177 + $0x90] sm:$0xff]
      %v4317 = vld [vmem:[%s4177 + $0xa8] sm:$0xff]
      %v4318 = vld [vmem:[%s4177 + $0xb0] sm:$0xff]
      %v4319 = vld [vmem:[%s4177 + $0xc8] sm:$0xff]
      %v4320 = vld [vmem:[%s4177 + $0xd0] sm:$0xff]
      %v4321 = vld [vmem:[%s4177 + $0xe8] sm:$0xff]
      %v4322 = vld [vmem:[%s4177 + $0xf0] sm:$0xff]
      %v4323 = vld [vmem:[%s4177 + $0x108] sm:$0xff]
      %v4324 = vld [vmem:[%s4177 + $0x110] sm:$0xff]
      %v4325 = vld [vmem:[%s4177 + $0x128] sm:$0xff]
      %v4326 = vld [vmem:[%s4177 + $0x130] sm:$0xff]
      %v4327 = vld [vmem:[%s4177 + $0x148] sm:$0xff]
      %v4328 = vld [vmem:[%s4177 + $0x150] sm:$0xff]
      %v4329 = vld [vmem:[%s4177 + $0x168] sm:$0xff]
      %v4330 = vld [vmem:[%s4177 + $0x170] sm:$0xff]
      %v4331 = vld [vmem:[%s4177 + $0x188] sm:$0xff]
      %v4332 = vld [vmem:[%s4177 + $0x190] sm:$0xff]
      %v4333 = vld [vmem:[%s4177 + $0x1a8] sm:$0xff]
      %v4334 = vld [vmem:[%s4177 + $0x1b0] sm:$0xff]
      %v4335 = vld [vmem:[%s4177 + $0x1c8] sm:$0xff]
      %v4336 = vld [vmem:[%s4177 + $0x1d0] sm:$0xff]
      %v4337 = vld [vmem:[%s4177 + $0x1e8] sm:$0xff]
      %v4338 = vld [vmem:[%s4177 + $0x1f0] sm:$0xff]
      %v4339 = vpack.c.bf16 %v4308, %v4307
      %v4340 = vpack.c.bf16 %v4310, %v4309
      %v4341 = vpack.c.bf16 %v4312, %v4311
      %v4342 = vpack.c.bf16 %v4314, %v4313
      %v4343 = vpack.c.bf16 %v4316, %v4315
      %v4344 = vpack.c.bf16 %v4318, %v4317
      %v4345 = vpack.c.bf16 %v4320, %v4319
      %v4346 = vpack.c.bf16 %v4322, %v4321
      %v4347 = vpack.c.bf16 %v4324, %v4323
      %v4348 = vpack.c.bf16 %v4326, %v4325
      %v4349 = vpack.c.bf16 %v4328, %v4327
      %v4350 = vpack.c.bf16 %v4330, %v4329
      %v4351 = vpack.c.bf16 %v4332, %v4331
      %v4352 = vpack.c.bf16 %v4334, %v4333
      %v4353 = vpack.c.bf16 %v4336, %v4335
      %v4354 = vpack.c.bf16 %v4338, %v4337
      %4371 = vrot.lane.b32.xlu0 %v4339, 112
      %v4372 = vpop.permute.xlu0 %4371
      %4373 = vrot.lane.b32.xlu0 %v4340, 112
      %v4374 = vpop.permute.xlu0 %4373
      %4375 = vrot.lane.b32.xlu0 %v4341, 112
      %v4376 = vpop.permute.xlu0 %4375
      %4377 = vrot.lane.b32.xlu0 %v4342, 112
      %v4378 = vpop.permute.xlu0 %4377
      %4379 = vrot.lane.b32.xlu0 %v4343, 112
      %v4380 = vpop.permute.xlu0 %4379
      %4381 = vrot.lane.b32.xlu0 %v4344, 112
      %v4382 = vpop.permute.xlu0 %4381
      %4383 = vrot.lane.b32.xlu0 %v4345, 112
      %v4384 = vpop.permute.xlu0 %4383
      %4385 = vrot.lane.b32.xlu0 %v4346, 112
      %v4386 = vpop.permute.xlu0 %4385
      %4387 = vrot.lane.b32.xlu0 %v4347, 112
      %v4388 = vpop.permute.xlu0 %4387
      %4389 = vrot.lane.b32.xlu0 %v4348, 112
      %v4390 = vpop.permute.xlu0 %4389
      %4391 = vrot.lane.b32.xlu0 %v4349, 112
      %v4392 = vpop.permute.xlu0 %4391
      %4393 = vrot.lane.b32.xlu0 %v4350, 112
      %v4394 = vpop.permute.xlu0 %4393
      %4395 = vrot.lane.b32.xlu0 %v4351, 112
      %v4396 = vpop.permute.xlu0 %4395
      %4397 = vrot.lane.b32.xlu0 %v4352, 112
      %v4398 = vpop.permute.xlu0 %4397
      %4399 = vrot.lane.b32.xlu0 %v4353, 112
      %v4400 = vpop.permute.xlu0 %4399
      %4401 = vrot.lane.b32.xlu0 %v4354, 112
      %v4402 = vpop.permute.xlu0 %4401
      %vm4419 = vcmask 1048448
      %4420 = vst.msk [vmem:[#allocation5] sm:$0xff] %vm4419, %v4372
      %4421 = vst.msk [vmem:[#allocation5 + $0x10] sm:$0xff] %vm4419, %v4374
      %4422 = vst.msk [vmem:[#allocation5 + $0x20] sm:$0xff] %vm4419, %v4376
      %4423 = vst.msk [vmem:[#allocation5 + $0x30] sm:$0xff] %vm4419, %v4378
      %4424 = vst.msk [vmem:[#allocation5 + $0x40] sm:$0xff] %vm4419, %v4380
      %4425 = vst.msk [vmem:[#allocation5 + $0x50] sm:$0xff] %vm4419, %v4382
      %4426 = vst.msk [vmem:[#allocation5 + $0x60] sm:$0xff] %vm4419, %v4384
      %4427 = vst.msk [vmem:[#allocation5 + $0x70] sm:$0xff] %vm4419, %v4386
      %4428 = vst.msk [vmem:[#allocation5 + $0x80] sm:$0xff] %vm4419, %v4388
      %4429 = vst.msk [vmem:[#allocation5 + $0x90] sm:$0xff] %vm4419, %v4390
      %4430 = vst.msk [vmem:[#allocation5 + $0xa0] sm:$0xff] %vm4419, %v4392
      %4431 = vst.msk [vmem:[#allocation5 + $0xb0] sm:$0xff] %vm4419, %v4394
      %4432 = vst.msk [vmem:[#allocation5 + $0xc0] sm:$0xff] %vm4419, %v4396
      %4433 = vst.msk [vmem:[#allocation5 + $0xd0] sm:$0xff] %vm4419, %v4398
      %4434 = vst.msk [vmem:[#allocation5 + $0xe0] sm:$0xff] %vm4419, %v4400
      %4435 = vst.msk [vmem:[#allocation5 + $0xf0] sm:$0xff] %vm4419, %v4402
      %v4436 = vld [vmem:[%s4177 + $0x9] sm:$0xff]
      %v4437 = vld [vmem:[%s4177 + $0x11] sm:$0xff]
      %v4438 = vld [vmem:[%s4177 + $0x29] sm:$0xff]
      %v4439 = vld [vmem:[%s4177 + $0x31] sm:$0xff]
      %v4440 = vld [vmem:[%s4177 + $0x49] sm:$0xff]
      %v4441 = vld [vmem:[%s4177 + $0x51] sm:$0xff]
      %v4442 = vld [vmem:[%s4177 + $0x69] sm:$0xff]
      %v4443 = vld [vmem:[%s4177 + $0x71] sm:$0xff]
      %v4444 = vld [vmem:[%s4177 + $0x89] sm:$0xff]
      %v4445 = vld [vmem:[%s4177 + $0x91] sm:$0xff]
      %v4446 = vld [vmem:[%s4177 + $0xa9] sm:$0xff]
      %v4447 = vld [vmem:[%s4177 + $0xb1] sm:$0xff]
      %v4448 = vld [vmem:[%s4177 + $0xc9] sm:$0xff]
      %v4449 = vld [vmem:[%s4177 + $0xd1] sm:$0xff]
      %v4450 = vld [vmem:[%s4177 + $0xe9] sm:$0xff]
      %v4451 = vld [vmem:[%s4177 + $0xf1] sm:$0xff]
      %v4452 = vld [vmem:[%s4177 + $0x109] sm:$0xff]
      %v4453 = vld [vmem:[%s4177 + $0x111] sm:$0xff]
      %v4454 = vld [vmem:[%s4177 + $0x129] sm:$0xff]
      %v4455 = vld [vmem:[%s4177 + $0x131] sm:$0xff]
      %v4456 = vld [vmem:[%s4177 + $0x149] sm:$0xff]
      %v4457 = vld [vmem:[%s4177 + $0x151] sm:$0xff]
      %v4458 = vld [vmem:[%s4177 + $0x169] sm:$0xff]
      %v4459 = vld [vmem:[%s4177 + $0x171] sm:$0xff]
      %v4460 = vld [vmem:[%s4177 + $0x189] sm:$0xff]
      %v4461 = vld [vmem:[%s4177 + $0x191] sm:$0xff]
      %v4462 = vld [vmem:[%s4177 + $0x1a9] sm:$0xff]
      %v4463 = vld [vmem:[%s4177 + $0x1b1] sm:$0xff]
      %v4464 = vld [vmem:[%s4177 + $0x1c9] sm:$0xff]
      %v4465 = vld [vmem:[%s4177 + $0x1d1] sm:$0xff]
      %v4466 = vld [vmem:[%s4177 + $0x1e9] sm:$0xff]
      %v4467 = vld [vmem:[%s4177 + $0x1f1] sm:$0xff]
      %v4468 = vpack.c.bf16 %v4437, %v4436
      %v4469 = vpack.c.bf16 %v4439, %v4438
      %v4470 = vpack.c.bf16 %v4441, %v4440
      %v4471 = vpack.c.bf16 %v4443, %v4442
      %v4472 = vpack.c.bf16 %v4445, %v4444
      %v4473 = vpack.c.bf16 %v4447, %v4446
      %v4474 = vpack.c.bf16 %v4449, %v4448
      %v4475 = vpack.c.bf16 %v4451, %v4450
      %v4476 = vpack.c.bf16 %v4453, %v4452
      %v4477 = vpack.c.bf16 %v4455, %v4454
      %v4478 = vpack.c.bf16 %v4457, %v4456
      %v4479 = vpack.c.bf16 %v4459, %v4458
      %v4480 = vpack.c.bf16 %v4461, %v4460
      %v4481 = vpack.c.bf16 %v4463, %v4462
      %v4482 = vpack.c.bf16 %v4465, %v4464
      %v4483 = vpack.c.bf16 %v4467, %v4466
      %4484 = vst.msk [vmem:[#allocation5 + $0x8] sm:$0xff] %vm1849, %v4468
      %4485 = vst.msk [vmem:[#allocation5 + $0x18] sm:$0xff] %vm1849, %v4469
      %4486 = vst.msk [vmem:[#allocation5 + $0x28] sm:$0xff] %vm1849, %v4470
      %4487 = vst.msk [vmem:[#allocation5 + $0x38] sm:$0xff] %vm1849, %v4471
      %4488 = vst.msk [vmem:[#allocation5 + $0x48] sm:$0xff] %vm1849, %v4472
      %4489 = vst.msk [vmem:[#allocation5 + $0x58] sm:$0xff] %vm1849, %v4473
      %4490 = vst.msk [vmem:[#allocation5 + $0x68] sm:$0xff] %vm1849, %v4474
      %4491 = vst.msk [vmem:[#allocation5 + $0x78] sm:$0xff] %vm1849, %v4475
      %4492 = vst.msk [vmem:[#allocation5 + $0x88] sm:$0xff] %vm1849, %v4476
      %4493 = vst.msk [vmem:[#allocation5 + $0x98] sm:$0xff] %vm1849, %v4477
      %4494 = vst.msk [vmem:[#allocation5 + $0xa8] sm:$0xff] %vm1849, %v4478
      %4495 = vst.msk [vmem:[#allocation5 + $0xb8] sm:$0xff] %vm1849, %v4479
      %4496 = vst.msk [vmem:[#allocation5 + $0xc8] sm:$0xff] %vm1849, %v4480
      %4497 = vst.msk [vmem:[#allocation5 + $0xd8] sm:$0xff] %vm1849, %v4481
      %4498 = vst.msk [vmem:[#allocation5 + $0xe8] sm:$0xff] %vm1849, %v4482
      %4499 = vst.msk [vmem:[#allocation5 + $0xf8] sm:$0xff] %vm1849, %v4483
      %v4500 = vld [vmem:[#allocation5] sm:$0xff]
      %v4501 = vld [vmem:[#allocation5 + $0x8] sm:$0xff]
      %v4502 = vld [vmem:[#allocation5 + $0x10] sm:$0xff]
      %v4503 = vld [vmem:[#allocation5 + $0x18] sm:$0xff]
      %v4504 = vld [vmem:[#allocation5 + $0x20] sm:$0xff]
      %v4505 = vld [vmem:[#allocation5 + $0x28] sm:$0xff]
      %v4506 = vld [vmem:[#allocation5 + $0x30] sm:$0xff]
      %v4507 = vld [vmem:[#allocation5 + $0x38] sm:$0xff]
      %v4508 = vld [vmem:[#allocation5 + $0x40] sm:$0xff]
      %v4509 = vld [vmem:[#allocation5 + $0x48] sm:$0xff]
      %v4510 = vld [vmem:[#allocation5 + $0x50] sm:$0xff]
      %v4511 = vld [vmem:[#allocation5 + $0x58] sm:$0xff]
      %v4512 = vld [vmem:[#allocation5 + $0x60] sm:$0xff]
      %v4513 = vld [vmem:[#allocation5 + $0x68] sm:$0xff]
      %v4514 = vld [vmem:[#allocation5 + $0x70] sm:$0xff]
      %v4515 = vld [vmem:[#allocation5 + $0x78] sm:$0xff]
      %v4516 = vld [vmem:[#allocation5 + $0x80] sm:$0xff]
      %v4517 = vld [vmem:[#allocation5 + $0x88] sm:$0xff]
      %v4518 = vld [vmem:[#allocation5 + $0x90] sm:$0xff]
      %v4519 = vld [vmem:[#allocation5 + $0x98] sm:$0xff]
      %v4520 = vld [vmem:[#allocation5 + $0xa0] sm:$0xff]
      %v4521 = vld [vmem:[#allocation5 + $0xa8] sm:$0xff]
      %v4522 = vld [vmem:[#allocation5 + $0xb0] sm:$0xff]
      %v4523 = vld [vmem:[#allocation5 + $0xb8] sm:$0xff]
      %v4524 = vld [vmem:[#allocation5 + $0xc0] sm:$0xff]
      %v4525 = vld [vmem:[#allocation5 + $0xc8] sm:$0xff]
      %v4526 = vld [vmem:[#allocation5 + $0xd0] sm:$0xff]
      %v4527 = vld [vmem:[#allocation5 + $0xd8] sm:$0xff]
      %v4528 = vld [vmem:[#allocation5 + $0xe0] sm:$0xff]
      %v4529 = vld [vmem:[#allocation5 + $0xe8] sm:$0xff]
      %v4530 = vld [vmem:[#allocation5 + $0xf0] sm:$0xff]
      %v4531 = vld [vmem:[#allocation5 + $0xf8] sm:$0xff]
      %v4532 = vld [vmem:[%s3] sm:$0xf]
      %v4533 = vld [vmem:[%s3 + $0x4] sm:$0xf]
      %v4534 = vld [vmem:[%s3 + $0x8] sm:$0xf]
      %v4535 = vld [vmem:[%s3 + $0xc] sm:$0xf]
      %v4536 = vld [vmem:[%s3 + $0x10] sm:$0xf]
      %v4537 = vld [vmem:[%s3 + $0x14] sm:$0xf]
      %v4538 = vld [vmem:[%s3 + $0x18] sm:$0xf]
      %v4539 = vld [vmem:[%s3 + $0x1c] sm:$0xf]
      %v4540 = vld [vmem:[%s3 + $0x20] sm:$0xf]
      %v4541 = vld [vmem:[%s3 + $0x24] sm:$0xf]
      %v4542 = vld [vmem:[%s3 + $0x28] sm:$0xf]
      %v4543 = vld [vmem:[%s3 + $0x2c] sm:$0xf]
      %v4544 = vld [vmem:[%s3 + $0x30] sm:$0xf]
      %v4545 = vld [vmem:[%s3 + $0x34] sm:$0xf]
      %v4546 = vld [vmem:[%s3 + $0x38] sm:$0xf]
      %v4547 = vld [vmem:[%s3 + $0x3c] sm:$0xf]
      %v4548 = vld [vmem:[%s3 + $0x40] sm:$0xf]
      %v4549 = vld [vmem:[%s3 + $0x44] sm:$0xf]
      %v4550 = vlaneseq
      %v4551 = vshrl.u32 %v4550, 7
      %v4552 = vsub.s32 3, %v4551
      %v4553 = vrot.slane %v309, %v4552
      %v4572 = vunpack.c.l.b16 %v4532
      %v4573 = vunpack.c.l.b16 %v4533
      %v4574 = vunpack.c.l.b16 %v4534
      %v4575 = vunpack.c.l.b16 %v4535
      %v4576 = vunpack.c.l.b16 %v4536
      %v4577 = vunpack.c.l.b16 %v4537
      %v4578 = vunpack.c.l.b16 %v4538
      %v4579 = vunpack.c.l.b16 %v4539
      %v4580 = vunpack.c.l.b16 %v4540
      %v4581 = vunpack.c.l.b16 %v4541
      %v4582 = vunpack.c.l.b16 %v4542
      %v4583 = vunpack.c.l.b16 %v4543
      %v4584 = vunpack.c.l.b16 %v4544
      %v4585 = vunpack.c.l.b16 %v4545
      %v4586 = vunpack.c.l.b16 %v4546
      %v4587 = vunpack.c.l.b16 %v4547
      %v4588 = vunpack.c.l.b16 %v4548
      %v4589 = vunpack.c.l.b16 %v4549
      %v4590 = vpack.c.b16 %v4573, %v4572
      %v4591 = vpack.c.b16 %v4575, %v4574
      %v4592 = vpack.c.b16 %v4577, %v4576
      %v4593 = vpack.c.b16 %v4579, %v4578
      %v4594 = vpack.c.b16 %v4581, %v4580
      %v4595 = vpack.c.b16 %v4583, %v4582
      %v4596 = vpack.c.b16 %v4585, %v4584
      %v4597 = vpack.c.b16 %v4587, %v4586
      %v4598 = vpack.c.b16 %v4589, %v4588
      %v4609 = vsel %vm1849, %v4501, 0
      %v4612 = vsel %vm1849, %v4503, 0
      %v4615 = vsel %vm1849, %v4505, 0
      %v4618 = vsel %vm1849, %v4507, 0
      %v4621 = vsel %vm1849, %v4509, 0
      %v4624 = vsel %vm1849, %v4511, 0
      %v4627 = vsel %vm1849, %v4513, 0
      %v4630 = vsel %vm1849, %v4515, 0
      %v4633 = vsel %vm1849, %v4517, 0
      %v4636 = vsel %vm1849, %v4519, 0
      %v4639 = vsel %vm1849, %v4521, 0
      %v4642 = vsel %vm1849, %v4523, 0
      %v4645 = vsel %vm1849, %v4525, 0
      %v4648 = vsel %vm1849, %v4527, 0
      %v4651 = vsel %vm1849, %v4529, 0
      %v4654 = vsel %vm1849, %v4531, 0
      %4656 = vmatprep.subr.bf16.mxu0 0
      %4657 = vmatpush1.bf16.msra.mxu0 %v4590
      %4658 = vmatprep.subr.bf16.mxu0 0
      %4659 = vmatpush1.bf16.msra.mxu0 %v4591
      %4660 = vmatprep.subr.bf16.mxu0 0
      %4661 = vmatpush1.bf16.msra.mxu0 %v4592
      %4662 = vmatprep.subr.bf16.mxu0 0
      %4663 = vmatpush1.bf16.msra.mxu0 %v4593
      %4664 = vmatprep.subr.bf16.mxu0 0
      %4665 = vmatpush1.bf16.msra.mxu0 %v4594
      %4666 = vmatprep.subr.bf16.mxu0 0
      %4667 = vmatpush1.bf16.msra.mxu0 %v4595
      %4668 = vmatprep.subr.bf16.mxu0 0
      %4669 = vmatpush1.bf16.msra.mxu0 %v4596
      %4670 = vmatprep.subr.bf16.mxu0 0
      %4671 = vmatpush1.bf16.msra.mxu0 %v4597
      %4672 = vmatprep.subr.bf16.mxu0 0
      %4673 = vmatpush1.bf16.msra.mxu0 %v4598
      %4674 = vmatprep.subr.bf16.mxu0 0
      %4675 = vmatpush1.bf16.msra.mxu0 0
      %4676 = vmatprep.subr.bf16.mxu0 0
      %4677 = vmatpush1.bf16.msra.mxu0 0
      %4678 = vmatprep.subr.bf16.mxu0 0
      %4679 = vmatpush1.bf16.msra.mxu0 0
      %4680 = vmatprep.subr.bf16.mxu0 0
      %4681 = vmatpush1.bf16.msra.mxu0 0
      %4682 = vmatprep.subr.bf16.mxu0 0
      %4683 = vmatpush1.bf16.msra.mxu0 0
      %4684 = vmatprep.subr.bf16.mxu0 0
      %4685 = vmatpush1.bf16.msra.mxu0 0
      %4686 = vmatprep.subr.bf16.mxu0 0
      %4687 = vmatpush1.bf16.msra.mxu0 0
      %4688 = vmatprep.mubr.bf16.mxu0 %v4609
      %4689 = vmatmul.mubr.bf16.gmra.mrb[0].mxu0 %v4500
      %v4690 = vpop.f32.mrb[0].mxu0
      %v4691 = vadd.f32 %v4553, %v4690
      %v4692 = vpop.f32.mrb[0].mxu0
      %v4693 = vpop.f32.mrb[0].mxu0
      %v4694 = vadd.f32 %v4553, %v4693
      %v4695 = vpop.f32.mrb[0].mxu0
      %4696 = vmatprep.mubr.bf16.mxu0 %v4612
      %4697 = vmatmul.mubr.bf16.gmra.mrb[0].mxu0 %v4502
      %v4698 = vpop.f32.mrb[0].mxu0
      %v4699 = vadd.f32 %v4553, %v4698
      %v4700 = vpop.f32.mrb[0].mxu0
      %v4701 = vpop.f32.mrb[0].mxu0
      %v4702 = vadd.f32 %v4553, %v4701
      %v4703 = vpop.f32.mrb[0].mxu0
      %4704 = vmatprep.mubr.bf16.mxu0 %v4615
      %4705 = vmatmul.mubr.bf16.gmra.mrb[0].mxu0 %v4504
      %v4706 = vpop.f32.mrb[0].mxu0
      %v4707 = vadd.f32 %v4553, %v4706
      %v4708 = vpop.f32.mrb[0].mxu0
      %v4709 = vpop.f32.mrb[0].mxu0
      %v4710 = vadd.f32 %v4553, %v4709
      %v4711 = vpop.f32.mrb[0].mxu0
      %4712 = vmatprep.mubr.bf16.mxu0 %v4618
      %4713 = vmatmul.mubr.bf16.gmra.mrb[0].mxu0 %v4506
      %v4714 = vpop.f32.mrb[0].mxu0
      %v4715 = vadd.f32 %v4553, %v4714
      %v4716 = vpop.f32.mrb[0].mxu0
      %v4717 = vpop.f32.mrb[0].mxu0
      %v4718 = vadd.f32 %v4553, %v4717
      %v4719 = vpop.f32.mrb[0].mxu0
      %4720 = vmatprep.mubr.bf16.mxu0 %v4621
      %4721 = vmatmul.mubr.bf16.gmra.mrb[0].mxu0 %v4508
      %v4722 = vpop.f32.mrb[0].mxu0
      %v4723 = vadd.f32 %v4553, %v4722
      %v4724 = vpop.f32.mrb[0].mxu0
      %v4725 = vpop.f32.mrb[0].mxu0
      %v4726 = vadd.f32 %v4553, %v4725
      %v4727 = vpop.f32.mrb[0].mxu0
      %4728 = vmatprep.mubr.bf16.mxu0 %v4624
      %4729 = vmatmul.mubr.bf16.gmra.mrb[0].mxu0 %v4510
      %v4730 = vpop.f32.mrb[0].mxu0
      %v4731 = vadd.f32 %v4553, %v4730
      %v4732 = vpop.f32.mrb[0].mxu0
      %v4733 = vpop.f32.mrb[0].mxu0
      %v4734 = vadd.f32 %v4553, %v4733
      %v4735 = vpop.f32.mrb[0].mxu0
      %4736 = vmatprep.mubr.bf16.mxu0 %v4627
      %4737 = vmatmul.mubr.bf16.gmra.mrb[0].mxu0 %v4512
      %v4738 = vpop.f32.mrb[0].mxu0
      %v4739 = vadd.f32 %v4553, %v4738
      %v4740 = vpop.f32.mrb[0].mxu0
      %v4741 = vpop.f32.mrb[0].mxu0
      %v4742 = vadd.f32 %v4553, %v4741
      %v4743 = vpop.f32.mrb[0].mxu0
      %4744 = vmatprep.mubr.bf16.mxu0 %v4630
      %4745 = vmatmul.mubr.bf16.gmra.mrb[0].mxu0 %v4514
      %v4746 = vpop.f32.mrb[0].mxu0
      %v4747 = vadd.f32 %v4553, %v4746
      %v4748 = vpop.f32.mrb[0].mxu0
      %v4749 = vpop.f32.mrb[0].mxu0
      %v4750 = vadd.f32 %v4553, %v4749
      %v4751 = vpop.f32.mrb[0].mxu0
      %4752 = vmatprep.mubr.bf16.mxu0 %v4633
      %4753 = vmatmul.mubr.bf16.gmra.mrb[0].mxu0 %v4516
      %v4754 = vpop.f32.mrb[0].mxu0
      %v4755 = vadd.f32 %v4553, %v4754
      %v4756 = vpop.f32.mrb[0].mxu0
      %v4757 = vpop.f32.mrb[0].mxu0
      %v4758 = vadd.f32 %v4553, %v4757
      %v4759 = vpop.f32.mrb[0].mxu0
      %4760 = vmatprep.mubr.bf16.mxu0 %v4636
      %4761 = vmatmul.mubr.bf16.gmra.mrb[0].mxu0 %v4518
      %v4762 = vpop.f32.mrb[0].mxu0
      %v4763 = vadd.f32 %v4553, %v4762
      %v4764 = vpop.f32.mrb[0].mxu0
      %v4765 = vpop.f32.mrb[0].mxu0
      %v4766 = vadd.f32 %v4553, %v4765
      %v4767 = vpop.f32.mrb[0].mxu0
      %4768 = vmatprep.mubr.bf16.mxu0 %v4639
      %4769 = vmatmul.mubr.bf16.gmra.mrb[0].mxu0 %v4520
      %v4770 = vpop.f32.mrb[0].mxu0
      %v4771 = vadd.f32 %v4553, %v4770
      %v4772 = vpop.f32.mrb[0].mxu0
      %v4773 = vpop.f32.mrb[0].mxu0
      %v4774 = vadd.f32 %v4553, %v4773
      %v4775 = vpop.f32.mrb[0].mxu0
      %4776 = vmatprep.mubr.bf16.mxu0 %v4642
      %4777 = vmatmul.mubr.bf16.gmra.mrb[0].mxu0 %v4522
      %v4778 = vpop.f32.mrb[0].mxu0
      %v4779 = vadd.f32 %v4553, %v4778
      %v4780 = vpop.f32.mrb[0].mxu0
      %v4781 = vpop.f32.mrb[0].mxu0
      %v4782 = vadd.f32 %v4553, %v4781
      %v4783 = vpop.f32.mrb[0].mxu0
      %4784 = vmatprep.mubr.bf16.mxu0 %v4645
      %4785 = vmatmul.mubr.bf16.gmra.mrb[0].mxu0 %v4524
      %v4786 = vpop.f32.mrb[0].mxu0
      %v4787 = vadd.f32 %v4553, %v4786
      %v4788 = vpop.f32.mrb[0].mxu0
      %v4789 = vpop.f32.mrb[0].mxu0
      %v4790 = vadd.f32 %v4553, %v4789
      %v4791 = vpop.f32.mrb[0].mxu0
      %4792 = vmatprep.mubr.bf16.mxu0 %v4648
      %4793 = vmatmul.mubr.bf16.gmra.mrb[0].mxu0 %v4526
      %v4794 = vpop.f32.mrb[0].mxu0
      %v4795 = vadd.f32 %v4553, %v4794
      %v4796 = vpop.f32.mrb[0].mxu0
      %v4797 = vpop.f32.mrb[0].mxu0
      %v4798 = vadd.f32 %v4553, %v4797
      %v4799 = vpop.f32.mrb[0].mxu0
      %4800 = vmatprep.mubr.bf16.mxu0 %v4651
      %4801 = vmatmul.mubr.bf16.gmra.mrb[0].mxu0 %v4528
      %v4802 = vpop.f32.mrb[0].mxu0
      %v4803 = vadd.f32 %v4553, %v4802
      %v4804 = vpop.f32.mrb[0].mxu0
      %v4805 = vpop.f32.mrb[0].mxu0
      %v4806 = vadd.f32 %v4553, %v4805
      %v4807 = vpop.f32.mrb[0].mxu0
      %4808 = vmatprep.mubr.bf16.mxu0 %v4654
      %4809 = vmatmul.mubr.bf16.gmra.mrb[0].mxu0 %v4530
      %v4810 = vpop.f32.mrb[0].mxu0
      %v4811 = vadd.f32 %v4553, %v4810
      %v4812 = vpop.f32.mrb[0].mxu0
      %v4813 = vpop.f32.mrb[0].mxu0
      %v4814 = vadd.f32 %v4553, %v4813
      %v4815 = vpop.f32.mrb[0].mxu0
      %4816 = vdwg.mxu0
      %v4817 = vsel %vm1849, %v4691, 0.0
      %v4818 = vsel %vm1849, %v4694, 0.0
      %v4819 = vadd.f32 %v4817, %v4818
      %v4820 = vsel %vm1849, %v4699, 0.0
      %v4821 = vadd.f32 %v4819, %v4820
      %v4822 = vsel %vm1849, %v4702, 0.0
      %v4823 = vadd.f32 %v4821, %v4822
      %v4824 = vsel %vm1849, %v4707, 0.0
      %v4825 = vadd.f32 %v4823, %v4824
      %v4826 = vsel %vm1849, %v4710, 0.0
      %v4827 = vadd.f32 %v4825, %v4826
      %v4828 = vsel %vm1849, %v4715, 0.0
      %v4829 = vadd.f32 %v4827, %v4828
      %v4830 = vsel %vm1849, %v4718, 0.0
      %v4831 = vadd.f32 %v4829, %v4830
      %v4832 = vsel %vm1849, %v4723, 0.0
      %v4833 = vadd.f32 %v4831, %v4832
      %v4834 = vsel %vm1849, %v4726, 0.0
      %v4835 = vadd.f32 %v4833, %v4834
      %v4836 = vsel %vm1849, %v4731, 0.0
      %v4837 = vadd.f32 %v4835, %v4836
      %v4838 = vsel %vm1849, %v4734, 0.0
      %v4839 = vadd.f32 %v4837, %v4838
      %v4840 = vsel %vm1849, %v4739, 0.0
      %v4841 = vadd.f32 %v4839, %v4840
      %v4842 = vsel %vm1849, %v4742, 0.0
      %v4843 = vadd.f32 %v4841, %v4842
      %v4844 = vsel %vm1849, %v4747, 0.0
      %v4845 = vadd.f32 %v4843, %v4844
      %v4846 = vsel %vm1849, %v4750, 0.0
      %v4847 = vadd.f32 %v4845, %v4846
      %v4848 = vsel %vm1849, %v4755, 0.0
      %v4849 = vadd.f32 %v4847, %v4848
      %v4850 = vsel %vm1849, %v4758, 0.0
      %v4851 = vadd.f32 %v4849, %v4850
      %v4852 = vsel %vm1849, %v4763, 0.0
      %v4853 = vadd.f32 %v4851, %v4852
      %v4854 = vsel %vm1849, %v4766, 0.0
      %v4855 = vadd.f32 %v4853, %v4854
      %v4856 = vsel %vm1849, %v4771, 0.0
      %v4857 = vadd.f32 %v4855, %v4856
      %v4858 = vsel %vm1849, %v4774, 0.0
      %v4859 = vadd.f32 %v4857, %v4858
      %v4860 = vsel %vm1849, %v4779, 0.0
      %v4861 = vadd.f32 %v4859, %v4860
      %v4862 = vsel %vm1849, %v4782, 0.0
      %v4863 = vadd.f32 %v4861, %v4862
      %v4864 = vsel %vm1849, %v4787, 0.0
      %v4865 = vadd.f32 %v4863, %v4864
      %v4866 = vsel %vm1849, %v4790, 0.0
      %v4867 = vadd.f32 %v4865, %v4866
      %v4868 = vsel %vm1849, %v4795, 0.0
      %v4869 = vadd.f32 %v4867, %v4868
      %v4870 = vsel %vm1849, %v4798, 0.0
      %v4871 = vadd.f32 %v4869, %v4870
      %v4872 = vsel %vm1849, %v4803, 0.0
      %v4873 = vadd.f32 %v4871, %v4872
      %v4874 = vsel %vm1849, %v4806, 0.0
      %v4875 = vadd.f32 %v4873, %v4874
      %v4876 = vsel %vm1849, %v4811, 0.0
      %v4877 = vadd.f32 %v4875, %v4876
      %v4878 = vsel %vm1849, %v4814, 0.0
      %v4879 = vadd.f32 %v4877, %v4878
      %v4880 = vrot.slane %v4879, 4
      %v4881 = vadd.f32 %v4879, %v4880
      %v4882 = vrot.slane %v4881, 2
      %v4883 = vadd.f32 %v4881, %v4882
      %v4884 = vrot.slane %v4883, 1
      %v4885 = vadd.f32 %v4883, %v4884
      %v4887 = vsel %vm1849, %v4885, 0
      %4889 = vmatprep.subr.mxu0 0.0
      %v4890 = vand.u32 %v307, 4294901760
      %4891 = vmatpush1.msra.mxu0 %v4890
      %4892 = vmatprep.subr.mxu0 0.0
      %v4893 = vand.u32 %v308, 4294901760
      %4894 = vmatpush1.msra.mxu0 %v4893
      %4895 = vmatprep.subr.mxu0 0.0
      %4896 = vmatpush1.msra.mxu0 0.0
      %4897 = vmatprep.subr.mxu0 0.0
      %4898 = vmatpush1.msra.mxu0 0.0
      %4899 = vmatprep.subr.mxu0 0.0
      %4900 = vmatpush1.msra.mxu0 0.0
      %4901 = vmatprep.subr.mxu0 0.0
      %4902 = vmatpush1.msra.mxu0 0.0
      %4903 = vmatprep.subr.mxu0 0.0
      %4904 = vmatpush1.msra.mxu0 0.0
      %4905 = vmatprep.subr.mxu0 0.0
      %4906 = vmatpush1.msra.mxu0 0.0
      %4907 = vmatprep.subr.mxu0 0.0
      %4908 = vmatpush1.msra.mxu0 0.0
      %4909 = vmatprep.subr.mxu0 0.0
      %4910 = vmatpush1.msra.mxu0 0.0
      %4911 = vmatprep.subr.mxu0 0.0
      %4912 = vmatpush1.msra.mxu0 0.0
      %4913 = vmatprep.subr.mxu0 0.0
      %4914 = vmatpush1.msra.mxu0 0.0
      %4915 = vmatprep.subr.mxu0 0.0
      %4916 = vmatpush1.msra.mxu0 0.0
      %4917 = vmatprep.subr.mxu0 0.0
      %4918 = vmatpush1.msra.mxu0 0.0
      %4919 = vmatprep.subr.mxu0 0.0
      %4920 = vmatpush1.msra.mxu0 0.0
      %4921 = vmatprep.subr.mxu0 0.0
      %4922 = vmatpush1.msra.mxu0 0.0
      %4923 = vmatprep.subr.mxu0 0.0
      %4924 = vmatpush1.msra.mxu0 0.0
      %4925 = vmatprep.subr.mxu0 0.0
      %4926 = vmatpush1.msra.mxu0 0.0
      %4927 = vmatprep.subr.mxu0 0.0
      %4928 = vmatpush1.msra.mxu0 0.0
      %4929 = vmatprep.subr.mxu0 0.0
      %4930 = vmatpush1.msra.mxu0 0.0
      %4931 = vmatprep.subr.mxu0 0.0
      %4932 = vmatpush1.msra.mxu0 0.0
      %4933 = vmatprep.subr.mxu0 0.0
      %4934 = vmatpush1.msra.mxu0 0.0
      %4935 = vmatprep.subr.mxu0 0.0
      %4936 = vmatpush1.msra.mxu0 0.0
      %4937 = vmatprep.subr.mxu0 0.0
      %4938 = vmatpush1.msra.mxu0 0.0
      %4939 = vmatprep.subr.mxu0 0.0
      %4940 = vmatpush1.msra.mxu0 0.0
      %4941 = vmatprep.subr.mxu0 0.0
      %4942 = vmatpush1.msra.mxu0 0.0
      %4943 = vmatprep.subr.mxu0 0.0
      %4944 = vmatpush1.msra.mxu0 0.0
      %4945 = vmatprep.subr.mxu0 0.0
      %4946 = vmatpush1.msra.mxu0 0.0
      %4947 = vmatprep.subr.mxu0 0.0
      %4948 = vmatpush1.msra.mxu0 0.0
      %4949 = vmatprep.subr.mxu0 0.0
      %4950 = vmatpush1.msra.mxu0 0.0
      %4951 = vmatprep.subr.mxu0 0.0
      %4952 = vmatpush1.msra.mxu0 0.0
      %4953 = vmatprep.subr.mxu0 0.0
      %4954 = vmatpush1.msra.mxu0 0.0
      %4955 = vmatprep.mubr.f32.mxu0 0.0
      %v4956 = vand.u32 %v4887, 4294901760
      %v4957 = vsub.f32 %v4887, %v4956
      %v4958 = vand.u32 %v4957, 4294901760
      %v4959 = vsub.f32 %v4957, %v4958
      %v4960 = vand.u32 %v4959, 4294901760
      %4961 = vmatmul.mubr.f32.gmra.mrb[0].mxu0 %v4960
      %v4962 = vpop.f32.mrb[0].mxu0
      %v4963 = vadd.f32 0.0, %v4962
      %v4964 = vpop.f32.mrb[0].mxu0
      %4965 = vdwg.mxu0
      %4966 = vmatprep.subr.mxu0 0.0
      %v4967 = vand.u32 %v307, 4294901760
      %v4968 = vsub.f32 %v307, %v4967
      %v4969 = vand.u32 %v4968, 4294901760
      %v4970 = vsub.f32 %v4968, %v4969
      %v4971 = vand.u32 %v4970, 4294901760
      %4972 = vmatpush1.msra.mxu0 %v4971
      %4973 = vmatprep.subr.mxu0 0.0
      %v4974 = vand.u32 %v308, 4294901760
      %v4975 = vsub.f32 %v308, %v4974
      %v4976 = vand.u32 %v4975, 4294901760
      %v4977 = vsub.f32 %v4975, %v4976
      %v4978 = vand.u32 %v4977, 4294901760
      %4979 = vmatpush1.msra.mxu0 %v4978
      %4980 = vmatprep.subr.mxu0 0.0
      %4981 = vmatpush1.msra.mxu0 0.0
      %4982 = vmatprep.subr.mxu0 0.0
      %4983 = vmatpush1.msra.mxu0 0.0
      %4984 = vmatprep.subr.mxu0 0.0
      %4985 = vmatpush1.msra.mxu0 0.0
      %4986 = vmatprep.subr.mxu0 0.0
      %4987 = vmatpush1.msra.mxu0 0.0
      %4988 = vmatprep.subr.mxu0 0.0
      %4989 = vmatpush1.msra.mxu0 0.0
      %4990 = vmatprep.subr.mxu0 0.0
      %4991 = vmatpush1.msra.mxu0 0.0
      %4992 = vmatprep.subr.mxu0 0.0
      %4993 = vmatpush1.msra.mxu0 0.0
      %4994 = vmatprep.subr.mxu0 0.0
      %4995 = vmatpush1.msra.mxu0 0.0
      %4996 = vmatprep.subr.mxu0 0.0
      %4997 = vmatpush1.msra.mxu0 0.0
      %4998 = vmatprep.subr.mxu0 0.0
      %4999 = vmatpush1.msra.mxu0 0.0
      %5000 = vmatprep.subr.mxu0 0.0
      %5001 = vmatpush1.msra.mxu0 0.0
      %5002 = vmatprep.subr.mxu0 0.0
      %5003 = vmatpush1.msra.mxu0 0.0
      %5004 = vmatprep.subr.mxu0 0.0
      %5005 = vmatpush1.msra.mxu0 0.0
      %5006 = vmatprep.subr.mxu0 0.0
      %5007 = vmatpush1.msra.mxu0 0.0
      %5008 = vmatprep.subr.mxu0 0.0
      %5009 = vmatpush1.msra.mxu0 0.0
      %5010 = vmatprep.subr.mxu0 0.0
      %5011 = vmatpush1.msra.mxu0 0.0
      %5012 = vmatprep.subr.mxu0 0.0
      %5013 = vmatpush1.msra.mxu0 0.0
      %5014 = vmatprep.subr.mxu0 0.0
      %5015 = vmatpush1.msra.mxu0 0.0
      %5016 = vmatprep.subr.mxu0 0.0
      %5017 = vmatpush1.msra.mxu0 0.0
      %5018 = vmatprep.subr.mxu0 0.0
      %5019 = vmatpush1.msra.mxu0 0.0
      %5020 = vmatprep.subr.mxu0 0.0
      %5021 = vmatpush1.msra.mxu0 0.0
      %5022 = vmatprep.subr.mxu0 0.0
      %5023 = vmatpush1.msra.mxu0 0.0
      %5024 = vmatprep.subr.mxu0 0.0
      %5025 = vmatpush1.msra.mxu0 0.0
      %5026 = vmatprep.subr.mxu0 0.0
      %5027 = vmatpush1.msra.mxu0 0.0
      %5028 = vmatprep.subr.mxu0 0.0
      %5029 = vmatpush1.msra.mxu0 0.0
      %5030 = vmatprep.subr.mxu0 0.0
      %5031 = vmatpush1.msra.mxu0 0.0
      %5032 = vmatprep.subr.mxu0 0.0
      %5033 = vmatpush1.msra.mxu0 0.0
      %5034 = vmatprep.subr.mxu0 0.0
      %5035 = vmatpush1.msra.mxu0 0.0
      %5036 = vmatprep.subr.mxu0 0.0
      %5037 = vmatpush1.msra.mxu0 0.0
      %5038 = vmatprep.subr.mxu0 0.0
      %5039 = vmatpush1.msra.mxu0 0.0
      %5040 = vmatprep.mubr.f32.mxu0 0.0
      %v5041 = vand.u32 %v4887, 4294901760
      %5042 = vmatmul.mubr.f32.gmra.mrb[0].mxu0 %v5041
      %v5043 = vpop.f32.mrb[0].mxu0
      %v5044 = vadd.f32 %v4963, %v5043
      %v5045 = vpop.f32.mrb[0].mxu0
      %5046 = vdwg.mxu0
      %5047 = vmatprep.subr.mxu0 0.0
      %v5048 = vand.u32 %v307, 4294901760
      %v5049 = vsub.f32 %v307, %v5048
      %5050 = vmatpush1.msra.mxu0 %v5049
      %5051 = vmatprep.subr.mxu0 0.0
      %v5052 = vand.u32 %v308, 4294901760
      %v5053 = vsub.f32 %v308, %v5052
      %5054 = vmatpush1.msra.mxu0 %v5053
      %5055 = vmatprep.subr.mxu0 0.0
      %5056 = vmatpush1.msra.mxu0 0.0
      %5057 = vmatprep.subr.mxu0 0.0
      %5058 = vmatpush1.msra.mxu0 0.0
      %5059 = vmatprep.subr.mxu0 0.0
      %5060 = vmatpush1.msra.mxu0 0.0
      %5061 = vmatprep.subr.mxu0 0.0
      %5062 = vmatpush1.msra.mxu0 0.0
      %5063 = vmatprep.subr.mxu0 0.0
      %5064 = vmatpush1.msra.mxu0 0.0
      %5065 = vmatprep.subr.mxu0 0.0
      %5066 = vmatpush1.msra.mxu0 0.0
      %5067 = vmatprep.subr.mxu0 0.0
      %5068 = vmatpush1.msra.mxu0 0.0
      %5069 = vmatprep.subr.mxu0 0.0
      %5070 = vmatpush1.msra.mxu0 0.0
      %5071 = vmatprep.subr.mxu0 0.0
      %5072 = vmatpush1.msra.mxu0 0.0
      %5073 = vmatprep.subr.mxu0 0.0
      %5074 = vmatpush1.msra.mxu0 0.0
      %5075 = vmatprep.subr.mxu0 0.0
      %5076 = vmatpush1.msra.mxu0 0.0
      %5077 = vmatprep.subr.mxu0 0.0
      %5078 = vmatpush1.msra.mxu0 0.0
      %5079 = vmatprep.subr.mxu0 0.0
      %5080 = vmatpush1.msra.mxu0 0.0
      %5081 = vmatprep.subr.mxu0 0.0
      %5082 = vmatpush1.msra.mxu0 0.0
      %5083 = vmatprep.subr.mxu0 0.0
      %5084 = vmatpush1.msra.mxu0 0.0
      %5085 = vmatprep.subr.mxu0 0.0
      %5086 = vmatpush1.msra.mxu0 0.0
      %5087 = vmatprep.subr.mxu0 0.0
      %5088 = vmatpush1.msra.mxu0 0.0
      %5089 = vmatprep.subr.mxu0 0.0
      %5090 = vmatpush1.msra.mxu0 0.0
      %5091 = vmatprep.subr.mxu0 0.0
      %5092 = vmatpush1.msra.mxu0 0.0
      %5093 = vmatprep.subr.mxu0 0.0
      %5094 = vmatpush1.msra.mxu0 0.0
      %5095 = vmatprep.subr.mxu0 0.0
      %5096 = vmatpush1.msra.mxu0 0.0
      %5097 = vmatprep.subr.mxu0 0.0
      %5098 = vmatpush1.msra.mxu0 0.0
      %5099 = vmatprep.subr.mxu0 0.0
      %5100 = vmatpush1.msra.mxu0 0.0
      %5101 = vmatprep.subr.mxu0 0.0
      %5102 = vmatpush1.msra.mxu0 0.0
      %5103 = vmatprep.subr.mxu0 0.0
      %5104 = vmatpush1.msra.mxu0 0.0
      %5105 = vmatprep.subr.mxu0 0.0
      %5106 = vmatpush1.msra.mxu0 0.0
      %5107 = vmatprep.subr.mxu0 0.0
      %5108 = vmatpush1.msra.mxu0 0.0
      %5109 = vmatprep.subr.mxu0 0.0
      %5110 = vmatpush1.msra.mxu0 0.0
      %5111 = vmatprep.subr.mxu0 0.0
      %5112 = vmatpush1.msra.mxu0 0.0
      %5113 = vmatprep.subr.mxu0 0.0
      %5114 = vmatpush1.msra.mxu0 0.0
      %5115 = vmatprep.mubr.f32.mxu0 0.0
      %v5116 = vand.u32 %v4887, 4294901760
      %v5117 = vsub.f32 %v4887, %v5116
      %5118 = vmatmul.mubr.f32.gmra.mrb[0].mxu0 %v5117
      %v5119 = vpop.f32.mrb[0].mxu0
      %v5120 = vadd.f32 %v5044, %v5119
      %v5121 = vpop.f32.mrb[0].mxu0
      %5122 = vdwg.mxu0
      %5123 = vmatprep.subr.mxu0 0.0
      %v5124 = vand.u32 %v307, 4294901760
      %5125 = vmatpush1.msra.mxu0 %v5124
      %5126 = vmatprep.subr.mxu0 0.0
      %v5127 = vand.u32 %v308, 4294901760
      %5128 = vmatpush1.msra.mxu0 %v5127
      %5129 = vmatprep.subr.mxu0 0.0
      %5130 = vmatpush1.msra.mxu0 0.0
      %5131 = vmatprep.subr.mxu0 0.0
      %5132 = vmatpush1.msra.mxu0 0.0
      %5133 = vmatprep.subr.mxu0 0.0
      %5134 = vmatpush1.msra.mxu0 0.0
      %5135 = vmatprep.subr.mxu0 0.0
      %5136 = vmatpush1.msra.mxu0 0.0
      %5137 = vmatprep.subr.mxu0 0.0
      %5138 = vmatpush1.msra.mxu0 0.0
      %5139 = vmatprep.subr.mxu0 0.0
      %5140 = vmatpush1.msra.mxu0 0.0
      %5141 = vmatprep.subr.mxu0 0.0
      %5142 = vmatpush1.msra.mxu0 0.0
      %5143 = vmatprep.subr.mxu0 0.0
      %5144 = vmatpush1.msra.mxu0 0.0
      %5145 = vmatprep.subr.mxu0 0.0
      %5146 = vmatpush1.msra.mxu0 0.0
      %5147 = vmatprep.subr.mxu0 0.0
      %5148 = vmatpush1.msra.mxu0 0.0
      %5149 = vmatprep.subr.mxu0 0.0
      %5150 = vmatpush1.msra.mxu0 0.0
      %5151 = vmatprep.subr.mxu0 0.0
      %5152 = vmatpush1.msra.mxu0 0.0
      %5153 = vmatprep.subr.mxu0 0.0
      %5154 = vmatpush1.msra.mxu0 0.0
      %5155 = vmatprep.subr.mxu0 0.0
      %5156 = vmatpush1.msra.mxu0 0.0
      %5157 = vmatprep.subr.mxu0 0.0
      %5158 = vmatpush1.msra.mxu0 0.0
      %5159 = vmatprep.subr.mxu0 0.0
      %5160 = vmatpush1.msra.mxu0 0.0
      %5161 = vmatprep.subr.mxu0 0.0
      %5162 = vmatpush1.msra.mxu0 0.0
      %5163 = vmatprep.subr.mxu0 0.0
      %5164 = vmatpush1.msra.mxu0 0.0
      %5165 = vmatprep.subr.mxu0 0.0
      %5166 = vmatpush1.msra.mxu0 0.0
      %5167 = vmatprep.subr.mxu0 0.0
      %5168 = vmatpush1.msra.mxu0 0.0
      %5169 = vmatprep.subr.mxu0 0.0
      %5170 = vmatpush1.msra.mxu0 0.0
      %5171 = vmatprep.subr.mxu0 0.0
      %5172 = vmatpush1.msra.mxu0 0.0
      %5173 = vmatprep.subr.mxu0 0.0
      %5174 = vmatpush1.msra.mxu0 0.0
      %5175 = vmatprep.subr.mxu0 0.0
      %5176 = vmatpush1.msra.mxu0 0.0
      %5177 = vmatprep.subr.mxu0 0.0
      %5178 = vmatpush1.msra.mxu0 0.0
      %5179 = vmatprep.subr.mxu0 0.0
      %5180 = vmatpush1.msra.mxu0 0.0
      %5181 = vmatprep.subr.mxu0 0.0
      %5182 = vmatpush1.msra.mxu0 0.0
      %5183 = vmatprep.subr.mxu0 0.0
      %5184 = vmatpush1.msra.mxu0 0.0
      %5185 = vmatprep.subr.mxu0 0.0
      %5186 = vmatpush1.msra.mxu0 0.0
      %5187 = vmatprep.subr.mxu0 0.0
      %5188 = vmatpush1.msra.mxu0 0.0
      %5189 = vmatprep.mubr.f32.mxu0 0.0
      %v5190 = vand.u32 %v4887, 4294901760
      %v5191 = vsub.f32 %v4887, %v5190
      %v5192 = vand.u32 %v5191, 4294901760
      %5193 = vmatmul.mubr.f32.gmra.mrb[0].mxu0 %v5192
      %v5194 = vpop.f32.mrb[0].mxu0
      %v5195 = vadd.f32 %v5120, %v5194
      %v5196 = vpop.f32.mrb[0].mxu0
      %5197 = vdwg.mxu0
      %5198 = vmatprep.subr.mxu0 0.0
      %v5199 = vand.u32 %v307, 4294901760
      %v5200 = vsub.f32 %v307, %v5199
      %v5201 = vand.u32 %v5200, 4294901760
      %5202 = vmatpush1.msra.mxu0 %v5201
      %5203 = vmatprep.subr.mxu0 0.0
      %v5204 = vand.u32 %v308, 4294901760
      %v5205 = vsub.f32 %v308, %v5204
      %v5206 = vand.u32 %v5205, 4294901760
      %5207 = vmatpush1.msra.mxu0 %v5206
      %5208 = vmatprep.subr.mxu0 0.0
      %5209 = vmatpush1.msra.mxu0 0.0
      %5210 = vmatprep.subr.mxu0 0.0
      %5211 = vmatpush1.msra.mxu0 0.0
      %5212 = vmatprep.subr.mxu0 0.0
      %5213 = vmatpush1.msra.mxu0 0.0
      %5214 = vmatprep.subr.mxu0 0.0
      %5215 = vmatpush1.msra.mxu0 0.0
      %5216 = vmatprep.subr.mxu0 0.0
      %5217 = vmatpush1.msra.mxu0 0.0
      %5218 = vmatprep.subr.mxu0 0.0
      %5219 = vmatpush1.msra.mxu0 0.0
      %5220 = vmatprep.subr.mxu0 0.0
      %5221 = vmatpush1.msra.mxu0 0.0
      %5222 = vmatprep.subr.mxu0 0.0
      %5223 = vmatpush1.msra.mxu0 0.0
      %5224 = vmatprep.subr.mxu0 0.0
      %5225 = vmatpush1.msra.mxu0 0.0
      %5226 = vmatprep.subr.mxu0 0.0
      %5227 = vmatpush1.msra.mxu0 0.0
      %5228 = vmatprep.subr.mxu0 0.0
      %5229 = vmatpush1.msra.mxu0 0.0
      %5230 = vmatprep.subr.mxu0 0.0
      %5231 = vmatpush1.msra.mxu0 0.0
      %5232 = vmatprep.subr.mxu0 0.0
      %5233 = vmatpush1.msra.mxu0 0.0
      %5234 = vmatprep.subr.mxu0 0.0
      %5235 = vmatpush1.msra.mxu0 0.0
      %5236 = vmatprep.subr.mxu0 0.0
      %5237 = vmatpush1.msra.mxu0 0.0
      %5238 = vmatprep.subr.mxu0 0.0
      %5239 = vmatpush1.msra.mxu0 0.0
      %5240 = vmatprep.subr.mxu0 0.0
      %5241 = vmatpush1.msra.mxu0 0.0
      %5242 = vmatprep.subr.mxu0 0.0
      %5243 = vmatpush1.msra.mxu0 0.0
      %5244 = vmatprep.subr.mxu0 0.0
      %5245 = vmatpush1.msra.mxu0 0.0
      %5246 = vmatprep.subr.mxu0 0.0
      %5247 = vmatpush1.msra.mxu0 0.0
      %5248 = vmatprep.subr.mxu0 0.0
      %5249 = vmatpush1.msra.mxu0 0.0
      %5250 = vmatprep.subr.mxu0 0.0
      %5251 = vmatpush1.msra.mxu0 0.0
      %5252 = vmatprep.subr.mxu0 0.0
      %5253 = vmatpush1.msra.mxu0 0.0
      %5254 = vmatprep.subr.mxu0 0.0
      %5255 = vmatpush1.msra.mxu0 0.0
      %5256 = vmatprep.subr.mxu0 0.0
      %5257 = vmatpush1.msra.mxu0 0.0
      %5258 = vmatprep.subr.mxu0 0.0
      %5259 = vmatpush1.msra.mxu0 0.0
      %5260 = vmatprep.subr.mxu0 0.0
      %5261 = vmatpush1.msra.mxu0 0.0
      %5262 = vmatprep.subr.mxu0 0.0
      %5263 = vmatpush1.msra.mxu0 0.0
      %5264 = vmatprep.subr.mxu0 0.0
      %5265 = vmatpush1.msra.mxu0 0.0
      %5266 = vmatprep.subr.mxu0 0.0
      %5267 = vmatpush1.msra.mxu0 0.0
      %5268 = vmatprep.mubr.f32.mxu0 0.0
      %v5269 = vand.u32 %v4887, 4294901760
      %5270 = vmatmul.mubr.f32.gmra.mrb[0].mxu0 %v5269
      %v5271 = vpop.f32.mrb[0].mxu0
      %v5272 = vadd.f32 %v5195, %v5271
      %v5273 = vpop.f32.mrb[0].mxu0
      %5274 = vdwg.mxu0
      %5275 = vmatprep.subr.mxu0 0.0
      %v5276 = vand.u32 %v307, 4294901760
      %5277 = vmatpush1.msra.mxu0 %v5276
      %5278 = vmatprep.subr.mxu0 0.0
      %v5279 = vand.u32 %v308, 4294901760
      %5280 = vmatpush1.msra.mxu0 %v5279
      %5281 = vmatprep.subr.mxu0 0.0
      %5282 = vmatpush1.msra.mxu0 0.0
      %5283 = vmatprep.subr.mxu0 0.0
      %5284 = vmatpush1.msra.mxu0 0.0
      %5285 = vmatprep.subr.mxu0 0.0
      %5286 = vmatpush1.msra.mxu0 0.0
      %5287 = vmatprep.subr.mxu0 0.0
      %5288 = vmatpush1.msra.mxu0 0.0
      %5289 = vmatprep.subr.mxu0 0.0
      %5290 = vmatpush1.msra.mxu0 0.0
      %5291 = vmatprep.subr.mxu0 0.0
      %5292 = vmatpush1.msra.mxu0 0.0
      %5293 = vmatprep.subr.mxu0 0.0
      %5294 = vmatpush1.msra.mxu0 0.0
      %5295 = vmatprep.subr.mxu0 0.0
      %5296 = vmatpush1.msra.mxu0 0.0
      %5297 = vmatprep.subr.mxu0 0.0
      %5298 = vmatpush1.msra.mxu0 0.0
      %5299 = vmatprep.subr.mxu0 0.0
      %5300 = vmatpush1.msra.mxu0 0.0
      %5301 = vmatprep.subr.mxu0 0.0
      %5302 = vmatpush1.msra.mxu0 0.0
      %5303 = vmatprep.subr.mxu0 0.0
      %5304 = vmatpush1.msra.mxu0 0.0
      %5305 = vmatprep.subr.mxu0 0.0
      %5306 = vmatpush1.msra.mxu0 0.0
      %5307 = vmatprep.subr.mxu0 0.0
      %5308 = vmatpush1.msra.mxu0 0.0
      %5309 = vmatprep.subr.mxu0 0.0
      %5310 = vmatpush1.msra.mxu0 0.0
      %5311 = vmatprep.subr.mxu0 0.0
      %5312 = vmatpush1.msra.mxu0 0.0
      %5313 = vmatprep.subr.mxu0 0.0
      %5314 = vmatpush1.msra.mxu0 0.0
      %5315 = vmatprep.subr.mxu0 0.0
      %5316 = vmatpush1.msra.mxu0 0.0
      %5317 = vmatprep.subr.mxu0 0.0
      %5318 = vmatpush1.msra.mxu0 0.0
      %5319 = vmatprep.subr.mxu0 0.0
      %5320 = vmatpush1.msra.mxu0 0.0
      %5321 = vmatprep.subr.mxu0 0.0
      %5322 = vmatpush1.msra.mxu0 0.0
      %5323 = vmatprep.subr.mxu0 0.0
      %5324 = vmatpush1.msra.mxu0 0.0
      %5325 = vmatprep.subr.mxu0 0.0
      %5326 = vmatpush1.msra.mxu0 0.0
      %5327 = vmatprep.subr.mxu0 0.0
      %5328 = vmatpush1.msra.mxu0 0.0
      %5329 = vmatprep.subr.mxu0 0.0
      %5330 = vmatpush1.msra.mxu0 0.0
      %5331 = vmatprep.subr.mxu0 0.0
      %5332 = vmatpush1.msra.mxu0 0.0
      %5333 = vmatprep.subr.mxu0 0.0
      %5334 = vmatpush1.msra.mxu0 0.0
      %5335 = vmatprep.subr.mxu0 0.0
      %5336 = vmatpush1.msra.mxu0 0.0
      %5337 = vmatprep.subr.mxu0 0.0
      %5338 = vmatpush1.msra.mxu0 0.0
      %5339 = vmatprep.subr.mxu0 0.0
      %5340 = vmatpush1.msra.mxu0 0.0
      %5341 = vmatprep.mubr.f32.mxu0 0.0
      %v5342 = vand.u32 %v4887, 4294901760
      %5343 = vmatmul.mubr.f32.gmra.mrb[0].mxu0 %v5342
      %v5344 = vpop.f32.mrb[0].mxu0
      %v5345 = vadd.f32 %v5272, %v5344
      %v5346 = vpop.f32.mrb[0].mxu0
      %5347 = vdwg.mxu0
      %v5348 = vmul.f32 %v5345, 0.001953125
      %v5349 = vlaneseq
      %v5350 = vshrl.u32 %v5349, 7
      %v5351 = vsub.s32 0, %v5350
      %v5352 = vrot.slane %v5348, %v5351
      %v5353 = vsub.f32 %v4691, %v5352
      %v5354 = vsub.f32 %v4694, %v5352
      %v5355 = vsub.f32 %v4699, %v5352
      %v5356 = vsub.f32 %v4702, %v5352
      %v5357 = vsub.f32 %v4707, %v5352
      %v5358 = vsub.f32 %v4710, %v5352
      %v5359 = vsub.f32 %v4715, %v5352
      %v5360 = vsub.f32 %v4718, %v5352
      %v5361 = vsub.f32 %v4723, %v5352
      %v5362 = vsub.f32 %v4726, %v5352
      %v5363 = vsub.f32 %v4731, %v5352
      %v5364 = vsub.f32 %v4734, %v5352
      %v5365 = vsub.f32 %v4739, %v5352
      %v5366 = vsub.f32 %v4742, %v5352
      %v5367 = vsub.f32 %v4747, %v5352
      %v5368 = vsub.f32 %v4750, %v5352
      %v5369 = vsub.f32 %v4755, %v5352
      %v5370 = vsub.f32 %v4758, %v5352
      %v5371 = vsub.f32 %v4763, %v5352
      %v5372 = vsub.f32 %v4766, %v5352
      %v5373 = vsub.f32 %v4771, %v5352
      %v5374 = vsub.f32 %v4774, %v5352
      %v5375 = vsub.f32 %v4779, %v5352
      %v5376 = vsub.f32 %v4782, %v5352
      %v5377 = vsub.f32 %v4787, %v5352
      %v5378 = vsub.f32 %v4790, %v5352
      %v5379 = vsub.f32 %v4795, %v5352
      %v5380 = vsub.f32 %v4798, %v5352
      %v5381 = vsub.f32 %v4803, %v5352
      %v5382 = vsub.f32 %v4806, %v5352
      %v5383 = vsub.f32 %v4811, %v5352
      %v5384 = vsub.f32 %v4814, %v5352
      %v5385 = vmul.f32 %v5353, %v5353
      %v5386 = vmul.f32 %v5354, %v5354
      %v5387 = vmul.f32 %v5355, %v5355
      %v5388 = vmul.f32 %v5356, %v5356
      %v5389 = vmul.f32 %v5357, %v5357
      %v5390 = vmul.f32 %v5358, %v5358
      %v5391 = vmul.f32 %v5359, %v5359
      %v5392 = vmul.f32 %v5360, %v5360
      %v5393 = vmul.f32 %v5361, %v5361
      %v5394 = vmul.f32 %v5362, %v5362
      %v5395 = vmul.f32 %v5363, %v5363
      %v5396 = vmul.f32 %v5364, %v5364
      %v5397 = vmul.f32 %v5365, %v5365
      %v5398 = vmul.f32 %v5366, %v5366
      %v5399 = vmul.f32 %v5367, %v5367
      %v5400 = vmul.f32 %v5368, %v5368
      %v5401 = vmul.f32 %v5369, %v5369
      %v5402 = vmul.f32 %v5370, %v5370
      %v5403 = vmul.f32 %v5371, %v5371
      %v5404 = vmul.f32 %v5372, %v5372
      %v5405 = vmul.f32 %v5373, %v5373
      %v5406 = vmul.f32 %v5374, %v5374
      %v5407 = vmul.f32 %v5375, %v5375
      %v5408 = vmul.f32 %v5376, %v5376
      %v5409 = vmul.f32 %v5377, %v5377
      %v5410 = vmul.f32 %v5378, %v5378
      %v5411 = vmul.f32 %v5379, %v5379
      %v5412 = vmul.f32 %v5380, %v5380
      %v5413 = vmul.f32 %v5381, %v5381
      %v5414 = vmul.f32 %v5382, %v5382
      %v5415 = vmul.f32 %v5383, %v5383
      %v5416 = vmul.f32 %v5384, %v5384
      %v5417 = vsel %vm1849, %v5385, 0.0
      %v5418 = vsel %vm1849, %v5386, 0.0
      %v5419 = vadd.f32 %v5417, %v5418
      %v5420 = vsel %vm1849, %v5387, 0.0
      %v5421 = vadd.f32 %v5419, %v5420
      %v5422 = vsel %vm1849, %v5388, 0.0
      %v5423 = vadd.f32 %v5421, %v5422
      %v5424 = vsel %vm1849, %v5389, 0.0
      %v5425 = vadd.f32 %v5423, %v5424
      %v5426 = vsel %vm1849, %v5390, 0.0
      %v5427 = vadd.f32 %v5425, %v5426
      %v5428 = vsel %vm1849, %v5391, 0.0
      %v5429 = vadd.f32 %v5427, %v5428
      %v5430 = vsel %vm1849, %v5392, 0.0
      %v5431 = vadd.f32 %v5429, %v5430
      %v5432 = vsel %vm1849, %v5393, 0.0
      %v5433 = vadd.f32 %v5431, %v5432
      %v5434 = vsel %vm1849, %v5394, 0.0
      %v5435 = vadd.f32 %v5433, %v5434
      %v5436 = vsel %vm1849, %v5395, 0.0
      %v5437 = vadd.f32 %v5435, %v5436
      %v5438 = vsel %vm1849, %v5396, 0.0
      %v5439 = vadd.f32 %v5437, %v5438
      %v5440 = vsel %vm1849, %v5397, 0.0
      %v5441 = vadd.f32 %v5439, %v5440
      %v5442 = vsel %vm1849, %v5398, 0.0
      %v5443 = vadd.f32 %v5441, %v5442
      %v5444 = vsel %vm1849, %v5399, 0.0
      %v5445 = vadd.f32 %v5443, %v5444
      %v5446 = vsel %vm1849, %v5400, 0.0
      %v5447 = vadd.f32 %v5445, %v5446
      %v5448 = vsel %vm1849, %v5401, 0.0
      %v5449 = vadd.f32 %v5447, %v5448
      %v5450 = vsel %vm1849, %v5402, 0.0
      %v5451 = vadd.f32 %v5449, %v5450
      %v5452 = vsel %vm1849, %v5403, 0.0
      %v5453 = vadd.f32 %v5451, %v5452
      %v5454 = vsel %vm1849, %v5404, 0.0
      %v5455 = vadd.f32 %v5453, %v5454
      %v5456 = vsel %vm1849, %v5405, 0.0
      %v5457 = vadd.f32 %v5455, %v5456
      %v5458 = vsel %vm1849, %v5406, 0.0
      %v5459 = vadd.f32 %v5457, %v5458
      %v5460 = vsel %vm1849, %v5407, 0.0
      %v5461 = vadd.f32 %v5459, %v5460
      %v5462 = vsel %vm1849, %v5408, 0.0
      %v5463 = vadd.f32 %v5461, %v5462
      %v5464 = vsel %vm1849, %v5409, 0.0
      %v5465 = vadd.f32 %v5463, %v5464
      %v5466 = vsel %vm1849, %v5410, 0.0
      %v5467 = vadd.f32 %v5465, %v5466
      %v5468 = vsel %vm1849, %v5411, 0.0
      %v5469 = vadd.f32 %v5467, %v5468
      %v5470 = vsel %vm1849, %v5412, 0.0
      %v5471 = vadd.f32 %v5469, %v5470
      %v5472 = vsel %vm1849, %v5413, 0.0
      %v5473 = vadd.f32 %v5471, %v5472
      %v5474 = vsel %vm1849, %v5414, 0.0
      %v5475 = vadd.f32 %v5473, %v5474
      %v5476 = vsel %vm1849, %v5415, 0.0
      %v5477 = vadd.f32 %v5475, %v5476
      %v5478 = vsel %vm1849, %v5416, 0.0
      %v5479 = vadd.f32 %v5477, %v5478
      %v5480 = vrot.slane %v5479, 4
      %v5481 = vadd.f32 %v5479, %v5480
      %v5482 = vrot.slane %v5481, 2
      %v5483 = vadd.f32 %v5481, %v5482
      %v5484 = vrot.slane %v5483, 1
      %v5485 = vadd.f32 %v5483, %v5484
      %v5487 = vsel %vm1849, %v5485, 0
      %5489 = vmatprep.subr.mxu0 0.0
      %v5490 = vand.u32 %v307, 4294901760
      %5491 = vmatpush1.msra.mxu0 %v5490
      %5492 = vmatprep.subr.mxu0 0.0
      %v5493 = vand.u32 %v308, 4294901760
      %5494 = vmatpush1.msra.mxu0 %v5493
      %5495 = vmatprep.subr.mxu0 0.0
      %5496 = vmatpush1.msra.mxu0 0.0
      %5497 = vmatprep.subr.mxu0 0.0
      %5498 = vmatpush1.msra.mxu0 0.0
      %5499 = vmatprep.subr.mxu0 0.0
      %5500 = vmatpush1.msra.mxu0 0.0
      %5501 = vmatprep.subr.mxu0 0.0
      %5502 = vmatpush1.msra.mxu0 0.0
      %5503 = vmatprep.subr.mxu0 0.0
      %5504 = vmatpush1.msra.mxu0 0.0
      %5505 = vmatprep.subr.mxu0 0.0
      %5506 = vmatpush1.msra.mxu0 0.0
      %5507 = vmatprep.subr.mxu0 0.0
      %5508 = vmatpush1.msra.mxu0 0.0
      %5509 = vmatprep.subr.mxu0 0.0
      %5510 = vmatpush1.msra.mxu0 0.0
      %5511 = vmatprep.subr.mxu0 0.0
      %5512 = vmatpush1.msra.mxu0 0.0
      %5513 = vmatprep.subr.mxu0 0.0
      %5514 = vmatpush1.msra.mxu0 0.0
      %5515 = vmatprep.subr.mxu0 0.0
      %5516 = vmatpush1.msra.mxu0 0.0
      %5517 = vmatprep.subr.mxu0 0.0
      %5518 = vmatpush1.msra.mxu0 0.0
      %5519 = vmatprep.subr.mxu0 0.0
      %5520 = vmatpush1.msra.mxu0 0.0
      %5521 = vmatprep.subr.mxu0 0.0
      %5522 = vmatpush1.msra.mxu0 0.0
      %5523 = vmatprep.subr.mxu0 0.0
      %5524 = vmatpush1.msra.mxu0 0.0
      %5525 = vmatprep.subr.mxu0 0.0
      %5526 = vmatpush1.msra.mxu0 0.0
      %5527 = vmatprep.subr.mxu0 0.0
      %5528 = vmatpush1.msra.mxu0 0.0
      %5529 = vmatprep.subr.mxu0 0.0
      %5530 = vmatpush1.msra.mxu0 0.0
      %5531 = vmatprep.subr.mxu0 0.0
      %5532 = vmatpush1.msra.mxu0 0.0
      %5533 = vmatprep.subr.mxu0 0.0
      %5534 = vmatpush1.msra.mxu0 0.0
      %5535 = vmatprep.subr.mxu0 0.0
      %5536 = vmatpush1.msra.mxu0 0.0
      %5537 = vmatprep.subr.mxu0 0.0
      %5538 = vmatpush1.msra.mxu0 0.0
      %5539 = vmatprep.subr.mxu0 0.0
      %5540 = vmatpush1.msra.mxu0 0.0
      %5541 = vmatprep.subr.mxu0 0.0
      %5542 = vmatpush1.msra.mxu0 0.0
      %5543 = vmatprep.subr.mxu0 0.0
      %5544 = vmatpush1.msra.mxu0 0.0
      %5545 = vmatprep.subr.mxu0 0.0
      %5546 = vmatpush1.msra.mxu0 0.0
      %5547 = vmatprep.subr.mxu0 0.0
      %5548 = vmatpush1.msra.mxu0 0.0
      %5549 = vmatprep.subr.mxu0 0.0
      %5550 = vmatpush1.msra.mxu0 0.0
      %5551 = vmatprep.subr.mxu0 0.0
      %5552 = vmatpush1.msra.mxu0 0.0
      %5553 = vmatprep.subr.mxu0 0.0
      %5554 = vmatpush1.msra.mxu0 0.0
      %5555 = vmatprep.mubr.f32.mxu0 0.0
      %v5556 = vand.u32 %v5487, 4294901760
      %v5557 = vsub.f32 %v5487, %v5556
      %v5558 = vand.u32 %v5557, 4294901760
      %v5559 = vsub.f32 %v5557, %v5558
      %v5560 = vand.u32 %v5559, 4294901760
      %5561 = vmatmul.mubr.f32.gmra.mrb[0].mxu0 %v5560
      %v5562 = vpop.f32.mrb[0].mxu0
      %v5563 = vadd.f32 0.0, %v5562
      %v5564 = vpop.f32.mrb[0].mxu0
      %5565 = vdwg.mxu0
      %5566 = vmatprep.subr.mxu0 0.0
      %v5567 = vand.u32 %v307, 4294901760
      %v5568 = vsub.f32 %v307, %v5567
      %v5569 = vand.u32 %v5568, 4294901760
      %v5570 = vsub.f32 %v5568, %v5569
      %v5571 = vand.u32 %v5570, 4294901760
      %5572 = vmatpush1.msra.mxu0 %v5571
      %5573 = vmatprep.subr.mxu0 0.0
      %v5574 = vand.u32 %v308, 4294901760
      %v5575 = vsub.f32 %v308, %v5574
      %v5576 = vand.u32 %v5575, 4294901760
      %v5577 = vsub.f32 %v5575, %v5576
      %v5578 = vand.u32 %v5577, 4294901760
      %5579 = vmatpush1.msra.mxu0 %v5578
      %5580 = vmatprep.subr.mxu0 0.0
      %5581 = vmatpush1.msra.mxu0 0.0
      %5582 = vmatprep.subr.mxu0 0.0
      %5583 = vmatpush1.msra.mxu0 0.0
      %5584 = vmatprep.subr.mxu0 0.0
      %5585 = vmatpush1.msra.mxu0 0.0
      %5586 = vmatprep.subr.mxu0 0.0
      %5587 = vmatpush1.msra.mxu0 0.0
      %5588 = vmatprep.subr.mxu0 0.0
      %5589 = vmatpush1.msra.mxu0 0.0
      %5590 = vmatprep.subr.mxu0 0.0
      %5591 = vmatpush1.msra.mxu0 0.0
      %5592 = vmatprep.subr.mxu0 0.0
      %5593 = vmatpush1.msra.mxu0 0.0
      %5594 = vmatprep.subr.mxu0 0.0
      %5595 = vmatpush1.msra.mxu0 0.0
      %5596 = vmatprep.subr.mxu0 0.0
      %5597 = vmatpush1.msra.mxu0 0.0
      %5598 = vmatprep.subr.mxu0 0.0
      %5599 = vmatpush1.msra.mxu0 0.0
      %5600 = vmatprep.subr.mxu0 0.0
      %5601 = vmatpush1.msra.mxu0 0.0
      %5602 = vmatprep.subr.mxu0 0.0
      %5603 = vmatpush1.msra.mxu0 0.0
      %5604 = vmatprep.subr.mxu0 0.0
      %5605 = vmatpush1.msra.mxu0 0.0
      %5606 = vmatprep.subr.mxu0 0.0
      %5607 = vmatpush1.msra.mxu0 0.0
      %5608 = vmatprep.subr.mxu0 0.0
      %5609 = vmatpush1.msra.mxu0 0.0
      %5610 = vmatprep.subr.mxu0 0.0
      %5611 = vmatpush1.msra.mxu0 0.0
      %5612 = vmatprep.subr.mxu0 0.0
      %5613 = vmatpush1.msra.mxu0 0.0
      %5614 = vmatprep.subr.mxu0 0.0
      %5615 = vmatpush1.msra.mxu0 0.0
      %5616 = vmatprep.subr.mxu0 0.0
      %5617 = vmatpush1.msra.mxu0 0.0
      %5618 = vmatprep.subr.mxu0 0.0
      %5619 = vmatpush1.msra.mxu0 0.0
      %5620 = vmatprep.subr.mxu0 0.0
      %5621 = vmatpush1.msra.mxu0 0.0
      %5622 = vmatprep.subr.mxu0 0.0
      %5623 = vmatpush1.msra.mxu0 0.0
      %5624 = vmatprep.subr.mxu0 0.0
      %5625 = vmatpush1.msra.mxu0 0.0
      %5626 = vmatprep.subr.mxu0 0.0
      %5627 = vmatpush1.msra.mxu0 0.0
      %5628 = vmatprep.subr.mxu0 0.0
      %5629 = vmatpush1.msra.mxu0 0.0
      %5630 = vmatprep.subr.mxu0 0.0
      %5631 = vmatpush1.msra.mxu0 0.0
      %5632 = vmatprep.subr.mxu0 0.0
      %5633 = vmatpush1.msra.mxu0 0.0
      %5634 = vmatprep.subr.mxu0 0.0
      %5635 = vmatpush1.msra.mxu0 0.0
      %5636 = vmatprep.subr.mxu0 0.0
      %5637 = vmatpush1.msra.mxu0 0.0
      %5638 = vmatprep.subr.mxu0 0.0
      %5639 = vmatpush1.msra.mxu0 0.0
      %5640 = vmatprep.mubr.f32.mxu0 0.0
      %v5641 = vand.u32 %v5487, 4294901760
      %5642 = vmatmul.mubr.f32.gmra.mrb[0].mxu0 %v5641
      %v5643 = vpop.f32.mrb[0].mxu0
      %v5644 = vadd.f32 %v5563, %v5643
      %v5645 = vpop.f32.mrb[0].mxu0
      %5646 = vdwg.mxu0
      %5647 = vmatprep.subr.mxu0 0.0
      %v5648 = vand.u32 %v307, 4294901760
      %v5649 = vsub.f32 %v307, %v5648
      %5650 = vmatpush1.msra.mxu0 %v5649
      %5651 = vmatprep.subr.mxu0 0.0
      %v5652 = vand.u32 %v308, 4294901760
      %v5653 = vsub.f32 %v308, %v5652
      %5654 = vmatpush1.msra.mxu0 %v5653
      %5655 = vmatprep.subr.mxu0 0.0
      %5656 = vmatpush1.msra.mxu0 0.0
      %5657 = vmatprep.subr.mxu0 0.0
      %5658 = vmatpush1.msra.mxu0 0.0
      %5659 = vmatprep.subr.mxu0 0.0
      %5660 = vmatpush1.msra.mxu0 0.0
      %5661 = vmatprep.subr.mxu0 0.0
      %5662 = vmatpush1.msra.mxu0 0.0
      %5663 = vmatprep.subr.mxu0 0.0
      %5664 = vmatpush1.msra.mxu0 0.0
      %5665 = vmatprep.subr.mxu0 0.0
      %5666 = vmatpush1.msra.mxu0 0.0
      %5667 = vmatprep.subr.mxu0 0.0
      %5668 = vmatpush1.msra.mxu0 0.0
      %5669 = vmatprep.subr.mxu0 0.0
      %5670 = vmatpush1.msra.mxu0 0.0
      %5671 = vmatprep.subr.mxu0 0.0
      %5672 = vmatpush1.msra.mxu0 0.0
      %5673 = vmatprep.subr.mxu0 0.0
      %5674 = vmatpush1.msra.mxu0 0.0
      %5675 = vmatprep.subr.mxu0 0.0
      %5676 = vmatpush1.msra.mxu0 0.0
      %5677 = vmatprep.subr.mxu0 0.0
      %5678 = vmatpush1.msra.mxu0 0.0
      %5679 = vmatprep.subr.mxu0 0.0
      %5680 = vmatpush1.msra.mxu0 0.0
      %5681 = vmatprep.subr.mxu0 0.0
      %5682 = vmatpush1.msra.mxu0 0.0
      %5683 = vmatprep.subr.mxu0 0.0
      %5684 = vmatpush1.msra.mxu0 0.0
      %5685 = vmatprep.subr.mxu0 0.0
      %5686 = vmatpush1.msra.mxu0 0.0
      %5687 = vmatprep.subr.mxu0 0.0
      %5688 = vmatpush1.msra.mxu0 0.0
      %5689 = vmatprep.subr.mxu0 0.0
      %5690 = vmatpush1.msra.mxu0 0.0
      %5691 = vmatprep.subr.mxu0 0.0
      %5692 = vmatpush1.msra.mxu0 0.0
      %5693 = vmatprep.subr.mxu0 0.0
      %5694 = vmatpush1.msra.mxu0 0.0
      %5695 = vmatprep.subr.mxu0 0.0
      %5696 = vmatpush1.msra.mxu0 0.0
      %5697 = vmatprep.subr.mxu0 0.0
      %5698 = vmatpush1.msra.mxu0 0.0
      %5699 = vmatprep.subr.mxu0 0.0
      %5700 = vmatpush1.msra.mxu0 0.0
      %5701 = vmatprep.subr.mxu0 0.0
      %5702 = vmatpush1.msra.mxu0 0.0
      %5703 = vmatprep.subr.mxu0 0.0
      %5704 = vmatpush1.msra.mxu0 0.0
      %5705 = vmatprep.subr.mxu0 0.0
      %5706 = vmatpush1.msra.mxu0 0.0
      %5707 = vmatprep.subr.mxu0 0.0
      %5708 = vmatpush1.msra.mxu0 0.0
      %5709 = vmatprep.subr.mxu0 0.0
      %5710 = vmatpush1.msra.mxu0 0.0
      %5711 = vmatprep.subr.mxu0 0.0
      %5712 = vmatpush1.msra.mxu0 0.0
      %5713 = vmatprep.subr.mxu0 0.0
      %5714 = vmatpush1.msra.mxu0 0.0
      %5715 = vmatprep.mubr.f32.mxu0 0.0
      %v5716 = vand.u32 %v5487, 4294901760
      %v5717 = vsub.f32 %v5487, %v5716
      %5718 = vmatmul.mubr.f32.gmra.mrb[0].mxu0 %v5717
      %v5719 = vpop.f32.mrb[0].mxu0
      %v5720 = vadd.f32 %v5644, %v5719
      %v5721 = vpop.f32.mrb[0].mxu0
      %5722 = vdwg.mxu0
      %5723 = vmatprep.subr.mxu0 0.0
      %v5724 = vand.u32 %v307, 4294901760
      %5725 = vmatpush1.msra.mxu0 %v5724
      %5726 = vmatprep.subr.mxu0 0.0
      %v5727 = vand.u32 %v308, 4294901760
      %5728 = vmatpush1.msra.mxu0 %v5727
      %5729 = vmatprep.subr.mxu0 0.0
      %5730 = vmatpush1.msra.mxu0 0.0
      %5731 = vmatprep.subr.mxu0 0.0
      %5732 = vmatpush1.msra.mxu0 0.0
      %5733 = vmatprep.subr.mxu0 0.0
      %5734 = vmatpush1.msra.mxu0 0.0
      %5735 = vmatprep.subr.mxu0 0.0
      %5736 = vmatpush1.msra.mxu0 0.0
      %5737 = vmatprep.subr.mxu0 0.0
      %5738 = vmatpush1.msra.mxu0 0.0
      %5739 = vmatprep.subr.mxu0 0.0
      %5740 = vmatpush1.msra.mxu0 0.0
      %5741 = vmatprep.subr.mxu0 0.0
      %5742 = vmatpush1.msra.mxu0 0.0
      %5743 = vmatprep.subr.mxu0 0.0
      %5744 = vmatpush1.msra.mxu0 0.0
      %5745 = vmatprep.subr.mxu0 0.0
      %5746 = vmatpush1.msra.mxu0 0.0
      %5747 = vmatprep.subr.mxu0 0.0
      %5748 = vmatpush1.msra.mxu0 0.0
      %5749 = vmatprep.subr.mxu0 0.0
      %5750 = vmatpush1.msra.mxu0 0.0
      %5751 = vmatprep.subr.mxu0 0.0
      %5752 = vmatpush1.msra.mxu0 0.0
      %5753 = vmatprep.subr.mxu0 0.0
      %5754 = vmatpush1.msra.mxu0 0.0
      %5755 = vmatprep.subr.mxu0 0.0
      %5756 = vmatpush1.msra.mxu0 0.0
      %5757 = vmatprep.subr.mxu0 0.0
      %5758 = vmatpush1.msra.mxu0 0.0
      %5759 = vmatprep.subr.mxu0 0.0
      %5760 = vmatpush1.msra.mxu0 0.0
      %5761 = vmatprep.subr.mxu0 0.0
      %5762 = vmatpush1.msra.mxu0 0.0
      %5763 = vmatprep.subr.mxu0 0.0
      %5764 = vmatpush1.msra.mxu0 0.0
      %5765 = vmatprep.subr.mxu0 0.0
      %5766 = vmatpush1.msra.mxu0 0.0
      %5767 = vmatprep.subr.mxu0 0.0
      %5768 = vmatpush1.msra.mxu0 0.0
      %5769 = vmatprep.subr.mxu0 0.0
      %5770 = vmatpush1.msra.mxu0 0.0
      %5771 = vmatprep.subr.mxu0 0.0
      %5772 = vmatpush1.msra.mxu0 0.0
      %5773 = vmatprep.subr.mxu0 0.0
      %5774 = vmatpush1.msra.mxu0 0.0
      %5775 = vmatprep.subr.mxu0 0.0
      %5776 = vmatpush1.msra.mxu0 0.0
      %5777 = vmatprep.subr.mxu0 0.0
      %5778 = vmatpush1.msra.mxu0 0.0
      %5779 = vmatprep.subr.mxu0 0.0
      %5780 = vmatpush1.msra.mxu0 0.0
      %5781 = vmatprep.subr.mxu0 0.0
      %5782 = vmatpush1.msra.mxu0 0.0
      %5783 = vmatprep.subr.mxu0 0.0
      %5784 = vmatpush1.msra.mxu0 0.0
      %5785 = vmatprep.subr.mxu0 0.0
      %5786 = vmatpush1.msra.mxu0 0.0
      %5787 = vmatprep.subr.mxu0 0.0
      %5788 = vmatpush1.msra.mxu0 0.0
      %5789 = vmatprep.mubr.f32.mxu0 0.0
      %v5790 = vand.u32 %v5487, 4294901760
      %v5791 = vsub.f32 %v5487, %v5790
      %v5792 = vand.u32 %v5791, 4294901760
      %5793 = vmatmul.mubr.f32.gmra.mrb[0].mxu0 %v5792
      %v5794 = vpop.f32.mrb[0].mxu0
      %v5795 = vadd.f32 %v5720, %v5794
      %v5796 = vpop.f32.mrb[0].mxu0
      %5797 = vdwg.mxu0
      %5798 = vmatprep.subr.mxu0 0.0
      %v5799 = vand.u32 %v307, 4294901760
      %v5800 = vsub.f32 %v307, %v5799
      %v5801 = vand.u32 %v5800, 4294901760
      %5802 = vmatpush1.msra.mxu0 %v5801
      %5803 = vmatprep.subr.mxu0 0.0
      %v5804 = vand.u32 %v308, 4294901760
      %v5805 = vsub.f32 %v308, %v5804
      %v5806 = vand.u32 %v5805, 4294901760
      %5807 = vmatpush1.msra.mxu0 %v5806
      %5808 = vmatprep.subr.mxu0 0.0
      %5809 = vmatpush1.msra.mxu0 0.0
      %5810 = vmatprep.subr.mxu0 0.0
      %5811 = vmatpush1.msra.mxu0 0.0
      %5812 = vmatprep.subr.mxu0 0.0
      %5813 = vmatpush1.msra.mxu0 0.0
      %5814 = vmatprep.subr.mxu0 0.0
      %5815 = vmatpush1.msra.mxu0 0.0
      %5816 = vmatprep.subr.mxu0 0.0
      %5817 = vmatpush1.msra.mxu0 0.0
      %5818 = vmatprep.subr.mxu0 0.0
      %5819 = vmatpush1.msra.mxu0 0.0
      %5820 = vmatprep.subr.mxu0 0.0
      %5821 = vmatpush1.msra.mxu0 0.0
      %5822 = vmatprep.subr.mxu0 0.0
      %5823 = vmatpush1.msra.mxu0 0.0
      %5824 = vmatprep.subr.mxu0 0.0
      %5825 = vmatpush1.msra.mxu0 0.0
      %5826 = vmatprep.subr.mxu0 0.0
      %5827 = vmatpush1.msra.mxu0 0.0
      %5828 = vmatprep.subr.mxu0 0.0
      %5829 = vmatpush1.msra.mxu0 0.0
      %5830 = vmatprep.subr.mxu0 0.0
      %5831 = vmatpush1.msra.mxu0 0.0
      %5832 = vmatprep.subr.mxu0 0.0
      %5833 = vmatpush1.msra.mxu0 0.0
      %5834 = vmatprep.subr.mxu0 0.0
      %5835 = vmatpush1.msra.mxu0 0.0
      %5836 = vmatprep.subr.mxu0 0.0
      %5837 = vmatpush1.msra.mxu0 0.0
      %5838 = vmatprep.subr.mxu0 0.0
      %5839 = vmatpush1.msra.mxu0 0.0
      %5840 = vmatprep.subr.mxu0 0.0
      %5841 = vmatpush1.msra.mxu0 0.0
      %5842 = vmatprep.subr.mxu0 0.0
      %5843 = vmatpush1.msra.mxu0 0.0
      %5844 = vmatprep.subr.mxu0 0.0
      %5845 = vmatpush1.msra.mxu0 0.0
      %5846 = vmatprep.subr.mxu0 0.0
      %5847 = vmatpush1.msra.mxu0 0.0
      %5848 = vmatprep.subr.mxu0 0.0
      %5849 = vmatpush1.msra.mxu0 0.0
      %5850 = vmatprep.subr.mxu0 0.0
      %5851 = vmatpush1.msra.mxu0 0.0
      %5852 = vmatprep.subr.mxu0 0.0
      %5853 = vmatpush1.msra.mxu0 0.0
      %5854 = vmatprep.subr.mxu0 0.0
      %5855 = vmatpush1.msra.mxu0 0.0
      %5856 = vmatprep.subr.mxu0 0.0
      %5857 = vmatpush1.msra.mxu0 0.0
      %5858 = vmatprep.subr.mxu0 0.0
      %5859 = vmatpush1.msra.mxu0 0.0
      %5860 = vmatprep.subr.mxu0 0.0
      %5861 = vmatpush1.msra.mxu0 0.0
      %5862 = vmatprep.subr.mxu0 0.0
      %5863 = vmatpush1.msra.mxu0 0.0
      %5864 = vmatprep.subr.mxu0 0.0
      %5865 = vmatpush1.msra.mxu0 0.0
      %5866 = vmatprep.subr.mxu0 0.0
      %5867 = vmatpush1.msra.mxu0 0.0
      %5868 = vmatprep.mubr.f32.mxu0 0.0
      %v5869 = vand.u32 %v5487, 4294901760
      %5870 = vmatmul.mubr.f32.gmra.mrb[0].mxu0 %v5869
      %v5871 = vpop.f32.mrb[0].mxu0
      %v5872 = vadd.f32 %v5795, %v5871
      %v5873 = vpop.f32.mrb[0].mxu0
      %5874 = vdwg.mxu0
      %5875 = vmatprep.subr.mxu0 0.0
      %v5876 = vand.u32 %v307, 4294901760
      %5877 = vmatpush1.msra.mxu0 %v5876
      %5878 = vmatprep.subr.mxu0 0.0
      %v5879 = vand.u32 %v308, 4294901760
      %5880 = vmatpush1.msra.mxu0 %v5879
      %5881 = vmatprep.subr.mxu0 0.0
      %5882 = vmatpush1.msra.mxu0 0.0
      %5883 = vmatprep.subr.mxu0 0.0
      %5884 = vmatpush1.msra.mxu0 0.0
      %5885 = vmatprep.subr.mxu0 0.0
      %5886 = vmatpush1.msra.mxu0 0.0
      %5887 = vmatprep.subr.mxu0 0.0
      %5888 = vmatpush1.msra.mxu0 0.0
      %5889 = vmatprep.subr.mxu0 0.0
      %5890 = vmatpush1.msra.mxu0 0.0
      %5891 = vmatprep.subr.mxu0 0.0
      %5892 = vmatpush1.msra.mxu0 0.0
      %5893 = vmatprep.subr.mxu0 0.0
      %5894 = vmatpush1.msra.mxu0 0.0
      %5895 = vmatprep.subr.mxu0 0.0
      %5896 = vmatpush1.msra.mxu0 0.0
      %5897 = vmatprep.subr.mxu0 0.0
      %5898 = vmatpush1.msra.mxu0 0.0
      %5899 = vmatprep.subr.mxu0 0.0
      %5900 = vmatpush1.msra.mxu0 0.0
      %5901 = vmatprep.subr.mxu0 0.0
      %5902 = vmatpush1.msra.mxu0 0.0
      %5903 = vmatprep.subr.mxu0 0.0
      %5904 = vmatpush1.msra.mxu0 0.0
      %5905 = vmatprep.subr.mxu0 0.0
      %5906 = vmatpush1.msra.mxu0 0.0
      %5907 = vmatprep.subr.mxu0 0.0
      %5908 = vmatpush1.msra.mxu0 0.0
      %5909 = vmatprep.subr.mxu0 0.0
      %5910 = vmatpush1.msra.mxu0 0.0
      %5911 = vmatprep.subr.mxu0 0.0
      %5912 = vmatpush1.msra.mxu0 0.0
      %5913 = vmatprep.subr.mxu0 0.0
      %5914 = vmatpush1.msra.mxu0 0.0
      %5915 = vmatprep.subr.mxu0 0.0
      %5916 = vmatpush1.msra.mxu0 0.0
      %5917 = vmatprep.subr.mxu0 0.0
      %5918 = vmatpush1.msra.mxu0 0.0
      %5919 = vmatprep.subr.mxu0 0.0
      %5920 = vmatpush1.msra.mxu0 0.0
      %5921 = vmatprep.subr.mxu0 0.0
      %5922 = vmatpush1.msra.mxu0 0.0
      %5923 = vmatprep.subr.mxu0 0.0
      %5924 = vmatpush1.msra.mxu0 0.0
      %5925 = vmatprep.subr.mxu0 0.0
      %5926 = vmatpush1.msra.mxu0 0.0
      %5927 = vmatprep.subr.mxu0 0.0
      %5928 = vmatpush1.msra.mxu0 0.0
      %5929 = vmatprep.subr.mxu0 0.0
      %5930 = vmatpush1.msra.mxu0 0.0
      %5931 = vmatprep.subr.mxu0 0.0
      %5932 = vmatpush1.msra.mxu0 0.0
      %5933 = vmatprep.subr.mxu0 0.0
      %5934 = vmatpush1.msra.mxu0 0.0
      %5935 = vmatprep.subr.mxu0 0.0
      %5936 = vmatpush1.msra.mxu0 0.0
      %5937 = vmatprep.subr.mxu0 0.0
      %5938 = vmatpush1.msra.mxu0 0.0
      %5939 = vmatprep.subr.mxu0 0.0
      %5940 = vmatpush1.msra.mxu0 0.0
      %5941 = vmatprep.mubr.f32.mxu0 0.0
      %v5942 = vand.u32 %v5487, 4294901760
      %5943 = vmatmul.mubr.f32.gmra.mrb[0].mxu0 %v5942
      %v5944 = vpop.f32.mrb[0].mxu0
      %v5945 = vadd.f32 %v5872, %v5944
      %v5946 = vpop.f32.mrb[0].mxu0
      %5947 = vdwg.mxu0
      %v5948 = vmul.f32 %v5945, 0.001953125
      %v5949 = vadd.f32 %v5948, 1e-05
      %v5950 = vrsqrt.pop %v5949
      %v5951 = vlaneseq
      %v5952 = vshrl.u32 %v5951, 7
      %v5953 = vsub.s32 0, %v5952
      %v5954 = vrot.slane %v5950, %v5953
      %v5955 = vmul.f32 %v5353, %v5954
      %v5956 = vmul.f32 %v5354, %v5954
      %v5957 = vmul.f32 %v5355, %v5954
      %v5958 = vmul.f32 %v5356, %v5954
      %v5959 = vmul.f32 %v5357, %v5954
      %v5960 = vmul.f32 %v5358, %v5954
      %v5961 = vmul.f32 %v5359, %v5954
      %v5962 = vmul.f32 %v5360, %v5954
      %v5963 = vmul.f32 %v5361, %v5954
      %v5964 = vmul.f32 %v5362, %v5954
      %v5965 = vmul.f32 %v5363, %v5954
      %v5966 = vmul.f32 %v5364, %v5954
      %v5967 = vmul.f32 %v5365, %v5954
      %v5968 = vmul.f32 %v5366, %v5954
      %v5969 = vmul.f32 %v5367, %v5954
      %v5970 = vmul.f32 %v5368, %v5954
      %v5971 = vmul.f32 %v5369, %v5954
      %v5972 = vmul.f32 %v5370, %v5954
      %v5973 = vmul.f32 %v5371, %v5954
      %v5974 = vmul.f32 %v5372, %v5954
      %v5975 = vmul.f32 %v5373, %v5954
      %v5976 = vmul.f32 %v5374, %v5954
      %v5977 = vmul.f32 %v5375, %v5954
      %v5978 = vmul.f32 %v5376, %v5954
      %v5979 = vmul.f32 %v5377, %v5954
      %v5980 = vmul.f32 %v5378, %v5954
      %v5981 = vmul.f32 %v5379, %v5954
      %v5982 = vmul.f32 %v5380, %v5954
      %v5983 = vmul.f32 %v5381, %v5954
      %v5984 = vmul.f32 %v5382, %v5954
      %v5985 = vmul.f32 %v5383, %v5954
      %v5986 = vmul.f32 %v5384, %v5954
      %v5987 = vlaneseq
      %v5988 = vshrl.u32 %v5987, 7
      %v5989 = vsub.s32 4, %v5988
      %v5990 = vrot.slane %v309, %v5989
      %v5991 = vmul.f32 %v5955, %v5990
      %v5992 = vmul.f32 %v5956, %v5990
      %v5993 = vmul.f32 %v5957, %v5990
      %v5994 = vmul.f32 %v5958, %v5990
      %v5995 = vmul.f32 %v5959, %v5990
      %v5996 = vmul.f32 %v5960, %v5990
      %v5997 = vmul.f32 %v5961, %v5990
      %v5998 = vmul.f32 %v5962, %v5990
      %v5999 = vmul.f32 %v5963, %v5990
      %v6000 = vmul.f32 %v5964, %v5990
      %v6001 = vmul.f32 %v5965, %v5990
      %v6002 = vmul.f32 %v5966, %v5990
      %v6003 = vmul.f32 %v5967, %v5990
      %v6004 = vmul.f32 %v5968, %v5990
      %v6005 = vmul.f32 %v5969, %v5990
      %v6006 = vmul.f32 %v5970, %v5990
      %v6007 = vmul.f32 %v5971, %v5990
      %v6008 = vmul.f32 %v5972, %v5990
      %v6009 = vmul.f32 %v5973, %v5990
      %v6010 = vmul.f32 %v5974, %v5990
      %v6011 = vmul.f32 %v5975, %v5990
      %v6012 = vmul.f32 %v5976, %v5990
      %v6013 = vmul.f32 %v5977, %v5990
      %v6014 = vmul.f32 %v5978, %v5990
      %v6015 = vmul.f32 %v5979, %v5990
      %v6016 = vmul.f32 %v5980, %v5990
      %v6017 = vmul.f32 %v5981, %v5990
      %v6018 = vmul.f32 %v5982, %v5990
      %v6019 = vmul.f32 %v5983, %v5990
      %v6020 = vmul.f32 %v5984, %v5990
      %v6021 = vmul.f32 %v5985, %v5990
      %v6022 = vmul.f32 %v5986, %v5990
      %v6023 = vlaneseq
      %v6024 = vshrl.u32 %v6023, 7
      %v6025 = vsub.s32 5, %v6024
      %v6026 = vrot.slane %v309, %v6025
      %v6027 = vadd.f32 %v5991, %v6026
      %v6028 = vadd.f32 %v5992, %v6026
      %v6029 = vadd.f32 %v5993, %v6026
      %v6030 = vadd.f32 %v5994, %v6026
      %v6031 = vadd.f32 %v5995, %v6026
      %v6032 = vadd.f32 %v5996, %v6026
      %v6033 = vadd.f32 %v5997, %v6026
      %v6034 = vadd.f32 %v5998, %v6026
      %v6035 = vadd.f32 %v5999, %v6026
      %v6036 = vadd.f32 %v6000, %v6026
      %v6037 = vadd.f32 %v6001, %v6026
      %v6038 = vadd.f32 %v6002, %v6026
      %v6039 = vadd.f32 %v6003, %v6026
      %v6040 = vadd.f32 %v6004, %v6026
      %v6041 = vadd.f32 %v6005, %v6026
      %v6042 = vadd.f32 %v6006, %v6026
      %v6043 = vadd.f32 %v6007, %v6026
      %v6044 = vadd.f32 %v6008, %v6026
      %v6045 = vadd.f32 %v6009, %v6026
      %v6046 = vadd.f32 %v6010, %v6026
      %v6047 = vadd.f32 %v6011, %v6026
      %v6048 = vadd.f32 %v6012, %v6026
      %v6049 = vadd.f32 %v6013, %v6026
      %v6050 = vadd.f32 %v6014, %v6026
      %v6051 = vadd.f32 %v6015, %v6026
      %v6052 = vadd.f32 %v6016, %v6026
      %v6053 = vadd.f32 %v6017, %v6026
      %v6054 = vadd.f32 %v6018, %v6026
      %v6055 = vadd.f32 %v6019, %v6026
      %v6056 = vadd.f32 %v6020, %v6026
      %v6057 = vadd.f32 %v6021, %v6026
      %v6058 = vadd.f32 %v6022, %v6026
      %v6059 = vxor.u32 %v6027, 2147483648
      %v6060 = vxor.u32 %v6028, 2147483648
      %v6061 = vxor.u32 %v6029, 2147483648
      %v6062 = vxor.u32 %v6030, 2147483648
      %v6063 = vxor.u32 %v6031, 2147483648
      %v6064 = vxor.u32 %v6032, 2147483648
      %v6065 = vxor.u32 %v6033, 2147483648
      %v6066 = vxor.u32 %v6034, 2147483648
      %v6067 = vxor.u32 %v6035, 2147483648
      %v6068 = vxor.u32 %v6036, 2147483648
      %v6069 = vxor.u32 %v6037, 2147483648
      %v6070 = vxor.u32 %v6038, 2147483648
      %v6071 = vxor.u32 %v6039, 2147483648
      %v6072 = vxor.u32 %v6040, 2147483648
      %v6073 = vxor.u32 %v6041, 2147483648
      %v6074 = vxor.u32 %v6042, 2147483648
      %v6075 = vxor.u32 %v6043, 2147483648
      %v6076 = vxor.u32 %v6044, 2147483648
      %v6077 = vxor.u32 %v6045, 2147483648
      %v6078 = vxor.u32 %v6046, 2147483648
      %v6079 = vxor.u32 %v6047, 2147483648
      %v6080 = vxor.u32 %v6048, 2147483648
      %v6081 = vxor.u32 %v6049, 2147483648
      %v6082 = vxor.u32 %v6050, 2147483648
      %v6083 = vxor.u32 %v6051, 2147483648
      %v6084 = vxor.u32 %v6052, 2147483648
      %v6085 = vxor.u32 %v6053, 2147483648
      %v6086 = vxor.u32 %v6054, 2147483648
      %v6087 = vxor.u32 %v6055, 2147483648
      %v6088 = vxor.u32 %v6056, 2147483648
      %v6089 = vxor.u32 %v6057, 2147483648
      %v6090 = vxor.u32 %v6058, 2147483648
      %v6091 = vmul.f32 %v6059, 1.442695
      %v6092 = vpow.pop %v6091
      %v6093 = vmul.f32 %v6060, 1.442695
      %v6094 = vpow.pop %v6093
      %v6095 = vmul.f32 %v6061, 1.442695
      %v6096 = vpow.pop %v6095
      %v6097 = vmul.f32 %v6062, 1.442695
      %v6098 = vpow.pop %v6097
      %v6099 = vmul.f32 %v6063, 1.442695
      %v6100 = vpow.pop %v6099
      %v6101 = vmul.f32 %v6064, 1.442695
      %v6102 = vpow.pop %v6101
      %v6103 = vmul.f32 %v6065, 1.442695
      %v6104 = vpow.pop %v6103
      %v6105 = vmul.f32 %v6066, 1.442695
      %v6106 = vpow.pop %v6105
      %v6107 = vmul.f32 %v6067, 1.442695
      %v6108 = vpow.pop %v6107
      %v6109 = vmul.f32 %v6068, 1.442695
      %v6110 = vpow.pop %v6109
      %v6111 = vmul.f32 %v6069, 1.442695
      %v6112 = vpow.pop %v6111
      %v6113 = vmul.f32 %v6070, 1.442695
      %v6114 = vpow.pop %v6113
      %v6115 = vmul.f32 %v6071, 1.442695
      %v6116 = vpow.pop %v6115
      %v6117 = vmul.f32 %v6072, 1.442695
      %v6118 = vpow.pop %v6117
      %v6119 = vmul.f32 %v6073, 1.442695
      %v6120 = vpow.pop %v6119
      %v6121 = vmul.f32 %v6074, 1.442695
      %v6122 = vpow.pop %v6121
      %v6123 = vmul.f32 %v6075, 1.442695
      %v6124 = vpow.pop %v6123
      %v6125 = vmul.f32 %v6076, 1.442695
      %v6126 = vpow.pop %v6125
      %v6127 = vmul.f32 %v6077, 1.442695
      %v6128 = vpow.pop %v6127
      %v6129 = vmul.f32 %v6078, 1.442695
      %v6130 = vpow.pop %v6129
      %v6131 = vmul.f32 %v6079, 1.442695
      %v6132 = vpow.pop %v6131
      %v6133 = vmul.f32 %v6080, 1.442695
      %v6134 = vpow.pop %v6133
      %v6135 = vmul.f32 %v6081, 1.442695
      %v6136 = vpow.pop %v6135
      %v6137 = vmul.f32 %v6082, 1.442695
      %v6138 = vpow.pop %v6137
      %v6139 = vmul.f32 %v6083, 1.442695
      %v6140 = vpow.pop %v6139
      %v6141 = vmul.f32 %v6084, 1.442695
      %v6142 = vpow.pop %v6141
      %v6143 = vmul.f32 %v6085, 1.442695
      %v6144 = vpow.pop %v6143
      %v6145 = vmul.f32 %v6086, 1.442695
      %v6146 = vpow.pop %v6145
      %v6147 = vmul.f32 %v6087, 1.442695
      %v6148 = vpow.pop %v6147
      %v6149 = vmul.f32 %v6088, 1.442695
      %v6150 = vpow.pop %v6149
      %v6151 = vmul.f32 %v6089, 1.442695
      %v6152 = vpow.pop %v6151
      %v6153 = vmul.f32 %v6090, 1.442695
      %v6154 = vpow.pop %v6153
      %v6155 = vadd.f32 %v6092, 1.0
      %v6156 = vadd.f32 %v6094, 1.0
      %v6157 = vadd.f32 %v6096, 1.0
      %v6158 = vadd.f32 %v6098, 1.0
      %v6159 = vadd.f32 %v6100, 1.0
      %v6160 = vadd.f32 %v6102, 1.0
      %v6161 = vadd.f32 %v6104, 1.0
      %v6162 = vadd.f32 %v6106, 1.0
      %v6163 = vadd.f32 %v6108, 1.0
      %v6164 = vadd.f32 %v6110, 1.0
      %v6165 = vadd.f32 %v6112, 1.0
      %v6166 = vadd.f32 %v6114, 1.0
      %v6167 = vadd.f32 %v6116, 1.0
      %v6168 = vadd.f32 %v6118, 1.0
      %v6169 = vadd.f32 %v6120, 1.0
      %v6170 = vadd.f32 %v6122, 1.0
      %v6171 = vadd.f32 %v6124, 1.0
      %v6172 = vadd.f32 %v6126, 1.0
      %v6173 = vadd.f32 %v6128, 1.0
      %v6174 = vadd.f32 %v6130, 1.0
      %v6175 = vadd.f32 %v6132, 1.0
      %v6176 = vadd.f32 %v6134, 1.0
      %v6177 = vadd.f32 %v6136, 1.0
      %v6178 = vadd.f32 %v6138, 1.0
      %v6179 = vadd.f32 %v6140, 1.0
      %v6180 = vadd.f32 %v6142, 1.0
      %v6181 = vadd.f32 %v6144, 1.0
      %v6182 = vadd.f32 %v6146, 1.0
      %v6183 = vadd.f32 %v6148, 1.0
      %v6184 = vadd.f32 %v6150, 1.0
      %v6185 = vadd.f32 %v6152, 1.0
      %v6186 = vadd.f32 %v6154, 1.0
      %v6187 = vrcp.pop %v6155
      %v6188 = vmul.f32 1.0, %v6187
      %v6189 = vrcp.pop %v6156
      %v6190 = vmul.f32 1.0, %v6189
      %v6191 = vrcp.pop %v6157
      %v6192 = vmul.f32 1.0, %v6191
      %v6193 = vrcp.pop %v6158
      %v6194 = vmul.f32 1.0, %v6193
      %v6195 = vrcp.pop %v6159
      %v6196 = vmul.f32 1.0, %v6195
      %v6197 = vrcp.pop %v6160
      %v6198 = vmul.f32 1.0, %v6197
      %v6199 = vrcp.pop %v6161
      %v6200 = vmul.f32 1.0, %v6199
      %v6201 = vrcp.pop %v6162
      %v6202 = vmul.f32 1.0, %v6201
      %v6203 = vrcp.pop %v6163
      %v6204 = vmul.f32 1.0, %v6203
      %v6205 = vrcp.pop %v6164
      %v6206 = vmul.f32 1.0, %v6205
      %v6207 = vrcp.pop %v6165
      %v6208 = vmul.f32 1.0, %v6207
      %v6209 = vrcp.pop %v6166
      %v6210 = vmul.f32 1.0, %v6209
      %v6211 = vrcp.pop %v6167
      %v6212 = vmul.f32 1.0, %v6211
      %v6213 = vrcp.pop %v6168
      %v6214 = vmul.f32 1.0, %v6213
      %v6215 = vrcp.pop %v6169
      %v6216 = vmul.f32 1.0, %v6215
      %v6217 = vrcp.pop %v6170
      %v6218 = vmul.f32 1.0, %v6217
      %v6219 = vrcp.pop %v6171
      %v6220 = vmul.f32 1.0, %v6219
      %v6221 = vrcp.pop %v6172
      %v6222 = vmul.f32 1.0, %v6221
      %v6223 = vrcp.pop %v6173
      %v6224 = vmul.f32 1.0, %v6223
      %v6225 = vrcp.pop %v6174
      %v6226 = vmul.f32 1.0, %v6225
      %v6227 = vrcp.pop %v6175
      %v6228 = vmul.f32 1.0, %v6227
      %v6229 = vrcp.pop %v6176
      %v6230 = vmul.f32 1.0, %v6229
      %v6231 = vrcp.pop %v6177
      %v6232 = vmul.f32 1.0, %v6231
      %v6233 = vrcp.pop %v6178
      %v6234 = vmul.f32 1.0, %v6233
      %v6235 = vrcp.pop %v6179
      %v6236 = vmul.f32 1.0, %v6235
      %v6237 = vrcp.pop %v6180
      %v6238 = vmul.f32 1.0, %v6237
      %v6239 = vrcp.pop %v6181
      %v6240 = vmul.f32 1.0, %v6239
      %v6241 = vrcp.pop %v6182
      %v6242 = vmul.f32 1.0, %v6241
      %v6243 = vrcp.pop %v6183
      %v6244 = vmul.f32 1.0, %v6243
      %v6245 = vrcp.pop %v6184
      %v6246 = vmul.f32 1.0, %v6245
      %v6247 = vrcp.pop %v6185
      %v6248 = vmul.f32 1.0, %v6247
      %v6249 = vrcp.pop %v6186
      %v6250 = vmul.f32 1.0, %v6249
      %v6251 = vmul.f32 %v6027, %v6188
      %v6252 = vmul.f32 %v6028, %v6190
      %v6253 = vmul.f32 %v6029, %v6192
      %v6254 = vmul.f32 %v6030, %v6194
      %v6255 = vmul.f32 %v6031, %v6196
      %v6256 = vmul.f32 %v6032, %v6198
      %v6257 = vmul.f32 %v6033, %v6200
      %v6258 = vmul.f32 %v6034, %v6202
      %v6259 = vmul.f32 %v6035, %v6204
      %v6260 = vmul.f32 %v6036, %v6206
      %v6261 = vmul.f32 %v6037, %v6208
      %v6262 = vmul.f32 %v6038, %v6210
      %v6263 = vmul.f32 %v6039, %v6212
      %v6264 = vmul.f32 %v6040, %v6214
      %v6265 = vmul.f32 %v6041, %v6216
      %v6266 = vmul.f32 %v6042, %v6218
      %v6267 = vmul.f32 %v6043, %v6220
      %v6268 = vmul.f32 %v6044, %v6222
      %v6269 = vmul.f32 %v6045, %v6224
      %v6270 = vmul.f32 %v6046, %v6226
      %v6271 = vmul.f32 %v6047, %v6228
      %v6272 = vmul.f32 %v6048, %v6230
      %v6273 = vmul.f32 %v6049, %v6232
      %v6274 = vmul.f32 %v6050, %v6234
      %v6275 = vmul.f32 %v6051, %v6236
      %v6276 = vmul.f32 %v6052, %v6238
      %v6277 = vmul.f32 %v6053, %v6240
      %v6278 = vmul.f32 %v6054, %v6242
      %v6279 = vmul.f32 %v6055, %v6244
      %v6280 = vmul.f32 %v6056, %v6246
      %v6281 = vmul.f32 %v6057, %v6248
      %v6282 = vmul.f32 %v6058, %v6250
      %v6283 = vld [vmem:[#allocation4] sm:$0xff]
      %v6284 = vld [vmem:[#allocation4 + $0x8] sm:$0xff]
      %v6285 = vld [vmem:[#allocation4 + $0x10] sm:$0xff]
      %v6286 = vld [vmem:[#allocation4 + $0x18] sm:$0xff]
      %v6287 = vld [vmem:[#allocation4 + $0x20] sm:$0xff]
      %v6288 = vld [vmem:[#allocation4 + $0x28] sm:$0xff]
      %v6289 = vld [vmem:[#allocation4 + $0x30] sm:$0xff]
      %v6290 = vld [vmem:[#allocation4 + $0x38] sm:$0xff]
      %v6291 = vld [vmem:[#allocation4 + $0x40] sm:$0xff]
      %v6292 = vld [vmem:[#allocation4 + $0x48] sm:$0xff]
      %v6293 = vld [vmem:[#allocation4 + $0x50] sm:$0xff]
      %v6294 = vld [vmem:[#allocation4 + $0x58] sm:$0xff]
      %v6295 = vld [vmem:[#allocation4 + $0x60] sm:$0xff]
      %v6296 = vld [vmem:[#allocation4 + $0x68] sm:$0xff]
      %v6297 = vld [vmem:[#allocation4 + $0x70] sm:$0xff]
      %v6298 = vld [vmem:[#allocation4 + $0x78] sm:$0xff]
      %v6299 = vld [vmem:[%s5] sm:$0x3]
      %6316 = vrot.lane.b32.xlu0 %v6283, 112
      %v6317 = vpop.permute.xlu0 %6316
      %6318 = vrot.lane.b32.xlu0 %v6284, 112
      %v6319 = vpop.permute.xlu0 %6318
      %6320 = vrot.lane.b32.xlu0 %v6285, 112
      %v6321 = vpop.permute.xlu0 %6320
      %6322 = vrot.lane.b32.xlu0 %v6286, 112
      %v6323 = vpop.permute.xlu0 %6322
      %6324 = vrot.lane.b32.xlu0 %v6287, 112
      %v6325 = vpop.permute.xlu0 %6324
      %6326 = vrot.lane.b32.xlu0 %v6288, 112
      %v6327 = vpop.permute.xlu0 %6326
      %6328 = vrot.lane.b32.xlu0 %v6289, 112
      %v6329 = vpop.permute.xlu0 %6328
      %6330 = vrot.lane.b32.xlu0 %v6290, 112
      %v6331 = vpop.permute.xlu0 %6330
      %6332 = vrot.lane.b32.xlu0 %v6291, 112
      %v6333 = vpop.permute.xlu0 %6332
      %6334 = vrot.lane.b32.xlu0 %v6292, 112
      %v6335 = vpop.permute.xlu0 %6334
      %6336 = vrot.lane.b32.xlu0 %v6293, 112
      %v6337 = vpop.permute.xlu0 %6336
      %6338 = vrot.lane.b32.xlu0 %v6294, 112
      %v6339 = vpop.permute.xlu0 %6338
      %6340 = vrot.lane.b32.xlu0 %v6295, 112
      %v6341 = vpop.permute.xlu0 %6340
      %6342 = vrot.lane.b32.xlu0 %v6296, 112
      %v6343 = vpop.permute.xlu0 %6342
      %6344 = vrot.lane.b32.xlu0 %v6297, 112
      %v6345 = vpop.permute.xlu0 %6344
      %6346 = vrot.lane.b32.xlu0 %v6298, 112
      %v6347 = vpop.permute.xlu0 %6346
      %v6349 = vsel %vm423, %v6317, 0
      %v6352 = vsel %vm423, %v6319, 0
      %v6355 = vsel %vm423, %v6321, 0
      %v6358 = vsel %vm423, %v6323, 0
      %v6361 = vsel %vm423, %v6325, 0
      %v6364 = vsel %vm423, %v6327, 0
      %v6367 = vsel %vm423, %v6329, 0
      %v6370 = vsel %vm423, %v6331, 0
      %v6373 = vsel %vm423, %v6333, 0
      %v6376 = vsel %vm423, %v6335, 0
      %v6379 = vsel %vm423, %v6337, 0
      %v6382 = vsel %vm423, %v6339, 0
      %v6385 = vsel %vm423, %v6341, 0
      %v6388 = vsel %vm423, %v6343, 0
      %v6391 = vsel %vm423, %v6345, 0
      %v6394 = vsel %vm423, %v6347, 0
      %v6397 = vsel %vm1684, %v6299, 0
      %6399 = vmatprep.subr.bf16.mxu0 0
      %6400 = vmatpush1.bf16.msra.mxu0 %v6397
      %6401 = vmatprep.subr.bf16.mxu0 0
      %6402 = vmatpush1.bf16.msra.mxu0 0
      %6403 = vmatprep.subr.bf16.mxu0 0
      %6404 = vmatpush1.bf16.msra.mxu0 0
      %6405 = vmatprep.subr.bf16.mxu0 0
      %6406 = vmatpush1.bf16.msra.mxu0 0
      %6407 = vmatprep.subr.bf16.mxu0 0
      %6408 = vmatpush1.bf16.msra.mxu0 0
      %6409 = vmatprep.subr.bf16.mxu0 0
      %6410 = vmatpush1.bf16.msra.mxu0 0
      %6411 = vmatprep.subr.bf16.mxu0 0
      %6412 = vmatpush1.bf16.msra.mxu0 0
      %6413 = vmatprep.subr.bf16.mxu0 0
      %6414 = vmatpush1.bf16.msra.mxu0 0
      %6415 = vmatprep.subr.bf16.mxu0 0
      %6416 = vmatpush1.bf16.msra.mxu0 0
      %6417 = vmatprep.subr.bf16.mxu0 0
      %6418 = vmatpush1.bf16.msra.mxu0 0
      %6419 = vmatprep.subr.bf16.mxu0 0
      %6420 = vmatpush1.bf16.msra.mxu0 0
      %6421 = vmatprep.subr.bf16.mxu0 0
      %6422 = vmatpush1.bf16.msra.mxu0 0
      %6423 = vmatprep.subr.bf16.mxu0 0
      %6424 = vmatpush1.bf16.msra.mxu0 0
      %6425 = vmatprep.subr.bf16.mxu0 0
      %6426 = vmatpush1.bf16.msra.mxu0 0
      %6427 = vmatprep.subr.bf16.mxu0 0
      %6428 = vmatpush1.bf16.msra.mxu0 0
      %6429 = vmatprep.subr.bf16.mxu0 0
      %6430 = vmatpush1.bf16.msra.mxu0 0
      %6431 = vmatprep.mubr.bf16.mxu0 0
      %6432 = vmatmul.mubr.bf16.gmra.mrb[0].mxu0 %v6349
      %v6433 = vpop.f32.mrb[0].mxu0
      %v6434 = vadd.f32 0.0, %v6433
      %v6435 = vpop.f32.mrb[0].mxu0
      %v6436 = vpop.f32.mrb[0].mxu0
      %v6437 = vadd.f32 0.0, %v6436
      %v6438 = vpop.f32.mrb[0].mxu0
      %6439 = vmatprep.mubr.bf16.mxu0 0
      %6440 = vmatmul.mubr.bf16.gmra.mrb[0].mxu0 %v6352
      %v6441 = vpop.f32.mrb[0].mxu0
      %v6442 = vadd.f32 0.0, %v6441
      %v6443 = vpop.f32.mrb[0].mxu0
      %v6444 = vpop.f32.mrb[0].mxu0
      %v6445 = vadd.f32 0.0, %v6444
      %v6446 = vpop.f32.mrb[0].mxu0
      %6447 = vmatprep.mubr.bf16.mxu0 0
      %6448 = vmatmul.mubr.bf16.gmra.mrb[0].mxu0 %v6355
      %v6449 = vpop.f32.mrb[0].mxu0
      %v6450 = vadd.f32 0.0, %v6449
      %v6451 = vpop.f32.mrb[0].mxu0
      %v6452 = vpop.f32.mrb[0].mxu0
      %v6453 = vadd.f32 0.0, %v6452
      %v6454 = vpop.f32.mrb[0].mxu0
      %6455 = vmatprep.mubr.bf16.mxu0 0
      %6456 = vmatmul.mubr.bf16.gmra.mrb[0].mxu0 %v6358
      %v6457 = vpop.f32.mrb[0].mxu0
      %v6458 = vadd.f32 0.0, %v6457
      %v6459 = vpop.f32.mrb[0].mxu0
      %v6460 = vpop.f32.mrb[0].mxu0
      %v6461 = vadd.f32 0.0, %v6460
      %v6462 = vpop.f32.mrb[0].mxu0
      %6463 = vmatprep.mubr.bf16.mxu0 0
      %6464 = vmatmul.mubr.bf16.gmra.mrb[0].mxu0 %v6361
      %v6465 = vpop.f32.mrb[0].mxu0
      %v6466 = vadd.f32 0.0, %v6465
      %v6467 = vpop.f32.mrb[0].mxu0
      %v6468 = vpop.f32.mrb[0].mxu0
      %v6469 = vadd.f32 0.0, %v6468
      %v6470 = vpop.f32.mrb[0].mxu0
      %6471 = vmatprep.mubr.bf16.mxu0 0
      %6472 = vmatmul.mubr.bf16.gmra.mrb[0].mxu0 %v6364
      %v6473 = vpop.f32.mrb[0].mxu0
      %v6474 = vadd.f32 0.0, %v6473
      %v6475 = vpop.f32.mrb[0].mxu0
      %v6476 = vpop.f32.mrb[0].mxu0
      %v6477 = vadd.f32 0.0, %v6476
      %v6478 = vpop.f32.mrb[0].mxu0
      %6479 = vmatprep.mubr.bf16.mxu0 0
      %6480 = vmatmul.mubr.bf16.gmra.mrb[0].mxu0 %v6367
      %v6481 = vpop.f32.mrb[0].mxu0
      %v6482 = vadd.f32 0.0, %v6481
      %v6483 = vpop.f32.mrb[0].mxu0
      %v6484 = vpop.f32.mrb[0].mxu0
      %v6485 = vadd.f32 0.0, %v6484
      %v6486 = vpop.f32.mrb[0].mxu0
      %6487 = vmatprep.mubr.bf16.mxu0 0
      %6488 = vmatmul.mubr.bf16.gmra.mrb[0].mxu0 %v6370
      %v6489 = vpop.f32.mrb[0].mxu0
      %v6490 = vadd.f32 0.0, %v6489
      %v6491 = vpop.f32.mrb[0].mxu0
      %v6492 = vpop.f32.mrb[0].mxu0
      %v6493 = vadd.f32 0.0, %v6492
      %v6494 = vpop.f32.mrb[0].mxu0
      %6495 = vmatprep.mubr.bf16.mxu0 0
      %6496 = vmatmul.mubr.bf16.gmra.mrb[0].mxu0 %v6373
      %v6497 = vpop.f32.mrb[0].mxu0
      %v6498 = vadd.f32 0.0, %v6497
      %v6499 = vpop.f32.mrb[0].mxu0
      %v6500 = vpop.f32.mrb[0].mxu0
      %v6501 = vadd.f32 0.0, %v6500
      %v6502 = vpop.f32.mrb[0].mxu0
      %6503 = vmatprep.mubr.bf16.mxu0 0
      %6504 = vmatmul.mubr.bf16.gmra.mrb[0].mxu0 %v6376
      %v6505 = vpop.f32.mrb[0].mxu0
      %v6506 = vadd.f32 0.0, %v6505
      %v6507 = vpop.f32.mrb[0].mxu0
      %v6508 = vpop.f32.mrb[0].mxu0
      %v6509 = vadd.f32 0.0, %v6508
      %v6510 = vpop.f32.mrb[0].mxu0
      %6511 = vmatprep.mubr.bf16.mxu0 0
      %6512 = vmatmul.mubr.bf16.gmra.mrb[0].mxu0 %v6379
      %v6513 = vpop.f32.mrb[0].mxu0
      %v6514 = vadd.f32 0.0, %v6513
      %v6515 = vpop.f32.mrb[0].mxu0
      %v6516 = vpop.f32.mrb[0].mxu0
      %v6517 = vadd.f32 0.0, %v6516
      %v6518 = vpop.f32.mrb[0].mxu0
      %6519 = vmatprep.mubr.bf16.mxu0 0
      %6520 = vmatmul.mubr.bf16.gmra.mrb[0].mxu0 %v6382
      %v6521 = vpop.f32.mrb[0].mxu0
      %v6522 = vadd.f32 0.0, %v6521
      %v6523 = vpop.f32.mrb[0].mxu0
      %v6524 = vpop.f32.mrb[0].mxu0
      %v6525 = vadd.f32 0.0, %v6524
      %v6526 = vpop.f32.mrb[0].mxu0
      %6527 = vmatprep.mubr.bf16.mxu0 0
      %6528 = vmatmul.mubr.bf16.gmra.mrb[0].mxu0 %v6385
      %v6529 = vpop.f32.mrb[0].mxu0
      %v6530 = vadd.f32 0.0, %v6529
      %v6531 = vpop.f32.mrb[0].mxu0
      %v6532 = vpop.f32.mrb[0].mxu0
      %v6533 = vadd.f32 0.0, %v6532
      %v6534 = vpop.f32.mrb[0].mxu0
      %6535 = vmatprep.mubr.bf16.mxu0 0
      %6536 = vmatmul.mubr.bf16.gmra.mrb[0].mxu0 %v6388
      %v6537 = vpop.f32.mrb[0].mxu0
      %v6538 = vadd.f32 0.0, %v6537
      %v6539 = vpop.f32.mrb[0].mxu0
      %v6540 = vpop.f32.mrb[0].mxu0
      %v6541 = vadd.f32 0.0, %v6540
      %v6542 = vpop.f32.mrb[0].mxu0
      %6543 = vmatprep.mubr.bf16.mxu0 0
      %6544 = vmatmul.mubr.bf16.gmra.mrb[0].mxu0 %v6391
      %v6545 = vpop.f32.mrb[0].mxu0
      %v6546 = vadd.f32 0.0, %v6545
      %v6547 = vpop.f32.mrb[0].mxu0
      %v6548 = vpop.f32.mrb[0].mxu0
      %v6549 = vadd.f32 0.0, %v6548
      %v6550 = vpop.f32.mrb[0].mxu0
      %6551 = vmatprep.mubr.bf16.mxu0 0
      %6552 = vmatmul.mubr.bf16.gmra.mrb[0].mxu0 %v6394
      %v6553 = vpop.f32.mrb[0].mxu0
      %v6554 = vadd.f32 0.0, %v6553
      %v6555 = vpop.f32.mrb[0].mxu0
      %v6556 = vpop.f32.mrb[0].mxu0
      %v6557 = vadd.f32 0.0, %v6556
      %v6558 = vpop.f32.mrb[0].mxu0
      %6559 = vdwg.mxu0
      %v6560 = vadd.f32 %v6251, %v6434
      %v6561 = vadd.f32 %v6252, %v6437
      %v6562 = vadd.f32 %v6253, %v6442
      %v6563 = vadd.f32 %v6254, %v6445
      %v6564 = vadd.f32 %v6255, %v6450
      %v6565 = vadd.f32 %v6256, %v6453
      %v6566 = vadd.f32 %v6257, %v6458
      %v6567 = vadd.f32 %v6258, %v6461
      %v6568 = vadd.f32 %v6259, %v6466
      %v6569 = vadd.f32 %v6260, %v6469
      %v6570 = vadd.f32 %v6261, %v6474
      %v6571 = vadd.f32 %v6262, %v6477
      %v6572 = vadd.f32 %v6263, %v6482
      %v6573 = vadd.f32 %v6264, %v6485
      %v6574 = vadd.f32 %v6265, %v6490
      %v6575 = vadd.f32 %v6266, %v6493
      %v6576 = vadd.f32 %v6267, %v6498
      %v6577 = vadd.f32 %v6268, %v6501
      %v6578 = vadd.f32 %v6269, %v6506
      %v6579 = vadd.f32 %v6270, %v6509
      %v6580 = vadd.f32 %v6271, %v6514
      %v6581 = vadd.f32 %v6272, %v6517
      %v6582 = vadd.f32 %v6273, %v6522
      %v6583 = vadd.f32 %v6274, %v6525
      %v6584 = vadd.f32 %v6275, %v6530
      %v6585 = vadd.f32 %v6276, %v6533
      %v6586 = vadd.f32 %v6277, %v6538
      %v6587 = vadd.f32 %v6278, %v6541
      %v6588 = vadd.f32 %v6279, %v6546
      %v6589 = vadd.f32 %v6280, %v6549
      %v6590 = vadd.f32 %v6281, %v6554
      %v6591 = vadd.f32 %v6282, %v6557
      %v6592 = vlaneseq
      %v6593 = vshrl.u32 %v6592, 7
      %v6594 = vsub.s32 6, %v6593
      %v6595 = vrot.slane %v309, %v6594
      %v6596 = vadd.f32 %v6560, %v6595
      %v6597 = vadd.f32 %v6561, %v6595
      %v6598 = vadd.f32 %v6562, %v6595
      %v6599 = vadd.f32 %v6563, %v6595
      %v6600 = vadd.f32 %v6564, %v6595
      %v6601 = vadd.f32 %v6565, %v6595
      %v6602 = vadd.f32 %v6566, %v6595
      %v6603 = vadd.f32 %v6567, %v6595
      %v6604 = vadd.f32 %v6568, %v6595
      %v6605 = vadd.f32 %v6569, %v6595
      %v6606 = vadd.f32 %v6570, %v6595
      %v6607 = vadd.f32 %v6571, %v6595
      %v6608 = vadd.f32 %v6572, %v6595
      %v6609 = vadd.f32 %v6573, %v6595
      %v6610 = vadd.f32 %v6574, %v6595
      %v6611 = vadd.f32 %v6575, %v6595
      %v6612 = vadd.f32 %v6576, %v6595
      %v6613 = vadd.f32 %v6577, %v6595
      %v6614 = vadd.f32 %v6578, %v6595
      %v6615 = vadd.f32 %v6579, %v6595
      %v6616 = vadd.f32 %v6580, %v6595
      %v6617 = vadd.f32 %v6581, %v6595
      %v6618 = vadd.f32 %v6582, %v6595
      %v6619 = vadd.f32 %v6583, %v6595
      %v6620 = vadd.f32 %v6584, %v6595
      %v6621 = vadd.f32 %v6585, %v6595
      %v6622 = vadd.f32 %v6586, %v6595
      %v6623 = vadd.f32 %v6587, %v6595
      %v6624 = vadd.f32 %v6588, %v6595
      %v6625 = vadd.f32 %v6589, %v6595
      %v6626 = vadd.f32 %v6590, %v6595
      %v6627 = vadd.f32 %v6591, %v6595
      %6628 = vst.msk [vmem:[%s305] sm:$0xff] %vm1849, %v6596
      %6629 = vst.msk [vmem:[%s305 + $0x8] sm:$0xff] %vm1849, %v6597
      %6630 = vst.msk [vmem:[%s305 + $0x10] sm:$0xff] %vm1849, %v6598
      %6631 = vst.msk [vmem:[%s305 + $0x18] sm:$0xff] %vm1849, %v6599
      %6632 = vst.msk [vmem:[%s305 + $0x20] sm:$0xff] %vm1849, %v6600
      %6633 = vst.msk [vmem:[%s305 + $0x28] sm:$0xff] %vm1849, %v6601
      %6634 = vst.msk [vmem:[%s305 + $0x30] sm:$0xff] %vm1849, %v6602
      %6635 = vst.msk [vmem:[%s305 + $0x38] sm:$0xff] %vm1849, %v6603
      %6636 = vst.msk [vmem:[%s305 + $0x40] sm:$0xff] %vm1849, %v6604
      %6637 = vst.msk [vmem:[%s305 + $0x48] sm:$0xff] %vm1849, %v6605
      %6638 = vst.msk [vmem:[%s305 + $0x50] sm:$0xff] %vm1849, %v6606
      %6639 = vst.msk [vmem:[%s305 + $0x58] sm:$0xff] %vm1849, %v6607
      %6640 = vst.msk [vmem:[%s305 + $0x60] sm:$0xff] %vm1849, %v6608
      %6641 = vst.msk [vmem:[%s305 + $0x68] sm:$0xff] %vm1849, %v6609
      %6642 = vst.msk [vmem:[%s305 + $0x70] sm:$0xff] %vm1849, %v6610
      %6643 = vst.msk [vmem:[%s305 + $0x78] sm:$0xff] %vm1849, %v6611
      %6644 = vst.msk [vmem:[%s305 + $0x80] sm:$0xff] %vm1849, %v6612
      %6645 = vst.msk [vmem:[%s305 + $0x88] sm:$0xff] %vm1849, %v6613
      %6646 = vst.msk [vmem:[%s305 + $0x90] sm:$0xff] %vm1849, %v6614
      %6647 = vst.msk [vmem:[%s305 + $0x98] sm:$0xff] %vm1849, %v6615
      %6648 = vst.msk [vmem:[%s305 + $0xa0] sm:$0xff] %vm1849, %v6616
      %6649 = vst.msk [vmem:[%s305 + $0xa8] sm:$0xff] %vm1849, %v6617
      %6650 = vst.msk [vmem:[%s305 + $0xb0] sm:$0xff] %vm1849, %v6618
      %6651 = vst.msk [vmem:[%s305 + $0xb8] sm:$0xff] %vm1849, %v6619
      %6652 = vst.msk [vmem:[%s305 + $0xc0] sm:$0xff] %vm1849, %v6620
      %6653 = vst.msk [vmem:[%s305 + $0xc8] sm:$0xff] %vm1849, %v6621
      %6654 = vst.msk [vmem:[%s305 + $0xd0] sm:$0xff] %vm1849, %v6622
      %6655 = vst.msk [vmem:[%s305 + $0xd8] sm:$0xff] %vm1849, %v6623
      %6656 = vst.msk [vmem:[%s305 + $0xe0] sm:$0xff] %vm1849, %v6624
      %6657 = vst.msk [vmem:[%s305 + $0xe8] sm:$0xff] %vm1849, %v6625
      %6658 = vst.msk [vmem:[%s305 + $0xf0] sm:$0xff] %vm1849, %v6626
      %6659 = vst.msk [vmem:[%s305 + $0xf8] sm:$0xff] %vm1849, %v6627
      %p6660 = scmp.lt.s32.totalorder %s19, 1
      %s6661 = scalar_select %p6660, %s19, 1
      %s6662 = smul.addr %s6661, 32
      %s6663 = smul.addr %s6662, 8
      %s6664 = scalar_lea.vmem %s8, %s6663
      // Predicated region
      $region53: #{resnet_block_forward.1} parent=51 // pred_check
        %p6665 = pneg %p210
      $region54: #{resnet_block_forward.1} parent=51 // pred_check_branch
        %6667 = sbr.rel (%p6665) target = $region56
      $region55: #{resnet_block_forward.1} parent=51 // pred_region
        _
      $region56: #{resnet_block_forward.1} parent=51 // pred_fallthru
        _
    $region52: #{resnet_block_forward.1} parent=5 // pred_fallthru
      _
    %p6668 = scmp.le.s32.totalorder 2, %s14
    // Predicated region
    $region57: #{resnet_block_forward.1} parent=5 // pred_check
      %p6669 = pneg %p6668
    $region58: #{resnet_block_forward.1} parent=5 // pred_check_branch
      %6671 = sbr.rel (%p6669) target = $region60
    $region59: #{resnet_block_forward.1} parent=5 // pred_region
      %s6672 = ssub.s32 %s14, 2
      // Predicated region
      $region61: #{resnet_block_forward.1} parent=59 // pred_check
        %p6673 = pneg %p216
      $region62: #{resnet_block_forward.1} parent=59 // pred_check_branch
        %6675 = sbr.rel (%p6673) target = $region64
      $region63: #{resnet_block_forward.1} parent=59 // pred_region
        %p6676 = scmp.lt.s32.totalorder %s20, 1
        %s6677 = scalar_select %p6676, %s20, 1
        %s6678 = smul.addr %s6677, 32
        %s6679 = smul.addr %s6678, 8
        %s6680 = scalar_lea.vmem %s8, %s6679
      $region64: #{resnet_block_forward.1} parent=59 // pred_fallthru
        _
    $region60: #{resnet_block_forward.1} parent=5 // pred_fallthru
      _
  $region6: #{resnet_block_forward.1} parent=0 // loop_footer
    %s18 = sadd.s32 1, %s14
  $region7: #{resnet_block_forward.1} parent=0 // loop_footer_branch
    %13 = sbr.rel target = $region3
  $region8: #{resnet_block_forward.1} parent=0 // loop_exit
    _

</llo_original>
